<compile_context>
chip_gen: v7x
topology: tpu7x:2x2x1
jax: 0.10.0
libtpu: 0.0.40
codegen_flags: <defaults>
</compile_context>

<pallas_src>
import functools

import jax
import jax.numpy as jnp
import numpy as np
from jax.experimental import pallas as pl
from jax.experimental.pallas import tpu as pltpu


# ----------------------------------------------------------------------------
# Kernel 1: conv1 (im2col matmul) + bias + ReLU + 2x2 max-pool, fused.
#   p_ref: (1, 4, 144, 16)  -- 4 = pool-window position, 144 = pooled (h*12+w)
#   w_ref: (16, 128), b_ref: (1, 128)
#   o_ref: (1, 144, 128) bf16
# ----------------------------------------------------------------------------
def conv_pool_kernel(p_ref, w_ref, b_ref, o_ref):
    p = p_ref[0]                                   # (4, 144, 16) f32
    w = w_ref[...]                                 # (16, 128) f32
    m = jnp.dot(p[0], w, preferred_element_type=jnp.float32)
    for win in range(1, 4):
        m = jnp.maximum(m, jnp.dot(p[win], w, preferred_element_type=jnp.float32))
    # bias is constant across the pool window -> add after the max; relu after
    # max == max after relu (monotone).
    o_ref[0] = jnp.maximum(m + b_ref[...], 0.0).astype(o_ref.dtype)


def conv_pool_relu(patches, wc, bc):
    N, W4, S, Kp = patches.shape                   # (N, 4, 144, 16)
    C = wc.shape[1]
    return pl.pallas_call(
        conv_pool_kernel,
        out_shape=jax.ShapeDtypeStruct((N, S, C), jnp.bfloat16),
        grid=(N,),
        in_specs=[
            pl.BlockSpec((1, W4, S, Kp), lambda n: (n, 0, 0, 0)),
            pl.BlockSpec((Kp, C), lambda n: (0, 0)),
            pl.BlockSpec((1, C), lambda n: (0, 0)),
        ],
        out_specs=pl.BlockSpec((1, S, C), lambda n: (n, 0, 0)),
        compiler_params=pltpu.CompilerParams(dimension_semantics=("parallel",)),
    )(patches, wc, bc)


# ----------------------------------------------------------------------------
# Kernel 2: MultiHeadSelfAttention (128->128, 4 heads, no bias) + fused ReLU.
#   x_ref: (1, S, C) bf16
#   w_ref: (C, 4C) bf16  == [Wq | Wk | Wv | Wo] (all stored (in, out))
#   o_ref: (1, S, C) bf16
# ----------------------------------------------------------------------------
def attn_kernel(x_ref, w_ref, o_ref, *, num_heads, head_dim):
    xb = x_ref[0]                                  # (S, C) bf16
    C = xb.shape[1]
    w = w_ref[...]                                 # (C, 4C) bf16
    # Fused, lane-dense QKV projection: (S,128) @ (128,384) -> f32
    qkv = jnp.dot(xb, w[:, :3 * C], preferred_element_type=jnp.float32)
    heads = []
    for h in range(num_heads):
        lo = h * head_dim
        q = qkv[:, lo:lo + head_dim].astype(jnp.bfloat16)
        k = qkv[:, C + lo:C + lo + head_dim].astype(jnp.bfloat16)
        v = qkv[:, 2 * C + lo:2 * C + lo + head_dim].astype(jnp.bfloat16)
        # energy = q @ k^T  (reference has NO 1/sqrt(head_dim) scaling)
        e = jax.lax.dot_general(q, k, (((1,), (1,)), ((), ())),
                                preferred_element_type=jnp.float32)       # (S,S)
        e = e - jnp.max(e, axis=-1, keepdims=True)
        p = jnp.exp(e)
        p = p * pl.reciprocal(jnp.sum(p, axis=-1, keepdims=True), approx=True)
        heads.append(jnp.dot(p.astype(jnp.bfloat16), v,
                             preferred_element_type=jnp.float32))         # (S,Dh)
    # concat(heads) @ Wo as ONE full-width (S,128)@(128,128) matmul
    o_all = jnp.concatenate(heads, axis=-1).astype(jnp.bfloat16)          # (S,C)
    out = jnp.dot(o_all, w[:, 3 * C:], preferred_element_type=jnp.float32)
    # Net applies relu right after the attention block -> fuse it here.
    o_ref[0] = jnp.maximum(out, 0.0).astype(o_ref.dtype)


def mhsa_relu(x, w_attn, num_heads):
    N, S, C = x.shape
    kern = functools.partial(attn_kernel, num_heads=num_heads,
                             head_dim=C // num_heads)
    return pl.pallas_call(
        kern,
        out_shape=jax.ShapeDtypeStruct((N, S, C), jnp.bfloat16),
        grid=(N,),
        in_specs=[
            pl.BlockSpec((1, S, C), lambda n: (n, 0, 0)),
            pl.BlockSpec((C, 4 * C), lambda n: (0, 0)),
        ],
        out_specs=pl.BlockSpec((1, S, C), lambda n: (n, 0, 0)),
        compiler_params=pltpu.CompilerParams(dimension_semantics=("parallel",)),
    )(x, w_attn)


# ----------------------------------------------------------------------------
# Kernel 3a: fc1 (18432 -> 256, bf16 weights) + ReLU.
#   grid = (output-column blocks [parallel], K blocks [arbitrary reduction])
# ----------------------------------------------------------------------------
def fc1_kernel(x_ref, w1_ref, b1_ref, h_ref, acc_ref):
    @pl.when(pl.program_id(1) == 0)
    def _init():
        acc_ref[...] = jnp.zeros_like(acc_ref)

    acc_ref[...] += jnp.dot(x_ref[...], w1_ref[...],
                            preferred_element_type=jnp.float32)

    @pl.when(pl.program_id(1) == pl.num_programs(1) - 1)
    def _finish():
        h_ref[...] = jnp.maximum(acc_ref[...] + b1_ref[...], 0.0).astype(h_ref.dtype)


def fc1_relu(xflat, w1_t, b1, *, tk=9216, tn=128):
    N, K = xflat.shape
    H = w1_t.shape[1]
    nk = K // tk
    nj = H // tn
    return pl.pallas_call(
        fc1_kernel,
        out_shape=jax.ShapeDtypeStruct((N, H), jnp.bfloat16),
        grid=(nj, nk),
        in_specs=[
            pl.BlockSpec((N, tk), lambda j, k: (0, k)),
            pl.BlockSpec((tk, tn), lambda j, k: (k, j)),
            pl.BlockSpec((1, tn), lambda j, k: (0, j)),
        ],
        out_specs=pl.BlockSpec((N, tn), lambda j, k: (0, j)),
        scratch_shapes=[pltpu.VMEM((N, tn), jnp.float32)],
        compiler_params=pltpu.CompilerParams(
            dimension_semantics=("parallel", "arbitrary")),
    )(xflat, w1_t, b1)


# ----------------------------------------------------------------------------
# Kernel 3b: fc2 (256 -> 256) + log_softmax (tiny, single block)
# ----------------------------------------------------------------------------
def fc2_lsm_kernel(h_ref, w2_ref, b2_ref, o_ref):
    z = jnp.dot(h_ref[...], w2_ref[...],
                preferred_element_type=jnp.float32) + b2_ref[...]
    z = z - jnp.max(z, axis=-1, keepdims=True)
    o_ref[...] = z - jnp.log(jnp.sum(jnp.exp(z), axis=-1, keepdims=True))


def fc2_logsoftmax(h, w2_t, b2):
    N, H = h.shape
    O = w2_t.shape[1]
    return pl.pallas_call(
        fc2_lsm_kernel,
        out_shape=jax.ShapeDtypeStruct((N, O), jnp.float32),
        grid=(1,),
        in_specs=[
            pl.BlockSpec((N, H), lambda i: (0, 0)),
            pl.BlockSpec((H, O), lambda i: (0, 0)),
            pl.BlockSpec((1, O), lambda i: (0, 0)),
        ],
        out_specs=pl.BlockSpec((N, O), lambda i: (0, 0)),
    )(h, w2_t, b2)


# ----------------------------------------------------------------------------
# Glue: pool-aware im2col, parameter setup, full forward
# ----------------------------------------------------------------------------
def im2col_pool(x1):
    # x1: (N, 28, 28) -> (N, 4, 144, 16)
    # patches[n, dh*2+dw, ph*12+pw, kh*4+kw] = x1[n, 2*ph+dh+kh, 2*pw+dw+kw]
    # i.e. the conv-4x4 patch at conv position (2ph+dh, 2pw+dw); the 25th
    # conv row/col is never built because max_pool2d(2) floors 25 -> 12.
    N = x1.shape[0]
    wins = []
    for dh in range(2):
        for dw in range(2):
            cols = []
            for kh in range(4):
                for kw in range(4):
                    a, b = dh + kh, dw + kw
                    cols.append(x1[:, a:a + 23:2, b:b + 23:2])   # (N, 12, 12)
            wins.append(jnp.stack(cols, axis=-1).reshape(N, 144, 16))
    return jnp.stack(wins, axis=1)                               # (N, 4, 144, 16)


def net_forward(x, params):
    # x: (N, 1, 28, 28) NCHW float32 (PyTorch convention)
    N = x.shape[0]
    x1 = x[:, 0, :, :]                                           # (N, 28, 28)
    patches = im2col_pool(x1)                                    # (N, 4, 144, 16)
    seq = conv_pool_relu(patches, params["wc"], params["bc"])    # (N, 144, 128) bf16
    # seq rows are spatial (h*12+w)-major == x.view(N,C,HW).permute(0,2,1)
    attn = mhsa_relu(seq, params["w_attn"], num_heads=4)         # (N, 144, 128) bf16
    # Dropout2d layers are identity at inference time (deterministic forward).
    # torch: fc(out).view(N,128,12,12) then flatten(1) is a row-major reshape
    # of the contiguous (N, HW, C) buffer -> plain reshape here.
    flat = attn.reshape(N, 144 * 128)                            # (N, 18432) bf16
    h = fc1_relu(flat, params["w1_t"], params["b1"])             # (N, 256) bf16
    return fc2_logsoftmax(h, params["w2_t"], params["b2"])       # (N, 256) f32


def init_params(key):
    ks = jax.random.split(key, 10)

    def u(k, shape, fan_in):
        bound = 1.0 / np.sqrt(fan_in)
        return jax.random.uniform(k, shape, jnp.float32, -bound, bound)

    C = 128
    # conv1: torch weight (128,1,4,4); stored as (16,128): wc[kh*4+kw, c]
    wc = u(ks[0], (16, 128), 16)
    bc = u(ks[1], (1, 128), 16)
    # attention linears (no bias), stored transposed (in, out) so y = x @ w_t,
    # packed into a single lane-dense bf16 slab [Wq | Wk | Wv | Wo].
    wq_t = u(ks[2], (C, C), C)
    wk_t = u(ks[3], (C, C), C)
    wv_t = u(ks[4], (C, C), C)
    wo_t = u(ks[5], (C, C), C)
    w_attn = jnp.concatenate([wq_t, wk_t, wv_t, wo_t], axis=1).astype(jnp.bfloat16)
    # fc1 / fc2 (torch Linear weight is (out,in); stored transposed). bf16
    # weights halve the dominant fc1 HBM stream; accumulation stays f32.
    w1_t = u(ks[6], (18432, 256), 18432).astype(jnp.bfloat16)
    b1 = u(ks[7], (1, 256), 18432)
    w2_t = u(ks[8], (256, 256), 256).astype(jnp.bfloat16)
    b2 = u(ks[9], (1, 256), 256)
    return dict(wc=wc, bc=bc, w_attn=w_attn,
                w1_t=w1_t, b1=b1, w2_t=w2_t, b2=b2)


if __name__ == "__main__":
    key = jax.random.PRNGKey(0)
    kx, kp = jax.random.split(key)
    # batch=2; spatial must be 28x28 / 1 channel because fc1.in_features == 18432
    x = jax.random.normal(kx, (2, 1, 28, 28), jnp.float32)
    params = init_params(kp)

    out = jax.jit(net_forward)(x, params)
    out = jax.block_until_ready(out)

    assert out.shape == (2, 256), out.shape
    assert bool(jnp.all(jnp.isfinite(out)))
    # log_softmax rows must exponentiate-sum to 1
    row_sums = jnp.sum(jnp.exp(out), axis=1)
    assert bool(jnp.all(jnp.abs(row_sums - 1.0) < 1e-3)), row_sums
    print("KERNEL_OK")
</pallas_src>

<mosaic_0001>
module attributes {stable_mosaic.version = 11 : i64} {
  func.func @conv_pool_kernel(%arg0: i32, %arg1: memref<1x4x144x16xf32, #tpu.memory_space<vmem>>, %arg2: memref<16x128xf32, #tpu.memory_space<vmem>>, %arg3: memref<1x128xf32, #tpu.memory_space<vmem>>, %arg4: memref<1x144x128xbf16, #tpu.memory_space<vmem>>) attributes {dimension_semantics = [#tpu.dimension_semantics<parallel>], iteration_bounds = array<i64: 2>, scalar_prefetch = 0 : i64, scratch_operands = 0 : i64, tpu.core_type = #tpu.core_type<tc>, window_params = [{transform_indices = @transform_0, window_bounds = array<i64: 1, 4, 144, 16>}, {pipeline_mode = #tpu.pipeline_mode<synchronous>, transform_indices = @transform_1, window_bounds = array<i64: 16, 128>}, {pipeline_mode = #tpu.pipeline_mode<synchronous>, transform_indices = @transform_2, window_bounds = array<i64: 1, 128>}, {transform_indices = @transform_3, window_bounds = array<i64: 1, 144, 128>}]} {
    %c0 = arith.constant 0 : index
    %c0_0 = arith.constant 0 : index
    %c0_1 = arith.constant 0 : index
    %c0_2 = arith.constant 0 : index
    %0 = vector.load %arg1[%c0, %c0_0, %c0_1, %c0_2] : memref<1x4x144x16xf32, #tpu.memory_space<vmem>>, vector<1x4x144x16xf32>
    %1 = vector.shape_cast %0 : vector<1x4x144x16xf32> to vector<4x144x16xf32>
    %c0_3 = arith.constant 0 : index
    %c0_4 = arith.constant 0 : index
    %2 = vector.load %arg2[%c0_3, %c0_4] : memref<16x128xf32, #tpu.memory_space<vmem>>, vector<16x128xf32>
    %3 = vector.extract_strided_slice %1 {offsets = [0, 0, 0], sizes = [1, 144, 16], strides = [1, 1, 1]} : vector<4x144x16xf32> to vector<1x144x16xf32>
    %4 = vector.shape_cast %3 : vector<1x144x16xf32> to vector<144x16xf32>
    %cst = arith.constant dense<0.000000e+00> : vector<144x128xf32>
    %5 = tpu.matmul %4, %2, %cst {dimension_numbers = #tpu.dot_dimension_numbers<[1], [0], [0], [1], [0, 0, 1, 1], [], []>} : vector<144x16xf32>, vector<16x128xf32>, vector<144x128xf32> -> vector<144x128xf32>
    %6 = vector.extract_strided_slice %1 {offsets = [1, 0, 0], sizes = [1, 144, 16], strides = [1, 1, 1]} : vector<4x144x16xf32> to vector<1x144x16xf32>
    %7 = vector.shape_cast %6 : vector<1x144x16xf32> to vector<144x16xf32>
    %cst_5 = arith.constant dense<0.000000e+00> : vector<144x128xf32>
    %8 = tpu.matmul %7, %2, %cst_5 {dimension_numbers = #tpu.dot_dimension_numbers<[1], [0], [0], [1], [0, 0, 1, 1], [], []>} : vector<144x16xf32>, vector<16x128xf32>, vector<144x128xf32> -> vector<144x128xf32>
    %9 = arith.maximumf %5, %8 : vector<144x128xf32>
    %10 = vector.extract_strided_slice %1 {offsets = [2, 0, 0], sizes = [1, 144, 16], strides = [1, 1, 1]} : vector<4x144x16xf32> to vector<1x144x16xf32>
    %11 = vector.shape_cast %10 : vector<1x144x16xf32> to vector<144x16xf32>
    %cst_6 = arith.constant dense<0.000000e+00> : vector<144x128xf32>
    %12 = tpu.matmul %11, %2, %cst_6 {dimension_numbers = #tpu.dot_dimension_numbers<[1], [0], [0], [1], [0, 0, 1, 1], [], []>} : vector<144x16xf32>, vector<16x128xf32>, vector<144x128xf32> -> vector<144x128xf32>
    %13 = arith.maximumf %9, %12 : vector<144x128xf32>
    %14 = vector.extract_strided_slice %1 {offsets = [3, 0, 0], sizes = [1, 144, 16], strides = [1, 1, 1]} : vector<4x144x16xf32> to vector<1x144x16xf32>
    %15 = vector.shape_cast %14 : vector<1x144x16xf32> to vector<144x16xf32>
    %cst_7 = arith.constant dense<0.000000e+00> : vector<144x128xf32>
    %16 = tpu.matmul %15, %2, %cst_7 {dimension_numbers = #tpu.dot_dimension_numbers<[1], [0], [0], [1], [0, 0, 1, 1], [], []>} : vector<144x16xf32>, vector<16x128xf32>, vector<144x128xf32> -> vector<144x128xf32>
    %17 = arith.maximumf %13, %16 : vector<144x128xf32>
    %c0_8 = arith.constant 0 : index
    %c0_9 = arith.constant 0 : index
    %18 = vector.load %arg3[%c0_8, %c0_9] : memref<1x128xf32, #tpu.memory_space<vmem>>, vector<1x128xf32>
    %19 = vector.broadcast %18 : vector<1x128xf32> to vector<144x128xf32>
    %20 = arith.addf %17, %19 : vector<144x128xf32>
    %cst_10 = arith.constant 0.000000e+00 : f32
    %21 = vector.broadcast %cst_10 : f32 to vector<144x128xf32>
    %22 = arith.maximumf %20, %21 : vector<144x128xf32>
    %23 = arith.truncf %22 : vector<144x128xf32> to vector<144x128xbf16>
    %c0_11 = arith.constant 0 : index
    %c0_12 = arith.constant 0 : index
    %c0_13 = arith.constant 0 : index
    %24 = vector.load %arg4[%c0_11, %c0_12, %c0_13] : memref<1x144x128xbf16, #tpu.memory_space<vmem>>, vector<1x144x128xbf16>
    %25 = vector.shape_cast %24 : vector<1x144x128xbf16> to vector<144x128xbf16>
    %26 = vector.shape_cast %23 : vector<144x128xbf16> to vector<1x144x128xbf16>
    tpu.vector_store %arg4[%c0_11, %c0_12, %c0_13], %26 {strides = array<i32>} : memref<1x144x128xbf16, #tpu.memory_space<vmem>>, vector<1x144x128xbf16>,
    return
  }
  func.func @transform_0(%arg0: i32) -> (i32, i32, i32, i32) {
    %c0_i32 = arith.constant 0 : i32
    %c0_i32_0 = arith.constant 0 : i32
    %c0_i32_1 = arith.constant 0 : i32
    %c0_i32_2 = arith.constant 0 : i32
    return %arg0, %c0_i32, %c0_i32_0, %c0_i32_1 : i32, i32, i32, i32
  }
  func.func @transform_1(%arg0: i32) -> (i32, i32) {
    %c0_i32 = arith.constant 0 : i32
    %c0_i32_0 = arith.constant 0 : i32
    %c0_i32_1 = arith.constant 0 : i32
    return %c0_i32, %c0_i32_0 : i32, i32
  }
  func.func @transform_2(%arg0: i32) -> (i32, i32) {
    %c0_i32 = arith.constant 0 : i32
    %c0_i32_0 = arith.constant 0 : i32
    %c0_i32_1 = arith.constant 0 : i32
    return %c0_i32, %c0_i32_0 : i32, i32
  }
  func.func @transform_3(%arg0: i32) -> (i32, i32, i32) {
    %c0_i32 = arith.constant 0 : i32
    %c0_i32_0 = arith.constant 0 : i32
    %c0_i32_1 = arith.constant 0 : i32
    return %arg0, %c0_i32, %c0_i32_0 : i32, i32, i32
  }
}

module attributes {stable_mosaic.version = 11 : i64} {
  func.func @attn_kernel(%arg0: i32, %arg1: memref<1x144x128xbf16, #tpu.memory_space<vmem>>, %arg2: memref<128x512xbf16, #tpu.memory_space<vmem>>, %arg3: memref<1x144x128xbf16, #tpu.memory_space<vmem>>) attributes {dimension_semantics = [#tpu.dimension_semantics<parallel>], iteration_bounds = array<i64: 2>, scalar_prefetch = 0 : i64, scratch_operands = 0 : i64, tpu.core_type = #tpu.core_type<tc>, window_params = [{transform_indices = @transform_0, window_bounds = array<i64: 1, 144, 128>}, {pipeline_mode = #tpu.pipeline_mode<synchronous>, transform_indices = @transform_1, window_bounds = array<i64: 128, 512>}, {transform_indices = @transform_2, window_bounds = array<i64: 1, 144, 128>}]} {
    %c0 = arith.constant 0 : index
    %c0_0 = arith.constant 0 : index
    %c0_1 = arith.constant 0 : index
    %0 = vector.load %arg1[%c0, %c0_0, %c0_1] : memref<1x144x128xbf16, #tpu.memory_space<vmem>>, vector<1x144x128xbf16>
    %1 = vector.shape_cast %0 : vector<1x144x128xbf16> to vector<144x128xbf16>
    %c0_2 = arith.constant 0 : index
    %c0_3 = arith.constant 0 : index
    %2 = vector.load %arg2[%c0_2, %c0_3] : memref<128x512xbf16, #tpu.memory_space<vmem>>, vector<128x512xbf16>
    %3 = vector.extract_strided_slice %2 {offsets = [0, 0], sizes = [128, 384], strides = [1, 1]} : vector<128x512xbf16> to vector<128x384xbf16>
    %cst = arith.constant dense<0.000000e+00> : vector<144x384xf32>
    %4 = tpu.matmul %1, %3, %cst {dimension_numbers = #tpu.dot_dimension_numbers<[1], [0], [0], [1], [0, 0, 1, 1], [], []>} : vector<144x128xbf16>, vector<128x384xbf16>, vector<144x384xf32> -> vector<144x384xf32>
    %5 = vector.extract_strided_slice %4 {offsets = [0, 0], sizes = [144, 32], strides = [1, 1]} : vector<144x384xf32> to vector<144x32xf32>
    %6 = arith.truncf %5 : vector<144x32xf32> to vector<144x32xbf16>
    %7 = vector.extract_strided_slice %4 {offsets = [0, 128], sizes = [144, 32], strides = [1, 1]} : vector<144x384xf32> to vector<144x32xf32>
    %8 = arith.truncf %7 : vector<144x32xf32> to vector<144x32xbf16>
    %9 = vector.extract_strided_slice %4 {offsets = [0, 256], sizes = [144, 32], strides = [1, 1]} : vector<144x384xf32> to vector<144x32xf32>
    %10 = arith.truncf %9 : vector<144x32xf32> to vector<144x32xbf16>
    %cst_4 = arith.constant dense<0.000000e+00> : vector<144x144xf32>
    %11 = tpu.matmul %6, %8, %cst_4 {dimension_numbers = #tpu.dot_dimension_numbers<[1], [1], [0], [0], [0, 0, 1, 0], [], []>} : vector<144x32xbf16>, vector<144x32xbf16>, vector<144x144xf32> -> vector<144x144xf32>
    %cst_5 = arith.constant dense<0xFF800000> : vector<144xf32>
    %12 = vector.multi_reduction <maximumf>, %11, %cst_5 [1] : vector<144x144xf32> to vector<144xf32>
    %13 = vector.shape_cast %12 : vector<144xf32> to vector<144x1xf32>
    %14 = vector.broadcast %13 : vector<144x1xf32> to vector<144x144xf32>
    %15 = arith.subf %11, %14 : vector<144x144xf32>
    %16 = math.exp %15 : vector<144x144xf32>
    %cst_6 = arith.constant dense<0.000000e+00> : vector<144xf32>
    %17 = vector.multi_reduction <add>, %16, %cst_6 [1] : vector<144x144xf32> to vector<144xf32>
    %18 = vector.shape_cast %17 : vector<144xf32> to vector<144x1xf32>
    %19 = tpu.reciprocal %18 {approx = true} : vector<144x1xf32> -> vector<144x1xf32>
    %20 = vector.broadcast %19 : vector<144x1xf32> to vector<144x144xf32>
    %21 = arith.mulf %16, %20 : vector<144x144xf32>
    %22 = arith.truncf %21 : vector<144x144xf32> to vector<144x144xbf16>
    %cst_7 = arith.constant dense<0.000000e+00> : vector<144x32xf32>
    %23 = tpu.matmul %22, %10, %cst_7 {dimension_numbers = #tpu.dot_dimension_numbers<[1], [0], [0], [1], [0, 0, 1, 1], [], []>} : vector<144x144xbf16>, vector<144x32xbf16>, vector<144x32xf32> -> vector<144x32xf32>
    %24 = vector.extract_strided_slice %4 {offsets = [0, 32], sizes = [144, 32], strides = [1, 1]} : vector<144x384xf32> to vector<144x32xf32>
    %25 = arith.truncf %24 : vector<144x32xf32> to vector<144x32xbf16>
    %26 = vector.extract_strided_slice %4 {offsets = [0, 160], sizes = [144, 32], strides = [1, 1]} : vector<144x384xf32> to vector<144x32xf32>
    %27 = arith.truncf %26 : vector<144x32xf32> to vector<144x32xbf16>
    %28 = vector.extract_strided_slice %4 {offsets = [0, 288], sizes = [144, 32], strides = [1, 1]} : vector<144x384xf32> to vector<144x32xf32>
    %29 = arith.truncf %28 : vector<144x32xf32> to vector<144x32xbf16>
    %cst_8 = arith.constant dense<0.000000e+00> : vector<144x144xf32>
    %30 = tpu.matmul %25, %27, %cst_8 {dimension_numbers = #tpu.dot_dimension_numbers<[1], [1], [0], [0], [0, 0, 1, 0], [], []>} : vector<144x32xbf16>, vector<144x32xbf16>, vector<144x144xf32> -> vector<144x144xf32>
    %cst_9 = arith.constant dense<0xFF800000> : vector<144xf32>
    %31 = vector.multi_reduction <maximumf>, %30, %cst_9 [1] : vector<144x144xf32> to vector<144xf32>
    %32 = vector.shape_cast %31 : vector<144xf32> to vector<144x1xf32>
    %33 = vector.broadcast %32 : vector<144x1xf32> to vector<144x144xf32>
    %34 = arith.subf %30, %33 : vector<144x144xf32>
    %35 = math.exp %34 : vector<144x144xf32>
    %cst_10 = arith.constant dense<0.000000e+00> : vector<144xf32>
    %36 = vector.multi_reduction <add>, %35, %cst_10 [1] : vector<144x144xf32> to vector<144xf32>
    %37 = vector.shape_cast %36 : vector<144xf32> to vector<144x1xf32>
    %38 = tpu.reciprocal %37 {approx = true} : vector<144x1xf32> -> vector<144x1xf32>
    %39 = vector.broadcast %38 : vector<144x1xf32> to vector<144x144xf32>
    %40 = arith.mulf %35, %39 : vector<144x144xf32>
    %41 = arith.truncf %40 : vector<144x144xf32> to vector<144x144xbf16>
    %cst_11 = arith.constant dense<0.000000e+00> : vector<144x32xf32>
    %42 = tpu.matmul %41, %29, %cst_11 {dimension_numbers = #tpu.dot_dimension_numbers<[1], [0], [0], [1], [0, 0, 1, 1], [], []>} : vector<144x144xbf16>, vector<144x32xbf16>, vector<144x32xf32> -> vector<144x32xf32>
    %43 = vector.extract_strided_slice %4 {offsets = [0, 64], sizes = [144, 32], strides = [1, 1]} : vector<144x384xf32> to vector<144x32xf32>
    %44 = arith.truncf %43 : vector<144x32xf32> to vector<144x32xbf16>
    %45 = vector.extract_strided_slice %4 {offsets = [0, 192], sizes = [144, 32], strides = [1, 1]} : vector<144x384xf32> to vector<144x32xf32>
    %46 = arith.truncf %45 : vector<144x32xf32> to vector<144x32xbf16>
    %47 = vector.extract_strided_slice %4 {offsets = [0, 320], sizes = [144, 32], strides = [1, 1]} : vector<144x384xf32> to vector<144x32xf32>
    %48 = arith.truncf %47 : vector<144x32xf32> to vector<144x32xbf16>
    %cst_12 = arith.constant dense<0.000000e+00> : vector<144x144xf32>
    %49 = tpu.matmul %44, %46, %cst_12 {dimension_numbers = #tpu.dot_dimension_numbers<[1], [1], [0], [0], [0, 0, 1, 0], [], []>} : vector<144x32xbf16>, vector<144x32xbf16>, vector<144x144xf32> -> vector<144x144xf32>
    %cst_13 = arith.constant dense<0xFF800000> : vector<144xf32>
    %50 = vector.multi_reduction <maximumf>, %49, %cst_13 [1] : vector<144x144xf32> to vector<144xf32>
    %51 = vector.shape_cast %50 : vector<144xf32> to vector<144x1xf32>
    %52 = vector.broadcast %51 : vector<144x1xf32> to vector<144x144xf32>
    %53 = arith.subf %49, %52 : vector<144x144xf32>
    %54 = math.exp %53 : vector<144x144xf32>
    %cst_14 = arith.constant dense<0.000000e+00> : vector<144xf32>
    %55 = vector.multi_reduction <add>, %54, %cst_14 [1] : vector<144x144xf32> to vector<144xf32>
    %56 = vector.shape_cast %55 : vector<144xf32> to vector<144x1xf32>
    %57 = tpu.reciprocal %56 {approx = true} : vector<144x1xf32> -> vector<144x1xf32>
    %58 = vector.broadcast %57 : vector<144x1xf32> to vector<144x144xf32>
    %59 = arith.mulf %54, %58 : vector<144x144xf32>
    %60 = arith.truncf %59 : vector<144x144xf32> to vector<144x144xbf16>
    %cst_15 = arith.constant dense<0.000000e+00> : vector<144x32xf32>
    %61 = tpu.matmul %60, %48, %cst_15 {dimension_numbers = #tpu.dot_dimension_numbers<[1], [0], [0], [1], [0, 0, 1, 1], [], []>} : vector<144x144xbf16>, vector<144x32xbf16>, vector<144x32xf32> -> vector<144x32xf32>
    %62 = vector.extract_strided_slice %4 {offsets = [0, 96], sizes = [144, 32], strides = [1, 1]} : vector<144x384xf32> to vector<144x32xf32>
    %63 = arith.truncf %62 : vector<144x32xf32> to vector<144x32xbf16>
    %64 = vector.extract_strided_slice %4 {offsets = [0, 224], sizes = [144, 32], strides = [1, 1]} : vector<144x384xf32> to vector<144x32xf32>
    %65 = arith.truncf %64 : vector<144x32xf32> to vector<144x32xbf16>
    %66 = vector.extract_strided_slice %4 {offsets = [0, 352], sizes = [144, 32], strides = [1, 1]} : vector<144x384xf32> to vector<144x32xf32>
    %67 = arith.truncf %66 : vector<144x32xf32> to vector<144x32xbf16>
    %cst_16 = arith.constant dense<0.000000e+00> : vector<144x144xf32>
    %68 = tpu.matmul %63, %65, %cst_16 {dimension_numbers = #tpu.dot_dimension_numbers<[1], [1], [0], [0], [0, 0, 1, 0], [], []>} : vector<144x32xbf16>, vector<144x32xbf16>, vector<144x144xf32> -> vector<144x144xf32>
    %cst_17 = arith.constant dense<0xFF800000> : vector<144xf32>
    %69 = vector.multi_reduction <maximumf>, %68, %cst_17 [1] : vector<144x144xf32> to vector<144xf32>
    %70 = vector.shape_cast %69 : vector<144xf32> to vector<144x1xf32>
    %71 = vector.broadcast %70 : vector<144x1xf32> to vector<144x144xf32>
    %72 = arith.subf %68, %71 : vector<144x144xf32>
    %73 = math.exp %72 : vector<144x144xf32>
    %cst_18 = arith.constant dense<0.000000e+00> : vector<144xf32>
    %74 = vector.multi_reduction <add>, %73, %cst_18 [1] : vector<144x144xf32> to vector<144xf32>
    %75 = vector.shape_cast %74 : vector<144xf32> to vector<144x1xf32>
    %76 = tpu.reciprocal %75 {approx = true} : vector<144x1xf32> -> vector<144x1xf32>
    %77 = vector.broadcast %76 : vector<144x1xf32> to vector<144x144xf32>
    %78 = arith.mulf %73, %77 : vector<144x144xf32>
    %79 = arith.truncf %78 : vector<144x144xf32> to vector<144x144xbf16>
    %cst_19 = arith.constant dense<0.000000e+00> : vector<144x32xf32>
    %80 = tpu.matmul %79, %67, %cst_19 {dimension_numbers = #tpu.dot_dimension_numbers<[1], [0], [0], [1], [0, 0, 1, 1], [], []>} : vector<144x144xbf16>, vector<144x32xbf16>, vector<144x32xf32> -> vector<144x32xf32>
    %81 = tpu.concatenate %23, %42, %61, %80 in 1 : vector<144x32xf32>, vector<144x32xf32>, vector<144x32xf32>, vector<144x32xf32> -> vector<144x128xf32>
    %82 = arith.truncf %81 : vector<144x128xf32> to vector<144x128xbf16>
    %83 = vector.extract_strided_slice %2 {offsets = [0, 384], sizes = [128, 128], strides = [1, 1]} : vector<128x512xbf16> to vector<128x128xbf16>
    %cst_20 = arith.constant dense<0.000000e+00> : vector<144x128xf32>
    %84 = tpu.matmul %82, %83, %cst_20 {dimension_numbers = #tpu.dot_dimension_numbers<[1], [0], [0], [1], [0, 0, 1, 1], [], []>} : vector<144x128xbf16>, vector<128x128xbf16>, vector<144x128xf32> -> vector<144x128xf32>
    %cst_21 = arith.constant 0.000000e+00 : f32
    %85 = vector.broadcast %cst_21 : f32 to vector<144x128xf32>
    %86 = arith.maximumf %84, %85 : vector<144x128xf32>
    %87 = arith.truncf %86 : vector<144x128xf32> to vector<144x128xbf16>
    %c0_22 = arith.constant 0 : index
    %c0_23 = arith.constant 0 : index
    %c0_24 = arith.constant 0 : index
    %88 = vector.load %arg3[%c0_22, %c0_23, %c0_24] : memref<1x144x128xbf16, #tpu.memory_space<vmem>>, vector<1x144x128xbf16>
    %89 = vector.shape_cast %88 : vector<1x144x128xbf16> to vector<144x128xbf16>
    %90 = vector.shape_cast %87 : vector<144x128xbf16> to vector<1x144x128xbf16>
    tpu.vector_store %arg3[%c0_22, %c0_23, %c0_24], %90 {strides = array<i32>} : memref<1x144x128xbf16, #tpu.memory_space<vmem>>, vector<1x144x128xbf16>,
    return
  }
  func.func @transform_0(%arg0: i32) -> (i32, i32, i32) {
    %c0_i32 = arith.constant 0 : i32
    %c0_i32_0 = arith.constant 0 : i32
    %c0_i32_1 = arith.constant 0 : i32
    return %arg0, %c0_i32, %c0_i32_0 : i32, i32, i32
  }
  func.func @transform_1(%arg0: i32) -> (i32, i32) {
    %c0_i32 = arith.constant 0 : i32
    %c0_i32_0 = arith.constant 0 : i32
    %c0_i32_1 = arith.constant 0 : i32
    return %c0_i32, %c0_i32_0 : i32, i32
  }
  func.func @transform_2(%arg0: i32) -> (i32, i32, i32) {
    %c0_i32 = arith.constant 0 : i32
    %c0_i32_0 = arith.constant 0 : i32
    %c0_i32_1 = arith.constant 0 : i32
    return %arg0, %c0_i32, %c0_i32_0 : i32, i32, i32
  }
}

module attributes {stable_mosaic.version = 11 : i64} {
  func.func @fc1_kernel(%arg0: i32, %arg1: i32, %arg2: memref<2x9216xbf16, #tpu.memory_space<vmem>>, %arg3: memref<9216x128xbf16, #tpu.memory_space<vmem>>, %arg4: memref<1x128xf32, #tpu.memory_space<vmem>>, %arg5: memref<2x128xbf16, #tpu.memory_space<vmem>>, %arg6: memref<2x128xf32, #tpu.memory_space<vmem>>) attributes {dimension_semantics = [#tpu.dimension_semantics<parallel>, #tpu.dimension_semantics<arbitrary>], iteration_bounds = array<i64: 2, 2>, scalar_prefetch = 0 : i64, scratch_operands = 1 : i64, tpu.core_type = #tpu.core_type<tc>, window_params = [{transform_indices = @transform_0, window_bounds = array<i64: 2, 9216>}, {transform_indices = @transform_1, window_bounds = array<i64: 9216, 128>}, {transform_indices = @transform_2, window_bounds = array<i64: 1, 128>}, {transform_indices = @transform_3, window_bounds = array<i64: 2, 128>}]} {
    %c0_i32 = arith.constant 0 : i32
    %0 = arith.cmpi eq, %arg1, %c0_i32 : i32
    %1 = arith.extui %0 : i1 to i32
    %c0_i32_0 = arith.constant 0 : i32
    %2 = arith.cmpi ne, %1, %c0_i32_0 : i32
    scf.if %2 {
      %cst_9 = arith.constant 0.000000e+00 : f32
      %12 = vector.broadcast %cst_9 : f32 to vector<2x128xf32>
      %c0_10 = arith.constant 0 : index
      %c0_11 = arith.constant 0 : index
      %13 = vector.load %arg6[%c0_10, %c0_11] : memref<2x128xf32, #tpu.memory_space<vmem>>, vector<2x128xf32>
      tpu.vector_store %arg6[%c0_10, %c0_11], %12 {strides = array<i32>} : memref<2x128xf32, #tpu.memory_space<vmem>>, vector<2x128xf32>,
    } else {
    }
    %c0 = arith.constant 0 : index
    %c0_1 = arith.constant 0 : index
    %3 = vector.load %arg6[%c0, %c0_1] : memref<2x128xf32, #tpu.memory_space<vmem>>, vector<2x128xf32>
    %c0_2 = arith.constant 0 : index
    %c0_3 = arith.constant 0 : index
    %4 = vector.load %arg2[%c0_2, %c0_3] : memref<2x9216xbf16, #tpu.memory_space<vmem>>, vector<2x9216xbf16>
    %c0_4 = arith.constant 0 : index
    %c0_5 = arith.constant 0 : index
    %5 = vector.load %arg3[%c0_4, %c0_5] : memref<9216x128xbf16, #tpu.memory_space<vmem>>, vector<9216x128xbf16>
    %cst = arith.constant dense<0.000000e+00> : vector<2x128xf32>
    %6 = tpu.matmul %4, %5, %cst {dimension_numbers = #tpu.dot_dimension_numbers<[1], [0], [0], [1], [0, 0, 1, 1], [], []>} : vector<2x9216xbf16>, vector<9216x128xbf16>, vector<2x128xf32> -> vector<2x128xf32>
    %7 = arith.addf %3, %6 : vector<2x128xf32>
    %c0_6 = arith.constant 0 : index
    %c0_7 = arith.constant 0 : index
    %8 = vector.load %arg6[%c0_6, %c0_7] : memref<2x128xf32, #tpu.memory_space<vmem>>, vector<2x128xf32>
    tpu.vector_store %arg6[%c0_6, %c0_7], %7 {strides = array<i32>} : memref<2x128xf32, #tpu.memory_space<vmem>>, vector<2x128xf32>,
    %c1_i32 = arith.constant 1 : i32
    %9 = arith.cmpi eq, %arg1, %c1_i32 : i32
    %10 = arith.extui %9 : i1 to i32
    %c0_i32_8 = arith.constant 0 : i32
    %11 = arith.cmpi ne, %10, %c0_i32_8 : i32
    scf.if %11 {
      %c0_9 = arith.constant 0 : index
      %c0_10 = arith.constant 0 : index
      %12 = vector.load %arg6[%c0_9, %c0_10] : memref<2x128xf32, #tpu.memory_space<vmem>>, vector<2x128xf32>
      %c0_11 = arith.constant 0 : index
      %c0_12 = arith.constant 0 : index
      %13 = vector.load %arg4[%c0_11, %c0_12] : memref<1x128xf32, #tpu.memory_space<vmem>>, vector<1x128xf32>
      %14 = vector.broadcast %13 : vector<1x128xf32> to vector<2x128xf32>
      %15 = arith.addf %12, %14 : vector<2x128xf32>
      %cst_13 = arith.constant 0.000000e+00 : f32
      %16 = vector.broadcast %cst_13 : f32 to vector<2x128xf32>
      %17 = arith.maximumf %15, %16 : vector<2x128xf32>
      %18 = arith.truncf %17 : vector<2x128xf32> to vector<2x128xbf16>
      %c0_14 = arith.constant 0 : index
      %c0_15 = arith.constant 0 : index
      %19 = vector.load %arg5[%c0_14, %c0_15] : memref<2x128xbf16, #tpu.memory_space<vmem>>, vector<2x128xbf16>
      tpu.vector_store %arg5[%c0_14, %c0_15], %18 {strides = array<i32>} : memref<2x128xbf16, #tpu.memory_space<vmem>>, vector<2x128xbf16>,
    } else {
    }
    return
  }
  func.func @transform_0(%arg0: i32, %arg1: i32) -> (i32, i32) {
    %c0_i32 = arith.constant 0 : i32
    %c0_i32_0 = arith.constant 0 : i32
    return %c0_i32, %arg1 : i32, i32
  }
  func.func @transform_1(%arg0: i32, %arg1: i32) -> (i32, i32) {
    %c0_i32 = arith.constant 0 : i32
    return %arg1, %arg0 : i32, i32
  }
  func.func @transform_2(%arg0: i32, %arg1: i32) -> (i32, i32) {
    %c0_i32 = arith.constant 0 : i32
    %c0_i32_0 = arith.constant 0 : i32
    return %c0_i32, %arg0 : i32, i32
  }
  func.func @transform_3(%arg0: i32, %arg1: i32) -> (i32, i32) {
    %c0_i32 = arith.constant 0 : i32
    %c0_i32_0 = arith.constant 0 : i32
    return %c0_i32, %arg0 : i32, i32
  }
}

module attributes {stable_mosaic.version = 11 : i64} {
  func.func @fc2_lsm_kernel(%arg0: i32, %arg1: memref<2x256xbf16, #tpu.memory_space<vmem>>, %arg2: memref<256x256xbf16, #tpu.memory_space<vmem>>, %arg3: memref<1x256xf32, #tpu.memory_space<vmem>>, %arg4: memref<2x256xf32, #tpu.memory_space<vmem>>) attributes {dimension_semantics = [#tpu.dimension_semantics<arbitrary>], iteration_bounds = array<i64: 1>, scalar_prefetch = 0 : i64, scratch_operands = 0 : i64, tpu.core_type = #tpu.core_type<tc>, window_params = [{pipeline_mode = #tpu.pipeline_mode<synchronous>, transform_indices = @transform_0, window_bounds = array<i64: 2, 256>}, {pipeline_mode = #tpu.pipeline_mode<synchronous>, transform_indices = @transform_1, window_bounds = array<i64: 256, 256>}, {pipeline_mode = #tpu.pipeline_mode<synchronous>, transform_indices = @transform_2, window_bounds = array<i64: 1, 256>}, {pipeline_mode = #tpu.pipeline_mode<synchronous>, transform_indices = @transform_3, window_bounds = array<i64: 2, 256>}]} {
    %c0 = arith.constant 0 : index
    %c0_0 = arith.constant 0 : index
    %0 = vector.load %arg1[%c0, %c0_0] : memref<2x256xbf16, #tpu.memory_space<vmem>>, vector<2x256xbf16>
    %c0_1 = arith.constant 0 : index
    %c0_2 = arith.constant 0 : index
    %1 = vector.load %arg2[%c0_1, %c0_2] : memref<256x256xbf16, #tpu.memory_space<vmem>>, vector<256x256xbf16>
    %cst = arith.constant dense<0.000000e+00> : vector<2x256xf32>
    %2 = tpu.matmul %0, %1, %cst {dimension_numbers = #tpu.dot_dimension_numbers<[1], [0], [0], [1], [0, 0, 1, 1], [], []>} : vector<2x256xbf16>, vector<256x256xbf16>, vector<2x256xf32> -> vector<2x256xf32>
    %c0_3 = arith.constant 0 : index
    %c0_4 = arith.constant 0 : index
    %3 = vector.load %arg3[%c0_3, %c0_4] : memref<1x256xf32, #tpu.memory_space<vmem>>, vector<1x256xf32>
    %4 = vector.broadcast %3 : vector<1x256xf32> to vector<2x256xf32>
    %5 = arith.addf %2, %4 : vector<2x256xf32>
    %cst_5 = arith.constant dense<0xFF800000> : vector<2xf32>
    %6 = vector.multi_reduction <maximumf>, %5, %cst_5 [1] : vector<2x256xf32> to vector<2xf32>
    %7 = vector.shape_cast %6 : vector<2xf32> to vector<2x1xf32>
    %8 = vector.broadcast %7 : vector<2x1xf32> to vector<2x256xf32>
    %9 = arith.subf %5, %8 : vector<2x256xf32>
    %10 = math.exp %9 : vector<2x256xf32>
    %cst_6 = arith.constant dense<0.000000e+00> : vector<2xf32>
    %11 = vector.multi_reduction <add>, %10, %cst_6 [1] : vector<2x256xf32> to vector<2xf32>
    %12 = vector.shape_cast %11 : vector<2xf32> to vector<2x1xf32>
    %13 = math.log %12 : vector<2x1xf32>
    %14 = vector.broadcast %13 : vector<2x1xf32> to vector<2x256xf32>
    %15 = arith.subf %9, %14 : vector<2x256xf32>
    %c0_7 = arith.constant 0 : index
    %c0_8 = arith.constant 0 : index
    %16 = vector.load %arg4[%c0_7, %c0_8] : memref<2x256xf32, #tpu.memory_space<vmem>>, vector<2x256xf32>
    tpu.vector_store %arg4[%c0_7, %c0_8], %15 {strides = array<i32>} : memref<2x256xf32, #tpu.memory_space<vmem>>, vector<2x256xf32>,
    return
  }
  func.func @transform_0(%arg0: i32) -> (i32, i32) {
    %c0_i32 = arith.constant 0 : i32
    %c0_i32_0 = arith.constant 0 : i32
    %c0_i32_1 = arith.constant 0 : i32
    return %c0_i32, %c0_i32_0 : i32, i32
  }
  func.func @transform_1(%arg0: i32) -> (i32, i32) {
    %c0_i32 = arith.constant 0 : i32
    %c0_i32_0 = arith.constant 0 : i32
    %c0_i32_1 = arith.constant 0 : i32
    return %c0_i32, %c0_i32_0 : i32, i32
  }
  func.func @transform_2(%arg0: i32) -> (i32, i32) {
    %c0_i32 = arith.constant 0 : i32
    %c0_i32_0 = arith.constant 0 : i32
    %c0_i32_1 = arith.constant 0 : i32
    return %c0_i32, %c0_i32_0 : i32, i32
  }
  func.func @transform_3(%arg0: i32) -> (i32, i32) {
    %c0_i32 = arith.constant 0 : i32
    %c0_i32_0 = arith.constant 0 : i32
    %c0_i32_1 = arith.constant 0 : i32
    return %c0_i32, %c0_i32_0 : i32, i32
  }
}

</mosaic_0001>

<llo_original>
// kernel: net_forward.7
$region0: #{net_forward.7}
  #allocation0 [shape = 'u32[]', space=smem, size = 0x4, offset = 0x4, fixed_abs, tag = 'smem constant byte address 0x4 - core index']
  #allocation1 [shape = 'u32[144,128]{1,0:T(1,128)}', space=vmem, size = 0x12000, scoped, tag = 'internal scratch']
  %s0 = inlined_call_operand.vmem [shape: bf16[2,256], index: 0, kind: input, shape index: {}]
  %s1 = inlined_call_operand.vmem [shape: bf16[256,256], index: 1, kind: input, shape index: {}]
  %s2 = inlined_call_operand.vmem [shape: f32[1,256], index: 2, kind: input, shape index: {}]
  %s3 = inlined_call_operand.hbm [shape: f32[2,256], index: 3, kind: output, shape index: {}]
  %s4 = sld [smem:[#allocation0]]
  $region22: #{net_forward.7} parent=0
    _
  %s6 = ssub.s32 1, %s4
  %s7 = scalar_select 0, %s6, %s4
  $region1: #{net_forward.7} parent=0
    #allocation2 [shape = 'u8[2048]{0}', space=vmem, size = 0x800, scoped, tag = 'output window, operand 0, single buffered']
    #allocation3 [shape = 's32[1]{0}', space=sflag, size = 0x4, scoped, tag = 'scoped memory for net_forward.7']
    %8 = vsyncpa [#allocation3], 0
    // Predicated region
    $region2: #{net_forward.7} parent=1 // pred_check
      _
    $region3: #{net_forward.7} parent=1 // pred_check_branch
      %10 = sbr.rel (0) target = $region5
    $region4: #{net_forward.7} parent=1 // pred_region
      _
    $region5: #{net_forward.7} parent=1 // pred_fallthru
      _
    // Predicated region
    $region6: #{net_forward.7} parent=1 // pred_check
      _
    $region7: #{net_forward.7} parent=1 // pred_check_branch
      %12 = sbr.rel (0) target = $region9
    $region8: #{net_forward.7} parent=1 // pred_region
      _
    $region9: #{net_forward.7} parent=1 // pred_fallthru
      _
    // Predicated region
    $region10: #{net_forward.7} parent=1 // pred_check
      _
    $region11: #{net_forward.7} parent=1 // pred_check_branch
      %14 = sbr.rel (0) target = $region13
    $region12: #{net_forward.7} parent=1 // pred_region
      _
    $region13: #{net_forward.7} parent=1 // pred_fallthru
      _
    %v15 = vld [vmem:[%s0] sm:$0x3]
    %v16 = vld [vmem:[%s1] sm:$0xff]
    %v17 = vld [vmem:[%s1 + $0x8] sm:$0xff]
    %v18 = vld [vmem:[%s1 + $0x10] sm:$0xff]
    %v19 = vld [vmem:[%s1 + $0x18] sm:$0xff]
    %v20 = vld [vmem:[%s1 + $0x20] sm:$0xff]
    %v21 = vld [vmem:[%s1 + $0x28] sm:$0xff]
    %v22 = vld [vmem:[%s1 + $0x30] sm:$0xff]
    %v23 = vld [vmem:[%s1 + $0x38] sm:$0xff]
    %v24 = vld [vmem:[%s1 + $0x40] sm:$0xff]
    %v25 = vld [vmem:[%s1 + $0x48] sm:$0xff]
    %v26 = vld [vmem:[%s1 + $0x50] sm:$0xff]
    %v27 = vld [vmem:[%s1 + $0x58] sm:$0xff]
    %v28 = vld [vmem:[%s1 + $0x60] sm:$0xff]
    %v29 = vld [vmem:[%s1 + $0x68] sm:$0xff]
    %v30 = vld [vmem:[%s1 + $0x70] sm:$0xff]
    %v31 = vld [vmem:[%s1 + $0x78] sm:$0xff]
    %v32 = vld [vmem:[%s1 + $0x80] sm:$0xff]
    %v33 = vld [vmem:[%s1 + $0x88] sm:$0xff]
    %v34 = vld [vmem:[%s1 + $0x90] sm:$0xff]
    %v35 = vld [vmem:[%s1 + $0x98] sm:$0xff]
    %v36 = vld [vmem:[%s1 + $0xa0] sm:$0xff]
    %v37 = vld [vmem:[%s1 + $0xa8] sm:$0xff]
    %v38 = vld [vmem:[%s1 + $0xb0] sm:$0xff]
    %v39 = vld [vmem:[%s1 + $0xb8] sm:$0xff]
    %v40 = vld [vmem:[%s1 + $0xc0] sm:$0xff]
    %v41 = vld [vmem:[%s1 + $0xc8] sm:$0xff]
    %v42 = vld [vmem:[%s1 + $0xd0] sm:$0xff]
    %v43 = vld [vmem:[%s1 + $0xd8] sm:$0xff]
    %v44 = vld [vmem:[%s1 + $0xe0] sm:$0xff]
    %v45 = vld [vmem:[%s1 + $0xe8] sm:$0xff]
    %v46 = vld [vmem:[%s1 + $0xf0] sm:$0xff]
    %v47 = vld [vmem:[%s1 + $0xf8] sm:$0xff]
    %v48 = vld [vmem:[%s2] sm:$0x3]
    %v50 = vlaneseq
    %v51 = vshrl.u32 %v50, 7
    %v52 = vsub.s32 0, %v51
    %v53 = vrot.slane %v48, %v52
    %v54 = vlaneseq
    %v55 = vshrl.u32 %v54, 7
    %v56 = vsub.s32 1, %v55
    %v57 = vrot.slane %v48, %v56
    %v62 = vunpack.c.l.s4 1966171168
    %v63 = vunpack.c.0.s8 %v62
    %v64 = vlaneseq
    %v65 = vshrl.u32 %v64, 7
    %v66 = vsub.s32 %v63, %v65
    %v67 = vrot.slane %v15, %v66
    %v68 = vcombine.high %v67, %v67
    %v70 = vunpack.c.l.s4 1966171168
    %v71 = vunpack.c.0.s8 %v70
    %v72 = vlaneseq
    %v73 = vshrl.u32 %v72, 7
    %v74 = vsub.s32 %v71, %v73
    %v75 = vrot.slane %v67, %v74
    %v77 = vunpack.c.l.s4 1966171168
    %v78 = vunpack.c.0.s8 %v77
    %v79 = vlaneseq
    %v80 = vshrl.u32 %v79, 7
    %v81 = vsub.s32 %v78, %v80
    %v82 = vrot.slane %v68, %v81
    %v117 = vunpack.c.l.b16 %v16
    %v118 = vunpack.c.h.b16 %v16
    %v119 = vunpack.c.l.b16 %v17
    %v120 = vunpack.c.h.b16 %v17
    %v121 = vunpack.c.l.b16 %v18
    %v122 = vunpack.c.h.b16 %v18
    %v123 = vunpack.c.l.b16 %v19
    %v124 = vunpack.c.h.b16 %v19
    %v125 = vunpack.c.l.b16 %v20
    %v126 = vunpack.c.h.b16 %v20
    %v127 = vunpack.c.l.b16 %v21
    %v128 = vunpack.c.h.b16 %v21
    %v129 = vunpack.c.l.b16 %v22
    %v130 = vunpack.c.h.b16 %v22
    %v131 = vunpack.c.l.b16 %v23
    %v132 = vunpack.c.h.b16 %v23
    %v133 = vunpack.c.l.b16 %v24
    %v134 = vunpack.c.h.b16 %v24
    %v135 = vunpack.c.l.b16 %v25
    %v136 = vunpack.c.h.b16 %v25
    %v137 = vunpack.c.l.b16 %v26
    %v138 = vunpack.c.h.b16 %v26
    %v139 = vunpack.c.l.b16 %v27
    %v140 = vunpack.c.h.b16 %v27
    %v141 = vunpack.c.l.b16 %v28
    %v142 = vunpack.c.h.b16 %v28
    %v143 = vunpack.c.l.b16 %v29
    %v144 = vunpack.c.h.b16 %v29
    %v145 = vunpack.c.l.b16 %v30
    %v146 = vunpack.c.h.b16 %v30
    %v147 = vunpack.c.l.b16 %v31
    %v148 = vunpack.c.h.b16 %v31
    %v149 = vunpack.c.l.b16 %v32
    %v150 = vunpack.c.h.b16 %v32
    %v151 = vunpack.c.l.b16 %v33
    %v152 = vunpack.c.h.b16 %v33
    %v153 = vunpack.c.l.b16 %v34
    %v154 = vunpack.c.h.b16 %v34
    %v155 = vunpack.c.l.b16 %v35
    %v156 = vunpack.c.h.b16 %v35
    %v157 = vunpack.c.l.b16 %v36
    %v158 = vunpack.c.h.b16 %v36
    %v159 = vunpack.c.l.b16 %v37
    %v160 = vunpack.c.h.b16 %v37
    %v161 = vunpack.c.l.b16 %v38
    %v162 = vunpack.c.h.b16 %v38
    %v163 = vunpack.c.l.b16 %v39
    %v164 = vunpack.c.h.b16 %v39
    %v165 = vunpack.c.l.b16 %v40
    %v166 = vunpack.c.h.b16 %v40
    %v167 = vunpack.c.l.b16 %v41
    %v168 = vunpack.c.h.b16 %v41
    %v169 = vunpack.c.l.b16 %v42
    %v170 = vunpack.c.h.b16 %v42
    %v171 = vunpack.c.l.b16 %v43
    %v172 = vunpack.c.h.b16 %v43
    %v173 = vunpack.c.l.b16 %v44
    %v174 = vunpack.c.h.b16 %v44
    %v175 = vunpack.c.l.b16 %v45
    %v176 = vunpack.c.h.b16 %v45
    %v177 = vunpack.c.l.b16 %v46
    %v178 = vunpack.c.h.b16 %v46
    %v179 = vunpack.c.l.b16 %v47
    %v180 = vunpack.c.h.b16 %v47
    %v181 = vpack.c.b16 %v119, %v117
    %v182 = vpack.c.b16 %v120, %v118
    %v183 = vpack.c.b16 %v123, %v121
    %v184 = vpack.c.b16 %v124, %v122
    %v185 = vpack.c.b16 %v127, %v125
    %v186 = vpack.c.b16 %v128, %v126
    %v187 = vpack.c.b16 %v131, %v129
    %v188 = vpack.c.b16 %v132, %v130
    %v189 = vpack.c.b16 %v135, %v133
    %v190 = vpack.c.b16 %v136, %v134
    %v191 = vpack.c.b16 %v139, %v137
    %v192 = vpack.c.b16 %v140, %v138
    %v193 = vpack.c.b16 %v143, %v141
    %v194 = vpack.c.b16 %v144, %v142
    %v195 = vpack.c.b16 %v147, %v145
    %v196 = vpack.c.b16 %v148, %v146
    %v197 = vpack.c.b16 %v151, %v149
    %v198 = vpack.c.b16 %v152, %v150
    %v199 = vpack.c.b16 %v155, %v153
    %v200 = vpack.c.b16 %v156, %v154
    %v201 = vpack.c.b16 %v159, %v157
    %v202 = vpack.c.b16 %v160, %v158
    %v203 = vpack.c.b16 %v163, %v161
    %v204 = vpack.c.b16 %v164, %v162
    %v205 = vpack.c.b16 %v167, %v165
    %v206 = vpack.c.b16 %v168, %v166
    %v207 = vpack.c.b16 %v171, %v169
    %v208 = vpack.c.b16 %v172, %v170
    %v209 = vpack.c.b16 %v175, %v173
    %v210 = vpack.c.b16 %v176, %v174
    %v211 = vpack.c.b16 %v179, %v177
    %v212 = vpack.c.b16 %v180, %v178
    %245 = vmatprep.subr.bf16.mxu0 %v182
    %246 = vmatpush1.bf16.msra.mxu0 %v181
    %247 = vmatprep.subr.bf16.mxu0 %v184
    %248 = vmatpush1.bf16.msra.mxu0 %v183
    %249 = vmatprep.subr.bf16.mxu0 %v186
    %250 = vmatpush1.bf16.msra.mxu0 %v185
    %251 = vmatprep.subr.bf16.mxu0 %v188
    %252 = vmatpush1.bf16.msra.mxu0 %v187
    %253 = vmatprep.subr.bf16.mxu0 %v190
    %254 = vmatpush1.bf16.msra.mxu0 %v189
    %255 = vmatprep.subr.bf16.mxu0 %v192
    %256 = vmatpush1.bf16.msra.mxu0 %v191
    %257 = vmatprep.subr.bf16.mxu0 %v194
    %258 = vmatpush1.bf16.msra.mxu0 %v193
    %259 = vmatprep.subr.bf16.mxu0 %v196
    %260 = vmatpush1.bf16.msra.mxu0 %v195
    %261 = vmatprep.subr.bf16.mxu0 %v198
    %262 = vmatpush1.bf16.msra.mxu0 %v197
    %263 = vmatprep.subr.bf16.mxu0 %v200
    %264 = vmatpush1.bf16.msra.mxu0 %v199
    %265 = vmatprep.subr.bf16.mxu0 %v202
    %266 = vmatpush1.bf16.msra.mxu0 %v201
    %267 = vmatprep.subr.bf16.mxu0 %v204
    %268 = vmatpush1.bf16.msra.mxu0 %v203
    %269 = vmatprep.subr.bf16.mxu0 %v206
    %270 = vmatpush1.bf16.msra.mxu0 %v205
    %271 = vmatprep.subr.bf16.mxu0 %v208
    %272 = vmatpush1.bf16.msra.mxu0 %v207
    %273 = vmatprep.subr.bf16.mxu0 %v210
    %274 = vmatpush1.bf16.msra.mxu0 %v209
    %275 = vmatprep.subr.bf16.mxu0 %v212
    %276 = vmatpush1.bf16.msra.mxu0 %v211
    %277 = vmatprep.mubr.bf16.mxu0 %v82
    %278 = vmatmul.mubr.bf16.gmra.mrb[0].mxu0 %v75
    %v279 = vpop.f32.mrb[0].mxu0
    %v280 = vadd.f32 %v53, %v279
    %v281 = vpop.f32.mrb[0].mxu0
    %v282 = vadd.f32 %v57, %v281
    %v283 = vpop.f32.mrb[0].mxu0
    %v284 = vpop.f32.mrb[0].mxu0
    %285 = vdwg.mxu0
    %vm286 = vcmask 1041408
    %v287 = vsel %vm286, %v280, -inf
    %v288 = vsel %vm286, %v282, -inf
    %v289 = vmax.f32 %v287, %v288
    %290 = vmax.xlane.f32.xlu0 %v289
    %v291 = vpop.xlane.xlu0 %290
    %v292 = vsub.f32 %v280, %v291
    %v293 = vsub.f32 %v282, %v291
    %v294 = vmul.f32 %v292, 1.442695
    %v295 = vpow.pop %v294
    %v296 = vmul.f32 %v293, 1.442695
    %v297 = vpow.pop %v296
    %v298 = vsel %vm286, %v295, 0.0
    %v299 = vsel %vm286, %v297, 0.0
    %v300 = vadd.f32 %v298, %v299
    %301 = vadd.xlane.f32.xlu0 %v300
    %v302 = vpop.xlane.xlu0 %301
    %v303 = vlog2.pop %v302
    %v304 = vmul.f32 %v303, 0.6931472
    %v305 = vsub.f32 %v292, %v304
    %v306 = vsub.f32 %v293, %v304
    %v309 = vcombine.low %v305, %v306
    %v311 = vunpack.c.l.s4 1983009808
    %v312 = vunpack.c.0.s8 %v311
    %v313 = vlaneseq
    %v314 = vshrl.u32 %v313, 7
    %v315 = vsub.s32 %v312, %v314
    %v316 = vrot.slane %v309, %v315
    %318 = vst [vmem:[#allocation2] sm:$0xf] %v316
    // Predicated region
    $region14: #{net_forward.7} parent=1 // pred_check
      _
    $region15: #{net_forward.7} parent=1 // pred_check_branch
      %320 = sbr.rel (0) target = $region17
    $region16: #{net_forward.7} parent=1 // pred_region
      %s322 = ssub.s32 64, 64
      %323 = vsyncadd [#allocation3], %s322
      %s325 = sshll.u32 [#allocation2], 4
      %s326 = int_to_ptr.vmem [resolvable:$true] %s325
      %328 = dma.vmem_to_hbm [thread:$0]  %s326, 64, %s3, [#allocation3]
    $region17: #{net_forward.7} parent=1 // pred_fallthru
      _
    // Predicated region
    $region18: #{net_forward.7} parent=1 // pred_check
      _
    $region19: #{net_forward.7} parent=1 // pred_check_branch
      %330 = sbr.rel (0) target = $region21
    $region20: #{net_forward.7} parent=1 // pred_region
      %331 = dma.done [#allocation3], 64
    $region21: #{net_forward.7} parent=1 // pred_fallthru
      _
    %332 = vsyncpa [#allocation3], 1

// kernel: net_forward.4
$region0: #{net_forward.4}
  #allocation0 [shape = 'u32[]', space=smem, size = 0x4, offset = 0x4, fixed_abs, tag = 'smem constant byte address 0x4 - core index']
  #allocation1 [shape = 'u32[144,128]{1,0:T(1,128)}', space=vmem, size = 0x12000, scoped, tag = 'internal scratch']
  %s0 = inlined_call_operand.vmem [shape: f32[2,4,144,16], index: 0, kind: input, shape index: {}]
  %s1 = inlined_call_operand.hbm [shape: f32[16,128], index: 1, kind: input, shape index: {}]
  %s2 = inlined_call_operand.hbm [shape: f32[1,128], index: 2, kind: input, shape index: {}]
  %s3 = inlined_call_operand.vmem [shape: bf16[2,144,128], index: 3, kind: output, shape index: {}]
  %s4 = sld [smem:[#allocation0]]
  $region53: #{net_forward.4} parent=0
    _
  %s6 = ssub.s32 1, %s4
  %s7 = scalar_select 0, %s6, %s4
  $region1: #{net_forward.4} parent=0
    #allocation2 [shape = 'u8[8192]{0}', space=vmem, size = 0x2000, scoped, tag = 'input window, operand 1, single buffered']
    #allocation3 [shape = 's32[2]{0}', space=sflag, size = 0x8, scoped, tag = 'scoped memory for net_forward.4']
    #allocation4 [shape = 'u8[512]{0}', space=vmem, size = 0x400, scoped, tag = 'input window, operand 2, single buffered']
    #allocation5 [shape = 's32[1]{0}', space=sflag, size = 0x4, scoped, tag = 'scoped memory for net_forward.4']
    %8 = vsyncpa [#allocation3], 0
    %9 = vsyncpa [#allocation5], 0
    loop: start=0, step=1, limit=4
    $region2: #{net_forward.4} parent=1 // loop_pre_header
      _
    $region3: #{net_forward.4} parent=1 // loop_header
      %s11 = sphi 0, %s15
      %p12 = scmp.ge.s32.totalorder %s11, 4
      %s21 = sphi 0, %s23
      %s24 = sphi 0, %s21
      %s25 = sphi 0, %s24
      %s41 = sphi 0, %s25
      %s45 = sphi 0, %s45
      %s47 = sphi 0, %s45
      %s48 = sphi 0, %s47
      %s62 = sphi 0, %s48
      %s66 = sphi 0, %s66
      %s68 = sphi 0, %s66
      %s69 = sphi 0, %s68
      %s83 = sphi 0, %s69
      %s89 = sphi 0, %s91
      %s92 = sphi 0, %s89
      %s93 = sphi 0, %s92
      %s109 = sphi 0, %s93
    $region4: #{net_forward.4} parent=1 // loop_header_branch
      %14 = sbr.rel (%p12) target = $region8
    $region5: #{net_forward.4} parent=1 // loop_body
      %s16 = ssub.s32 %s11, 1
      %s17 = ssub.s32 %s11, 2
      %s18 = sadd.s32 %s11, 1
      %s19 = ssub.s32 %s11, %s18
      %p20 = scmp.eq.s32.totalorder %s19, 0
      %s22 = sadd.s32 %s21, 1
      %s23 = scalar_select %p20, %s21, %s22
      %p26 = pneg %p20
      %p27 = scmp.eq.s32.totalorder %s11, 1
      %p28 = por %p26, %p27
      %p29 = scmp.ne.s32.totalorder %s21, %s24
      %p30 = scmp.eq.s32.totalorder %s11, 0
      %p31 = por %p29, %p30
      %p32 = scmp.ne.s32.totalorder %s21, %s24
      %p33 = scmp.eq.s32.totalorder %s16, 1
      %p34 = por %p32, %p33
      %p35 = scmp.ne.s32.totalorder %s24, %s25
      %p36 = scmp.eq.s32.totalorder %s16, 0
      %p37 = por %p35, %p36
      %p38 = scmp.ne.s32.totalorder %s24, %s25
      %p39 = scmp.eq.s32.totalorder %s17, 1
      %p40 = por %p38, %p39
      %p42 = scmp.ne.s32.totalorder %s25, %s41
      %p43 = scmp.eq.s32.totalorder %s17, 0
      %p44 = por %p42, %p43
      %s46 = sadd.s32 %s45, 1
      %p49 = scmp.eq.s32.totalorder %s11, 1
      %p50 = scmp.ne.s32.totalorder %s45, %s47
      %p51 = scmp.eq.s32.totalorder %s11, 0
      %p52 = por %p50, %p51
      %p53 = scmp.ne.s32.totalorder %s45, %s47
      %p54 = scmp.eq.s32.totalorder %s16, 1
      %p55 = por %p53, %p54
      %p56 = scmp.ne.s32.totalorder %s47, %s48
      %p57 = scmp.eq.s32.totalorder %s16, 0
      %p58 = por %p56, %p57
      %p59 = scmp.ne.s32.totalorder %s47, %s48
      %p60 = scmp.eq.s32.totalorder %s17, 1
      %p61 = por %p59, %p60
      %p63 = scmp.ne.s32.totalorder %s48, %s62
      %p64 = scmp.eq.s32.totalorder %s17, 0
      %p65 = por %p63, %p64
      %s67 = sadd.s32 %s66, 1
      %p70 = scmp.eq.s32.totalorder %s11, 1
      %p71 = scmp.ne.s32.totalorder %s66, %s68
      %p72 = scmp.eq.s32.totalorder %s11, 0
      %p73 = por %p71, %p72
      %p74 = scmp.ne.s32.totalorder %s66, %s68
      %p75 = scmp.eq.s32.totalorder %s16, 1
      %p76 = por %p74, %p75
      %p77 = scmp.ne.s32.totalorder %s68, %s69
      %p78 = scmp.eq.s32.totalorder %s16, 0
      %p79 = por %p77, %p78
      %p80 = scmp.ne.s32.totalorder %s68, %s69
      %p81 = scmp.eq.s32.totalorder %s17, 1
      %p82 = por %p80, %p81
      %p84 = scmp.ne.s32.totalorder %s69, %s83
      %p85 = scmp.eq.s32.totalorder %s17, 0
      %p86 = por %p84, %p85
      %s87 = ssub.s32 %s11, %s18
      %p88 = scmp.eq.s32.totalorder %s87, 0
      %s90 = sadd.s32 %s89, 1
      %s91 = scalar_select %p88, %s89, %s90
      %p94 = pneg %p88
      %p95 = scmp.eq.s32.totalorder %s11, 1
      %p96 = por %p94, %p95
      %p97 = scmp.ne.s32.totalorder %s89, %s92
      %p98 = scmp.eq.s32.totalorder %s11, 0
      %p99 = por %p97, %p98
      %p100 = scmp.ne.s32.totalorder %s89, %s92
      %p101 = scmp.eq.s32.totalorder %s16, 1
      %p102 = por %p100, %p101
      %p103 = scmp.ne.s32.totalorder %s92, %s93
      %p104 = scmp.eq.s32.totalorder %s16, 0
      %p105 = por %p103, %p104
      %p106 = scmp.ne.s32.totalorder %s92, %s93
      %p107 = scmp.eq.s32.totalorder %s17, 1
      %p108 = por %p106, %p107
      %p110 = scmp.ne.s32.totalorder %s93, %s109
      %p111 = scmp.eq.s32.totalorder %s17, 0
      %p112 = por %p110, %p111
      %p113 = scmp.le.s32.totalorder 1, %s11
      %p114 = scmp.lt.s32.totalorder %s11, 3
      %p115 = pnand %p113, %p114
      %p116 = pneg %p115
      // Predicated region
      $region9: #{net_forward.4} parent=5 // pred_check
        _
      $region10: #{net_forward.4} parent=5 // pred_check_branch
        %118 = sbr.rel (%p115) target = $region12
      $region11: #{net_forward.4} parent=5 // pred_region
        %s119 = ssub.s32 %s11, 1
        // Predicated region
        $region13: #{net_forward.4} parent=11 // pred_check
          %p120 = pneg %p58
        $region14: #{net_forward.4} parent=11 // pred_check_branch
          %122 = sbr.rel (%p120) target = $region16
        $region15: #{net_forward.4} parent=11 // pred_region
          %s124 = ssub.s32 256, 256
          %125 = vsyncadd [#allocation3], %s124
          %s126 = sshll.u32 [#allocation2], 4
          %s127 = int_to_ptr.vmem [resolvable:$true] %s126
          %132 = dma.hbm_to_vmem [thread:$0]  %s1, 256, %s127, [#allocation3], 128, 128, 8
        $region16: #{net_forward.4} parent=11 // pred_fallthru
          _
        // Predicated region
        $region17: #{net_forward.4} parent=11 // pred_check
          %p133 = pneg %p79
        $region18: #{net_forward.4} parent=11 // pred_check_branch
          %135 = sbr.rel (%p133) target = $region20
        $region19: #{net_forward.4} parent=11 // pred_region
          %s137 = ssub.s32 16, 16
          %138 = vsyncadd [#allocation5], %s137
          %s140 = sshll.u32 [#allocation4], 4
          %s141 = int_to_ptr.vmem [resolvable:$true] %s140
          %143 = dma.hbm_to_vmem [thread:$0]  %s2, 16, %s141, [#allocation5]
        $region20: #{net_forward.4} parent=11 // pred_fallthru
          _
      $region12: #{net_forward.4} parent=5 // pred_fallthru
        _
      %p144 = scmp.lt.s32.totalorder %s11, 2
      // Predicated region
      $region21: #{net_forward.4} parent=5 // pred_check
        %p145 = pneg %p144
      $region22: #{net_forward.4} parent=5 // pred_check_branch
        %147 = sbr.rel (%p145) target = $region24
      $region23: #{net_forward.4} parent=5 // pred_region
        // Predicated region
        $region25: #{net_forward.4} parent=23 // pred_check
          %p148 = pneg %p31
        $region26: #{net_forward.4} parent=23 // pred_check_branch
          %150 = sbr.rel (%p148) target = $region28
        $region27: #{net_forward.4} parent=23 // pred_region
          %p151 = scmp.lt.s32.totalorder %s11, 1
          %s152 = scalar_select %p151, %s11, 1
          %s153 = smul.addr %s152, 72
          %s154 = smul.addr %s153, 8
          %s155 = scalar_lea.vmem %s0, %s154
        $region28: #{net_forward.4} parent=23 // pred_fallthru
          _
      $region24: #{net_forward.4} parent=5 // pred_fallthru
        _
      %p156 = scmp.le.s32.totalorder 1, %s11
      %p157 = scmp.lt.s32.totalorder %s11, 3
      %p158 = pnand %p156, %p157
      %p159 = pneg %p158
      // Predicated region
      $region29: #{net_forward.4} parent=5 // pred_check
        _
      $region30: #{net_forward.4} parent=5 // pred_check_branch
        %161 = sbr.rel (%p158) target = $region32
      $region31: #{net_forward.4} parent=5 // pred_region
        %s162 = ssub.s32 %s11, 1
        // Predicated region
        $region33: #{net_forward.4} parent=31 // pred_check
          %p163 = pneg %p58
        $region34: #{net_forward.4} parent=31 // pred_check_branch
          %165 = sbr.rel (%p163) target = $region36
        $region35: #{net_forward.4} parent=31 // pred_region
          %166 = dma.done [#allocation3], 256
        $region36: #{net_forward.4} parent=31 // pred_fallthru
          _
        // Predicated region
        $region37: #{net_forward.4} parent=31 // pred_check
          %p167 = pneg %p79
        $region38: #{net_forward.4} parent=31 // pred_check_branch
          %169 = sbr.rel (%p167) target = $region40
        $region39: #{net_forward.4} parent=31 // pred_region
          %170 = dma.done [#allocation5], 16
        $region40: #{net_forward.4} parent=31 // pred_fallthru
          _
        %p171 = scmp.lt.s32.totalorder %s16, 1
        %s172 = scalar_select %p171, %s16, 1
        %s173 = smul.addr %s172, 72
        %s174 = smul.addr %s173, 8
        %s175 = scalar_lea.vmem %s0, %s174
        %p176 = pneg %p37
        %p177 = pneg %p34
        %p178 = pneg %p58
        %p179 = pneg %p55
        %p180 = pneg %p79
        %p181 = pneg %p76
        %p182 = pneg %p105
        %p183 = pneg %p102
        %p184 = scmp.lt.s32.totalorder %s16, 1
        %s185 = scalar_select %p184, %s16, 1
        %s186 = smul.addr %s185, 18
        %s187 = smul.addr %s186, 4
        %s188 = scalar_lea.vmem %s3, %s187
        %p189 = scmp.lt.s32.totalorder %s16, 1
        %s190 = scalar_select %p189, %s16, 1
        %s191 = smul.addr %s190, 72
        %s192 = smul.addr %s191, 8
        %s193 = scalar_lea.vmem %s0, %s192
        %p194 = scmp.lt.s32.totalorder %s16, 1
        %s195 = scalar_select %p194, %s16, 1
        %s196 = smul.addr %s195, 18
        %s197 = smul.addr %s196, 4
        %s198 = scalar_lea.vmem %s3, %s197
        %v199 = vld [vmem:[%s193] sm:$0xff]
        %v200 = vld [vmem:[%s193 + $0x8] sm:$0xff]
        %v201 = vld [vmem:[%s193 + $0x10] sm:$0xff]
        %v202 = vld [vmem:[%s193 + $0x18] sm:$0xff]
        %v203 = vld [vmem:[%s193 + $0x20] sm:$0xff]
        %v204 = vld [vmem:[%s193 + $0x28] sm:$0xff]
        %v205 = vld [vmem:[%s193 + $0x30] sm:$0xff]
        %v206 = vld [vmem:[%s193 + $0x38] sm:$0xff]
        %v207 = vld [vmem:[%s193 + $0x40] sm:$0xff]
        %v208 = vld [vmem:[%s193 + $0x48] sm:$0xff]
        %v209 = vld [vmem:[%s193 + $0x50] sm:$0xff]
        %v210 = vld [vmem:[%s193 + $0x58] sm:$0xff]
        %v211 = vld [vmem:[%s193 + $0x60] sm:$0xff]
        %v212 = vld [vmem:[%s193 + $0x68] sm:$0xff]
        %v213 = vld [vmem:[%s193 + $0x70] sm:$0xff]
        %v214 = vld [vmem:[%s193 + $0x78] sm:$0xff]
        %v215 = vld [vmem:[%s193 + $0x80] sm:$0xff]
        %v216 = vld [vmem:[%s193 + $0x88] sm:$0xff]
        %v217 = vld [vmem:[%s193 + $0x90] sm:$0xff]
        %v218 = vld [vmem:[%s193 + $0x98] sm:$0xff]
        %v219 = vld [vmem:[%s193 + $0xa0] sm:$0xff]
        %v220 = vld [vmem:[%s193 + $0xa8] sm:$0xff]
        %v221 = vld [vmem:[%s193 + $0xb0] sm:$0xff]
        %v222 = vld [vmem:[%s193 + $0xb8] sm:$0xff]
        %v223 = vld [vmem:[%s193 + $0xc0] sm:$0xff]
        %v224 = vld [vmem:[%s193 + $0xc8] sm:$0xff]
        %v225 = vld [vmem:[%s193 + $0xd0] sm:$0xff]
        %v226 = vld [vmem:[%s193 + $0xd8] sm:$0xff]
        %v227 = vld [vmem:[%s193 + $0xe0] sm:$0xff]
        %v228 = vld [vmem:[%s193 + $0xe8] sm:$0xff]
        %v229 = vld [vmem:[%s193 + $0xf0] sm:$0xff]
        %v230 = vld [vmem:[%s193 + $0xf8] sm:$0xff]
        %v231 = vld [vmem:[%s193 + $0x100] sm:$0xff]
        %v232 = vld [vmem:[%s193 + $0x108] sm:$0xff]
        %v233 = vld [vmem:[%s193 + $0x110] sm:$0xff]
        %v234 = vld [vmem:[%s193 + $0x118] sm:$0xff]
        %v235 = vld [vmem:[%s193 + $0x120] sm:$0xff]
        %v236 = vld [vmem:[%s193 + $0x128] sm:$0xff]
        %v237 = vld [vmem:[%s193 + $0x130] sm:$0xff]
        %v238 = vld [vmem:[%s193 + $0x138] sm:$0xff]
        %v239 = vld [vmem:[%s193 + $0x140] sm:$0xff]
        %v240 = vld [vmem:[%s193 + $0x148] sm:$0xff]
        %v241 = vld [vmem:[%s193 + $0x150] sm:$0xff]
        %v242 = vld [vmem:[%s193 + $0x158] sm:$0xff]
        %v243 = vld [vmem:[%s193 + $0x160] sm:$0xff]
        %v244 = vld [vmem:[%s193 + $0x168] sm:$0xff]
        %v245 = vld [vmem:[%s193 + $0x170] sm:$0xff]
        %v246 = vld [vmem:[%s193 + $0x178] sm:$0xff]
        %v247 = vld [vmem:[%s193 + $0x180] sm:$0xff]
        %v248 = vld [vmem:[%s193 + $0x188] sm:$0xff]
        %v249 = vld [vmem:[%s193 + $0x190] sm:$0xff]
        %v250 = vld [vmem:[%s193 + $0x198] sm:$0xff]
        %v251 = vld [vmem:[%s193 + $0x1a0] sm:$0xff]
        %v252 = vld [vmem:[%s193 + $0x1a8] sm:$0xff]
        %v253 = vld [vmem:[%s193 + $0x1b0] sm:$0xff]
        %v254 = vld [vmem:[%s193 + $0x1b8] sm:$0xff]
        %v255 = vld [vmem:[%s193 + $0x1c0] sm:$0xff]
        %v256 = vld [vmem:[%s193 + $0x1c8] sm:$0xff]
        %v257 = vld [vmem:[%s193 + $0x1d0] sm:$0xff]
        %v258 = vld [vmem:[%s193 + $0x1d8] sm:$0xff]
        %v259 = vld [vmem:[%s193 + $0x1e0] sm:$0xff]
        %v260 = vld [vmem:[%s193 + $0x1e8] sm:$0xff]
        %v261 = vld [vmem:[%s193 + $0x1f0] sm:$0xff]
        %v262 = vld [vmem:[%s193 + $0x1f8] sm:$0xff]
        %v263 = vld [vmem:[%s193 + $0x200] sm:$0xff]
        %v264 = vld [vmem:[%s193 + $0x208] sm:$0xff]
        %v265 = vld [vmem:[%s193 + $0x210] sm:$0xff]
        %v266 = vld [vmem:[%s193 + $0x218] sm:$0xff]
        %v267 = vld [vmem:[%s193 + $0x220] sm:$0xff]
        %v268 = vld [vmem:[%s193 + $0x228] sm:$0xff]
        %v269 = vld [vmem:[%s193 + $0x230] sm:$0xff]
        %v270 = vld [vmem:[%s193 + $0x238] sm:$0xff]
        %v271 = vld [vmem:[#allocation2] sm:$0xff]
        %v272 = vld [vmem:[#allocation2 + $0x8] sm:$0xff]
        %vm273 = vcmask 130048
        %v275 = vsel %vm273, %v199, 0
        %v278 = vsel %vm273, %v200, 0
        %v281 = vsel %vm273, %v201, 0
        %v284 = vsel %vm273, %v202, 0
        %v287 = vsel %vm273, %v203, 0
        %v290 = vsel %vm273, %v204, 0
        %v293 = vsel %vm273, %v205, 0
        %v296 = vsel %vm273, %v206, 0
        %v299 = vsel %vm273, %v207, 0
        %v302 = vsel %vm273, %v208, 0
        %v305 = vsel %vm273, %v209, 0
        %v308 = vsel %vm273, %v210, 0
        %v311 = vsel %vm273, %v211, 0
        %v314 = vsel %vm273, %v212, 0
        %v317 = vsel %vm273, %v213, 0
        %v320 = vsel %vm273, %v214, 0
        %v323 = vsel %vm273, %v215, 0
        %v326 = vsel %vm273, %v216, 0
        %328 = vmatprep.subr.mxu0 0.0
        %329 = vmatpush1.msra.mxu0 %v271
        %330 = vmatprep.subr.mxu0 0.0
        %331 = vmatpush1.msra.mxu0 %v272
        %332 = vmatprep.subr.mxu0 0.0
        %333 = vmatpush1.msra.mxu0 0.0
        %334 = vmatprep.subr.mxu0 0.0
        %335 = vmatpush1.msra.mxu0 0.0
        %336 = vmatprep.subr.mxu0 0.0
        %337 = vmatpush1.msra.mxu0 0.0
        %338 = vmatprep.subr.mxu0 0.0
        %339 = vmatpush1.msra.mxu0 0.0
        %340 = vmatprep.subr.mxu0 0.0
        %341 = vmatpush1.msra.mxu0 0.0
        %342 = vmatprep.subr.mxu0 0.0
        %343 = vmatpush1.msra.mxu0 0.0
        %344 = vmatprep.subr.mxu0 0.0
        %345 = vmatpush1.msra.mxu0 0.0
        %346 = vmatprep.subr.mxu0 0.0
        %347 = vmatpush1.msra.mxu0 0.0
        %348 = vmatprep.subr.mxu0 0.0
        %349 = vmatpush1.msra.mxu0 0.0
        %350 = vmatprep.subr.mxu0 0.0
        %351 = vmatpush1.msra.mxu0 0.0
        %352 = vmatprep.subr.mxu0 0.0
        %353 = vmatpush1.msra.mxu0 0.0
        %354 = vmatprep.subr.mxu0 0.0
        %355 = vmatpush1.msra.mxu0 0.0
        %356 = vmatprep.subr.mxu0 0.0
        %357 = vmatpush1.msra.mxu0 0.0
        %358 = vmatprep.subr.mxu0 0.0
        %359 = vmatpush1.msra.mxu0 0.0
        %360 = vmatprep.subr.mxu0 0.0
        %361 = vmatpush1.msra.mxu0 0.0
        %362 = vmatprep.subr.mxu0 0.0
        %363 = vmatpush1.msra.mxu0 0.0
        %364 = vmatprep.subr.mxu0 0.0
        %365 = vmatpush1.msra.mxu0 0.0
        %366 = vmatprep.subr.mxu0 0.0
        %367 = vmatpush1.msra.mxu0 0.0
        %368 = vmatprep.subr.mxu0 0.0
        %369 = vmatpush1.msra.mxu0 0.0
        %370 = vmatprep.subr.mxu0 0.0
        %371 = vmatpush1.msra.mxu0 0.0
        %372 = vmatprep.subr.mxu0 0.0
        %373 = vmatpush1.msra.mxu0 0.0
        %374 = vmatprep.subr.mxu0 0.0
        %375 = vmatpush1.msra.mxu0 0.0
        %376 = vmatprep.subr.mxu0 0.0
        %377 = vmatpush1.msra.mxu0 0.0
        %378 = vmatprep.subr.mxu0 0.0
        %379 = vmatpush1.msra.mxu0 0.0
        %380 = vmatprep.subr.mxu0 0.0
        %381 = vmatpush1.msra.mxu0 0.0
        %382 = vmatprep.subr.mxu0 0.0
        %383 = vmatpush1.msra.mxu0 0.0
        %384 = vmatprep.subr.mxu0 0.0
        %385 = vmatpush1.msra.mxu0 0.0
        %386 = vmatprep.subr.mxu0 0.0
        %387 = vmatpush1.msra.mxu0 0.0
        %388 = vmatprep.subr.mxu0 0.0
        %389 = vmatpush1.msra.mxu0 0.0
        %390 = vmatprep.subr.mxu0 0.0
        %391 = vmatpush1.msra.mxu0 0.0
        %392 = vmatprep.mubr.f32.mxu0 0.0
        %393 = vmatmul.mubr.f32.gmra.mrb[0].mxu0 %v275
        %v394 = vpop.f32.mrb[0].mxu0
        %v395 = vadd.f32 0.0, %v394
        %v396 = vpop.f32.mrb[0].mxu0
        %397 = vmatprep.mubr.f32.mxu0 0.0
        %398 = vmatmul.mubr.f32.gmra.mrb[0].mxu0 %v278
        %v399 = vpop.f32.mrb[0].mxu0
        %v400 = vadd.f32 0.0, %v399
        %v401 = vpop.f32.mrb[0].mxu0
        %402 = vmatprep.mubr.f32.mxu0 0.0
        %403 = vmatmul.mubr.f32.gmra.mrb[0].mxu0 %v281
        %v404 = vpop.f32.mrb[0].mxu0
        %v405 = vadd.f32 0.0, %v404
        %v406 = vpop.f32.mrb[0].mxu0
        %407 = vmatprep.mubr.f32.mxu0 0.0
        %408 = vmatmul.mubr.f32.gmra.mrb[0].mxu0 %v284
        %v409 = vpop.f32.mrb[0].mxu0
        %v410 = vadd.f32 0.0, %v409
        %v411 = vpop.f32.mrb[0].mxu0
        %412 = vmatprep.mubr.f32.mxu0 0.0
        %413 = vmatmul.mubr.f32.gmra.mrb[0].mxu0 %v287
        %v414 = vpop.f32.mrb[0].mxu0
        %v415 = vadd.f32 0.0, %v414
        %v416 = vpop.f32.mrb[0].mxu0
        %417 = vmatprep.mubr.f32.mxu0 0.0
        %418 = vmatmul.mubr.f32.gmra.mrb[0].mxu0 %v290
        %v419 = vpop.f32.mrb[0].mxu0
        %v420 = vadd.f32 0.0, %v419
        %v421 = vpop.f32.mrb[0].mxu0
        %422 = vmatprep.mubr.f32.mxu0 0.0
        %423 = vmatmul.mubr.f32.gmra.mrb[0].mxu0 %v293
        %v424 = vpop.f32.mrb[0].mxu0
        %v425 = vadd.f32 0.0, %v424
        %v426 = vpop.f32.mrb[0].mxu0
        %427 = vmatprep.mubr.f32.mxu0 0.0
        %428 = vmatmul.mubr.f32.gmra.mrb[0].mxu0 %v296
        %v429 = vpop.f32.mrb[0].mxu0
        %v430 = vadd.f32 0.0, %v429
        %v431 = vpop.f32.mrb[0].mxu0
        %432 = vmatprep.mubr.f32.mxu0 0.0
        %433 = vmatmul.mubr.f32.gmra.mrb[0].mxu0 %v299
        %v434 = vpop.f32.mrb[0].mxu0
        %v435 = vadd.f32 0.0, %v434
        %v436 = vpop.f32.mrb[0].mxu0
        %437 = vmatprep.mubr.f32.mxu0 0.0
        %438 = vmatmul.mubr.f32.gmra.mrb[0].mxu0 %v302
        %v439 = vpop.f32.mrb[0].mxu0
        %v440 = vadd.f32 0.0, %v439
        %v441 = vpop.f32.mrb[0].mxu0
        %442 = vmatprep.mubr.f32.mxu0 0.0
        %443 = vmatmul.mubr.f32.gmra.mrb[0].mxu0 %v305
        %v444 = vpop.f32.mrb[0].mxu0
        %v445 = vadd.f32 0.0, %v444
        %v446 = vpop.f32.mrb[0].mxu0
        %447 = vmatprep.mubr.f32.mxu0 0.0
        %448 = vmatmul.mubr.f32.gmra.mrb[0].mxu0 %v308
        %v449 = vpop.f32.mrb[0].mxu0
        %v450 = vadd.f32 0.0, %v449
        %v451 = vpop.f32.mrb[0].mxu0
        %452 = vmatprep.mubr.f32.mxu0 0.0
        %453 = vmatmul.mubr.f32.gmra.mrb[0].mxu0 %v311
        %v454 = vpop.f32.mrb[0].mxu0
        %v455 = vadd.f32 0.0, %v454
        %v456 = vpop.f32.mrb[0].mxu0
        %457 = vmatprep.mubr.f32.mxu0 0.0
        %458 = vmatmul.mubr.f32.gmra.mrb[0].mxu0 %v314
        %v459 = vpop.f32.mrb[0].mxu0
        %v460 = vadd.f32 0.0, %v459
        %v461 = vpop.f32.mrb[0].mxu0
        %462 = vmatprep.mubr.f32.mxu0 0.0
        %463 = vmatmul.mubr.f32.gmra.mrb[0].mxu0 %v317
        %v464 = vpop.f32.mrb[0].mxu0
        %v465 = vadd.f32 0.0, %v464
        %v466 = vpop.f32.mrb[0].mxu0
        %467 = vmatprep.mubr.f32.mxu0 0.0
        %468 = vmatmul.mubr.f32.gmra.mrb[0].mxu0 %v320
        %v469 = vpop.f32.mrb[0].mxu0
        %v470 = vadd.f32 0.0, %v469
        %v471 = vpop.f32.mrb[0].mxu0
        %472 = vmatprep.mubr.f32.mxu0 0.0
        %473 = vmatmul.mubr.f32.gmra.mrb[0].mxu0 %v323
        %v474 = vpop.f32.mrb[0].mxu0
        %v475 = vadd.f32 0.0, %v474
        %v476 = vpop.f32.mrb[0].mxu0
        %477 = vmatprep.mubr.f32.mxu0 0.0
        %478 = vmatmul.mubr.f32.gmra.mrb[0].mxu0 %v326
        %v479 = vpop.f32.mrb[0].mxu0
        %v480 = vadd.f32 0.0, %v479
        %v481 = vpop.f32.mrb[0].mxu0
        %482 = vdwg.mxu0
        %v484 = vsel %vm273, %v217, 0
        %v487 = vsel %vm273, %v218, 0
        %v490 = vsel %vm273, %v219, 0
        %v493 = vsel %vm273, %v220, 0
        %v496 = vsel %vm273, %v221, 0
        %v499 = vsel %vm273, %v222, 0
        %v502 = vsel %vm273, %v223, 0
        %v505 = vsel %vm273, %v224, 0
        %v508 = vsel %vm273, %v225, 0
        %v511 = vsel %vm273, %v226, 0
        %v514 = vsel %vm273, %v227, 0
        %v517 = vsel %vm273, %v228, 0
        %v520 = vsel %vm273, %v229, 0
        %v523 = vsel %vm273, %v230, 0
        %v526 = vsel %vm273, %v231, 0
        %v529 = vsel %vm273, %v232, 0
        %v532 = vsel %vm273, %v233, 0
        %v535 = vsel %vm273, %v234, 0
        %537 = vmatprep.subr.mxu0 0.0
        %538 = vmatpush1.msra.mxu0 %v271
        %539 = vmatprep.subr.mxu0 0.0
        %540 = vmatpush1.msra.mxu0 %v272
        %541 = vmatprep.subr.mxu0 0.0
        %542 = vmatpush1.msra.mxu0 0.0
        %543 = vmatprep.subr.mxu0 0.0
        %544 = vmatpush1.msra.mxu0 0.0
        %545 = vmatprep.subr.mxu0 0.0
        %546 = vmatpush1.msra.mxu0 0.0
        %547 = vmatprep.subr.mxu0 0.0
        %548 = vmatpush1.msra.mxu0 0.0
        %549 = vmatprep.subr.mxu0 0.0
        %550 = vmatpush1.msra.mxu0 0.0
        %551 = vmatprep.subr.mxu0 0.0
        %552 = vmatpush1.msra.mxu0 0.0
        %553 = vmatprep.subr.mxu0 0.0
        %554 = vmatpush1.msra.mxu0 0.0
        %555 = vmatprep.subr.mxu0 0.0
        %556 = vmatpush1.msra.mxu0 0.0
        %557 = vmatprep.subr.mxu0 0.0
        %558 = vmatpush1.msra.mxu0 0.0
        %559 = vmatprep.subr.mxu0 0.0
        %560 = vmatpush1.msra.mxu0 0.0
        %561 = vmatprep.subr.mxu0 0.0
        %562 = vmatpush1.msra.mxu0 0.0
        %563 = vmatprep.subr.mxu0 0.0
        %564 = vmatpush1.msra.mxu0 0.0
        %565 = vmatprep.subr.mxu0 0.0
        %566 = vmatpush1.msra.mxu0 0.0
        %567 = vmatprep.subr.mxu0 0.0
        %568 = vmatpush1.msra.mxu0 0.0
        %569 = vmatprep.subr.mxu0 0.0
        %570 = vmatpush1.msra.mxu0 0.0
        %571 = vmatprep.subr.mxu0 0.0
        %572 = vmatpush1.msra.mxu0 0.0
        %573 = vmatprep.subr.mxu0 0.0
        %574 = vmatpush1.msra.mxu0 0.0
        %575 = vmatprep.subr.mxu0 0.0
        %576 = vmatpush1.msra.mxu0 0.0
        %577 = vmatprep.subr.mxu0 0.0
        %578 = vmatpush1.msra.mxu0 0.0
        %579 = vmatprep.subr.mxu0 0.0
        %580 = vmatpush1.msra.mxu0 0.0
        %581 = vmatprep.subr.mxu0 0.0
        %582 = vmatpush1.msra.mxu0 0.0
        %583 = vmatprep.subr.mxu0 0.0
        %584 = vmatpush1.msra.mxu0 0.0
        %585 = vmatprep.subr.mxu0 0.0
        %586 = vmatpush1.msra.mxu0 0.0
        %587 = vmatprep.subr.mxu0 0.0
        %588 = vmatpush1.msra.mxu0 0.0
        %589 = vmatprep.subr.mxu0 0.0
        %590 = vmatpush1.msra.mxu0 0.0
        %591 = vmatprep.subr.mxu0 0.0
        %592 = vmatpush1.msra.mxu0 0.0
        %593 = vmatprep.subr.mxu0 0.0
        %594 = vmatpush1.msra.mxu0 0.0
        %595 = vmatprep.subr.mxu0 0.0
        %596 = vmatpush1.msra.mxu0 0.0
        %597 = vmatprep.subr.mxu0 0.0
        %598 = vmatpush1.msra.mxu0 0.0
        %599 = vmatprep.subr.mxu0 0.0
        %600 = vmatpush1.msra.mxu0 0.0
        %601 = vmatprep.mubr.f32.mxu0 0.0
        %602 = vmatmul.mubr.f32.gmra.mrb[0].mxu0 %v484
        %v603 = vpop.f32.mrb[0].mxu0
        %v604 = vadd.f32 0.0, %v603
        %v605 = vpop.f32.mrb[0].mxu0
        %606 = vmatprep.mubr.f32.mxu0 0.0
        %607 = vmatmul.mubr.f32.gmra.mrb[0].mxu0 %v487
        %v608 = vpop.f32.mrb[0].mxu0
        %v609 = vadd.f32 0.0, %v608
        %v610 = vpop.f32.mrb[0].mxu0
        %611 = vmatprep.mubr.f32.mxu0 0.0
        %612 = vmatmul.mubr.f32.gmra.mrb[0].mxu0 %v490
        %v613 = vpop.f32.mrb[0].mxu0
        %v614 = vadd.f32 0.0, %v613
        %v615 = vpop.f32.mrb[0].mxu0
        %616 = vmatprep.mubr.f32.mxu0 0.0
        %617 = vmatmul.mubr.f32.gmra.mrb[0].mxu0 %v493
        %v618 = vpop.f32.mrb[0].mxu0
        %v619 = vadd.f32 0.0, %v618
        %v620 = vpop.f32.mrb[0].mxu0
        %621 = vmatprep.mubr.f32.mxu0 0.0
        %622 = vmatmul.mubr.f32.gmra.mrb[0].mxu0 %v496
        %v623 = vpop.f32.mrb[0].mxu0
        %v624 = vadd.f32 0.0, %v623
        %v625 = vpop.f32.mrb[0].mxu0
        %626 = vmatprep.mubr.f32.mxu0 0.0
        %627 = vmatmul.mubr.f32.gmra.mrb[0].mxu0 %v499
        %v628 = vpop.f32.mrb[0].mxu0
        %v629 = vadd.f32 0.0, %v628
        %v630 = vpop.f32.mrb[0].mxu0
        %631 = vmatprep.mubr.f32.mxu0 0.0
        %632 = vmatmul.mubr.f32.gmra.mrb[0].mxu0 %v502
        %v633 = vpop.f32.mrb[0].mxu0
        %v634 = vadd.f32 0.0, %v633
        %v635 = vpop.f32.mrb[0].mxu0
        %636 = vmatprep.mubr.f32.mxu0 0.0
        %637 = vmatmul.mubr.f32.gmra.mrb[0].mxu0 %v505
        %v638 = vpop.f32.mrb[0].mxu0
        %v639 = vadd.f32 0.0, %v638
        %v640 = vpop.f32.mrb[0].mxu0
        %641 = vmatprep.mubr.f32.mxu0 0.0
        %642 = vmatmul.mubr.f32.gmra.mrb[0].mxu0 %v508
        %v643 = vpop.f32.mrb[0].mxu0
        %v644 = vadd.f32 0.0, %v643
        %v645 = vpop.f32.mrb[0].mxu0
        %646 = vmatprep.mubr.f32.mxu0 0.0
        %647 = vmatmul.mubr.f32.gmra.mrb[0].mxu0 %v511
        %v648 = vpop.f32.mrb[0].mxu0
        %v649 = vadd.f32 0.0, %v648
        %v650 = vpop.f32.mrb[0].mxu0
        %651 = vmatprep.mubr.f32.mxu0 0.0
        %652 = vmatmul.mubr.f32.gmra.mrb[0].mxu0 %v514
        %v653 = vpop.f32.mrb[0].mxu0
        %v654 = vadd.f32 0.0, %v653
        %v655 = vpop.f32.mrb[0].mxu0
        %656 = vmatprep.mubr.f32.mxu0 0.0
        %657 = vmatmul.mubr.f32.gmra.mrb[0].mxu0 %v517
        %v658 = vpop.f32.mrb[0].mxu0
        %v659 = vadd.f32 0.0, %v658
        %v660 = vpop.f32.mrb[0].mxu0
        %661 = vmatprep.mubr.f32.mxu0 0.0
        %662 = vmatmul.mubr.f32.gmra.mrb[0].mxu0 %v520
        %v663 = vpop.f32.mrb[0].mxu0
        %v664 = vadd.f32 0.0, %v663
        %v665 = vpop.f32.mrb[0].mxu0
        %666 = vmatprep.mubr.f32.mxu0 0.0
        %667 = vmatmul.mubr.f32.gmra.mrb[0].mxu0 %v523
        %v668 = vpop.f32.mrb[0].mxu0
        %v669 = vadd.f32 0.0, %v668
        %v670 = vpop.f32.mrb[0].mxu0
        %671 = vmatprep.mubr.f32.mxu0 0.0
        %672 = vmatmul.mubr.f32.gmra.mrb[0].mxu0 %v526
        %v673 = vpop.f32.mrb[0].mxu0
        %v674 = vadd.f32 0.0, %v673
        %v675 = vpop.f32.mrb[0].mxu0
        %676 = vmatprep.mubr.f32.mxu0 0.0
        %677 = vmatmul.mubr.f32.gmra.mrb[0].mxu0 %v529
        %v678 = vpop.f32.mrb[0].mxu0
        %v679 = vadd.f32 0.0, %v678
        %v680 = vpop.f32.mrb[0].mxu0
        %681 = vmatprep.mubr.f32.mxu0 0.0
        %682 = vmatmul.mubr.f32.gmra.mrb[0].mxu0 %v532
        %v683 = vpop.f32.mrb[0].mxu0
        %v684 = vadd.f32 0.0, %v683
        %v685 = vpop.f32.mrb[0].mxu0
        %686 = vmatprep.mubr.f32.mxu0 0.0
        %687 = vmatmul.mubr.f32.gmra.mrb[0].mxu0 %v535
        %v688 = vpop.f32.mrb[0].mxu0
        %v689 = vadd.f32 0.0, %v688
        %v690 = vpop.f32.mrb[0].mxu0
        %691 = vdwg.mxu0
        %v692 = vmax.f32 %v395, %v604
        %v693 = vmax.f32 %v400, %v609
        %v694 = vmax.f32 %v405, %v614
        %v695 = vmax.f32 %v410, %v619
        %v696 = vmax.f32 %v415, %v624
        %v697 = vmax.f32 %v420, %v629
        %v698 = vmax.f32 %v425, %v634
        %v699 = vmax.f32 %v430, %v639
        %v700 = vmax.f32 %v435, %v644
        %v701 = vmax.f32 %v440, %v649
        %v702 = vmax.f32 %v445, %v654
        %v703 = vmax.f32 %v450, %v659
        %v704 = vmax.f32 %v455, %v664
        %v705 = vmax.f32 %v460, %v669
        %v706 = vmax.f32 %v465, %v674
        %v707 = vmax.f32 %v470, %v679
        %v708 = vmax.f32 %v475, %v684
        %v709 = vmax.f32 %v480, %v689
        %v711 = vsel %vm273, %v235, 0
        %v714 = vsel %vm273, %v236, 0
        %v717 = vsel %vm273, %v237, 0
        %v720 = vsel %vm273, %v238, 0
        %v723 = vsel %vm273, %v239, 0
        %v726 = vsel %vm273, %v240, 0
        %v729 = vsel %vm273, %v241, 0
        %v732 = vsel %vm273, %v242, 0
        %v735 = vsel %vm273, %v243, 0
        %v738 = vsel %vm273, %v244, 0
        %v741 = vsel %vm273, %v245, 0
        %v744 = vsel %vm273, %v246, 0
        %v747 = vsel %vm273, %v247, 0
        %v750 = vsel %vm273, %v248, 0
        %v753 = vsel %vm273, %v249, 0
        %v756 = vsel %vm273, %v250, 0
        %v759 = vsel %vm273, %v251, 0
        %v762 = vsel %vm273, %v252, 0
        %764 = vmatprep.subr.mxu0 0.0
        %765 = vmatpush1.msra.mxu0 %v271
        %766 = vmatprep.subr.mxu0 0.0
        %767 = vmatpush1.msra.mxu0 %v272
        %768 = vmatprep.subr.mxu0 0.0
        %769 = vmatpush1.msra.mxu0 0.0
        %770 = vmatprep.subr.mxu0 0.0
        %771 = vmatpush1.msra.mxu0 0.0
        %772 = vmatprep.subr.mxu0 0.0
        %773 = vmatpush1.msra.mxu0 0.0
        %774 = vmatprep.subr.mxu0 0.0
        %775 = vmatpush1.msra.mxu0 0.0
        %776 = vmatprep.subr.mxu0 0.0
        %777 = vmatpush1.msra.mxu0 0.0
        %778 = vmatprep.subr.mxu0 0.0
        %779 = vmatpush1.msra.mxu0 0.0
        %780 = vmatprep.subr.mxu0 0.0
        %781 = vmatpush1.msra.mxu0 0.0
        %782 = vmatprep.subr.mxu0 0.0
        %783 = vmatpush1.msra.mxu0 0.0
        %784 = vmatprep.subr.mxu0 0.0
        %785 = vmatpush1.msra.mxu0 0.0
        %786 = vmatprep.subr.mxu0 0.0
        %787 = vmatpush1.msra.mxu0 0.0
        %788 = vmatprep.subr.mxu0 0.0
        %789 = vmatpush1.msra.mxu0 0.0
        %790 = vmatprep.subr.mxu0 0.0
        %791 = vmatpush1.msra.mxu0 0.0
        %792 = vmatprep.subr.mxu0 0.0
        %793 = vmatpush1.msra.mxu0 0.0
        %794 = vmatprep.subr.mxu0 0.0
        %795 = vmatpush1.msra.mxu0 0.0
        %796 = vmatprep.subr.mxu0 0.0
        %797 = vmatpush1.msra.mxu0 0.0
        %798 = vmatprep.subr.mxu0 0.0
        %799 = vmatpush1.msra.mxu0 0.0
        %800 = vmatprep.subr.mxu0 0.0
        %801 = vmatpush1.msra.mxu0 0.0
        %802 = vmatprep.subr.mxu0 0.0
        %803 = vmatpush1.msra.mxu0 0.0
        %804 = vmatprep.subr.mxu0 0.0
        %805 = vmatpush1.msra.mxu0 0.0
        %806 = vmatprep.subr.mxu0 0.0
        %807 = vmatpush1.msra.mxu0 0.0
        %808 = vmatprep.subr.mxu0 0.0
        %809 = vmatpush1.msra.mxu0 0.0
        %810 = vmatprep.subr.mxu0 0.0
        %811 = vmatpush1.msra.mxu0 0.0
        %812 = vmatprep.subr.mxu0 0.0
        %813 = vmatpush1.msra.mxu0 0.0
        %814 = vmatprep.subr.mxu0 0.0
        %815 = vmatpush1.msra.mxu0 0.0
        %816 = vmatprep.subr.mxu0 0.0
        %817 = vmatpush1.msra.mxu0 0.0
        %818 = vmatprep.subr.mxu0 0.0
        %819 = vmatpush1.msra.mxu0 0.0
        %820 = vmatprep.subr.mxu0 0.0
        %821 = vmatpush1.msra.mxu0 0.0
        %822 = vmatprep.subr.mxu0 0.0
        %823 = vmatpush1.msra.mxu0 0.0
        %824 = vmatprep.subr.mxu0 0.0
        %825 = vmatpush1.msra.mxu0 0.0
        %826 = vmatprep.subr.mxu0 0.0
        %827 = vmatpush1.msra.mxu0 0.0
        %828 = vmatprep.mubr.f32.mxu0 0.0
        %829 = vmatmul.mubr.f32.gmra.mrb[0].mxu0 %v711
        %v830 = vpop.f32.mrb[0].mxu0
        %v831 = vadd.f32 0.0, %v830
        %v832 = vpop.f32.mrb[0].mxu0
        %833 = vmatprep.mubr.f32.mxu0 0.0
        %834 = vmatmul.mubr.f32.gmra.mrb[0].mxu0 %v714
        %v835 = vpop.f32.mrb[0].mxu0
        %v836 = vadd.f32 0.0, %v835
        %v837 = vpop.f32.mrb[0].mxu0
        %838 = vmatprep.mubr.f32.mxu0 0.0
        %839 = vmatmul.mubr.f32.gmra.mrb[0].mxu0 %v717
        %v840 = vpop.f32.mrb[0].mxu0
        %v841 = vadd.f32 0.0, %v840
        %v842 = vpop.f32.mrb[0].mxu0
        %843 = vmatprep.mubr.f32.mxu0 0.0
        %844 = vmatmul.mubr.f32.gmra.mrb[0].mxu0 %v720
        %v845 = vpop.f32.mrb[0].mxu0
        %v846 = vadd.f32 0.0, %v845
        %v847 = vpop.f32.mrb[0].mxu0
        %848 = vmatprep.mubr.f32.mxu0 0.0
        %849 = vmatmul.mubr.f32.gmra.mrb[0].mxu0 %v723
        %v850 = vpop.f32.mrb[0].mxu0
        %v851 = vadd.f32 0.0, %v850
        %v852 = vpop.f32.mrb[0].mxu0
        %853 = vmatprep.mubr.f32.mxu0 0.0
        %854 = vmatmul.mubr.f32.gmra.mrb[0].mxu0 %v726
        %v855 = vpop.f32.mrb[0].mxu0
        %v856 = vadd.f32 0.0, %v855
        %v857 = vpop.f32.mrb[0].mxu0
        %858 = vmatprep.mubr.f32.mxu0 0.0
        %859 = vmatmul.mubr.f32.gmra.mrb[0].mxu0 %v729
        %v860 = vpop.f32.mrb[0].mxu0
        %v861 = vadd.f32 0.0, %v860
        %v862 = vpop.f32.mrb[0].mxu0
        %863 = vmatprep.mubr.f32.mxu0 0.0
        %864 = vmatmul.mubr.f32.gmra.mrb[0].mxu0 %v732
        %v865 = vpop.f32.mrb[0].mxu0
        %v866 = vadd.f32 0.0, %v865
        %v867 = vpop.f32.mrb[0].mxu0
        %868 = vmatprep.mubr.f32.mxu0 0.0
        %869 = vmatmul.mubr.f32.gmra.mrb[0].mxu0 %v735
        %v870 = vpop.f32.mrb[0].mxu0
        %v871 = vadd.f32 0.0, %v870
        %v872 = vpop.f32.mrb[0].mxu0
        %873 = vmatprep.mubr.f32.mxu0 0.0
        %874 = vmatmul.mubr.f32.gmra.mrb[0].mxu0 %v738
        %v875 = vpop.f32.mrb[0].mxu0
        %v876 = vadd.f32 0.0, %v875
        %v877 = vpop.f32.mrb[0].mxu0
        %878 = vmatprep.mubr.f32.mxu0 0.0
        %879 = vmatmul.mubr.f32.gmra.mrb[0].mxu0 %v741
        %v880 = vpop.f32.mrb[0].mxu0
        %v881 = vadd.f32 0.0, %v880
        %v882 = vpop.f32.mrb[0].mxu0
        %883 = vmatprep.mubr.f32.mxu0 0.0
        %884 = vmatmul.mubr.f32.gmra.mrb[0].mxu0 %v744
        %v885 = vpop.f32.mrb[0].mxu0
        %v886 = vadd.f32 0.0, %v885
        %v887 = vpop.f32.mrb[0].mxu0
        %888 = vmatprep.mubr.f32.mxu0 0.0
        %889 = vmatmul.mubr.f32.gmra.mrb[0].mxu0 %v747
        %v890 = vpop.f32.mrb[0].mxu0
        %v891 = vadd.f32 0.0, %v890
        %v892 = vpop.f32.mrb[0].mxu0
        %893 = vmatprep.mubr.f32.mxu0 0.0
        %894 = vmatmul.mubr.f32.gmra.mrb[0].mxu0 %v750
        %v895 = vpop.f32.mrb[0].mxu0
        %v896 = vadd.f32 0.0, %v895
        %v897 = vpop.f32.mrb[0].mxu0
        %898 = vmatprep.mubr.f32.mxu0 0.0
        %899 = vmatmul.mubr.f32.gmra.mrb[0].mxu0 %v753
        %v900 = vpop.f32.mrb[0].mxu0
        %v901 = vadd.f32 0.0, %v900
        %v902 = vpop.f32.mrb[0].mxu0
        %903 = vmatprep.mubr.f32.mxu0 0.0
        %904 = vmatmul.mubr.f32.gmra.mrb[0].mxu0 %v756
        %v905 = vpop.f32.mrb[0].mxu0
        %v906 = vadd.f32 0.0, %v905
        %v907 = vpop.f32.mrb[0].mxu0
        %908 = vmatprep.mubr.f32.mxu0 0.0
        %909 = vmatmul.mubr.f32.gmra.mrb[0].mxu0 %v759
        %v910 = vpop.f32.mrb[0].mxu0
        %v911 = vadd.f32 0.0, %v910
        %v912 = vpop.f32.mrb[0].mxu0
        %913 = vmatprep.mubr.f32.mxu0 0.0
        %914 = vmatmul.mubr.f32.gmra.mrb[0].mxu0 %v762
        %v915 = vpop.f32.mrb[0].mxu0
        %v916 = vadd.f32 0.0, %v915
        %v917 = vpop.f32.mrb[0].mxu0
        %918 = vdwg.mxu0
        %v919 = vmax.f32 %v692, %v831
        %v920 = vmax.f32 %v693, %v836
        %v921 = vmax.f32 %v694, %v841
        %v922 = vmax.f32 %v695, %v846
        %v923 = vmax.f32 %v696, %v851
        %v924 = vmax.f32 %v697, %v856
        %v925 = vmax.f32 %v698, %v861
        %v926 = vmax.f32 %v699, %v866
        %v927 = vmax.f32 %v700, %v871
        %v928 = vmax.f32 %v701, %v876
        %v929 = vmax.f32 %v702, %v881
        %v930 = vmax.f32 %v703, %v886
        %v931 = vmax.f32 %v704, %v891
        %v932 = vmax.f32 %v705, %v896
        %v933 = vmax.f32 %v706, %v901
        %v934 = vmax.f32 %v707, %v906
        %v935 = vmax.f32 %v708, %v911
        %v936 = vmax.f32 %v709, %v916
        %v938 = vsel %vm273, %v253, 0
        %v941 = vsel %vm273, %v254, 0
        %v944 = vsel %vm273, %v255, 0
        %v947 = vsel %vm273, %v256, 0
        %v950 = vsel %vm273, %v257, 0
        %v953 = vsel %vm273, %v258, 0
        %v956 = vsel %vm273, %v259, 0
        %v959 = vsel %vm273, %v260, 0
        %v962 = vsel %vm273, %v261, 0
        %v965 = vsel %vm273, %v262, 0
        %v968 = vsel %vm273, %v263, 0
        %v971 = vsel %vm273, %v264, 0
        %v974 = vsel %vm273, %v265, 0
        %v977 = vsel %vm273, %v266, 0
        %v980 = vsel %vm273, %v267, 0
        %v983 = vsel %vm273, %v268, 0
        %v986 = vsel %vm273, %v269, 0
        %v989 = vsel %vm273, %v270, 0
        %991 = vmatprep.subr.mxu0 0.0
        %992 = vmatpush1.msra.mxu0 %v271
        %993 = vmatprep.subr.mxu0 0.0
        %994 = vmatpush1.msra.mxu0 %v272
        %995 = vmatprep.subr.mxu0 0.0
        %996 = vmatpush1.msra.mxu0 0.0
        %997 = vmatprep.subr.mxu0 0.0
        %998 = vmatpush1.msra.mxu0 0.0
        %999 = vmatprep.subr.mxu0 0.0
        %1000 = vmatpush1.msra.mxu0 0.0
        %1001 = vmatprep.subr.mxu0 0.0
        %1002 = vmatpush1.msra.mxu0 0.0
        %1003 = vmatprep.subr.mxu0 0.0
        %1004 = vmatpush1.msra.mxu0 0.0
        %1005 = vmatprep.subr.mxu0 0.0
        %1006 = vmatpush1.msra.mxu0 0.0
        %1007 = vmatprep.subr.mxu0 0.0
        %1008 = vmatpush1.msra.mxu0 0.0
        %1009 = vmatprep.subr.mxu0 0.0
        %1010 = vmatpush1.msra.mxu0 0.0
        %1011 = vmatprep.subr.mxu0 0.0
        %1012 = vmatpush1.msra.mxu0 0.0
        %1013 = vmatprep.subr.mxu0 0.0
        %1014 = vmatpush1.msra.mxu0 0.0
        %1015 = vmatprep.subr.mxu0 0.0
        %1016 = vmatpush1.msra.mxu0 0.0
        %1017 = vmatprep.subr.mxu0 0.0
        %1018 = vmatpush1.msra.mxu0 0.0
        %1019 = vmatprep.subr.mxu0 0.0
        %1020 = vmatpush1.msra.mxu0 0.0
        %1021 = vmatprep.subr.mxu0 0.0
        %1022 = vmatpush1.msra.mxu0 0.0
        %1023 = vmatprep.subr.mxu0 0.0
        %1024 = vmatpush1.msra.mxu0 0.0
        %1025 = vmatprep.subr.mxu0 0.0
        %1026 = vmatpush1.msra.mxu0 0.0
        %1027 = vmatprep.subr.mxu0 0.0
        %1028 = vmatpush1.msra.mxu0 0.0
        %1029 = vmatprep.subr.mxu0 0.0
        %1030 = vmatpush1.msra.mxu0 0.0
        %1031 = vmatprep.subr.mxu0 0.0
        %1032 = vmatpush1.msra.mxu0 0.0
        %1033 = vmatprep.subr.mxu0 0.0
        %1034 = vmatpush1.msra.mxu0 0.0
        %1035 = vmatprep.subr.mxu0 0.0
        %1036 = vmatpush1.msra.mxu0 0.0
        %1037 = vmatprep.subr.mxu0 0.0
        %1038 = vmatpush1.msra.mxu0 0.0
        %1039 = vmatprep.subr.mxu0 0.0
        %1040 = vmatpush1.msra.mxu0 0.0
        %1041 = vmatprep.subr.mxu0 0.0
        %1042 = vmatpush1.msra.mxu0 0.0
        %1043 = vmatprep.subr.mxu0 0.0
        %1044 = vmatpush1.msra.mxu0 0.0
        %1045 = vmatprep.subr.mxu0 0.0
        %1046 = vmatpush1.msra.mxu0 0.0
        %1047 = vmatprep.subr.mxu0 0.0
        %1048 = vmatpush1.msra.mxu0 0.0
        %1049 = vmatprep.subr.mxu0 0.0
        %1050 = vmatpush1.msra.mxu0 0.0
        %1051 = vmatprep.subr.mxu0 0.0
        %1052 = vmatpush1.msra.mxu0 0.0
        %1053 = vmatprep.subr.mxu0 0.0
        %1054 = vmatpush1.msra.mxu0 0.0
        %1055 = vmatprep.mubr.f32.mxu0 0.0
        %1056 = vmatmul.mubr.f32.gmra.mrb[0].mxu0 %v938
        %v1057 = vpop.f32.mrb[0].mxu0
        %v1058 = vadd.f32 0.0, %v1057
        %v1059 = vpop.f32.mrb[0].mxu0
        %1060 = vmatprep.mubr.f32.mxu0 0.0
        %1061 = vmatmul.mubr.f32.gmra.mrb[0].mxu0 %v941
        %v1062 = vpop.f32.mrb[0].mxu0
        %v1063 = vadd.f32 0.0, %v1062
        %v1064 = vpop.f32.mrb[0].mxu0
        %1065 = vmatprep.mubr.f32.mxu0 0.0
        %1066 = vmatmul.mubr.f32.gmra.mrb[0].mxu0 %v944
        %v1067 = vpop.f32.mrb[0].mxu0
        %v1068 = vadd.f32 0.0, %v1067
        %v1069 = vpop.f32.mrb[0].mxu0
        %1070 = vmatprep.mubr.f32.mxu0 0.0
        %1071 = vmatmul.mubr.f32.gmra.mrb[0].mxu0 %v947
        %v1072 = vpop.f32.mrb[0].mxu0
        %v1073 = vadd.f32 0.0, %v1072
        %v1074 = vpop.f32.mrb[0].mxu0
        %1075 = vmatprep.mubr.f32.mxu0 0.0
        %1076 = vmatmul.mubr.f32.gmra.mrb[0].mxu0 %v950
        %v1077 = vpop.f32.mrb[0].mxu0
        %v1078 = vadd.f32 0.0, %v1077
        %v1079 = vpop.f32.mrb[0].mxu0
        %1080 = vmatprep.mubr.f32.mxu0 0.0
        %1081 = vmatmul.mubr.f32.gmra.mrb[0].mxu0 %v953
        %v1082 = vpop.f32.mrb[0].mxu0
        %v1083 = vadd.f32 0.0, %v1082
        %v1084 = vpop.f32.mrb[0].mxu0
        %1085 = vmatprep.mubr.f32.mxu0 0.0
        %1086 = vmatmul.mubr.f32.gmra.mrb[0].mxu0 %v956
        %v1087 = vpop.f32.mrb[0].mxu0
        %v1088 = vadd.f32 0.0, %v1087
        %v1089 = vpop.f32.mrb[0].mxu0
        %1090 = vmatprep.mubr.f32.mxu0 0.0
        %1091 = vmatmul.mubr.f32.gmra.mrb[0].mxu0 %v959
        %v1092 = vpop.f32.mrb[0].mxu0
        %v1093 = vadd.f32 0.0, %v1092
        %v1094 = vpop.f32.mrb[0].mxu0
        %1095 = vmatprep.mubr.f32.mxu0 0.0
        %1096 = vmatmul.mubr.f32.gmra.mrb[0].mxu0 %v962
        %v1097 = vpop.f32.mrb[0].mxu0
        %v1098 = vadd.f32 0.0, %v1097
        %v1099 = vpop.f32.mrb[0].mxu0
        %1100 = vmatprep.mubr.f32.mxu0 0.0
        %1101 = vmatmul.mubr.f32.gmra.mrb[0].mxu0 %v965
        %v1102 = vpop.f32.mrb[0].mxu0
        %v1103 = vadd.f32 0.0, %v1102
        %v1104 = vpop.f32.mrb[0].mxu0
        %1105 = vmatprep.mubr.f32.mxu0 0.0
        %1106 = vmatmul.mubr.f32.gmra.mrb[0].mxu0 %v968
        %v1107 = vpop.f32.mrb[0].mxu0
        %v1108 = vadd.f32 0.0, %v1107
        %v1109 = vpop.f32.mrb[0].mxu0
        %1110 = vmatprep.mubr.f32.mxu0 0.0
        %1111 = vmatmul.mubr.f32.gmra.mrb[0].mxu0 %v971
        %v1112 = vpop.f32.mrb[0].mxu0
        %v1113 = vadd.f32 0.0, %v1112
        %v1114 = vpop.f32.mrb[0].mxu0
        %1115 = vmatprep.mubr.f32.mxu0 0.0
        %1116 = vmatmul.mubr.f32.gmra.mrb[0].mxu0 %v974
        %v1117 = vpop.f32.mrb[0].mxu0
        %v1118 = vadd.f32 0.0, %v1117
        %v1119 = vpop.f32.mrb[0].mxu0
        %1120 = vmatprep.mubr.f32.mxu0 0.0
        %1121 = vmatmul.mubr.f32.gmra.mrb[0].mxu0 %v977
        %v1122 = vpop.f32.mrb[0].mxu0
        %v1123 = vadd.f32 0.0, %v1122
        %v1124 = vpop.f32.mrb[0].mxu0
        %1125 = vmatprep.mubr.f32.mxu0 0.0
        %1126 = vmatmul.mubr.f32.gmra.mrb[0].mxu0 %v980
        %v1127 = vpop.f32.mrb[0].mxu0
        %v1128 = vadd.f32 0.0, %v1127
        %v1129 = vpop.f32.mrb[0].mxu0
        %1130 = vmatprep.mubr.f32.mxu0 0.0
        %1131 = vmatmul.mubr.f32.gmra.mrb[0].mxu0 %v983
        %v1132 = vpop.f32.mrb[0].mxu0
        %v1133 = vadd.f32 0.0, %v1132
        %v1134 = vpop.f32.mrb[0].mxu0
        %1135 = vmatprep.mubr.f32.mxu0 0.0
        %1136 = vmatmul.mubr.f32.gmra.mrb[0].mxu0 %v986
        %v1137 = vpop.f32.mrb[0].mxu0
        %v1138 = vadd.f32 0.0, %v1137
        %v1139 = vpop.f32.mrb[0].mxu0
        %1140 = vmatprep.mubr.f32.mxu0 0.0
        %1141 = vmatmul.mubr.f32.gmra.mrb[0].mxu0 %v989
        %v1142 = vpop.f32.mrb[0].mxu0
        %v1143 = vadd.f32 0.0, %v1142
        %v1144 = vpop.f32.mrb[0].mxu0
        %1145 = vdwg.mxu0
        %v1146 = vmax.f32 %v919, %v1058
        %v1147 = vmax.f32 %v920, %v1063
        %v1148 = vmax.f32 %v921, %v1068
        %v1149 = vmax.f32 %v922, %v1073
        %v1150 = vmax.f32 %v923, %v1078
        %v1151 = vmax.f32 %v924, %v1083
        %v1152 = vmax.f32 %v925, %v1088
        %v1153 = vmax.f32 %v926, %v1093
        %v1154 = vmax.f32 %v927, %v1098
        %v1155 = vmax.f32 %v928, %v1103
        %v1156 = vmax.f32 %v929, %v1108
        %v1157 = vmax.f32 %v930, %v1113
        %v1158 = vmax.f32 %v931, %v1118
        %v1159 = vmax.f32 %v932, %v1123
        %v1160 = vmax.f32 %v933, %v1128
        %v1161 = vmax.f32 %v934, %v1133
        %v1162 = vmax.f32 %v935, %v1138
        %v1163 = vmax.f32 %v936, %v1143
        %v1164 = vld [vmem:[#allocation4] sm:$0x1]
        %v1166 = vlaneseq
        %v1167 = vshrl.u32 %v1166, 7
        %v1168 = vsub.s32 0, %v1167
        %v1169 = vrot.slane %v1164, %v1168
        %v1171 = vadd.f32 %v1146, %v1169
        %v1172 = vadd.f32 %v1147, %v1169
        %v1173 = vadd.f32 %v1148, %v1169
        %v1174 = vadd.f32 %v1149, %v1169
        %v1175 = vadd.f32 %v1150, %v1169
        %v1176 = vadd.f32 %v1151, %v1169
        %v1177 = vadd.f32 %v1152, %v1169
        %v1178 = vadd.f32 %v1153, %v1169
        %v1179 = vadd.f32 %v1154, %v1169
        %v1180 = vadd.f32 %v1155, %v1169
        %v1181 = vadd.f32 %v1156, %v1169
        %v1182 = vadd.f32 %v1157, %v1169
        %v1183 = vadd.f32 %v1158, %v1169
        %v1184 = vadd.f32 %v1159, %v1169
        %v1185 = vadd.f32 %v1160, %v1169
        %v1186 = vadd.f32 %v1161, %v1169
        %v1187 = vadd.f32 %v1162, %v1169
        %v1188 = vadd.f32 %v1163, %v1169
        %v1189 = vmax.f32 %v1171, 0.0
        %v1190 = vmax.f32 %v1172, 0.0
        %v1191 = vmax.f32 %v1173, 0.0
        %v1192 = vmax.f32 %v1174, 0.0
        %v1193 = vmax.f32 %v1175, 0.0
        %v1194 = vmax.f32 %v1176, 0.0
        %v1195 = vmax.f32 %v1177, 0.0
        %v1196 = vmax.f32 %v1178, 0.0
        %v1197 = vmax.f32 %v1179, 0.0
        %v1198 = vmax.f32 %v1180, 0.0
        %v1199 = vmax.f32 %v1181, 0.0
        %v1200 = vmax.f32 %v1182, 0.0
        %v1201 = vmax.f32 %v1183, 0.0
        %v1202 = vmax.f32 %v1184, 0.0
        %v1203 = vmax.f32 %v1185, 0.0
        %v1204 = vmax.f32 %v1186, 0.0
        %v1205 = vmax.f32 %v1187, 0.0
        %v1206 = vmax.f32 %v1188, 0.0
        %v1207 = vpack.c.bf16 %v1190, %v1189
        %v1208 = vpack.c.bf16 %v1192, %v1191
        %v1209 = vpack.c.bf16 %v1194, %v1193
        %v1210 = vpack.c.bf16 %v1196, %v1195
        %v1211 = vpack.c.bf16 %v1198, %v1197
        %v1212 = vpack.c.bf16 %v1200, %v1199
        %v1213 = vpack.c.bf16 %v1202, %v1201
        %v1214 = vpack.c.bf16 %v1204, %v1203
        %v1215 = vpack.c.bf16 %v1206, %v1205
        %v1225 = vunpack.c.l.b16 %v1207
        %v1226 = vunpack.c.h.b16 %v1207
        %v1227 = vunpack.c.l.b16 %v1208
        %v1228 = vunpack.c.h.b16 %v1208
        %v1229 = vunpack.c.l.b16 %v1209
        %v1230 = vunpack.c.h.b16 %v1209
        %v1231 = vunpack.c.l.b16 %v1210
        %v1232 = vunpack.c.h.b16 %v1210
        %v1233 = vunpack.c.l.b16 %v1211
        %v1234 = vunpack.c.h.b16 %v1211
        %v1235 = vunpack.c.l.b16 %v1212
        %v1236 = vunpack.c.h.b16 %v1212
        %v1237 = vunpack.c.l.b16 %v1213
        %v1238 = vunpack.c.h.b16 %v1213
        %v1239 = vunpack.c.l.b16 %v1214
        %v1240 = vunpack.c.h.b16 %v1214
        %v1241 = vunpack.c.l.b16 %v1215
        %v1242 = vunpack.c.h.b16 %v1215
        %v1243 = vpack.c.b16 %v1225, %v1225
        %v1244 = vpack.c.b16 %v1226, %v1226
        %v1245 = vpack.c.b16 %v1227, %v1227
        %v1246 = vpack.c.b16 %v1228, %v1228
        %v1247 = vpack.c.b16 %v1229, %v1229
        %v1248 = vpack.c.b16 %v1230, %v1230
        %v1249 = vpack.c.b16 %v1231, %v1231
        %v1250 = vpack.c.b16 %v1232, %v1232
        %v1251 = vpack.c.b16 %v1233, %v1233
        %v1252 = vpack.c.b16 %v1234, %v1234
        %v1253 = vpack.c.b16 %v1235, %v1235
        %v1254 = vpack.c.b16 %v1236, %v1236
        %v1255 = vpack.c.b16 %v1237, %v1237
        %v1256 = vpack.c.b16 %v1238, %v1238
        %v1257 = vpack.c.b16 %v1239, %v1239
        %v1258 = vpack.c.b16 %v1240, %v1240
        %v1259 = vpack.c.b16 %v1241, %v1241
        %v1260 = vpack.c.b16 %v1242, %v1242
        %1279 = vst [vmem:[%s198] sm:$0xf] %v1243
        %1280 = vst [vmem:[%s198 + $0x4] sm:$0xf] %v1244
        %1281 = vst [vmem:[%s198 + $0x8] sm:$0xf] %v1245
        %1282 = vst [vmem:[%s198 + $0xc] sm:$0xf] %v1246
        %1283 = vst [vmem:[%s198 + $0x10] sm:$0xf] %v1247
        %1284 = vst [vmem:[%s198 + $0x14] sm:$0xf] %v1248
        %1285 = vst [vmem:[%s198 + $0x18] sm:$0xf] %v1249
        %1286 = vst [vmem:[%s198 + $0x1c] sm:$0xf] %v1250
        %1287 = vst [vmem:[%s198 + $0x20] sm:$0xf] %v1251
        %1288 = vst [vmem:[%s198 + $0x24] sm:$0xf] %v1252
        %1289 = vst [vmem:[%s198 + $0x28] sm:$0xf] %v1253
        %1290 = vst [vmem:[%s198 + $0x2c] sm:$0xf] %v1254
        %1291 = vst [vmem:[%s198 + $0x30] sm:$0xf] %v1255
        %1292 = vst [vmem:[%s198 + $0x34] sm:$0xf] %v1256
        %1293 = vst [vmem:[%s198 + $0x38] sm:$0xf] %v1257
        %1294 = vst [vmem:[%s198 + $0x3c] sm:$0xf] %v1258
        %1295 = vst [vmem:[%s198 + $0x40] sm:$0xf] %v1259
        %1296 = vst [vmem:[%s198 + $0x44] sm:$0xf] %v1260
        %p1297 = scmp.lt.s32.totalorder %s16, 1
        %s1298 = scalar_select %p1297, %s16, 1
        %s1299 = smul.addr %s1298, 18
        %s1300 = smul.addr %s1299, 4
        %s1301 = scalar_lea.vmem %s3, %s1300
        // Predicated region
        $region41: #{net_forward.4} parent=31 // pred_check
          %p1302 = pneg %p102
        $region42: #{net_forward.4} parent=31 // pred_check_branch
          %1304 = sbr.rel (%p1302) target = $region44
        $region43: #{net_forward.4} parent=31 // pred_region
          _
        $region44: #{net_forward.4} parent=31 // pred_fallthru
          _
      $region32: #{net_forward.4} parent=5 // pred_fallthru
        _
      %p1305 = scmp.le.s32.totalorder 2, %s11
      // Predicated region
      $region45: #{net_forward.4} parent=5 // pred_check
        %p1306 = pneg %p1305
      $region46: #{net_forward.4} parent=5 // pred_check_branch
        %1308 = sbr.rel (%p1306) target = $region48
      $region47: #{net_forward.4} parent=5 // pred_region
        %s1309 = ssub.s32 %s11, 2
        // Predicated region
        $region49: #{net_forward.4} parent=47 // pred_check
          %p1310 = pneg %p108
        $region50: #{net_forward.4} parent=47 // pred_check_branch
          %1312 = sbr.rel (%p1310) target = $region52
        $region51: #{net_forward.4} parent=47 // pred_region
          %p1313 = scmp.lt.s32.totalorder %s17, 1
          %s1314 = scalar_select %p1313, %s17, 1
          %s1315 = smul.addr %s1314, 18
          %s1316 = smul.addr %s1315, 4
          %s1317 = scalar_lea.vmem %s3, %s1316
        $region52: #{net_forward.4} parent=47 // pred_fallthru
          _
      $region48: #{net_forward.4} parent=5 // pred_fallthru
        _
    $region6: #{net_forward.4} parent=1 // loop_footer
      %s15 = sadd.s32 1, %s11
    $region7: #{net_forward.4} parent=1 // loop_footer_branch
      %10 = sbr.rel target = $region3
    $region8: #{net_forward.4} parent=1 // loop_exit
      _
    %1318 = vsyncpa [#allocation3], 1
    %s1319 = scalar_lea.sflag [#allocation3], 1
    %1320 = vsyncpa %s1319, 1
    %1321 = vsyncpa [#allocation5], 1

// kernel: net_forward.5
$region0: #{net_forward.5}
  #allocation0 [shape = 'u32[]', space=smem, size = 0x4, offset = 0x4, fixed_abs, tag = 'smem constant byte address 0x4 - core index']
  #allocation1 [shape = 'u32[144,128]{1,0:T(1,128)}', space=vmem, size = 0x12000, scoped, tag = 'internal scratch']
  %s0 = inlined_call_operand.vmem [shape: bf16[2,144,128], index: 0, kind: input, shape index: {}]
  %s1 = inlined_call_operand.hbm [shape: bf16[128,512], index: 1, kind: input, shape index: {}]
  %s2 = inlined_call_operand.vmem [shape: bf16[2,144,128], index: 2, kind: output, shape index: {}]
  %s3 = sld [smem:[#allocation0]]
  $region45: #{net_forward.5} parent=0
    _
  %s5 = ssub.s32 1, %s3
  %s6 = scalar_select 0, %s5, %s3
  $region1: #{net_forward.5} parent=0
    #allocation2 [shape = 'u8[131072]{0}', space=vmem, size = 0x20000, scoped, tag = 'input window, operand 1, single buffered']
    #allocation3 [shape = 's32[2]{0}', space=sflag, size = 0x8, scoped, tag = 'scoped memory for net_forward.5']
    %7 = vsyncpa [#allocation3], 0
    loop: start=0, step=1, limit=4
    $region2: #{net_forward.5} parent=1 // loop_pre_header
      _
    $region3: #{net_forward.5} parent=1 // loop_header
      %s9 = sphi 0, %s13
      %p10 = scmp.ge.s32.totalorder %s9, 4
      %s19 = sphi 0, %s21
      %s22 = sphi 0, %s19
      %s23 = sphi 0, %s22
      %s39 = sphi 0, %s23
      %s43 = sphi 0, %s43
      %s45 = sphi 0, %s43
      %s46 = sphi 0, %s45
      %s60 = sphi 0, %s46
      %s66 = sphi 0, %s68
      %s69 = sphi 0, %s66
      %s70 = sphi 0, %s69
      %s86 = sphi 0, %s70
    $region4: #{net_forward.5} parent=1 // loop_header_branch
      %12 = sbr.rel (%p10) target = $region8
    $region5: #{net_forward.5} parent=1 // loop_body
      %s14 = ssub.s32 %s9, 1
      %s15 = ssub.s32 %s9, 2
      %s16 = sadd.s32 %s9, 1
      %s17 = ssub.s32 %s9, %s16
      %p18 = scmp.eq.s32.totalorder %s17, 0
      %s20 = sadd.s32 %s19, 1
      %s21 = scalar_select %p18, %s19, %s20
      %p24 = pneg %p18
      %p25 = scmp.eq.s32.totalorder %s9, 1
      %p26 = por %p24, %p25
      %p27 = scmp.ne.s32.totalorder %s19, %s22
      %p28 = scmp.eq.s32.totalorder %s9, 0
      %p29 = por %p27, %p28
      %p30 = scmp.ne.s32.totalorder %s19, %s22
      %p31 = scmp.eq.s32.totalorder %s14, 1
      %p32 = por %p30, %p31
      %p33 = scmp.ne.s32.totalorder %s22, %s23
      %p34 = scmp.eq.s32.totalorder %s14, 0
      %p35 = por %p33, %p34
      %p36 = scmp.ne.s32.totalorder %s22, %s23
      %p37 = scmp.eq.s32.totalorder %s15, 1
      %p38 = por %p36, %p37
      %p40 = scmp.ne.s32.totalorder %s23, %s39
      %p41 = scmp.eq.s32.totalorder %s15, 0
      %p42 = por %p40, %p41
      %s44 = sadd.s32 %s43, 1
      %p47 = scmp.eq.s32.totalorder %s9, 1
      %p48 = scmp.ne.s32.totalorder %s43, %s45
      %p49 = scmp.eq.s32.totalorder %s9, 0
      %p50 = por %p48, %p49
      %p51 = scmp.ne.s32.totalorder %s43, %s45
      %p52 = scmp.eq.s32.totalorder %s14, 1
      %p53 = por %p51, %p52
      %p54 = scmp.ne.s32.totalorder %s45, %s46
      %p55 = scmp.eq.s32.totalorder %s14, 0
      %p56 = por %p54, %p55
      %p57 = scmp.ne.s32.totalorder %s45, %s46
      %p58 = scmp.eq.s32.totalorder %s15, 1
      %p59 = por %p57, %p58
      %p61 = scmp.ne.s32.totalorder %s46, %s60
      %p62 = scmp.eq.s32.totalorder %s15, 0
      %p63 = por %p61, %p62
      %s64 = ssub.s32 %s9, %s16
      %p65 = scmp.eq.s32.totalorder %s64, 0
      %s67 = sadd.s32 %s66, 1
      %s68 = scalar_select %p65, %s66, %s67
      %p71 = pneg %p65
      %p72 = scmp.eq.s32.totalorder %s9, 1
      %p73 = por %p71, %p72
      %p74 = scmp.ne.s32.totalorder %s66, %s69
      %p75 = scmp.eq.s32.totalorder %s9, 0
      %p76 = por %p74, %p75
      %p77 = scmp.ne.s32.totalorder %s66, %s69
      %p78 = scmp.eq.s32.totalorder %s14, 1
      %p79 = por %p77, %p78
      %p80 = scmp.ne.s32.totalorder %s69, %s70
      %p81 = scmp.eq.s32.totalorder %s14, 0
      %p82 = por %p80, %p81
      %p83 = scmp.ne.s32.totalorder %s69, %s70
      %p84 = scmp.eq.s32.totalorder %s15, 1
      %p85 = por %p83, %p84
      %p87 = scmp.ne.s32.totalorder %s70, %s86
      %p88 = scmp.eq.s32.totalorder %s15, 0
      %p89 = por %p87, %p88
      %p90 = scmp.le.s32.totalorder 1, %s9
      %p91 = scmp.lt.s32.totalorder %s9, 3
      %p92 = pnand %p90, %p91
      %p93 = pneg %p92
      // Predicated region
      $region9: #{net_forward.5} parent=5 // pred_check
        _
      $region10: #{net_forward.5} parent=5 // pred_check_branch
        %95 = sbr.rel (%p92) target = $region12
      $region11: #{net_forward.5} parent=5 // pred_region
        %s96 = ssub.s32 %s9, 1
        // Predicated region
        $region13: #{net_forward.5} parent=11 // pred_check
          %p97 = pneg %p56
        $region14: #{net_forward.5} parent=11 // pred_check_branch
          %99 = sbr.rel (%p97) target = $region16
        $region15: #{net_forward.5} parent=11 // pred_region
          %s101 = ssub.s32 4096, 4096
          %102 = vsyncadd [#allocation3], %s101
          %s103 = sshll.u32 [#allocation2], 4
          %s104 = int_to_ptr.vmem [resolvable:$true] %s103
          %109 = dma.hbm_to_vmem [thread:$0]  %s1, 4096, %s104, [#allocation3], 256, 256, 16
        $region16: #{net_forward.5} parent=11 // pred_fallthru
          _
      $region12: #{net_forward.5} parent=5 // pred_fallthru
        _
      %p110 = scmp.lt.s32.totalorder %s9, 2
      // Predicated region
      $region17: #{net_forward.5} parent=5 // pred_check
        %p111 = pneg %p110
      $region18: #{net_forward.5} parent=5 // pred_check_branch
        %113 = sbr.rel (%p111) target = $region20
      $region19: #{net_forward.5} parent=5 // pred_region
        // Predicated region
        $region21: #{net_forward.5} parent=19 // pred_check
          %p114 = pneg %p29
        $region22: #{net_forward.5} parent=19 // pred_check_branch
          %116 = sbr.rel (%p114) target = $region24
        $region23: #{net_forward.5} parent=19 // pred_region
          %p117 = scmp.lt.s32.totalorder %s9, 1
          %s118 = scalar_select %p117, %s9, 1
          %s119 = smul.addr %s118, 18
          %s120 = smul.addr %s119, 4
          %s121 = scalar_lea.vmem %s0, %s120
        $region24: #{net_forward.5} parent=19 // pred_fallthru
          _
      $region20: #{net_forward.5} parent=5 // pred_fallthru
        _
      %p122 = scmp.le.s32.totalorder 1, %s9
      %p123 = scmp.lt.s32.totalorder %s9, 3
      %p124 = pnand %p122, %p123
      %p125 = pneg %p124
      // Predicated region
      $region25: #{net_forward.5} parent=5 // pred_check
        _
      $region26: #{net_forward.5} parent=5 // pred_check_branch
        %127 = sbr.rel (%p124) target = $region28
      $region27: #{net_forward.5} parent=5 // pred_region
        %s128 = ssub.s32 %s9, 1
        // Predicated region
        $region29: #{net_forward.5} parent=27 // pred_check
          %p129 = pneg %p56
        $region30: #{net_forward.5} parent=27 // pred_check_branch
          %131 = sbr.rel (%p129) target = $region32
        $region31: #{net_forward.5} parent=27 // pred_region
          %132 = dma.done [#allocation3], 4096
        $region32: #{net_forward.5} parent=27 // pred_fallthru
          _
        %p133 = scmp.lt.s32.totalorder %s14, 1
        %s134 = scalar_select %p133, %s14, 1
        %s135 = smul.addr %s134, 18
        %s136 = smul.addr %s135, 4
        %s137 = scalar_lea.vmem %s0, %s136
        %p138 = pneg %p35
        %p139 = pneg %p32
        %p140 = pneg %p56
        %p141 = pneg %p53
        %p142 = pneg %p82
        %p143 = pneg %p79
        %p144 = scmp.lt.s32.totalorder %s14, 1
        %s145 = scalar_select %p144, %s14, 1
        %s146 = smul.addr %s145, 18
        %s147 = smul.addr %s146, 4
        %s148 = scalar_lea.vmem %s2, %s147
        %p149 = scmp.lt.s32.totalorder %s14, 1
        %s150 = scalar_select %p149, %s14, 1
        %s151 = smul.addr %s150, 18
        %s152 = smul.addr %s151, 4
        %s153 = scalar_lea.vmem %s0, %s152
        %p154 = scmp.lt.s32.totalorder %s14, 1
        %s155 = scalar_select %p154, %s14, 1
        %s156 = smul.addr %s155, 18
        %s157 = smul.addr %s156, 4
        %s158 = scalar_lea.vmem %s2, %s157
        %v160 = vld [vmem:[%s153] sm:$0xf]
        %v161 = vld [vmem:[%s153 + $0x4] sm:$0xf]
        %v162 = vld [vmem:[%s153 + $0x8] sm:$0xf]
        %v163 = vld [vmem:[%s153 + $0xc] sm:$0xf]
        %v164 = vld [vmem:[%s153 + $0x10] sm:$0xf]
        %v165 = vld [vmem:[%s153 + $0x14] sm:$0xf]
        %v166 = vld [vmem:[%s153 + $0x18] sm:$0xf]
        %v167 = vld [vmem:[%s153 + $0x1c] sm:$0xf]
        %v168 = vld [vmem:[%s153 + $0x20] sm:$0xf]
        %v169 = vld [vmem:[%s153 + $0x24] sm:$0xf]
        %v170 = vld [vmem:[%s153 + $0x28] sm:$0xf]
        %v171 = vld [vmem:[%s153 + $0x2c] sm:$0xf]
        %v172 = vld [vmem:[%s153 + $0x30] sm:$0xf]
        %v173 = vld [vmem:[%s153 + $0x34] sm:$0xf]
        %v174 = vld [vmem:[%s153 + $0x38] sm:$0xf]
        %v175 = vld [vmem:[%s153 + $0x3c] sm:$0xf]
        %v176 = vld [vmem:[%s153 + $0x40] sm:$0xf]
        %v177 = vld [vmem:[%s153 + $0x44] sm:$0xf]
        %v178 = vld [vmem:[#allocation2] sm:$0xff]
        %v179 = vld [vmem:[#allocation2 + $0x8] sm:$0xff]
        %v180 = vld [vmem:[#allocation2 + $0x10] sm:$0xff]
        %v181 = vld [vmem:[#allocation2 + $0x18] sm:$0xff]
        %v182 = vld [vmem:[#allocation2 + $0x20] sm:$0xff]
        %v183 = vld [vmem:[#allocation2 + $0x28] sm:$0xff]
        %v184 = vld [vmem:[#allocation2 + $0x30] sm:$0xff]
        %v185 = vld [vmem:[#allocation2 + $0x38] sm:$0xff]
        %v186 = vld [vmem:[#allocation2 + $0x40] sm:$0xff]
        %v187 = vld [vmem:[#allocation2 + $0x48] sm:$0xff]
        %v188 = vld [vmem:[#allocation2 + $0x50] sm:$0xff]
        %v189 = vld [vmem:[#allocation2 + $0x58] sm:$0xff]
        %v190 = vld [vmem:[#allocation2 + $0x60] sm:$0xff]
        %v191 = vld [vmem:[#allocation2 + $0x68] sm:$0xff]
        %v192 = vld [vmem:[#allocation2 + $0x70] sm:$0xff]
        %v193 = vld [vmem:[#allocation2 + $0x78] sm:$0xff]
        %v194 = vld [vmem:[#allocation2 + $0x80] sm:$0xff]
        %v195 = vld [vmem:[#allocation2 + $0x88] sm:$0xff]
        %v196 = vld [vmem:[#allocation2 + $0x90] sm:$0xff]
        %v197 = vld [vmem:[#allocation2 + $0x98] sm:$0xff]
        %v198 = vld [vmem:[#allocation2 + $0xa0] sm:$0xff]
        %v199 = vld [vmem:[#allocation2 + $0xa8] sm:$0xff]
        %v200 = vld [vmem:[#allocation2 + $0xb0] sm:$0xff]
        %v201 = vld [vmem:[#allocation2 + $0xb8] sm:$0xff]
        %v202 = vld [vmem:[#allocation2 + $0xc0] sm:$0xff]
        %v203 = vld [vmem:[#allocation2 + $0xc8] sm:$0xff]
        %v204 = vld [vmem:[#allocation2 + $0xd0] sm:$0xff]
        %v205 = vld [vmem:[#allocation2 + $0xd8] sm:$0xff]
        %v206 = vld [vmem:[#allocation2 + $0xe0] sm:$0xff]
        %v207 = vld [vmem:[#allocation2 + $0xe8] sm:$0xff]
        %v208 = vld [vmem:[#allocation2 + $0xf0] sm:$0xff]
        %v209 = vld [vmem:[#allocation2 + $0xf8] sm:$0xff]
        %v228 = vunpack.c.l.b16 %v160
        %v229 = vunpack.c.l.b16 %v161
        %v230 = vunpack.c.l.b16 %v162
        %v231 = vunpack.c.l.b16 %v163
        %v232 = vunpack.c.l.b16 %v164
        %v233 = vunpack.c.l.b16 %v165
        %v234 = vunpack.c.l.b16 %v166
        %v235 = vunpack.c.l.b16 %v167
        %v236 = vunpack.c.l.b16 %v168
        %v237 = vunpack.c.l.b16 %v169
        %v238 = vunpack.c.l.b16 %v170
        %v239 = vunpack.c.l.b16 %v171
        %v240 = vunpack.c.l.b16 %v172
        %v241 = vunpack.c.l.b16 %v173
        %v242 = vunpack.c.l.b16 %v174
        %v243 = vunpack.c.l.b16 %v175
        %v244 = vunpack.c.l.b16 %v176
        %v245 = vunpack.c.l.b16 %v177
        %v246 = vpack.c.b16 %v229, %v228
        %v247 = vpack.c.b16 %v231, %v230
        %v248 = vpack.c.b16 %v233, %v232
        %v249 = vpack.c.b16 %v235, %v234
        %v250 = vpack.c.b16 %v237, %v236
        %v251 = vpack.c.b16 %v239, %v238
        %v252 = vpack.c.b16 %v241, %v240
        %v253 = vpack.c.b16 %v243, %v242
        %v254 = vpack.c.b16 %v245, %v244
        %v296 = vunpack.c.l.b16 %v178
        %v297 = vunpack.c.h.b16 %v178
        %v298 = vunpack.c.l.b16 %v179
        %v299 = vunpack.c.l.b16 %v180
        %v300 = vunpack.c.h.b16 %v180
        %v301 = vunpack.c.l.b16 %v181
        %v302 = vunpack.c.l.b16 %v182
        %v303 = vunpack.c.h.b16 %v182
        %v304 = vunpack.c.l.b16 %v183
        %v305 = vunpack.c.l.b16 %v184
        %v306 = vunpack.c.h.b16 %v184
        %v307 = vunpack.c.l.b16 %v185
        %v308 = vunpack.c.l.b16 %v186
        %v309 = vunpack.c.h.b16 %v186
        %v310 = vunpack.c.l.b16 %v187
        %v311 = vunpack.c.l.b16 %v188
        %v312 = vunpack.c.h.b16 %v188
        %v313 = vunpack.c.l.b16 %v189
        %v314 = vunpack.c.l.b16 %v190
        %v315 = vunpack.c.h.b16 %v190
        %v316 = vunpack.c.l.b16 %v191
        %v317 = vunpack.c.l.b16 %v192
        %v318 = vunpack.c.h.b16 %v192
        %v319 = vunpack.c.l.b16 %v193
        %v320 = vunpack.c.l.b16 %v194
        %v321 = vunpack.c.h.b16 %v194
        %v322 = vunpack.c.l.b16 %v195
        %v323 = vunpack.c.l.b16 %v196
        %v324 = vunpack.c.h.b16 %v196
        %v325 = vunpack.c.l.b16 %v197
        %v326 = vunpack.c.l.b16 %v198
        %v327 = vunpack.c.h.b16 %v198
        %v328 = vunpack.c.l.b16 %v199
        %v329 = vunpack.c.l.b16 %v200
        %v330 = vunpack.c.h.b16 %v200
        %v331 = vunpack.c.l.b16 %v201
        %v332 = vunpack.c.l.b16 %v202
        %v333 = vunpack.c.h.b16 %v202
        %v334 = vunpack.c.l.b16 %v203
        %v335 = vunpack.c.l.b16 %v204
        %v336 = vunpack.c.h.b16 %v204
        %v337 = vunpack.c.l.b16 %v205
        %v338 = vunpack.c.l.b16 %v206
        %v339 = vunpack.c.h.b16 %v206
        %v340 = vunpack.c.l.b16 %v207
        %v341 = vunpack.c.l.b16 %v208
        %v342 = vunpack.c.h.b16 %v208
        %v343 = vunpack.c.l.b16 %v209
        %v344 = vpack.c.b16 %v299, %v296
        %v345 = vpack.c.b16 %v300, %v297
        %v346 = vpack.c.b16 %v301, %v298
        %v347 = vpack.c.b16 %v305, %v302
        %v348 = vpack.c.b16 %v306, %v303
        %v349 = vpack.c.b16 %v307, %v304
        %v350 = vpack.c.b16 %v311, %v308
        %v351 = vpack.c.b16 %v312, %v309
        %v352 = vpack.c.b16 %v313, %v310
        %v353 = vpack.c.b16 %v317, %v314
        %v354 = vpack.c.b16 %v318, %v315
        %v355 = vpack.c.b16 %v319, %v316
        %v356 = vpack.c.b16 %v323, %v320
        %v357 = vpack.c.b16 %v324, %v321
        %v358 = vpack.c.b16 %v325, %v322
        %v359 = vpack.c.b16 %v329, %v326
        %v360 = vpack.c.b16 %v330, %v327
        %v361 = vpack.c.b16 %v331, %v328
        %v362 = vpack.c.b16 %v335, %v332
        %v363 = vpack.c.b16 %v336, %v333
        %v364 = vpack.c.b16 %v337, %v334
        %v365 = vpack.c.b16 %v341, %v338
        %v366 = vpack.c.b16 %v342, %v339
        %v367 = vpack.c.b16 %v343, %v340
        %392 = vmatprep.subr.bf16.mxu0 %v345
        %393 = vmatpush1.bf16.msra.mxu0 %v344
        %394 = vmatprep.subr.bf16.mxu0 %v348
        %395 = vmatpush1.bf16.msra.mxu0 %v347
        %396 = vmatprep.subr.bf16.mxu0 %v351
        %397 = vmatpush1.bf16.msra.mxu0 %v350
        %398 = vmatprep.subr.bf16.mxu0 %v354
        %399 = vmatpush1.bf16.msra.mxu0 %v353
        %400 = vmatprep.subr.bf16.mxu0 %v357
        %401 = vmatpush1.bf16.msra.mxu0 %v356
        %402 = vmatprep.subr.bf16.mxu0 %v360
        %403 = vmatpush1.bf16.msra.mxu0 %v359
        %404 = vmatprep.subr.bf16.mxu0 %v363
        %405 = vmatpush1.bf16.msra.mxu0 %v362
        %406 = vmatprep.subr.bf16.mxu0 %v366
        %407 = vmatpush1.bf16.msra.mxu0 %v365
        %408 = vmatprep.subr.bf16.mxu0 0
        %409 = vmatpush1.bf16.msra.mxu0 0
        %410 = vmatprep.subr.bf16.mxu0 0
        %411 = vmatpush1.bf16.msra.mxu0 0
        %412 = vmatprep.subr.bf16.mxu0 0
        %413 = vmatpush1.bf16.msra.mxu0 0
        %414 = vmatprep.subr.bf16.mxu0 0
        %415 = vmatpush1.bf16.msra.mxu0 0
        %416 = vmatprep.subr.bf16.mxu0 0
        %417 = vmatpush1.bf16.msra.mxu0 0
        %418 = vmatprep.subr.bf16.mxu0 0
        %419 = vmatpush1.bf16.msra.mxu0 0
        %420 = vmatprep.subr.bf16.mxu0 0
        %421 = vmatpush1.bf16.msra.mxu0 0
        %422 = vmatprep.subr.bf16.mxu0 0
        %423 = vmatpush1.bf16.msra.mxu0 0
        %424 = vmatprep.mubr.bf16.mxu0 0
        %425 = vmatmul.mubr.bf16.gmra.mrb[0].mxu0 %v246
        %v426 = vpop.f32.mrb[0].mxu0
        %v427 = vadd.f32 0.0, %v426
        %v428 = vpop.f32.mrb[0].mxu0
        %v429 = vadd.f32 0.0, %v428
        %v430 = vpop.f32.mrb[0].mxu0
        %v431 = vadd.f32 0.0, %v430
        %v432 = vpop.f32.mrb[0].mxu0
        %v433 = vadd.f32 0.0, %v432
        %434 = vmatprep.mubr.bf16.mxu0 0
        %435 = vmatmul.mubr.bf16.gmra.mrb[0].mxu0 %v247
        %v436 = vpop.f32.mrb[0].mxu0
        %v437 = vadd.f32 0.0, %v436
        %v438 = vpop.f32.mrb[0].mxu0
        %v439 = vadd.f32 0.0, %v438
        %v440 = vpop.f32.mrb[0].mxu0
        %v441 = vadd.f32 0.0, %v440
        %v442 = vpop.f32.mrb[0].mxu0
        %v443 = vadd.f32 0.0, %v442
        %444 = vmatprep.mubr.bf16.mxu0 0
        %445 = vmatmul.mubr.bf16.gmra.mrb[0].mxu0 %v248
        %v446 = vpop.f32.mrb[0].mxu0
        %v447 = vadd.f32 0.0, %v446
        %v448 = vpop.f32.mrb[0].mxu0
        %v449 = vadd.f32 0.0, %v448
        %v450 = vpop.f32.mrb[0].mxu0
        %v451 = vadd.f32 0.0, %v450
        %v452 = vpop.f32.mrb[0].mxu0
        %v453 = vadd.f32 0.0, %v452
        %454 = vmatprep.mubr.bf16.mxu0 0
        %455 = vmatmul.mubr.bf16.gmra.mrb[0].mxu0 %v249
        %v456 = vpop.f32.mrb[0].mxu0
        %v457 = vadd.f32 0.0, %v456
        %v458 = vpop.f32.mrb[0].mxu0
        %v459 = vadd.f32 0.0, %v458
        %v460 = vpop.f32.mrb[0].mxu0
        %v461 = vadd.f32 0.0, %v460
        %v462 = vpop.f32.mrb[0].mxu0
        %v463 = vadd.f32 0.0, %v462
        %464 = vmatprep.mubr.bf16.mxu0 0
        %465 = vmatmul.mubr.bf16.gmra.mrb[0].mxu0 %v250
        %v466 = vpop.f32.mrb[0].mxu0
        %v467 = vadd.f32 0.0, %v466
        %v468 = vpop.f32.mrb[0].mxu0
        %v469 = vadd.f32 0.0, %v468
        %v470 = vpop.f32.mrb[0].mxu0
        %v471 = vadd.f32 0.0, %v470
        %v472 = vpop.f32.mrb[0].mxu0
        %v473 = vadd.f32 0.0, %v472
        %474 = vmatprep.mubr.bf16.mxu0 0
        %475 = vmatmul.mubr.bf16.gmra.mrb[0].mxu0 %v251
        %v476 = vpop.f32.mrb[0].mxu0
        %v477 = vadd.f32 0.0, %v476
        %v478 = vpop.f32.mrb[0].mxu0
        %v479 = vadd.f32 0.0, %v478
        %v480 = vpop.f32.mrb[0].mxu0
        %v481 = vadd.f32 0.0, %v480
        %v482 = vpop.f32.mrb[0].mxu0
        %v483 = vadd.f32 0.0, %v482
        %484 = vmatprep.mubr.bf16.mxu0 0
        %485 = vmatmul.mubr.bf16.gmra.mrb[0].mxu0 %v252
        %v486 = vpop.f32.mrb[0].mxu0
        %v487 = vadd.f32 0.0, %v486
        %v488 = vpop.f32.mrb[0].mxu0
        %v489 = vadd.f32 0.0, %v488
        %v490 = vpop.f32.mrb[0].mxu0
        %v491 = vadd.f32 0.0, %v490
        %v492 = vpop.f32.mrb[0].mxu0
        %v493 = vadd.f32 0.0, %v492
        %494 = vmatprep.mubr.bf16.mxu0 0
        %495 = vmatmul.mubr.bf16.gmra.mrb[0].mxu0 %v253
        %v496 = vpop.f32.mrb[0].mxu0
        %v497 = vadd.f32 0.0, %v496
        %v498 = vpop.f32.mrb[0].mxu0
        %v499 = vadd.f32 0.0, %v498
        %v500 = vpop.f32.mrb[0].mxu0
        %v501 = vadd.f32 0.0, %v500
        %v502 = vpop.f32.mrb[0].mxu0
        %v503 = vadd.f32 0.0, %v502
        %504 = vmatprep.mubr.bf16.mxu0 0
        %505 = vmatmul.mubr.bf16.gmra.mrb[0].mxu0 %v254
        %v506 = vpop.f32.mrb[0].mxu0
        %v507 = vadd.f32 0.0, %v506
        %v508 = vpop.f32.mrb[0].mxu0
        %v509 = vadd.f32 0.0, %v508
        %v510 = vpop.f32.mrb[0].mxu0
        %v511 = vadd.f32 0.0, %v510
        %v512 = vpop.f32.mrb[0].mxu0
        %v513 = vadd.f32 0.0, %v512
        %514 = vdwg.mxu0
        %515 = vmatprep.subr.bf16.mxu0 0
        %516 = vmatpush1.bf16.msra.mxu0 %v346
        %517 = vmatprep.subr.bf16.mxu0 0
        %518 = vmatpush1.bf16.msra.mxu0 %v349
        %519 = vmatprep.subr.bf16.mxu0 0
        %520 = vmatpush1.bf16.msra.mxu0 %v352
        %521 = vmatprep.subr.bf16.mxu0 0
        %522 = vmatpush1.bf16.msra.mxu0 %v355
        %523 = vmatprep.subr.bf16.mxu0 0
        %524 = vmatpush1.bf16.msra.mxu0 %v358
        %525 = vmatprep.subr.bf16.mxu0 0
        %526 = vmatpush1.bf16.msra.mxu0 %v361
        %527 = vmatprep.subr.bf16.mxu0 0
        %528 = vmatpush1.bf16.msra.mxu0 %v364
        %529 = vmatprep.subr.bf16.mxu0 0
        %530 = vmatpush1.bf16.msra.mxu0 %v367
        %531 = vmatprep.subr.bf16.mxu0 0
        %532 = vmatpush1.bf16.msra.mxu0 0
        %533 = vmatprep.subr.bf16.mxu0 0
        %534 = vmatpush1.bf16.msra.mxu0 0
        %535 = vmatprep.subr.bf16.mxu0 0
        %536 = vmatpush1.bf16.msra.mxu0 0
        %537 = vmatprep.subr.bf16.mxu0 0
        %538 = vmatpush1.bf16.msra.mxu0 0
        %539 = vmatprep.subr.bf16.mxu0 0
        %540 = vmatpush1.bf16.msra.mxu0 0
        %541 = vmatprep.subr.bf16.mxu0 0
        %542 = vmatpush1.bf16.msra.mxu0 0
        %543 = vmatprep.subr.bf16.mxu0 0
        %544 = vmatpush1.bf16.msra.mxu0 0
        %545 = vmatprep.subr.bf16.mxu0 0
        %546 = vmatpush1.bf16.msra.mxu0 0
        %547 = vmatprep.mubr.bf16.mxu0 0
        %548 = vmatmul.mubr.bf16.gmra.mrb[0].mxu0 %v246
        %v549 = vpop.f32.mrb[0].mxu0
        %v550 = vadd.f32 0.0, %v549
        %v551 = vpop.f32.mrb[0].mxu0
        %v552 = vpop.f32.mrb[0].mxu0
        %v553 = vadd.f32 0.0, %v552
        %v554 = vpop.f32.mrb[0].mxu0
        %555 = vmatprep.mubr.bf16.mxu0 0
        %556 = vmatmul.mubr.bf16.gmra.mrb[0].mxu0 %v247
        %v557 = vpop.f32.mrb[0].mxu0
        %v558 = vadd.f32 0.0, %v557
        %v559 = vpop.f32.mrb[0].mxu0
        %v560 = vpop.f32.mrb[0].mxu0
        %v561 = vadd.f32 0.0, %v560
        %v562 = vpop.f32.mrb[0].mxu0
        %563 = vmatprep.mubr.bf16.mxu0 0
        %564 = vmatmul.mubr.bf16.gmra.mrb[0].mxu0 %v248
        %v565 = vpop.f32.mrb[0].mxu0
        %v566 = vadd.f32 0.0, %v565
        %v567 = vpop.f32.mrb[0].mxu0
        %v568 = vpop.f32.mrb[0].mxu0
        %v569 = vadd.f32 0.0, %v568
        %v570 = vpop.f32.mrb[0].mxu0
        %571 = vmatprep.mubr.bf16.mxu0 0
        %572 = vmatmul.mubr.bf16.gmra.mrb[0].mxu0 %v249
        %v573 = vpop.f32.mrb[0].mxu0
        %v574 = vadd.f32 0.0, %v573
        %v575 = vpop.f32.mrb[0].mxu0
        %v576 = vpop.f32.mrb[0].mxu0
        %v577 = vadd.f32 0.0, %v576
        %v578 = vpop.f32.mrb[0].mxu0
        %579 = vmatprep.mubr.bf16.mxu0 0
        %580 = vmatmul.mubr.bf16.gmra.mrb[0].mxu0 %v250
        %v581 = vpop.f32.mrb[0].mxu0
        %v582 = vadd.f32 0.0, %v581
        %v583 = vpop.f32.mrb[0].mxu0
        %v584 = vpop.f32.mrb[0].mxu0
        %v585 = vadd.f32 0.0, %v584
        %v586 = vpop.f32.mrb[0].mxu0
        %587 = vmatprep.mubr.bf16.mxu0 0
        %588 = vmatmul.mubr.bf16.gmra.mrb[0].mxu0 %v251
        %v589 = vpop.f32.mrb[0].mxu0
        %v590 = vadd.f32 0.0, %v589
        %v591 = vpop.f32.mrb[0].mxu0
        %v592 = vpop.f32.mrb[0].mxu0
        %v593 = vadd.f32 0.0, %v592
        %v594 = vpop.f32.mrb[0].mxu0
        %595 = vmatprep.mubr.bf16.mxu0 0
        %596 = vmatmul.mubr.bf16.gmra.mrb[0].mxu0 %v252
        %v597 = vpop.f32.mrb[0].mxu0
        %v598 = vadd.f32 0.0, %v597
        %v599 = vpop.f32.mrb[0].mxu0
        %v600 = vpop.f32.mrb[0].mxu0
        %v601 = vadd.f32 0.0, %v600
        %v602 = vpop.f32.mrb[0].mxu0
        %603 = vmatprep.mubr.bf16.mxu0 0
        %604 = vmatmul.mubr.bf16.gmra.mrb[0].mxu0 %v253
        %v605 = vpop.f32.mrb[0].mxu0
        %v606 = vadd.f32 0.0, %v605
        %v607 = vpop.f32.mrb[0].mxu0
        %v608 = vpop.f32.mrb[0].mxu0
        %v609 = vadd.f32 0.0, %v608
        %v610 = vpop.f32.mrb[0].mxu0
        %611 = vmatprep.mubr.bf16.mxu0 0
        %612 = vmatmul.mubr.bf16.gmra.mrb[0].mxu0 %v254
        %v613 = vpop.f32.mrb[0].mxu0
        %v614 = vadd.f32 0.0, %v613
        %v615 = vpop.f32.mrb[0].mxu0
        %v616 = vpop.f32.mrb[0].mxu0
        %v617 = vadd.f32 0.0, %v616
        %v618 = vpop.f32.mrb[0].mxu0
        %619 = vdwg.mxu0
        %v620 = vpack.c.bf16 %v431, %v427
        %v621 = vpack.c.bf16 %v441, %v437
        %v622 = vpack.c.bf16 %v451, %v447
        %v623 = vpack.c.bf16 %v461, %v457
        %v624 = vpack.c.bf16 %v471, %v467
        %v625 = vpack.c.bf16 %v481, %v477
        %v626 = vpack.c.bf16 %v491, %v487
        %v627 = vpack.c.bf16 %v501, %v497
        %v628 = vpack.c.bf16 %v511, %v507
        %v629 = vpack.c.bf16 %v433, %v429
        %v630 = vpack.c.bf16 %v443, %v439
        %v631 = vpack.c.bf16 %v453, %v449
        %v632 = vpack.c.bf16 %v463, %v459
        %v633 = vpack.c.bf16 %v473, %v469
        %v634 = vpack.c.bf16 %v483, %v479
        %v635 = vpack.c.bf16 %v493, %v489
        %v636 = vpack.c.bf16 %v503, %v499
        %v637 = vpack.c.bf16 %v513, %v509
        %v638 = vpack.c.bf16 %v553, %v550
        %v639 = vpack.c.bf16 %v561, %v558
        %v640 = vpack.c.bf16 %v569, %v566
        %v641 = vpack.c.bf16 %v577, %v574
        %v642 = vpack.c.bf16 %v585, %v582
        %v643 = vpack.c.bf16 %v593, %v590
        %v644 = vpack.c.bf16 %v601, %v598
        %v645 = vpack.c.bf16 %v609, %v606
        %v646 = vpack.c.bf16 %v617, %v614
        %vm647 = vcmask 261120
        %v649 = vsel %vm647, %v620, 0
        %v652 = vsel %vm647, %v621, 0
        %v655 = vsel %vm647, %v622, 0
        %v658 = vsel %vm647, %v623, 0
        %v661 = vsel %vm647, %v624, 0
        %v664 = vsel %vm647, %v625, 0
        %v667 = vsel %vm647, %v626, 0
        %v670 = vsel %vm647, %v627, 0
        %v673 = vsel %vm647, %v628, 0
        %v676 = vsel %vm647, %v629, 0
        %v679 = vsel %vm647, %v630, 0
        %v682 = vsel %vm647, %v631, 0
        %v685 = vsel %vm647, %v632, 0
        %v688 = vsel %vm647, %v633, 0
        %v691 = vsel %vm647, %v634, 0
        %v694 = vsel %vm647, %v635, 0
        %v697 = vsel %vm647, %v636, 0
        %v700 = vsel %vm647, %v637, 0
        %702 = vmatprep.subr.bf16.mxu0 0
        %703 = vmatpush1.bf16.xpose.msra.mxu0 %v676
        %704 = vmatprep.subr.bf16.mxu0 0
        %705 = vmatpush1.bf16.xpose.msra.mxu0 %v679
        %706 = vmatprep.subr.bf16.mxu0 0
        %707 = vmatpush1.bf16.xpose.msra.mxu0 %v682
        %708 = vmatprep.subr.bf16.mxu0 0
        %709 = vmatpush1.bf16.xpose.msra.mxu0 %v685
        %710 = vmatprep.subr.bf16.mxu0 0
        %711 = vmatpush1.bf16.xpose.msra.mxu0 %v688
        %712 = vmatprep.subr.bf16.mxu0 0
        %713 = vmatpush1.bf16.xpose.msra.mxu0 %v691
        %714 = vmatprep.subr.bf16.mxu0 0
        %715 = vmatpush1.bf16.xpose.msra.mxu0 %v694
        %716 = vmatprep.subr.bf16.mxu0 0
        %717 = vmatpush1.bf16.xpose.msra.mxu0 %v697
        %718 = vmatprep.subr.bf16.mxu0 0
        %719 = vmatpush1.bf16.xpose.msra.mxu0 %v700
        %720 = vmatprep.subr.bf16.mxu0 0
        %721 = vmatpush1.bf16.xpose.msra.mxu0 0
        %722 = vmatprep.subr.bf16.mxu0 0
        %723 = vmatpush1.bf16.xpose.msra.mxu0 0
        %724 = vmatprep.subr.bf16.mxu0 0
        %725 = vmatpush1.bf16.xpose.msra.mxu0 0
        %726 = vmatprep.subr.bf16.mxu0 0
        %727 = vmatpush1.bf16.xpose.msra.mxu0 0
        %728 = vmatprep.subr.bf16.mxu0 0
        %729 = vmatpush1.bf16.xpose.msra.mxu0 0
        %730 = vmatprep.subr.bf16.mxu0 0
        %731 = vmatpush1.bf16.xpose.msra.mxu0 0
        %732 = vmatprep.subr.bf16.mxu0 0
        %733 = vmatpush1.bf16.xpose.msra.mxu0 0
        %734 = vmatprep.mubr.bf16.mxu0 0
        %735 = vmatmul.mubr.bf16.gmra.mrb[0].mxu0 %v649
        %v736 = vpop.f32.mrb[0].mxu0
        %v737 = vadd.f32 0.0, %v736
        %v738 = vpop.f32.mrb[0].mxu0
        %v739 = vadd.f32 0.0, %v738
        %v740 = vpop.f32.mrb[0].mxu0
        %v741 = vadd.f32 0.0, %v740
        %v742 = vpop.f32.mrb[0].mxu0
        %v743 = vadd.f32 0.0, %v742
        %744 = vmatprep.mubr.bf16.mxu0 0
        %745 = vmatmul.mubr.bf16.gmra.mrb[0].mxu0 %v652
        %v746 = vpop.f32.mrb[0].mxu0
        %v747 = vadd.f32 0.0, %v746
        %v748 = vpop.f32.mrb[0].mxu0
        %v749 = vadd.f32 0.0, %v748
        %v750 = vpop.f32.mrb[0].mxu0
        %v751 = vadd.f32 0.0, %v750
        %v752 = vpop.f32.mrb[0].mxu0
        %v753 = vadd.f32 0.0, %v752
        %754 = vmatprep.mubr.bf16.mxu0 0
        %755 = vmatmul.mubr.bf16.gmra.mrb[0].mxu0 %v655
        %v756 = vpop.f32.mrb[0].mxu0
        %v757 = vadd.f32 0.0, %v756
        %v758 = vpop.f32.mrb[0].mxu0
        %v759 = vadd.f32 0.0, %v758
        %v760 = vpop.f32.mrb[0].mxu0
        %v761 = vadd.f32 0.0, %v760
        %v762 = vpop.f32.mrb[0].mxu0
        %v763 = vadd.f32 0.0, %v762
        %764 = vmatprep.mubr.bf16.mxu0 0
        %765 = vmatmul.mubr.bf16.gmra.mrb[0].mxu0 %v658
        %v766 = vpop.f32.mrb[0].mxu0
        %v767 = vadd.f32 0.0, %v766
        %v768 = vpop.f32.mrb[0].mxu0
        %v769 = vadd.f32 0.0, %v768
        %v770 = vpop.f32.mrb[0].mxu0
        %v771 = vadd.f32 0.0, %v770
        %v772 = vpop.f32.mrb[0].mxu0
        %v773 = vadd.f32 0.0, %v772
        %774 = vmatprep.mubr.bf16.mxu0 0
        %775 = vmatmul.mubr.bf16.gmra.mrb[0].mxu0 %v661
        %v776 = vpop.f32.mrb[0].mxu0
        %v777 = vadd.f32 0.0, %v776
        %v778 = vpop.f32.mrb[0].mxu0
        %v779 = vadd.f32 0.0, %v778
        %v780 = vpop.f32.mrb[0].mxu0
        %v781 = vadd.f32 0.0, %v780
        %v782 = vpop.f32.mrb[0].mxu0
        %v783 = vadd.f32 0.0, %v782
        %784 = vmatprep.mubr.bf16.mxu0 0
        %785 = vmatmul.mubr.bf16.gmra.mrb[0].mxu0 %v664
        %v786 = vpop.f32.mrb[0].mxu0
        %v787 = vadd.f32 0.0, %v786
        %v788 = vpop.f32.mrb[0].mxu0
        %v789 = vadd.f32 0.0, %v788
        %v790 = vpop.f32.mrb[0].mxu0
        %v791 = vadd.f32 0.0, %v790
        %v792 = vpop.f32.mrb[0].mxu0
        %v793 = vadd.f32 0.0, %v792
        %794 = vmatprep.mubr.bf16.mxu0 0
        %795 = vmatmul.mubr.bf16.gmra.mrb[0].mxu0 %v667
        %v796 = vpop.f32.mrb[0].mxu0
        %v797 = vadd.f32 0.0, %v796
        %v798 = vpop.f32.mrb[0].mxu0
        %v799 = vadd.f32 0.0, %v798
        %v800 = vpop.f32.mrb[0].mxu0
        %v801 = vadd.f32 0.0, %v800
        %v802 = vpop.f32.mrb[0].mxu0
        %v803 = vadd.f32 0.0, %v802
        %804 = vmatprep.mubr.bf16.mxu0 0
        %805 = vmatmul.mubr.bf16.gmra.mrb[0].mxu0 %v670
        %v806 = vpop.f32.mrb[0].mxu0
        %v807 = vadd.f32 0.0, %v806
        %v808 = vpop.f32.mrb[0].mxu0
        %v809 = vadd.f32 0.0, %v808
        %v810 = vpop.f32.mrb[0].mxu0
        %v811 = vadd.f32 0.0, %v810
        %v812 = vpop.f32.mrb[0].mxu0
        %v813 = vadd.f32 0.0, %v812
        %814 = vmatprep.mubr.bf16.mxu0 0
        %815 = vmatmul.mubr.bf16.gmra.mrb[0].mxu0 %v673
        %v816 = vpop.f32.mrb[0].mxu0
        %v817 = vadd.f32 0.0, %v816
        %v818 = vpop.f32.mrb[0].mxu0
        %v819 = vadd.f32 0.0, %v818
        %v820 = vpop.f32.mrb[0].mxu0
        %v821 = vadd.f32 0.0, %v820
        %v822 = vpop.f32.mrb[0].mxu0
        %v823 = vadd.f32 0.0, %v822
        %824 = vdwg.mxu0
        %vm825 = vcmask 130048
        %v826 = vsel %vm825, %v739, -inf
        %v827 = vmax.f32 %v737, %v826
        %828 = vmax.xlane.f32.xlu0 %v827
        %v829 = vpop.xlane.xlu0 %828
        %v830 = vsel %vm825, %v743, -inf
        %v831 = vmax.f32 %v741, %v830
        %832 = vmax.xlane.f32.xlu0 %v831
        %v833 = vpop.xlane.xlu0 %832
        %v834 = vsel %vm825, %v749, -inf
        %v835 = vmax.f32 %v747, %v834
        %836 = vmax.xlane.f32.xlu0 %v835
        %v837 = vpop.xlane.xlu0 %836
        %v838 = vsel %vm825, %v753, -inf
        %v839 = vmax.f32 %v751, %v838
        %840 = vmax.xlane.f32.xlu0 %v839
        %v841 = vpop.xlane.xlu0 %840
        %v842 = vsel %vm825, %v759, -inf
        %v843 = vmax.f32 %v757, %v842
        %844 = vmax.xlane.f32.xlu0 %v843
        %v845 = vpop.xlane.xlu0 %844
        %v846 = vsel %vm825, %v763, -inf
        %v847 = vmax.f32 %v761, %v846
        %848 = vmax.xlane.f32.xlu0 %v847
        %v849 = vpop.xlane.xlu0 %848
        %v850 = vsel %vm825, %v769, -inf
        %v851 = vmax.f32 %v767, %v850
        %852 = vmax.xlane.f32.xlu0 %v851
        %v853 = vpop.xlane.xlu0 %852
        %v854 = vsel %vm825, %v773, -inf
        %v855 = vmax.f32 %v771, %v854
        %856 = vmax.xlane.f32.xlu0 %v855
        %v857 = vpop.xlane.xlu0 %856
        %v858 = vsel %vm825, %v779, -inf
        %v859 = vmax.f32 %v777, %v858
        %860 = vmax.xlane.f32.xlu0 %v859
        %v861 = vpop.xlane.xlu0 %860
        %v862 = vsel %vm825, %v783, -inf
        %v863 = vmax.f32 %v781, %v862
        %864 = vmax.xlane.f32.xlu0 %v863
        %v865 = vpop.xlane.xlu0 %864
        %v866 = vsel %vm825, %v789, -inf
        %v867 = vmax.f32 %v787, %v866
        %868 = vmax.xlane.f32.xlu0 %v867
        %v869 = vpop.xlane.xlu0 %868
        %v870 = vsel %vm825, %v793, -inf
        %v871 = vmax.f32 %v791, %v870
        %872 = vmax.xlane.f32.xlu0 %v871
        %v873 = vpop.xlane.xlu0 %872
        %v874 = vsel %vm825, %v799, -inf
        %v875 = vmax.f32 %v797, %v874
        %876 = vmax.xlane.f32.xlu0 %v875
        %v877 = vpop.xlane.xlu0 %876
        %v878 = vsel %vm825, %v803, -inf
        %v879 = vmax.f32 %v801, %v878
        %880 = vmax.xlane.f32.xlu0 %v879
        %v881 = vpop.xlane.xlu0 %880
        %v882 = vsel %vm825, %v809, -inf
        %v883 = vmax.f32 %v807, %v882
        %884 = vmax.xlane.f32.xlu0 %v883
        %v885 = vpop.xlane.xlu0 %884
        %v886 = vsel %vm825, %v813, -inf
        %v887 = vmax.f32 %v811, %v886
        %888 = vmax.xlane.f32.xlu0 %v887
        %v889 = vpop.xlane.xlu0 %888
        %v890 = vsel %vm825, %v819, -inf
        %v891 = vmax.f32 %v817, %v890
        %892 = vmax.xlane.f32.xlu0 %v891
        %v893 = vpop.xlane.xlu0 %892
        %v894 = vsel %vm825, %v823, -inf
        %v895 = vmax.f32 %v821, %v894
        %896 = vmax.xlane.f32.xlu0 %v895
        %v897 = vpop.xlane.xlu0 %896
        %v898 = vsub.f32 %v737, %v829
        %v899 = vsub.f32 %v739, %v829
        %v900 = vsub.f32 %v741, %v833
        %v901 = vsub.f32 %v743, %v833
        %v902 = vsub.f32 %v747, %v837
        %v903 = vsub.f32 %v749, %v837
        %v904 = vsub.f32 %v751, %v841
        %v905 = vsub.f32 %v753, %v841
        %v906 = vsub.f32 %v757, %v845
        %v907 = vsub.f32 %v759, %v845
        %v908 = vsub.f32 %v761, %v849
        %v909 = vsub.f32 %v763, %v849
        %v910 = vsub.f32 %v767, %v853
        %v911 = vsub.f32 %v769, %v853
        %v912 = vsub.f32 %v771, %v857
        %v913 = vsub.f32 %v773, %v857
        %v914 = vsub.f32 %v777, %v861
        %v915 = vsub.f32 %v779, %v861
        %v916 = vsub.f32 %v781, %v865
        %v917 = vsub.f32 %v783, %v865
        %v918 = vsub.f32 %v787, %v869
        %v919 = vsub.f32 %v789, %v869
        %v920 = vsub.f32 %v791, %v873
        %v921 = vsub.f32 %v793, %v873
        %v922 = vsub.f32 %v797, %v877
        %v923 = vsub.f32 %v799, %v877
        %v924 = vsub.f32 %v801, %v881
        %v925 = vsub.f32 %v803, %v881
        %v926 = vsub.f32 %v807, %v885
        %v927 = vsub.f32 %v809, %v885
        %v928 = vsub.f32 %v811, %v889
        %v929 = vsub.f32 %v813, %v889
        %v930 = vsub.f32 %v817, %v893
        %v931 = vsub.f32 %v819, %v893
        %v932 = vsub.f32 %v821, %v897
        %v933 = vsub.f32 %v823, %v897
        %v934 = vmul.f32 %v898, 1.442695
        %v935 = vpow.pop %v934
        %v936 = vmul.f32 %v899, 1.442695
        %v937 = vpow.pop %v936
        %v938 = vmul.f32 %v900, 1.442695
        %v939 = vpow.pop %v938
        %v940 = vmul.f32 %v901, 1.442695
        %v941 = vpow.pop %v940
        %v942 = vmul.f32 %v902, 1.442695
        %v943 = vpow.pop %v942
        %v944 = vmul.f32 %v903, 1.442695
        %v945 = vpow.pop %v944
        %v946 = vmul.f32 %v904, 1.442695
        %v947 = vpow.pop %v946
        %v948 = vmul.f32 %v905, 1.442695
        %v949 = vpow.pop %v948
        %v950 = vmul.f32 %v906, 1.442695
        %v951 = vpow.pop %v950
        %v952 = vmul.f32 %v907, 1.442695
        %v953 = vpow.pop %v952
        %v954 = vmul.f32 %v908, 1.442695
        %v955 = vpow.pop %v954
        %v956 = vmul.f32 %v909, 1.442695
        %v957 = vpow.pop %v956
        %v958 = vmul.f32 %v910, 1.442695
        %v959 = vpow.pop %v958
        %v960 = vmul.f32 %v911, 1.442695
        %v961 = vpow.pop %v960
        %v962 = vmul.f32 %v912, 1.442695
        %v963 = vpow.pop %v962
        %v964 = vmul.f32 %v913, 1.442695
        %v965 = vpow.pop %v964
        %v966 = vmul.f32 %v914, 1.442695
        %v967 = vpow.pop %v966
        %v968 = vmul.f32 %v915, 1.442695
        %v969 = vpow.pop %v968
        %v970 = vmul.f32 %v916, 1.442695
        %v971 = vpow.pop %v970
        %v972 = vmul.f32 %v917, 1.442695
        %v973 = vpow.pop %v972
        %v974 = vmul.f32 %v918, 1.442695
        %v975 = vpow.pop %v974
        %v976 = vmul.f32 %v919, 1.442695
        %v977 = vpow.pop %v976
        %v978 = vmul.f32 %v920, 1.442695
        %v979 = vpow.pop %v978
        %v980 = vmul.f32 %v921, 1.442695
        %v981 = vpow.pop %v980
        %v982 = vmul.f32 %v922, 1.442695
        %v983 = vpow.pop %v982
        %v984 = vmul.f32 %v923, 1.442695
        %v985 = vpow.pop %v984
        %v986 = vmul.f32 %v924, 1.442695
        %v987 = vpow.pop %v986
        %v988 = vmul.f32 %v925, 1.442695
        %v989 = vpow.pop %v988
        %v990 = vmul.f32 %v926, 1.442695
        %v991 = vpow.pop %v990
        %v992 = vmul.f32 %v927, 1.442695
        %v993 = vpow.pop %v992
        %v994 = vmul.f32 %v928, 1.442695
        %v995 = vpow.pop %v994
        %v996 = vmul.f32 %v929, 1.442695
        %v997 = vpow.pop %v996
        %v998 = vmul.f32 %v930, 1.442695
        %v999 = vpow.pop %v998
        %v1000 = vmul.f32 %v931, 1.442695
        %v1001 = vpow.pop %v1000
        %v1002 = vmul.f32 %v932, 1.442695
        %v1003 = vpow.pop %v1002
        %v1004 = vmul.f32 %v933, 1.442695
        %v1005 = vpow.pop %v1004
        %v1006 = vsel %vm825, %v937, 0.0
        %v1007 = vadd.f32 %v935, %v1006
        %1008 = vadd.xlane.f32.xlu0 %v1007
        %v1009 = vpop.xlane.xlu0 %1008
        %v1010 = vsel %vm825, %v941, 0.0
        %v1011 = vadd.f32 %v939, %v1010
        %1012 = vadd.xlane.f32.xlu0 %v1011
        %v1013 = vpop.xlane.xlu0 %1012
        %v1014 = vsel %vm825, %v945, 0.0
        %v1015 = vadd.f32 %v943, %v1014
        %1016 = vadd.xlane.f32.xlu0 %v1015
        %v1017 = vpop.xlane.xlu0 %1016
        %v1018 = vsel %vm825, %v949, 0.0
        %v1019 = vadd.f32 %v947, %v1018
        %1020 = vadd.xlane.f32.xlu0 %v1019
        %v1021 = vpop.xlane.xlu0 %1020
        %v1022 = vsel %vm825, %v953, 0.0
        %v1023 = vadd.f32 %v951, %v1022
        %1024 = vadd.xlane.f32.xlu0 %v1023
        %v1025 = vpop.xlane.xlu0 %1024
        %v1026 = vsel %vm825, %v957, 0.0
        %v1027 = vadd.f32 %v955, %v1026
        %1028 = vadd.xlane.f32.xlu0 %v1027
        %v1029 = vpop.xlane.xlu0 %1028
        %v1030 = vsel %vm825, %v961, 0.0
        %v1031 = vadd.f32 %v959, %v1030
        %1032 = vadd.xlane.f32.xlu0 %v1031
        %v1033 = vpop.xlane.xlu0 %1032
        %v1034 = vsel %vm825, %v965, 0.0
        %v1035 = vadd.f32 %v963, %v1034
        %1036 = vadd.xlane.f32.xlu0 %v1035
        %v1037 = vpop.xlane.xlu0 %1036
        %v1038 = vsel %vm825, %v969, 0.0
        %v1039 = vadd.f32 %v967, %v1038
        %1040 = vadd.xlane.f32.xlu0 %v1039
        %v1041 = vpop.xlane.xlu0 %1040
        %v1042 = vsel %vm825, %v973, 0.0
        %v1043 = vadd.f32 %v971, %v1042
        %1044 = vadd.xlane.f32.xlu0 %v1043
        %v1045 = vpop.xlane.xlu0 %1044
        %v1046 = vsel %vm825, %v977, 0.0
        %v1047 = vadd.f32 %v975, %v1046
        %1048 = vadd.xlane.f32.xlu0 %v1047
        %v1049 = vpop.xlane.xlu0 %1048
        %v1050 = vsel %vm825, %v981, 0.0
        %v1051 = vadd.f32 %v979, %v1050
        %1052 = vadd.xlane.f32.xlu0 %v1051
        %v1053 = vpop.xlane.xlu0 %1052
        %v1054 = vsel %vm825, %v985, 0.0
        %v1055 = vadd.f32 %v983, %v1054
        %1056 = vadd.xlane.f32.xlu0 %v1055
        %v1057 = vpop.xlane.xlu0 %1056
        %v1058 = vsel %vm825, %v989, 0.0
        %v1059 = vadd.f32 %v987, %v1058
        %1060 = vadd.xlane.f32.xlu0 %v1059
        %v1061 = vpop.xlane.xlu0 %1060
        %v1062 = vsel %vm825, %v993, 0.0
        %v1063 = vadd.f32 %v991, %v1062
        %1064 = vadd.xlane.f32.xlu0 %v1063
        %v1065 = vpop.xlane.xlu0 %1064
        %v1066 = vsel %vm825, %v997, 0.0
        %v1067 = vadd.f32 %v995, %v1066
        %1068 = vadd.xlane.f32.xlu0 %v1067
        %v1069 = vpop.xlane.xlu0 %1068
        %v1070 = vsel %vm825, %v1001, 0.0
        %v1071 = vadd.f32 %v999, %v1070
        %1072 = vadd.xlane.f32.xlu0 %v1071
        %v1073 = vpop.xlane.xlu0 %1072
        %v1074 = vsel %vm825, %v1005, 0.0
        %v1075 = vadd.f32 %v1003, %v1074
        %1076 = vadd.xlane.f32.xlu0 %v1075
        %v1077 = vpop.xlane.xlu0 %1076
        %v1078 = vrcp.pop %v1009
        %v1079 = vrcp.pop %v1013
        %v1080 = vrcp.pop %v1017
        %v1081 = vrcp.pop %v1021
        %v1082 = vrcp.pop %v1025
        %v1083 = vrcp.pop %v1029
        %v1084 = vrcp.pop %v1033
        %v1085 = vrcp.pop %v1037
        %v1086 = vrcp.pop %v1041
        %v1087 = vrcp.pop %v1045
        %v1088 = vrcp.pop %v1049
        %v1089 = vrcp.pop %v1053
        %v1090 = vrcp.pop %v1057
        %v1091 = vrcp.pop %v1061
        %v1092 = vrcp.pop %v1065
        %v1093 = vrcp.pop %v1069
        %v1094 = vrcp.pop %v1073
        %v1095 = vrcp.pop %v1077
        %v1096 = vmul.f32 %v935, %v1078
        %v1097 = vmul.f32 %v937, %v1078
        %v1098 = vmul.f32 %v939, %v1079
        %v1099 = vmul.f32 %v941, %v1079
        %v1100 = vmul.f32 %v943, %v1080
        %v1101 = vmul.f32 %v945, %v1080
        %v1102 = vmul.f32 %v947, %v1081
        %v1103 = vmul.f32 %v949, %v1081
        %v1104 = vmul.f32 %v951, %v1082
        %v1105 = vmul.f32 %v953, %v1082
        %v1106 = vmul.f32 %v955, %v1083
        %v1107 = vmul.f32 %v957, %v1083
        %v1108 = vmul.f32 %v959, %v1084
        %v1109 = vmul.f32 %v961, %v1084
        %v1110 = vmul.f32 %v963, %v1085
        %v1111 = vmul.f32 %v965, %v1085
        %v1112 = vmul.f32 %v967, %v1086
        %v1113 = vmul.f32 %v969, %v1086
        %v1114 = vmul.f32 %v971, %v1087
        %v1115 = vmul.f32 %v973, %v1087
        %v1116 = vmul.f32 %v975, %v1088
        %v1117 = vmul.f32 %v977, %v1088
        %v1118 = vmul.f32 %v979, %v1089
        %v1119 = vmul.f32 %v981, %v1089
        %v1120 = vmul.f32 %v983, %v1090
        %v1121 = vmul.f32 %v985, %v1090
        %v1122 = vmul.f32 %v987, %v1091
        %v1123 = vmul.f32 %v989, %v1091
        %v1124 = vmul.f32 %v991, %v1092
        %v1125 = vmul.f32 %v993, %v1092
        %v1126 = vmul.f32 %v995, %v1093
        %v1127 = vmul.f32 %v997, %v1093
        %v1128 = vmul.f32 %v999, %v1094
        %v1129 = vmul.f32 %v1001, %v1094
        %v1130 = vmul.f32 %v1003, %v1095
        %v1131 = vmul.f32 %v1005, %v1095
        %v1132 = vpack.c.bf16 %v1098, %v1096
        %v1133 = vpack.c.bf16 %v1099, %v1097
        %v1134 = vpack.c.bf16 %v1102, %v1100
        %v1135 = vpack.c.bf16 %v1103, %v1101
        %v1136 = vpack.c.bf16 %v1106, %v1104
        %v1137 = vpack.c.bf16 %v1107, %v1105
        %v1138 = vpack.c.bf16 %v1110, %v1108
        %v1139 = vpack.c.bf16 %v1111, %v1109
        %v1140 = vpack.c.bf16 %v1114, %v1112
        %v1141 = vpack.c.bf16 %v1115, %v1113
        %v1142 = vpack.c.bf16 %v1118, %v1116
        %v1143 = vpack.c.bf16 %v1119, %v1117
        %v1144 = vpack.c.bf16 %v1122, %v1120
        %v1145 = vpack.c.bf16 %v1123, %v1121
        %v1146 = vpack.c.bf16 %v1126, %v1124
        %v1147 = vpack.c.bf16 %v1127, %v1125
        %v1148 = vpack.c.bf16 %v1130, %v1128
        %v1149 = vpack.c.bf16 %v1131, %v1129
        %v1151 = vsel %vm825, %v1133, 0
        %v1154 = vsel %vm825, %v1135, 0
        %v1157 = vsel %vm825, %v1137, 0
        %v1160 = vsel %vm825, %v1139, 0
        %v1163 = vsel %vm825, %v1141, 0
        %v1166 = vsel %vm825, %v1143, 0
        %v1169 = vsel %vm825, %v1145, 0
        %v1172 = vsel %vm825, %v1147, 0
        %v1175 = vsel %vm825, %v1149, 0
        %1177 = vmatprep.subr.bf16.mxu0 0
        %1178 = vmatpush1.bf16.msra.mxu0 %v638
        %1179 = vmatprep.subr.bf16.mxu0 0
        %1180 = vmatpush1.bf16.msra.mxu0 %v639
        %1181 = vmatprep.subr.bf16.mxu0 0
        %1182 = vmatpush1.bf16.msra.mxu0 %v640
        %1183 = vmatprep.subr.bf16.mxu0 0
        %1184 = vmatpush1.bf16.msra.mxu0 %v641
        %1185 = vmatprep.subr.bf16.mxu0 0
        %1186 = vmatpush1.bf16.msra.mxu0 %v642
        %1187 = vmatprep.subr.bf16.mxu0 0
        %1188 = vmatpush1.bf16.msra.mxu0 %v643
        %1189 = vmatprep.subr.bf16.mxu0 0
        %1190 = vmatpush1.bf16.msra.mxu0 %v644
        %1191 = vmatprep.subr.bf16.mxu0 0
        %1192 = vmatpush1.bf16.msra.mxu0 %v645
        %1193 = vmatprep.subr.bf16.mxu0 0
        %1194 = vmatpush1.bf16.msra.mxu0 %v646
        %1195 = vmatprep.subr.bf16.mxu0 0
        %1196 = vmatpush1.bf16.msra.mxu0 0
        %1197 = vmatprep.subr.bf16.mxu0 0
        %1198 = vmatpush1.bf16.msra.mxu0 0
        %1199 = vmatprep.subr.bf16.mxu0 0
        %1200 = vmatpush1.bf16.msra.mxu0 0
        %1201 = vmatprep.subr.bf16.mxu0 0
        %1202 = vmatpush1.bf16.msra.mxu0 0
        %1203 = vmatprep.subr.bf16.mxu0 0
        %1204 = vmatpush1.bf16.msra.mxu0 0
        %1205 = vmatprep.subr.bf16.mxu0 0
        %1206 = vmatpush1.bf16.msra.mxu0 0
        %1207 = vmatprep.subr.bf16.mxu0 0
        %1208 = vmatpush1.bf16.msra.mxu0 0
        %1209 = vmatprep.mubr.bf16.mxu0 %v1151
        %1210 = vmatmul.mubr.bf16.gmra.mrb[0].mxu0 %v1132
        %v1211 = vpop.f32.mrb[0].mxu0
        %v1212 = vadd.f32 0.0, %v1211
        %v1213 = vpop.f32.mrb[0].mxu0
        %v1214 = vpop.f32.mrb[0].mxu0
        %v1215 = vadd.f32 0.0, %v1214
        %v1216 = vpop.f32.mrb[0].mxu0
        %1217 = vmatprep.mubr.bf16.mxu0 %v1154
        %1218 = vmatmul.mubr.bf16.gmra.mrb[0].mxu0 %v1134
        %v1219 = vpop.f32.mrb[0].mxu0
        %v1220 = vadd.f32 0.0, %v1219
        %v1221 = vpop.f32.mrb[0].mxu0
        %v1222 = vpop.f32.mrb[0].mxu0
        %v1223 = vadd.f32 0.0, %v1222
        %v1224 = vpop.f32.mrb[0].mxu0
        %1225 = vmatprep.mubr.bf16.mxu0 %v1157
        %1226 = vmatmul.mubr.bf16.gmra.mrb[0].mxu0 %v1136
        %v1227 = vpop.f32.mrb[0].mxu0
        %v1228 = vadd.f32 0.0, %v1227
        %v1229 = vpop.f32.mrb[0].mxu0
        %v1230 = vpop.f32.mrb[0].mxu0
        %v1231 = vadd.f32 0.0, %v1230
        %v1232 = vpop.f32.mrb[0].mxu0
        %1233 = vmatprep.mubr.bf16.mxu0 %v1160
        %1234 = vmatmul.mubr.bf16.gmra.mrb[0].mxu0 %v1138
        %v1235 = vpop.f32.mrb[0].mxu0
        %v1236 = vadd.f32 0.0, %v1235
        %v1237 = vpop.f32.mrb[0].mxu0
        %v1238 = vpop.f32.mrb[0].mxu0
        %v1239 = vadd.f32 0.0, %v1238
        %v1240 = vpop.f32.mrb[0].mxu0
        %1241 = vmatprep.mubr.bf16.mxu0 %v1163
        %1242 = vmatmul.mubr.bf16.gmra.mrb[0].mxu0 %v1140
        %v1243 = vpop.f32.mrb[0].mxu0
        %v1244 = vadd.f32 0.0, %v1243
        %v1245 = vpop.f32.mrb[0].mxu0
        %v1246 = vpop.f32.mrb[0].mxu0
        %v1247 = vadd.f32 0.0, %v1246
        %v1248 = vpop.f32.mrb[0].mxu0
        %1249 = vmatprep.mubr.bf16.mxu0 %v1166
        %1250 = vmatmul.mubr.bf16.gmra.mrb[0].mxu0 %v1142
        %v1251 = vpop.f32.mrb[0].mxu0
        %v1252 = vadd.f32 0.0, %v1251
        %v1253 = vpop.f32.mrb[0].mxu0
        %v1254 = vpop.f32.mrb[0].mxu0
        %v1255 = vadd.f32 0.0, %v1254
        %v1256 = vpop.f32.mrb[0].mxu0
        %1257 = vmatprep.mubr.bf16.mxu0 %v1169
        %1258 = vmatmul.mubr.bf16.gmra.mrb[0].mxu0 %v1144
        %v1259 = vpop.f32.mrb[0].mxu0
        %v1260 = vadd.f32 0.0, %v1259
        %v1261 = vpop.f32.mrb[0].mxu0
        %v1262 = vpop.f32.mrb[0].mxu0
        %v1263 = vadd.f32 0.0, %v1262
        %v1264 = vpop.f32.mrb[0].mxu0
        %1265 = vmatprep.mubr.bf16.mxu0 %v1172
        %1266 = vmatmul.mubr.bf16.gmra.mrb[0].mxu0 %v1146
        %v1267 = vpop.f32.mrb[0].mxu0
        %v1268 = vadd.f32 0.0, %v1267
        %v1269 = vpop.f32.mrb[0].mxu0
        %v1270 = vpop.f32.mrb[0].mxu0
        %v1271 = vadd.f32 0.0, %v1270
        %v1272 = vpop.f32.mrb[0].mxu0
        %1273 = vmatprep.mubr.bf16.mxu0 %v1175
        %1274 = vmatmul.mubr.bf16.gmra.mrb[0].mxu0 %v1148
        %v1275 = vpop.f32.mrb[0].mxu0
        %v1276 = vadd.f32 0.0, %v1275
        %v1277 = vpop.f32.mrb[0].mxu0
        %v1278 = vpop.f32.mrb[0].mxu0
        %v1279 = vadd.f32 0.0, %v1278
        %v1280 = vpop.f32.mrb[0].mxu0
        %1281 = vdwg.mxu0
        %1291 = vrot.lane.b32.xlu0 %v620, 96
        %v1292 = vpop.permute.xlu0 %1291
        %1293 = vrot.lane.b32.xlu0 %v621, 96
        %v1294 = vpop.permute.xlu0 %1293
        %1295 = vrot.lane.b32.xlu0 %v622, 96
        %v1296 = vpop.permute.xlu0 %1295
        %1297 = vrot.lane.b32.xlu0 %v623, 96
        %v1298 = vpop.permute.xlu0 %1297
        %1299 = vrot.lane.b32.xlu0 %v624, 96
        %v1300 = vpop.permute.xlu0 %1299
        %1301 = vrot.lane.b32.xlu0 %v625, 96
        %v1302 = vpop.permute.xlu0 %1301
        %1303 = vrot.lane.b32.xlu0 %v626, 96
        %v1304 = vpop.permute.xlu0 %1303
        %1305 = vrot.lane.b32.xlu0 %v627, 96
        %v1306 = vpop.permute.xlu0 %1305
        %1307 = vrot.lane.b32.xlu0 %v628, 96
        %v1308 = vpop.permute.xlu0 %1307
        %1318 = vrot.lane.b32.xlu0 %v629, 96
        %v1319 = vpop.permute.xlu0 %1318
        %1320 = vrot.lane.b32.xlu0 %v630, 96
        %v1321 = vpop.permute.xlu0 %1320
        %1322 = vrot.lane.b32.xlu0 %v631, 96
        %v1323 = vpop.permute.xlu0 %1322
        %1324 = vrot.lane.b32.xlu0 %v632, 96
        %v1325 = vpop.permute.xlu0 %1324
        %1326 = vrot.lane.b32.xlu0 %v633, 96
        %v1327 = vpop.permute.xlu0 %1326
        %1328 = vrot.lane.b32.xlu0 %v634, 96
        %v1329 = vpop.permute.xlu0 %1328
        %1330 = vrot.lane.b32.xlu0 %v635, 96
        %v1331 = vpop.permute.xlu0 %1330
        %1332 = vrot.lane.b32.xlu0 %v636, 96
        %v1333 = vpop.permute.xlu0 %1332
        %1334 = vrot.lane.b32.xlu0 %v637, 96
        %v1335 = vpop.permute.xlu0 %1334
        %v1337 = vsel %vm647, %v1292, 0
        %v1340 = vsel %vm647, %v1294, 0
        %v1343 = vsel %vm647, %v1296, 0
        %v1346 = vsel %vm647, %v1298, 0
        %v1349 = vsel %vm647, %v1300, 0
        %v1352 = vsel %vm647, %v1302, 0
        %v1355 = vsel %vm647, %v1304, 0
        %v1358 = vsel %vm647, %v1306, 0
        %v1361 = vsel %vm647, %v1308, 0
        %v1364 = vsel %vm647, %v1319, 0
        %v1367 = vsel %vm647, %v1321, 0
        %v1370 = vsel %vm647, %v1323, 0
        %v1373 = vsel %vm647, %v1325, 0
        %v1376 = vsel %vm647, %v1327, 0
        %v1379 = vsel %vm647, %v1329, 0
        %v1382 = vsel %vm647, %v1331, 0
        %v1385 = vsel %vm647, %v1333, 0
        %v1388 = vsel %vm647, %v1335, 0
        %1390 = vmatprep.subr.bf16.mxu0 0
        %1391 = vmatpush1.bf16.xpose.msra.mxu0 %v1364
        %1392 = vmatprep.subr.bf16.mxu0 0
        %1393 = vmatpush1.bf16.xpose.msra.mxu0 %v1367
        %1394 = vmatprep.subr.bf16.mxu0 0
        %1395 = vmatpush1.bf16.xpose.msra.mxu0 %v1370
        %1396 = vmatprep.subr.bf16.mxu0 0
        %1397 = vmatpush1.bf16.xpose.msra.mxu0 %v1373
        %1398 = vmatprep.subr.bf16.mxu0 0
        %1399 = vmatpush1.bf16.xpose.msra.mxu0 %v1376
        %1400 = vmatprep.subr.bf16.mxu0 0
        %1401 = vmatpush1.bf16.xpose.msra.mxu0 %v1379
        %1402 = vmatprep.subr.bf16.mxu0 0
        %1403 = vmatpush1.bf16.xpose.msra.mxu0 %v1382
        %1404 = vmatprep.subr.bf16.mxu0 0
        %1405 = vmatpush1.bf16.xpose.msra.mxu0 %v1385
        %1406 = vmatprep.subr.bf16.mxu0 0
        %1407 = vmatpush1.bf16.xpose.msra.mxu0 %v1388
        %1408 = vmatprep.subr.bf16.mxu0 0
        %1409 = vmatpush1.bf16.xpose.msra.mxu0 0
        %1410 = vmatprep.subr.bf16.mxu0 0
        %1411 = vmatpush1.bf16.xpose.msra.mxu0 0
        %1412 = vmatprep.subr.bf16.mxu0 0
        %1413 = vmatpush1.bf16.xpose.msra.mxu0 0
        %1414 = vmatprep.subr.bf16.mxu0 0
        %1415 = vmatpush1.bf16.xpose.msra.mxu0 0
        %1416 = vmatprep.subr.bf16.mxu0 0
        %1417 = vmatpush1.bf16.xpose.msra.mxu0 0
        %1418 = vmatprep.subr.bf16.mxu0 0
        %1419 = vmatpush1.bf16.xpose.msra.mxu0 0
        %1420 = vmatprep.subr.bf16.mxu0 0
        %1421 = vmatpush1.bf16.xpose.msra.mxu0 0
        %1422 = vmatprep.mubr.bf16.mxu0 0
        %1423 = vmatmul.mubr.bf16.gmra.mrb[0].mxu0 %v1337
        %v1424 = vpop.f32.mrb[0].mxu0
        %v1425 = vadd.f32 0.0, %v1424
        %v1426 = vpop.f32.mrb[0].mxu0
        %v1427 = vadd.f32 0.0, %v1426
        %v1428 = vpop.f32.mrb[0].mxu0
        %v1429 = vadd.f32 0.0, %v1428
        %v1430 = vpop.f32.mrb[0].mxu0
        %v1431 = vadd.f32 0.0, %v1430
        %1432 = vmatprep.mubr.bf16.mxu0 0
        %1433 = vmatmul.mubr.bf16.gmra.mrb[0].mxu0 %v1340
        %v1434 = vpop.f32.mrb[0].mxu0
        %v1435 = vadd.f32 0.0, %v1434
        %v1436 = vpop.f32.mrb[0].mxu0
        %v1437 = vadd.f32 0.0, %v1436
        %v1438 = vpop.f32.mrb[0].mxu0
        %v1439 = vadd.f32 0.0, %v1438
        %v1440 = vpop.f32.mrb[0].mxu0
        %v1441 = vadd.f32 0.0, %v1440
        %1442 = vmatprep.mubr.bf16.mxu0 0
        %1443 = vmatmul.mubr.bf16.gmra.mrb[0].mxu0 %v1343
        %v1444 = vpop.f32.mrb[0].mxu0
        %v1445 = vadd.f32 0.0, %v1444
        %v1446 = vpop.f32.mrb[0].mxu0
        %v1447 = vadd.f32 0.0, %v1446
        %v1448 = vpop.f32.mrb[0].mxu0
        %v1449 = vadd.f32 0.0, %v1448
        %v1450 = vpop.f32.mrb[0].mxu0
        %v1451 = vadd.f32 0.0, %v1450
        %1452 = vmatprep.mubr.bf16.mxu0 0
        %1453 = vmatmul.mubr.bf16.gmra.mrb[0].mxu0 %v1346
        %v1454 = vpop.f32.mrb[0].mxu0
        %v1455 = vadd.f32 0.0, %v1454
        %v1456 = vpop.f32.mrb[0].mxu0
        %v1457 = vadd.f32 0.0, %v1456
        %v1458 = vpop.f32.mrb[0].mxu0
        %v1459 = vadd.f32 0.0, %v1458
        %v1460 = vpop.f32.mrb[0].mxu0
        %v1461 = vadd.f32 0.0, %v1460
        %1462 = vmatprep.mubr.bf16.mxu0 0
        %1463 = vmatmul.mubr.bf16.gmra.mrb[0].mxu0 %v1349
        %v1464 = vpop.f32.mrb[0].mxu0
        %v1465 = vadd.f32 0.0, %v1464
        %v1466 = vpop.f32.mrb[0].mxu0
        %v1467 = vadd.f32 0.0, %v1466
        %v1468 = vpop.f32.mrb[0].mxu0
        %v1469 = vadd.f32 0.0, %v1468
        %v1470 = vpop.f32.mrb[0].mxu0
        %v1471 = vadd.f32 0.0, %v1470
        %1472 = vmatprep.mubr.bf16.mxu0 0
        %1473 = vmatmul.mubr.bf16.gmra.mrb[0].mxu0 %v1352
        %v1474 = vpop.f32.mrb[0].mxu0
        %v1475 = vadd.f32 0.0, %v1474
        %v1476 = vpop.f32.mrb[0].mxu0
        %v1477 = vadd.f32 0.0, %v1476
        %v1478 = vpop.f32.mrb[0].mxu0
        %v1479 = vadd.f32 0.0, %v1478
        %v1480 = vpop.f32.mrb[0].mxu0
        %v1481 = vadd.f32 0.0, %v1480
        %1482 = vmatprep.mubr.bf16.mxu0 0
        %1483 = vmatmul.mubr.bf16.gmra.mrb[0].mxu0 %v1355
        %v1484 = vpop.f32.mrb[0].mxu0
        %v1485 = vadd.f32 0.0, %v1484
        %v1486 = vpop.f32.mrb[0].mxu0
        %v1487 = vadd.f32 0.0, %v1486
        %v1488 = vpop.f32.mrb[0].mxu0
        %v1489 = vadd.f32 0.0, %v1488
        %v1490 = vpop.f32.mrb[0].mxu0
        %v1491 = vadd.f32 0.0, %v1490
        %1492 = vmatprep.mubr.bf16.mxu0 0
        %1493 = vmatmul.mubr.bf16.gmra.mrb[0].mxu0 %v1358
        %v1494 = vpop.f32.mrb[0].mxu0
        %v1495 = vadd.f32 0.0, %v1494
        %v1496 = vpop.f32.mrb[0].mxu0
        %v1497 = vadd.f32 0.0, %v1496
        %v1498 = vpop.f32.mrb[0].mxu0
        %v1499 = vadd.f32 0.0, %v1498
        %v1500 = vpop.f32.mrb[0].mxu0
        %v1501 = vadd.f32 0.0, %v1500
        %1502 = vmatprep.mubr.bf16.mxu0 0
        %1503 = vmatmul.mubr.bf16.gmra.mrb[0].mxu0 %v1361
        %v1504 = vpop.f32.mrb[0].mxu0
        %v1505 = vadd.f32 0.0, %v1504
        %v1506 = vpop.f32.mrb[0].mxu0
        %v1507 = vadd.f32 0.0, %v1506
        %v1508 = vpop.f32.mrb[0].mxu0
        %v1509 = vadd.f32 0.0, %v1508
        %v1510 = vpop.f32.mrb[0].mxu0
        %v1511 = vadd.f32 0.0, %v1510
        %1512 = vdwg.mxu0
        %v1513 = vsel %vm825, %v1427, -inf
        %v1514 = vmax.f32 %v1425, %v1513
        %1515 = vmax.xlane.f32.xlu0 %v1514
        %v1516 = vpop.xlane.xlu0 %1515
        %v1517 = vsel %vm825, %v1431, -inf
        %v1518 = vmax.f32 %v1429, %v1517
        %1519 = vmax.xlane.f32.xlu0 %v1518
        %v1520 = vpop.xlane.xlu0 %1519
        %v1521 = vsel %vm825, %v1437, -inf
        %v1522 = vmax.f32 %v1435, %v1521
        %1523 = vmax.xlane.f32.xlu0 %v1522
        %v1524 = vpop.xlane.xlu0 %1523
        %v1525 = vsel %vm825, %v1441, -inf
        %v1526 = vmax.f32 %v1439, %v1525
        %1527 = vmax.xlane.f32.xlu0 %v1526
        %v1528 = vpop.xlane.xlu0 %1527
        %v1529 = vsel %vm825, %v1447, -inf
        %v1530 = vmax.f32 %v1445, %v1529
        %1531 = vmax.xlane.f32.xlu0 %v1530
        %v1532 = vpop.xlane.xlu0 %1531
        %v1533 = vsel %vm825, %v1451, -inf
        %v1534 = vmax.f32 %v1449, %v1533
        %1535 = vmax.xlane.f32.xlu0 %v1534
        %v1536 = vpop.xlane.xlu0 %1535
        %v1537 = vsel %vm825, %v1457, -inf
        %v1538 = vmax.f32 %v1455, %v1537
        %1539 = vmax.xlane.f32.xlu0 %v1538
        %v1540 = vpop.xlane.xlu0 %1539
        %v1541 = vsel %vm825, %v1461, -inf
        %v1542 = vmax.f32 %v1459, %v1541
        %1543 = vmax.xlane.f32.xlu0 %v1542
        %v1544 = vpop.xlane.xlu0 %1543
        %v1545 = vsel %vm825, %v1467, -inf
        %v1546 = vmax.f32 %v1465, %v1545
        %1547 = vmax.xlane.f32.xlu0 %v1546
        %v1548 = vpop.xlane.xlu0 %1547
        %v1549 = vsel %vm825, %v1471, -inf
        %v1550 = vmax.f32 %v1469, %v1549
        %1551 = vmax.xlane.f32.xlu0 %v1550
        %v1552 = vpop.xlane.xlu0 %1551
        %v1553 = vsel %vm825, %v1477, -inf
        %v1554 = vmax.f32 %v1475, %v1553
        %1555 = vmax.xlane.f32.xlu0 %v1554
        %v1556 = vpop.xlane.xlu0 %1555
        %v1557 = vsel %vm825, %v1481, -inf
        %v1558 = vmax.f32 %v1479, %v1557
        %1559 = vmax.xlane.f32.xlu0 %v1558
        %v1560 = vpop.xlane.xlu0 %1559
        %v1561 = vsel %vm825, %v1487, -inf
        %v1562 = vmax.f32 %v1485, %v1561
        %1563 = vmax.xlane.f32.xlu0 %v1562
        %v1564 = vpop.xlane.xlu0 %1563
        %v1565 = vsel %vm825, %v1491, -inf
        %v1566 = vmax.f32 %v1489, %v1565
        %1567 = vmax.xlane.f32.xlu0 %v1566
        %v1568 = vpop.xlane.xlu0 %1567
        %v1569 = vsel %vm825, %v1497, -inf
        %v1570 = vmax.f32 %v1495, %v1569
        %1571 = vmax.xlane.f32.xlu0 %v1570
        %v1572 = vpop.xlane.xlu0 %1571
        %v1573 = vsel %vm825, %v1501, -inf
        %v1574 = vmax.f32 %v1499, %v1573
        %1575 = vmax.xlane.f32.xlu0 %v1574
        %v1576 = vpop.xlane.xlu0 %1575
        %v1577 = vsel %vm825, %v1507, -inf
        %v1578 = vmax.f32 %v1505, %v1577
        %1579 = vmax.xlane.f32.xlu0 %v1578
        %v1580 = vpop.xlane.xlu0 %1579
        %v1581 = vsel %vm825, %v1511, -inf
        %v1582 = vmax.f32 %v1509, %v1581
        %1583 = vmax.xlane.f32.xlu0 %v1582
        %v1584 = vpop.xlane.xlu0 %1583
        %v1585 = vsub.f32 %v1425, %v1516
        %v1586 = vsub.f32 %v1427, %v1516
        %v1587 = vsub.f32 %v1429, %v1520
        %v1588 = vsub.f32 %v1431, %v1520
        %v1589 = vsub.f32 %v1435, %v1524
        %v1590 = vsub.f32 %v1437, %v1524
        %v1591 = vsub.f32 %v1439, %v1528
        %v1592 = vsub.f32 %v1441, %v1528
        %v1593 = vsub.f32 %v1445, %v1532
        %v1594 = vsub.f32 %v1447, %v1532
        %v1595 = vsub.f32 %v1449, %v1536
        %v1596 = vsub.f32 %v1451, %v1536
        %v1597 = vsub.f32 %v1455, %v1540
        %v1598 = vsub.f32 %v1457, %v1540
        %v1599 = vsub.f32 %v1459, %v1544
        %v1600 = vsub.f32 %v1461, %v1544
        %v1601 = vsub.f32 %v1465, %v1548
        %v1602 = vsub.f32 %v1467, %v1548
        %v1603 = vsub.f32 %v1469, %v1552
        %v1604 = vsub.f32 %v1471, %v1552
        %v1605 = vsub.f32 %v1475, %v1556
        %v1606 = vsub.f32 %v1477, %v1556
        %v1607 = vsub.f32 %v1479, %v1560
        %v1608 = vsub.f32 %v1481, %v1560
        %v1609 = vsub.f32 %v1485, %v1564
        %v1610 = vsub.f32 %v1487, %v1564
        %v1611 = vsub.f32 %v1489, %v1568
        %v1612 = vsub.f32 %v1491, %v1568
        %v1613 = vsub.f32 %v1495, %v1572
        %v1614 = vsub.f32 %v1497, %v1572
        %v1615 = vsub.f32 %v1499, %v1576
        %v1616 = vsub.f32 %v1501, %v1576
        %v1617 = vsub.f32 %v1505, %v1580
        %v1618 = vsub.f32 %v1507, %v1580
        %v1619 = vsub.f32 %v1509, %v1584
        %v1620 = vsub.f32 %v1511, %v1584
        %v1621 = vmul.f32 %v1585, 1.442695
        %v1622 = vpow.pop %v1621
        %v1623 = vmul.f32 %v1586, 1.442695
        %v1624 = vpow.pop %v1623
        %v1625 = vmul.f32 %v1587, 1.442695
        %v1626 = vpow.pop %v1625
        %v1627 = vmul.f32 %v1588, 1.442695
        %v1628 = vpow.pop %v1627
        %v1629 = vmul.f32 %v1589, 1.442695
        %v1630 = vpow.pop %v1629
        %v1631 = vmul.f32 %v1590, 1.442695
        %v1632 = vpow.pop %v1631
        %v1633 = vmul.f32 %v1591, 1.442695
        %v1634 = vpow.pop %v1633
        %v1635 = vmul.f32 %v1592, 1.442695
        %v1636 = vpow.pop %v1635
        %v1637 = vmul.f32 %v1593, 1.442695
        %v1638 = vpow.pop %v1637
        %v1639 = vmul.f32 %v1594, 1.442695
        %v1640 = vpow.pop %v1639
        %v1641 = vmul.f32 %v1595, 1.442695
        %v1642 = vpow.pop %v1641
        %v1643 = vmul.f32 %v1596, 1.442695
        %v1644 = vpow.pop %v1643
        %v1645 = vmul.f32 %v1597, 1.442695
        %v1646 = vpow.pop %v1645
        %v1647 = vmul.f32 %v1598, 1.442695
        %v1648 = vpow.pop %v1647
        %v1649 = vmul.f32 %v1599, 1.442695
        %v1650 = vpow.pop %v1649
        %v1651 = vmul.f32 %v1600, 1.442695
        %v1652 = vpow.pop %v1651
        %v1653 = vmul.f32 %v1601, 1.442695
        %v1654 = vpow.pop %v1653
        %v1655 = vmul.f32 %v1602, 1.442695
        %v1656 = vpow.pop %v1655
        %v1657 = vmul.f32 %v1603, 1.442695
        %v1658 = vpow.pop %v1657
        %v1659 = vmul.f32 %v1604, 1.442695
        %v1660 = vpow.pop %v1659
        %v1661 = vmul.f32 %v1605, 1.442695
        %v1662 = vpow.pop %v1661
        %v1663 = vmul.f32 %v1606, 1.442695
        %v1664 = vpow.pop %v1663
        %v1665 = vmul.f32 %v1607, 1.442695
        %v1666 = vpow.pop %v1665
        %v1667 = vmul.f32 %v1608, 1.442695
        %v1668 = vpow.pop %v1667
        %v1669 = vmul.f32 %v1609, 1.442695
        %v1670 = vpow.pop %v1669
        %v1671 = vmul.f32 %v1610, 1.442695
        %v1672 = vpow.pop %v1671
        %v1673 = vmul.f32 %v1611, 1.442695
        %v1674 = vpow.pop %v1673
        %v1675 = vmul.f32 %v1612, 1.442695
        %v1676 = vpow.pop %v1675
        %v1677 = vmul.f32 %v1613, 1.442695
        %v1678 = vpow.pop %v1677
        %v1679 = vmul.f32 %v1614, 1.442695
        %v1680 = vpow.pop %v1679
        %v1681 = vmul.f32 %v1615, 1.442695
        %v1682 = vpow.pop %v1681
        %v1683 = vmul.f32 %v1616, 1.442695
        %v1684 = vpow.pop %v1683
        %v1685 = vmul.f32 %v1617, 1.442695
        %v1686 = vpow.pop %v1685
        %v1687 = vmul.f32 %v1618, 1.442695
        %v1688 = vpow.pop %v1687
        %v1689 = vmul.f32 %v1619, 1.442695
        %v1690 = vpow.pop %v1689
        %v1691 = vmul.f32 %v1620, 1.442695
        %v1692 = vpow.pop %v1691
        %v1693 = vsel %vm825, %v1624, 0.0
        %v1694 = vadd.f32 %v1622, %v1693
        %1695 = vadd.xlane.f32.xlu0 %v1694
        %v1696 = vpop.xlane.xlu0 %1695
        %v1697 = vsel %vm825, %v1628, 0.0
        %v1698 = vadd.f32 %v1626, %v1697
        %1699 = vadd.xlane.f32.xlu0 %v1698
        %v1700 = vpop.xlane.xlu0 %1699
        %v1701 = vsel %vm825, %v1632, 0.0
        %v1702 = vadd.f32 %v1630, %v1701
        %1703 = vadd.xlane.f32.xlu0 %v1702
        %v1704 = vpop.xlane.xlu0 %1703
        %v1705 = vsel %vm825, %v1636, 0.0
        %v1706 = vadd.f32 %v1634, %v1705
        %1707 = vadd.xlane.f32.xlu0 %v1706
        %v1708 = vpop.xlane.xlu0 %1707
        %v1709 = vsel %vm825, %v1640, 0.0
        %v1710 = vadd.f32 %v1638, %v1709
        %1711 = vadd.xlane.f32.xlu0 %v1710
        %v1712 = vpop.xlane.xlu0 %1711
        %v1713 = vsel %vm825, %v1644, 0.0
        %v1714 = vadd.f32 %v1642, %v1713
        %1715 = vadd.xlane.f32.xlu0 %v1714
        %v1716 = vpop.xlane.xlu0 %1715
        %v1717 = vsel %vm825, %v1648, 0.0
        %v1718 = vadd.f32 %v1646, %v1717
        %1719 = vadd.xlane.f32.xlu0 %v1718
        %v1720 = vpop.xlane.xlu0 %1719
        %v1721 = vsel %vm825, %v1652, 0.0
        %v1722 = vadd.f32 %v1650, %v1721
        %1723 = vadd.xlane.f32.xlu0 %v1722
        %v1724 = vpop.xlane.xlu0 %1723
        %v1725 = vsel %vm825, %v1656, 0.0
        %v1726 = vadd.f32 %v1654, %v1725
        %1727 = vadd.xlane.f32.xlu0 %v1726
        %v1728 = vpop.xlane.xlu0 %1727
        %v1729 = vsel %vm825, %v1660, 0.0
        %v1730 = vadd.f32 %v1658, %v1729
        %1731 = vadd.xlane.f32.xlu0 %v1730
        %v1732 = vpop.xlane.xlu0 %1731
        %v1733 = vsel %vm825, %v1664, 0.0
        %v1734 = vadd.f32 %v1662, %v1733
        %1735 = vadd.xlane.f32.xlu0 %v1734
        %v1736 = vpop.xlane.xlu0 %1735
        %v1737 = vsel %vm825, %v1668, 0.0
        %v1738 = vadd.f32 %v1666, %v1737
        %1739 = vadd.xlane.f32.xlu0 %v1738
        %v1740 = vpop.xlane.xlu0 %1739
        %v1741 = vsel %vm825, %v1672, 0.0
        %v1742 = vadd.f32 %v1670, %v1741
        %1743 = vadd.xlane.f32.xlu0 %v1742
        %v1744 = vpop.xlane.xlu0 %1743
        %v1745 = vsel %vm825, %v1676, 0.0
        %v1746 = vadd.f32 %v1674, %v1745
        %1747 = vadd.xlane.f32.xlu0 %v1746
        %v1748 = vpop.xlane.xlu0 %1747
        %v1749 = vsel %vm825, %v1680, 0.0
        %v1750 = vadd.f32 %v1678, %v1749
        %1751 = vadd.xlane.f32.xlu0 %v1750
        %v1752 = vpop.xlane.xlu0 %1751
        %v1753 = vsel %vm825, %v1684, 0.0
        %v1754 = vadd.f32 %v1682, %v1753
        %1755 = vadd.xlane.f32.xlu0 %v1754
        %v1756 = vpop.xlane.xlu0 %1755
        %v1757 = vsel %vm825, %v1688, 0.0
        %v1758 = vadd.f32 %v1686, %v1757
        %1759 = vadd.xlane.f32.xlu0 %v1758
        %v1760 = vpop.xlane.xlu0 %1759
        %v1761 = vsel %vm825, %v1692, 0.0
        %v1762 = vadd.f32 %v1690, %v1761
        %1763 = vadd.xlane.f32.xlu0 %v1762
        %v1764 = vpop.xlane.xlu0 %1763
        %v1765 = vrcp.pop %v1696
        %v1766 = vrcp.pop %v1700
        %v1767 = vrcp.pop %v1704
        %v1768 = vrcp.pop %v1708
        %v1769 = vrcp.pop %v1712
        %v1770 = vrcp.pop %v1716
        %v1771 = vrcp.pop %v1720
        %v1772 = vrcp.pop %v1724
        %v1773 = vrcp.pop %v1728
        %v1774 = vrcp.pop %v1732
        %v1775 = vrcp.pop %v1736
        %v1776 = vrcp.pop %v1740
        %v1777 = vrcp.pop %v1744
        %v1778 = vrcp.pop %v1748
        %v1779 = vrcp.pop %v1752
        %v1780 = vrcp.pop %v1756
        %v1781 = vrcp.pop %v1760
        %v1782 = vrcp.pop %v1764
        %v1783 = vmul.f32 %v1622, %v1765
        %v1784 = vmul.f32 %v1624, %v1765
        %v1785 = vmul.f32 %v1626, %v1766
        %v1786 = vmul.f32 %v1628, %v1766
        %v1787 = vmul.f32 %v1630, %v1767
        %v1788 = vmul.f32 %v1632, %v1767
        %v1789 = vmul.f32 %v1634, %v1768
        %v1790 = vmul.f32 %v1636, %v1768
        %v1791 = vmul.f32 %v1638, %v1769
        %v1792 = vmul.f32 %v1640, %v1769
        %v1793 = vmul.f32 %v1642, %v1770
        %v1794 = vmul.f32 %v1644, %v1770
        %v1795 = vmul.f32 %v1646, %v1771
        %v1796 = vmul.f32 %v1648, %v1771
        %v1797 = vmul.f32 %v1650, %v1772
        %v1798 = vmul.f32 %v1652, %v1772
        %v1799 = vmul.f32 %v1654, %v1773
        %v1800 = vmul.f32 %v1656, %v1773
        %v1801 = vmul.f32 %v1658, %v1774
        %v1802 = vmul.f32 %v1660, %v1774
        %v1803 = vmul.f32 %v1662, %v1775
        %v1804 = vmul.f32 %v1664, %v1775
        %v1805 = vmul.f32 %v1666, %v1776
        %v1806 = vmul.f32 %v1668, %v1776
        %v1807 = vmul.f32 %v1670, %v1777
        %v1808 = vmul.f32 %v1672, %v1777
        %v1809 = vmul.f32 %v1674, %v1778
        %v1810 = vmul.f32 %v1676, %v1778
        %v1811 = vmul.f32 %v1678, %v1779
        %v1812 = vmul.f32 %v1680, %v1779
        %v1813 = vmul.f32 %v1682, %v1780
        %v1814 = vmul.f32 %v1684, %v1780
        %v1815 = vmul.f32 %v1686, %v1781
        %v1816 = vmul.f32 %v1688, %v1781
        %v1817 = vmul.f32 %v1690, %v1782
        %v1818 = vmul.f32 %v1692, %v1782
        %v1819 = vpack.c.bf16 %v1785, %v1783
        %v1820 = vpack.c.bf16 %v1786, %v1784
        %v1821 = vpack.c.bf16 %v1789, %v1787
        %v1822 = vpack.c.bf16 %v1790, %v1788
        %v1823 = vpack.c.bf16 %v1793, %v1791
        %v1824 = vpack.c.bf16 %v1794, %v1792
        %v1825 = vpack.c.bf16 %v1797, %v1795
        %v1826 = vpack.c.bf16 %v1798, %v1796
        %v1827 = vpack.c.bf16 %v1801, %v1799
        %v1828 = vpack.c.bf16 %v1802, %v1800
        %v1829 = vpack.c.bf16 %v1805, %v1803
        %v1830 = vpack.c.bf16 %v1806, %v1804
        %v1831 = vpack.c.bf16 %v1809, %v1807
        %v1832 = vpack.c.bf16 %v1810, %v1808
        %v1833 = vpack.c.bf16 %v1813, %v1811
        %v1834 = vpack.c.bf16 %v1814, %v1812
        %v1835 = vpack.c.bf16 %v1817, %v1815
        %v1836 = vpack.c.bf16 %v1818, %v1816
        %1846 = vrot.lane.b32.xlu0 %v638, 96
        %v1847 = vpop.permute.xlu0 %1846
        %1848 = vrot.lane.b32.xlu0 %v639, 96
        %v1849 = vpop.permute.xlu0 %1848
        %1850 = vrot.lane.b32.xlu0 %v640, 96
        %v1851 = vpop.permute.xlu0 %1850
        %1852 = vrot.lane.b32.xlu0 %v641, 96
        %v1853 = vpop.permute.xlu0 %1852
        %1854 = vrot.lane.b32.xlu0 %v642, 96
        %v1855 = vpop.permute.xlu0 %1854
        %1856 = vrot.lane.b32.xlu0 %v643, 96
        %v1857 = vpop.permute.xlu0 %1856
        %1858 = vrot.lane.b32.xlu0 %v644, 96
        %v1859 = vpop.permute.xlu0 %1858
        %1860 = vrot.lane.b32.xlu0 %v645, 96
        %v1861 = vpop.permute.xlu0 %1860
        %1862 = vrot.lane.b32.xlu0 %v646, 96
        %v1863 = vpop.permute.xlu0 %1862
        %v1874 = vsel %vm825, %v1820, 0
        %v1877 = vsel %vm825, %v1822, 0
        %v1880 = vsel %vm825, %v1824, 0
        %v1883 = vsel %vm825, %v1826, 0
        %v1886 = vsel %vm825, %v1828, 0
        %v1889 = vsel %vm825, %v1830, 0
        %v1892 = vsel %vm825, %v1832, 0
        %v1895 = vsel %vm825, %v1834, 0
        %v1898 = vsel %vm825, %v1836, 0
        %1900 = vmatprep.subr.bf16.mxu0 0
        %1901 = vmatpush1.bf16.msra.mxu0 %v1847
        %1902 = vmatprep.subr.bf16.mxu0 0
        %1903 = vmatpush1.bf16.msra.mxu0 %v1849
        %1904 = vmatprep.subr.bf16.mxu0 0
        %1905 = vmatpush1.bf16.msra.mxu0 %v1851
        %1906 = vmatprep.subr.bf16.mxu0 0
        %1907 = vmatpush1.bf16.msra.mxu0 %v1853
        %1908 = vmatprep.subr.bf16.mxu0 0
        %1909 = vmatpush1.bf16.msra.mxu0 %v1855
        %1910 = vmatprep.subr.bf16.mxu0 0
        %1911 = vmatpush1.bf16.msra.mxu0 %v1857
        %1912 = vmatprep.subr.bf16.mxu0 0
        %1913 = vmatpush1.bf16.msra.mxu0 %v1859
        %1914 = vmatprep.subr.bf16.mxu0 0
        %1915 = vmatpush1.bf16.msra.mxu0 %v1861
        %1916 = vmatprep.subr.bf16.mxu0 0
        %1917 = vmatpush1.bf16.msra.mxu0 %v1863
        %1918 = vmatprep.subr.bf16.mxu0 0
        %1919 = vmatpush1.bf16.msra.mxu0 0
        %1920 = vmatprep.subr.bf16.mxu0 0
        %1921 = vmatpush1.bf16.msra.mxu0 0
        %1922 = vmatprep.subr.bf16.mxu0 0
        %1923 = vmatpush1.bf16.msra.mxu0 0
        %1924 = vmatprep.subr.bf16.mxu0 0
        %1925 = vmatpush1.bf16.msra.mxu0 0
        %1926 = vmatprep.subr.bf16.mxu0 0
        %1927 = vmatpush1.bf16.msra.mxu0 0
        %1928 = vmatprep.subr.bf16.mxu0 0
        %1929 = vmatpush1.bf16.msra.mxu0 0
        %1930 = vmatprep.subr.bf16.mxu0 0
        %1931 = vmatpush1.bf16.msra.mxu0 0
        %1932 = vmatprep.mubr.bf16.mxu0 %v1874
        %1933 = vmatmul.mubr.bf16.gmra.mrb[0].mxu0 %v1819
        %v1934 = vpop.f32.mrb[0].mxu0
        %v1935 = vadd.f32 0.0, %v1934
        %v1936 = vpop.f32.mrb[0].mxu0
        %v1937 = vpop.f32.mrb[0].mxu0
        %v1938 = vadd.f32 0.0, %v1937
        %v1939 = vpop.f32.mrb[0].mxu0
        %1940 = vmatprep.mubr.bf16.mxu0 %v1877
        %1941 = vmatmul.mubr.bf16.gmra.mrb[0].mxu0 %v1821
        %v1942 = vpop.f32.mrb[0].mxu0
        %v1943 = vadd.f32 0.0, %v1942
        %v1944 = vpop.f32.mrb[0].mxu0
        %v1945 = vpop.f32.mrb[0].mxu0
        %v1946 = vadd.f32 0.0, %v1945
        %v1947 = vpop.f32.mrb[0].mxu0
        %1948 = vmatprep.mubr.bf16.mxu0 %v1880
        %1949 = vmatmul.mubr.bf16.gmra.mrb[0].mxu0 %v1823
        %v1950 = vpop.f32.mrb[0].mxu0
        %v1951 = vadd.f32 0.0, %v1950
        %v1952 = vpop.f32.mrb[0].mxu0
        %v1953 = vpop.f32.mrb[0].mxu0
        %v1954 = vadd.f32 0.0, %v1953
        %v1955 = vpop.f32.mrb[0].mxu0
        %1956 = vmatprep.mubr.bf16.mxu0 %v1883
        %1957 = vmatmul.mubr.bf16.gmra.mrb[0].mxu0 %v1825
        %v1958 = vpop.f32.mrb[0].mxu0
        %v1959 = vadd.f32 0.0, %v1958
        %v1960 = vpop.f32.mrb[0].mxu0
        %v1961 = vpop.f32.mrb[0].mxu0
        %v1962 = vadd.f32 0.0, %v1961
        %v1963 = vpop.f32.mrb[0].mxu0
        %1964 = vmatprep.mubr.bf16.mxu0 %v1886
        %1965 = vmatmul.mubr.bf16.gmra.mrb[0].mxu0 %v1827
        %v1966 = vpop.f32.mrb[0].mxu0
        %v1967 = vadd.f32 0.0, %v1966
        %v1968 = vpop.f32.mrb[0].mxu0
        %v1969 = vpop.f32.mrb[0].mxu0
        %v1970 = vadd.f32 0.0, %v1969
        %v1971 = vpop.f32.mrb[0].mxu0
        %1972 = vmatprep.mubr.bf16.mxu0 %v1889
        %1973 = vmatmul.mubr.bf16.gmra.mrb[0].mxu0 %v1829
        %v1974 = vpop.f32.mrb[0].mxu0
        %v1975 = vadd.f32 0.0, %v1974
        %v1976 = vpop.f32.mrb[0].mxu0
        %v1977 = vpop.f32.mrb[0].mxu0
        %v1978 = vadd.f32 0.0, %v1977
        %v1979 = vpop.f32.mrb[0].mxu0
        %1980 = vmatprep.mubr.bf16.mxu0 %v1892
        %1981 = vmatmul.mubr.bf16.gmra.mrb[0].mxu0 %v1831
        %v1982 = vpop.f32.mrb[0].mxu0
        %v1983 = vadd.f32 0.0, %v1982
        %v1984 = vpop.f32.mrb[0].mxu0
        %v1985 = vpop.f32.mrb[0].mxu0
        %v1986 = vadd.f32 0.0, %v1985
        %v1987 = vpop.f32.mrb[0].mxu0
        %1988 = vmatprep.mubr.bf16.mxu0 %v1895
        %1989 = vmatmul.mubr.bf16.gmra.mrb[0].mxu0 %v1833
        %v1990 = vpop.f32.mrb[0].mxu0
        %v1991 = vadd.f32 0.0, %v1990
        %v1992 = vpop.f32.mrb[0].mxu0
        %v1993 = vpop.f32.mrb[0].mxu0
        %v1994 = vadd.f32 0.0, %v1993
        %v1995 = vpop.f32.mrb[0].mxu0
        %1996 = vmatprep.mubr.bf16.mxu0 %v1898
        %1997 = vmatmul.mubr.bf16.gmra.mrb[0].mxu0 %v1835
        %v1998 = vpop.f32.mrb[0].mxu0
        %v1999 = vadd.f32 0.0, %v1998
        %v2000 = vpop.f32.mrb[0].mxu0
        %v2001 = vpop.f32.mrb[0].mxu0
        %v2002 = vadd.f32 0.0, %v2001
        %v2003 = vpop.f32.mrb[0].mxu0
        %2004 = vdwg.mxu0
        %2005 = vrot.lane.b32.xlu0 %v620, 64
        %v2006 = vpop.permute.xlu0 %2005
        %2007 = vrot.lane.b32.xlu0 %v621, 64
        %v2008 = vpop.permute.xlu0 %2007
        %2009 = vrot.lane.b32.xlu0 %v622, 64
        %v2010 = vpop.permute.xlu0 %2009
        %2011 = vrot.lane.b32.xlu0 %v623, 64
        %v2012 = vpop.permute.xlu0 %2011
        %2013 = vrot.lane.b32.xlu0 %v624, 64
        %v2014 = vpop.permute.xlu0 %2013
        %2015 = vrot.lane.b32.xlu0 %v625, 64
        %v2016 = vpop.permute.xlu0 %2015
        %2017 = vrot.lane.b32.xlu0 %v626, 64
        %v2018 = vpop.permute.xlu0 %2017
        %2019 = vrot.lane.b32.xlu0 %v627, 64
        %v2020 = vpop.permute.xlu0 %2019
        %2021 = vrot.lane.b32.xlu0 %v628, 64
        %v2022 = vpop.permute.xlu0 %2021
        %2023 = vrot.lane.b32.xlu0 %v629, 64
        %v2024 = vpop.permute.xlu0 %2023
        %2025 = vrot.lane.b32.xlu0 %v630, 64
        %v2026 = vpop.permute.xlu0 %2025
        %2027 = vrot.lane.b32.xlu0 %v631, 64
        %v2028 = vpop.permute.xlu0 %2027
        %2029 = vrot.lane.b32.xlu0 %v632, 64
        %v2030 = vpop.permute.xlu0 %2029
        %2031 = vrot.lane.b32.xlu0 %v633, 64
        %v2032 = vpop.permute.xlu0 %2031
        %2033 = vrot.lane.b32.xlu0 %v634, 64
        %v2034 = vpop.permute.xlu0 %2033
        %2035 = vrot.lane.b32.xlu0 %v635, 64
        %v2036 = vpop.permute.xlu0 %2035
        %2037 = vrot.lane.b32.xlu0 %v636, 64
        %v2038 = vpop.permute.xlu0 %2037
        %2039 = vrot.lane.b32.xlu0 %v637, 64
        %v2040 = vpop.permute.xlu0 %2039
        %v2042 = vsel %vm647, %v2006, 0
        %v2045 = vsel %vm647, %v2008, 0
        %v2048 = vsel %vm647, %v2010, 0
        %v2051 = vsel %vm647, %v2012, 0
        %v2054 = vsel %vm647, %v2014, 0
        %v2057 = vsel %vm647, %v2016, 0
        %v2060 = vsel %vm647, %v2018, 0
        %v2063 = vsel %vm647, %v2020, 0
        %v2066 = vsel %vm647, %v2022, 0
        %v2069 = vsel %vm647, %v2024, 0
        %v2072 = vsel %vm647, %v2026, 0
        %v2075 = vsel %vm647, %v2028, 0
        %v2078 = vsel %vm647, %v2030, 0
        %v2081 = vsel %vm647, %v2032, 0
        %v2084 = vsel %vm647, %v2034, 0
        %v2087 = vsel %vm647, %v2036, 0
        %v2090 = vsel %vm647, %v2038, 0
        %v2093 = vsel %vm647, %v2040, 0
        %2095 = vmatprep.subr.bf16.mxu0 0
        %2096 = vmatpush1.bf16.xpose.msra.mxu0 %v2069
        %2097 = vmatprep.subr.bf16.mxu0 0
        %2098 = vmatpush1.bf16.xpose.msra.mxu0 %v2072
        %2099 = vmatprep.subr.bf16.mxu0 0
        %2100 = vmatpush1.bf16.xpose.msra.mxu0 %v2075
        %2101 = vmatprep.subr.bf16.mxu0 0
        %2102 = vmatpush1.bf16.xpose.msra.mxu0 %v2078
        %2103 = vmatprep.subr.bf16.mxu0 0
        %2104 = vmatpush1.bf16.xpose.msra.mxu0 %v2081
        %2105 = vmatprep.subr.bf16.mxu0 0
        %2106 = vmatpush1.bf16.xpose.msra.mxu0 %v2084
        %2107 = vmatprep.subr.bf16.mxu0 0
        %2108 = vmatpush1.bf16.xpose.msra.mxu0 %v2087
        %2109 = vmatprep.subr.bf16.mxu0 0
        %2110 = vmatpush1.bf16.xpose.msra.mxu0 %v2090
        %2111 = vmatprep.subr.bf16.mxu0 0
        %2112 = vmatpush1.bf16.xpose.msra.mxu0 %v2093
        %2113 = vmatprep.subr.bf16.mxu0 0
        %2114 = vmatpush1.bf16.xpose.msra.mxu0 0
        %2115 = vmatprep.subr.bf16.mxu0 0
        %2116 = vmatpush1.bf16.xpose.msra.mxu0 0
        %2117 = vmatprep.subr.bf16.mxu0 0
        %2118 = vmatpush1.bf16.xpose.msra.mxu0 0
        %2119 = vmatprep.subr.bf16.mxu0 0
        %2120 = vmatpush1.bf16.xpose.msra.mxu0 0
        %2121 = vmatprep.subr.bf16.mxu0 0
        %2122 = vmatpush1.bf16.xpose.msra.mxu0 0
        %2123 = vmatprep.subr.bf16.mxu0 0
        %2124 = vmatpush1.bf16.xpose.msra.mxu0 0
        %2125 = vmatprep.subr.bf16.mxu0 0
        %2126 = vmatpush1.bf16.xpose.msra.mxu0 0
        %2127 = vmatprep.mubr.bf16.mxu0 0
        %2128 = vmatmul.mubr.bf16.gmra.mrb[0].mxu0 %v2042
        %v2129 = vpop.f32.mrb[0].mxu0
        %v2130 = vadd.f32 0.0, %v2129
        %v2131 = vpop.f32.mrb[0].mxu0
        %v2132 = vadd.f32 0.0, %v2131
        %v2133 = vpop.f32.mrb[0].mxu0
        %v2134 = vadd.f32 0.0, %v2133
        %v2135 = vpop.f32.mrb[0].mxu0
        %v2136 = vadd.f32 0.0, %v2135
        %2137 = vmatprep.mubr.bf16.mxu0 0
        %2138 = vmatmul.mubr.bf16.gmra.mrb[0].mxu0 %v2045
        %v2139 = vpop.f32.mrb[0].mxu0
        %v2140 = vadd.f32 0.0, %v2139
        %v2141 = vpop.f32.mrb[0].mxu0
        %v2142 = vadd.f32 0.0, %v2141
        %v2143 = vpop.f32.mrb[0].mxu0
        %v2144 = vadd.f32 0.0, %v2143
        %v2145 = vpop.f32.mrb[0].mxu0
        %v2146 = vadd.f32 0.0, %v2145
        %2147 = vmatprep.mubr.bf16.mxu0 0
        %2148 = vmatmul.mubr.bf16.gmra.mrb[0].mxu0 %v2048
        %v2149 = vpop.f32.mrb[0].mxu0
        %v2150 = vadd.f32 0.0, %v2149
        %v2151 = vpop.f32.mrb[0].mxu0
        %v2152 = vadd.f32 0.0, %v2151
        %v2153 = vpop.f32.mrb[0].mxu0
        %v2154 = vadd.f32 0.0, %v2153
        %v2155 = vpop.f32.mrb[0].mxu0
        %v2156 = vadd.f32 0.0, %v2155
        %2157 = vmatprep.mubr.bf16.mxu0 0
        %2158 = vmatmul.mubr.bf16.gmra.mrb[0].mxu0 %v2051
        %v2159 = vpop.f32.mrb[0].mxu0
        %v2160 = vadd.f32 0.0, %v2159
        %v2161 = vpop.f32.mrb[0].mxu0
        %v2162 = vadd.f32 0.0, %v2161
        %v2163 = vpop.f32.mrb[0].mxu0
        %v2164 = vadd.f32 0.0, %v2163
        %v2165 = vpop.f32.mrb[0].mxu0
        %v2166 = vadd.f32 0.0, %v2165
        %2167 = vmatprep.mubr.bf16.mxu0 0
        %2168 = vmatmul.mubr.bf16.gmra.mrb[0].mxu0 %v2054
        %v2169 = vpop.f32.mrb[0].mxu0
        %v2170 = vadd.f32 0.0, %v2169
        %v2171 = vpop.f32.mrb[0].mxu0
        %v2172 = vadd.f32 0.0, %v2171
        %v2173 = vpop.f32.mrb[0].mxu0
        %v2174 = vadd.f32 0.0, %v2173
        %v2175 = vpop.f32.mrb[0].mxu0
        %v2176 = vadd.f32 0.0, %v2175
        %2177 = vmatprep.mubr.bf16.mxu0 0
        %2178 = vmatmul.mubr.bf16.gmra.mrb[0].mxu0 %v2057
        %v2179 = vpop.f32.mrb[0].mxu0
        %v2180 = vadd.f32 0.0, %v2179
        %v2181 = vpop.f32.mrb[0].mxu0
        %v2182 = vadd.f32 0.0, %v2181
        %v2183 = vpop.f32.mrb[0].mxu0
        %v2184 = vadd.f32 0.0, %v2183
        %v2185 = vpop.f32.mrb[0].mxu0
        %v2186 = vadd.f32 0.0, %v2185
        %2187 = vmatprep.mubr.bf16.mxu0 0
        %2188 = vmatmul.mubr.bf16.gmra.mrb[0].mxu0 %v2060
        %v2189 = vpop.f32.mrb[0].mxu0
        %v2190 = vadd.f32 0.0, %v2189
        %v2191 = vpop.f32.mrb[0].mxu0
        %v2192 = vadd.f32 0.0, %v2191
        %v2193 = vpop.f32.mrb[0].mxu0
        %v2194 = vadd.f32 0.0, %v2193
        %v2195 = vpop.f32.mrb[0].mxu0
        %v2196 = vadd.f32 0.0, %v2195
        %2197 = vmatprep.mubr.bf16.mxu0 0
        %2198 = vmatmul.mubr.bf16.gmra.mrb[0].mxu0 %v2063
        %v2199 = vpop.f32.mrb[0].mxu0
        %v2200 = vadd.f32 0.0, %v2199
        %v2201 = vpop.f32.mrb[0].mxu0
        %v2202 = vadd.f32 0.0, %v2201
        %v2203 = vpop.f32.mrb[0].mxu0
        %v2204 = vadd.f32 0.0, %v2203
        %v2205 = vpop.f32.mrb[0].mxu0
        %v2206 = vadd.f32 0.0, %v2205
        %2207 = vmatprep.mubr.bf16.mxu0 0
        %2208 = vmatmul.mubr.bf16.gmra.mrb[0].mxu0 %v2066
        %v2209 = vpop.f32.mrb[0].mxu0
        %v2210 = vadd.f32 0.0, %v2209
        %v2211 = vpop.f32.mrb[0].mxu0
        %v2212 = vadd.f32 0.0, %v2211
        %v2213 = vpop.f32.mrb[0].mxu0
        %v2214 = vadd.f32 0.0, %v2213
        %v2215 = vpop.f32.mrb[0].mxu0
        %v2216 = vadd.f32 0.0, %v2215
        %2217 = vdwg.mxu0
        %v2218 = vsel %vm825, %v2132, -inf
        %v2219 = vmax.f32 %v2130, %v2218
        %2220 = vmax.xlane.f32.xlu0 %v2219
        %v2221 = vpop.xlane.xlu0 %2220
        %v2222 = vsel %vm825, %v2136, -inf
        %v2223 = vmax.f32 %v2134, %v2222
        %2224 = vmax.xlane.f32.xlu0 %v2223
        %v2225 = vpop.xlane.xlu0 %2224
        %v2226 = vsel %vm825, %v2142, -inf
        %v2227 = vmax.f32 %v2140, %v2226
        %2228 = vmax.xlane.f32.xlu0 %v2227
        %v2229 = vpop.xlane.xlu0 %2228
        %v2230 = vsel %vm825, %v2146, -inf
        %v2231 = vmax.f32 %v2144, %v2230
        %2232 = vmax.xlane.f32.xlu0 %v2231
        %v2233 = vpop.xlane.xlu0 %2232
        %v2234 = vsel %vm825, %v2152, -inf
        %v2235 = vmax.f32 %v2150, %v2234
        %2236 = vmax.xlane.f32.xlu0 %v2235
        %v2237 = vpop.xlane.xlu0 %2236
        %v2238 = vsel %vm825, %v2156, -inf
        %v2239 = vmax.f32 %v2154, %v2238
        %2240 = vmax.xlane.f32.xlu0 %v2239
        %v2241 = vpop.xlane.xlu0 %2240
        %v2242 = vsel %vm825, %v2162, -inf
        %v2243 = vmax.f32 %v2160, %v2242
        %2244 = vmax.xlane.f32.xlu0 %v2243
        %v2245 = vpop.xlane.xlu0 %2244
        %v2246 = vsel %vm825, %v2166, -inf
        %v2247 = vmax.f32 %v2164, %v2246
        %2248 = vmax.xlane.f32.xlu0 %v2247
        %v2249 = vpop.xlane.xlu0 %2248
        %v2250 = vsel %vm825, %v2172, -inf
        %v2251 = vmax.f32 %v2170, %v2250
        %2252 = vmax.xlane.f32.xlu0 %v2251
        %v2253 = vpop.xlane.xlu0 %2252
        %v2254 = vsel %vm825, %v2176, -inf
        %v2255 = vmax.f32 %v2174, %v2254
        %2256 = vmax.xlane.f32.xlu0 %v2255
        %v2257 = vpop.xlane.xlu0 %2256
        %v2258 = vsel %vm825, %v2182, -inf
        %v2259 = vmax.f32 %v2180, %v2258
        %2260 = vmax.xlane.f32.xlu0 %v2259
        %v2261 = vpop.xlane.xlu0 %2260
        %v2262 = vsel %vm825, %v2186, -inf
        %v2263 = vmax.f32 %v2184, %v2262
        %2264 = vmax.xlane.f32.xlu0 %v2263
        %v2265 = vpop.xlane.xlu0 %2264
        %v2266 = vsel %vm825, %v2192, -inf
        %v2267 = vmax.f32 %v2190, %v2266
        %2268 = vmax.xlane.f32.xlu0 %v2267
        %v2269 = vpop.xlane.xlu0 %2268
        %v2270 = vsel %vm825, %v2196, -inf
        %v2271 = vmax.f32 %v2194, %v2270
        %2272 = vmax.xlane.f32.xlu0 %v2271
        %v2273 = vpop.xlane.xlu0 %2272
        %v2274 = vsel %vm825, %v2202, -inf
        %v2275 = vmax.f32 %v2200, %v2274
        %2276 = vmax.xlane.f32.xlu0 %v2275
        %v2277 = vpop.xlane.xlu0 %2276
        %v2278 = vsel %vm825, %v2206, -inf
        %v2279 = vmax.f32 %v2204, %v2278
        %2280 = vmax.xlane.f32.xlu0 %v2279
        %v2281 = vpop.xlane.xlu0 %2280
        %v2282 = vsel %vm825, %v2212, -inf
        %v2283 = vmax.f32 %v2210, %v2282
        %2284 = vmax.xlane.f32.xlu0 %v2283
        %v2285 = vpop.xlane.xlu0 %2284
        %v2286 = vsel %vm825, %v2216, -inf
        %v2287 = vmax.f32 %v2214, %v2286
        %2288 = vmax.xlane.f32.xlu0 %v2287
        %v2289 = vpop.xlane.xlu0 %2288
        %v2290 = vsub.f32 %v2130, %v2221
        %v2291 = vsub.f32 %v2132, %v2221
        %v2292 = vsub.f32 %v2134, %v2225
        %v2293 = vsub.f32 %v2136, %v2225
        %v2294 = vsub.f32 %v2140, %v2229
        %v2295 = vsub.f32 %v2142, %v2229
        %v2296 = vsub.f32 %v2144, %v2233
        %v2297 = vsub.f32 %v2146, %v2233
        %v2298 = vsub.f32 %v2150, %v2237
        %v2299 = vsub.f32 %v2152, %v2237
        %v2300 = vsub.f32 %v2154, %v2241
        %v2301 = vsub.f32 %v2156, %v2241
        %v2302 = vsub.f32 %v2160, %v2245
        %v2303 = vsub.f32 %v2162, %v2245
        %v2304 = vsub.f32 %v2164, %v2249
        %v2305 = vsub.f32 %v2166, %v2249
        %v2306 = vsub.f32 %v2170, %v2253
        %v2307 = vsub.f32 %v2172, %v2253
        %v2308 = vsub.f32 %v2174, %v2257
        %v2309 = vsub.f32 %v2176, %v2257
        %v2310 = vsub.f32 %v2180, %v2261
        %v2311 = vsub.f32 %v2182, %v2261
        %v2312 = vsub.f32 %v2184, %v2265
        %v2313 = vsub.f32 %v2186, %v2265
        %v2314 = vsub.f32 %v2190, %v2269
        %v2315 = vsub.f32 %v2192, %v2269
        %v2316 = vsub.f32 %v2194, %v2273
        %v2317 = vsub.f32 %v2196, %v2273
        %v2318 = vsub.f32 %v2200, %v2277
        %v2319 = vsub.f32 %v2202, %v2277
        %v2320 = vsub.f32 %v2204, %v2281
        %v2321 = vsub.f32 %v2206, %v2281
        %v2322 = vsub.f32 %v2210, %v2285
        %v2323 = vsub.f32 %v2212, %v2285
        %v2324 = vsub.f32 %v2214, %v2289
        %v2325 = vsub.f32 %v2216, %v2289
        %v2326 = vmul.f32 %v2290, 1.442695
        %v2327 = vpow.pop %v2326
        %v2328 = vmul.f32 %v2291, 1.442695
        %v2329 = vpow.pop %v2328
        %v2330 = vmul.f32 %v2292, 1.442695
        %v2331 = vpow.pop %v2330
        %v2332 = vmul.f32 %v2293, 1.442695
        %v2333 = vpow.pop %v2332
        %v2334 = vmul.f32 %v2294, 1.442695
        %v2335 = vpow.pop %v2334
        %v2336 = vmul.f32 %v2295, 1.442695
        %v2337 = vpow.pop %v2336
        %v2338 = vmul.f32 %v2296, 1.442695
        %v2339 = vpow.pop %v2338
        %v2340 = vmul.f32 %v2297, 1.442695
        %v2341 = vpow.pop %v2340
        %v2342 = vmul.f32 %v2298, 1.442695
        %v2343 = vpow.pop %v2342
        %v2344 = vmul.f32 %v2299, 1.442695
        %v2345 = vpow.pop %v2344
        %v2346 = vmul.f32 %v2300, 1.442695
        %v2347 = vpow.pop %v2346
        %v2348 = vmul.f32 %v2301, 1.442695
        %v2349 = vpow.pop %v2348
        %v2350 = vmul.f32 %v2302, 1.442695
        %v2351 = vpow.pop %v2350
        %v2352 = vmul.f32 %v2303, 1.442695
        %v2353 = vpow.pop %v2352
        %v2354 = vmul.f32 %v2304, 1.442695
        %v2355 = vpow.pop %v2354
        %v2356 = vmul.f32 %v2305, 1.442695
        %v2357 = vpow.pop %v2356
        %v2358 = vmul.f32 %v2306, 1.442695
        %v2359 = vpow.pop %v2358
        %v2360 = vmul.f32 %v2307, 1.442695
        %v2361 = vpow.pop %v2360
        %v2362 = vmul.f32 %v2308, 1.442695
        %v2363 = vpow.pop %v2362
        %v2364 = vmul.f32 %v2309, 1.442695
        %v2365 = vpow.pop %v2364
        %v2366 = vmul.f32 %v2310, 1.442695
        %v2367 = vpow.pop %v2366
        %v2368 = vmul.f32 %v2311, 1.442695
        %v2369 = vpow.pop %v2368
        %v2370 = vmul.f32 %v2312, 1.442695
        %v2371 = vpow.pop %v2370
        %v2372 = vmul.f32 %v2313, 1.442695
        %v2373 = vpow.pop %v2372
        %v2374 = vmul.f32 %v2314, 1.442695
        %v2375 = vpow.pop %v2374
        %v2376 = vmul.f32 %v2315, 1.442695
        %v2377 = vpow.pop %v2376
        %v2378 = vmul.f32 %v2316, 1.442695
        %v2379 = vpow.pop %v2378
        %v2380 = vmul.f32 %v2317, 1.442695
        %v2381 = vpow.pop %v2380
        %v2382 = vmul.f32 %v2318, 1.442695
        %v2383 = vpow.pop %v2382
        %v2384 = vmul.f32 %v2319, 1.442695
        %v2385 = vpow.pop %v2384
        %v2386 = vmul.f32 %v2320, 1.442695
        %v2387 = vpow.pop %v2386
        %v2388 = vmul.f32 %v2321, 1.442695
        %v2389 = vpow.pop %v2388
        %v2390 = vmul.f32 %v2322, 1.442695
        %v2391 = vpow.pop %v2390
        %v2392 = vmul.f32 %v2323, 1.442695
        %v2393 = vpow.pop %v2392
        %v2394 = vmul.f32 %v2324, 1.442695
        %v2395 = vpow.pop %v2394
        %v2396 = vmul.f32 %v2325, 1.442695
        %v2397 = vpow.pop %v2396
        %v2398 = vsel %vm825, %v2329, 0.0
        %v2399 = vadd.f32 %v2327, %v2398
        %2400 = vadd.xlane.f32.xlu0 %v2399
        %v2401 = vpop.xlane.xlu0 %2400
        %v2402 = vsel %vm825, %v2333, 0.0
        %v2403 = vadd.f32 %v2331, %v2402
        %2404 = vadd.xlane.f32.xlu0 %v2403
        %v2405 = vpop.xlane.xlu0 %2404
        %v2406 = vsel %vm825, %v2337, 0.0
        %v2407 = vadd.f32 %v2335, %v2406
        %2408 = vadd.xlane.f32.xlu0 %v2407
        %v2409 = vpop.xlane.xlu0 %2408
        %v2410 = vsel %vm825, %v2341, 0.0
        %v2411 = vadd.f32 %v2339, %v2410
        %2412 = vadd.xlane.f32.xlu0 %v2411
        %v2413 = vpop.xlane.xlu0 %2412
        %v2414 = vsel %vm825, %v2345, 0.0
        %v2415 = vadd.f32 %v2343, %v2414
        %2416 = vadd.xlane.f32.xlu0 %v2415
        %v2417 = vpop.xlane.xlu0 %2416
        %v2418 = vsel %vm825, %v2349, 0.0
        %v2419 = vadd.f32 %v2347, %v2418
        %2420 = vadd.xlane.f32.xlu0 %v2419
        %v2421 = vpop.xlane.xlu0 %2420
        %v2422 = vsel %vm825, %v2353, 0.0
        %v2423 = vadd.f32 %v2351, %v2422
        %2424 = vadd.xlane.f32.xlu0 %v2423
        %v2425 = vpop.xlane.xlu0 %2424
        %v2426 = vsel %vm825, %v2357, 0.0
        %v2427 = vadd.f32 %v2355, %v2426
        %2428 = vadd.xlane.f32.xlu0 %v2427
        %v2429 = vpop.xlane.xlu0 %2428
        %v2430 = vsel %vm825, %v2361, 0.0
        %v2431 = vadd.f32 %v2359, %v2430
        %2432 = vadd.xlane.f32.xlu0 %v2431
        %v2433 = vpop.xlane.xlu0 %2432
        %v2434 = vsel %vm825, %v2365, 0.0
        %v2435 = vadd.f32 %v2363, %v2434
        %2436 = vadd.xlane.f32.xlu0 %v2435
        %v2437 = vpop.xlane.xlu0 %2436
        %v2438 = vsel %vm825, %v2369, 0.0
        %v2439 = vadd.f32 %v2367, %v2438
        %2440 = vadd.xlane.f32.xlu0 %v2439
        %v2441 = vpop.xlane.xlu0 %2440
        %v2442 = vsel %vm825, %v2373, 0.0
        %v2443 = vadd.f32 %v2371, %v2442
        %2444 = vadd.xlane.f32.xlu0 %v2443
        %v2445 = vpop.xlane.xlu0 %2444
        %v2446 = vsel %vm825, %v2377, 0.0
        %v2447 = vadd.f32 %v2375, %v2446
        %2448 = vadd.xlane.f32.xlu0 %v2447
        %v2449 = vpop.xlane.xlu0 %2448
        %v2450 = vsel %vm825, %v2381, 0.0
        %v2451 = vadd.f32 %v2379, %v2450
        %2452 = vadd.xlane.f32.xlu0 %v2451
        %v2453 = vpop.xlane.xlu0 %2452
        %v2454 = vsel %vm825, %v2385, 0.0
        %v2455 = vadd.f32 %v2383, %v2454
        %2456 = vadd.xlane.f32.xlu0 %v2455
        %v2457 = vpop.xlane.xlu0 %2456
        %v2458 = vsel %vm825, %v2389, 0.0
        %v2459 = vadd.f32 %v2387, %v2458
        %2460 = vadd.xlane.f32.xlu0 %v2459
        %v2461 = vpop.xlane.xlu0 %2460
        %v2462 = vsel %vm825, %v2393, 0.0
        %v2463 = vadd.f32 %v2391, %v2462
        %2464 = vadd.xlane.f32.xlu0 %v2463
        %v2465 = vpop.xlane.xlu0 %2464
        %v2466 = vsel %vm825, %v2397, 0.0
        %v2467 = vadd.f32 %v2395, %v2466
        %2468 = vadd.xlane.f32.xlu0 %v2467
        %v2469 = vpop.xlane.xlu0 %2468
        %v2470 = vrcp.pop %v2401
        %v2471 = vrcp.pop %v2405
        %v2472 = vrcp.pop %v2409
        %v2473 = vrcp.pop %v2413
        %v2474 = vrcp.pop %v2417
        %v2475 = vrcp.pop %v2421
        %v2476 = vrcp.pop %v2425
        %v2477 = vrcp.pop %v2429
        %v2478 = vrcp.pop %v2433
        %v2479 = vrcp.pop %v2437
        %v2480 = vrcp.pop %v2441
        %v2481 = vrcp.pop %v2445
        %v2482 = vrcp.pop %v2449
        %v2483 = vrcp.pop %v2453
        %v2484 = vrcp.pop %v2457
        %v2485 = vrcp.pop %v2461
        %v2486 = vrcp.pop %v2465
        %v2487 = vrcp.pop %v2469
        %v2488 = vmul.f32 %v2327, %v2470
        %v2489 = vmul.f32 %v2329, %v2470
        %v2490 = vmul.f32 %v2331, %v2471
        %v2491 = vmul.f32 %v2333, %v2471
        %v2492 = vmul.f32 %v2335, %v2472
        %v2493 = vmul.f32 %v2337, %v2472
        %v2494 = vmul.f32 %v2339, %v2473
        %v2495 = vmul.f32 %v2341, %v2473
        %v2496 = vmul.f32 %v2343, %v2474
        %v2497 = vmul.f32 %v2345, %v2474
        %v2498 = vmul.f32 %v2347, %v2475
        %v2499 = vmul.f32 %v2349, %v2475
        %v2500 = vmul.f32 %v2351, %v2476
        %v2501 = vmul.f32 %v2353, %v2476
        %v2502 = vmul.f32 %v2355, %v2477
        %v2503 = vmul.f32 %v2357, %v2477
        %v2504 = vmul.f32 %v2359, %v2478
        %v2505 = vmul.f32 %v2361, %v2478
        %v2506 = vmul.f32 %v2363, %v2479
        %v2507 = vmul.f32 %v2365, %v2479
        %v2508 = vmul.f32 %v2367, %v2480
        %v2509 = vmul.f32 %v2369, %v2480
        %v2510 = vmul.f32 %v2371, %v2481
        %v2511 = vmul.f32 %v2373, %v2481
        %v2512 = vmul.f32 %v2375, %v2482
        %v2513 = vmul.f32 %v2377, %v2482
        %v2514 = vmul.f32 %v2379, %v2483
        %v2515 = vmul.f32 %v2381, %v2483
        %v2516 = vmul.f32 %v2383, %v2484
        %v2517 = vmul.f32 %v2385, %v2484
        %v2518 = vmul.f32 %v2387, %v2485
        %v2519 = vmul.f32 %v2389, %v2485
        %v2520 = vmul.f32 %v2391, %v2486
        %v2521 = vmul.f32 %v2393, %v2486
        %v2522 = vmul.f32 %v2395, %v2487
        %v2523 = vmul.f32 %v2397, %v2487
        %v2524 = vpack.c.bf16 %v2490, %v2488
        %v2525 = vpack.c.bf16 %v2491, %v2489
        %v2526 = vpack.c.bf16 %v2494, %v2492
        %v2527 = vpack.c.bf16 %v2495, %v2493
        %v2528 = vpack.c.bf16 %v2498, %v2496
        %v2529 = vpack.c.bf16 %v2499, %v2497
        %v2530 = vpack.c.bf16 %v2502, %v2500
        %v2531 = vpack.c.bf16 %v2503, %v2501
        %v2532 = vpack.c.bf16 %v2506, %v2504
        %v2533 = vpack.c.bf16 %v2507, %v2505
        %v2534 = vpack.c.bf16 %v2510, %v2508
        %v2535 = vpack.c.bf16 %v2511, %v2509
        %v2536 = vpack.c.bf16 %v2514, %v2512
        %v2537 = vpack.c.bf16 %v2515, %v2513
        %v2538 = vpack.c.bf16 %v2518, %v2516
        %v2539 = vpack.c.bf16 %v2519, %v2517
        %v2540 = vpack.c.bf16 %v2522, %v2520
        %v2541 = vpack.c.bf16 %v2523, %v2521
        %2542 = vrot.lane.b32.xlu0 %v638, 64
        %v2543 = vpop.permute.xlu0 %2542
        %2544 = vrot.lane.b32.xlu0 %v639, 64
        %v2545 = vpop.permute.xlu0 %2544
        %2546 = vrot.lane.b32.xlu0 %v640, 64
        %v2547 = vpop.permute.xlu0 %2546
        %2548 = vrot.lane.b32.xlu0 %v641, 64
        %v2549 = vpop.permute.xlu0 %2548
        %2550 = vrot.lane.b32.xlu0 %v642, 64
        %v2551 = vpop.permute.xlu0 %2550
        %2552 = vrot.lane.b32.xlu0 %v643, 64
        %v2553 = vpop.permute.xlu0 %2552
        %2554 = vrot.lane.b32.xlu0 %v644, 64
        %v2555 = vpop.permute.xlu0 %2554
        %2556 = vrot.lane.b32.xlu0 %v645, 64
        %v2557 = vpop.permute.xlu0 %2556
        %2558 = vrot.lane.b32.xlu0 %v646, 64
        %v2559 = vpop.permute.xlu0 %2558
        %v2570 = vsel %vm825, %v2525, 0
        %v2573 = vsel %vm825, %v2527, 0
        %v2576 = vsel %vm825, %v2529, 0
        %v2579 = vsel %vm825, %v2531, 0
        %v2582 = vsel %vm825, %v2533, 0
        %v2585 = vsel %vm825, %v2535, 0
        %v2588 = vsel %vm825, %v2537, 0
        %v2591 = vsel %vm825, %v2539, 0
        %v2594 = vsel %vm825, %v2541, 0
        %2596 = vmatprep.subr.bf16.mxu0 0
        %2597 = vmatpush1.bf16.msra.mxu0 %v2543
        %2598 = vmatprep.subr.bf16.mxu0 0
        %2599 = vmatpush1.bf16.msra.mxu0 %v2545
        %2600 = vmatprep.subr.bf16.mxu0 0
        %2601 = vmatpush1.bf16.msra.mxu0 %v2547
        %2602 = vmatprep.subr.bf16.mxu0 0
        %2603 = vmatpush1.bf16.msra.mxu0 %v2549
        %2604 = vmatprep.subr.bf16.mxu0 0
        %2605 = vmatpush1.bf16.msra.mxu0 %v2551
        %2606 = vmatprep.subr.bf16.mxu0 0
        %2607 = vmatpush1.bf16.msra.mxu0 %v2553
        %2608 = vmatprep.subr.bf16.mxu0 0
        %2609 = vmatpush1.bf16.msra.mxu0 %v2555
        %2610 = vmatprep.subr.bf16.mxu0 0
        %2611 = vmatpush1.bf16.msra.mxu0 %v2557
        %2612 = vmatprep.subr.bf16.mxu0 0
        %2613 = vmatpush1.bf16.msra.mxu0 %v2559
        %2614 = vmatprep.subr.bf16.mxu0 0
        %2615 = vmatpush1.bf16.msra.mxu0 0
        %2616 = vmatprep.subr.bf16.mxu0 0
        %2617 = vmatpush1.bf16.msra.mxu0 0
        %2618 = vmatprep.subr.bf16.mxu0 0
        %2619 = vmatpush1.bf16.msra.mxu0 0
        %2620 = vmatprep.subr.bf16.mxu0 0
        %2621 = vmatpush1.bf16.msra.mxu0 0
        %2622 = vmatprep.subr.bf16.mxu0 0
        %2623 = vmatpush1.bf16.msra.mxu0 0
        %2624 = vmatprep.subr.bf16.mxu0 0
        %2625 = vmatpush1.bf16.msra.mxu0 0
        %2626 = vmatprep.subr.bf16.mxu0 0
        %2627 = vmatpush1.bf16.msra.mxu0 0
        %2628 = vmatprep.mubr.bf16.mxu0 %v2570
        %2629 = vmatmul.mubr.bf16.gmra.mrb[0].mxu0 %v2524
        %v2630 = vpop.f32.mrb[0].mxu0
        %v2631 = vadd.f32 0.0, %v2630
        %v2632 = vpop.f32.mrb[0].mxu0
        %v2633 = vpop.f32.mrb[0].mxu0
        %v2634 = vadd.f32 0.0, %v2633
        %v2635 = vpop.f32.mrb[0].mxu0
        %2636 = vmatprep.mubr.bf16.mxu0 %v2573
        %2637 = vmatmul.mubr.bf16.gmra.mrb[0].mxu0 %v2526
        %v2638 = vpop.f32.mrb[0].mxu0
        %v2639 = vadd.f32 0.0, %v2638
        %v2640 = vpop.f32.mrb[0].mxu0
        %v2641 = vpop.f32.mrb[0].mxu0
        %v2642 = vadd.f32 0.0, %v2641
        %v2643 = vpop.f32.mrb[0].mxu0
        %2644 = vmatprep.mubr.bf16.mxu0 %v2576
        %2645 = vmatmul.mubr.bf16.gmra.mrb[0].mxu0 %v2528
        %v2646 = vpop.f32.mrb[0].mxu0
        %v2647 = vadd.f32 0.0, %v2646
        %v2648 = vpop.f32.mrb[0].mxu0
        %v2649 = vpop.f32.mrb[0].mxu0
        %v2650 = vadd.f32 0.0, %v2649
        %v2651 = vpop.f32.mrb[0].mxu0
        %2652 = vmatprep.mubr.bf16.mxu0 %v2579
        %2653 = vmatmul.mubr.bf16.gmra.mrb[0].mxu0 %v2530
        %v2654 = vpop.f32.mrb[0].mxu0
        %v2655 = vadd.f32 0.0, %v2654
        %v2656 = vpop.f32.mrb[0].mxu0
        %v2657 = vpop.f32.mrb[0].mxu0
        %v2658 = vadd.f32 0.0, %v2657
        %v2659 = vpop.f32.mrb[0].mxu0
        %2660 = vmatprep.mubr.bf16.mxu0 %v2582
        %2661 = vmatmul.mubr.bf16.gmra.mrb[0].mxu0 %v2532
        %v2662 = vpop.f32.mrb[0].mxu0
        %v2663 = vadd.f32 0.0, %v2662
        %v2664 = vpop.f32.mrb[0].mxu0
        %v2665 = vpop.f32.mrb[0].mxu0
        %v2666 = vadd.f32 0.0, %v2665
        %v2667 = vpop.f32.mrb[0].mxu0
        %2668 = vmatprep.mubr.bf16.mxu0 %v2585
        %2669 = vmatmul.mubr.bf16.gmra.mrb[0].mxu0 %v2534
        %v2670 = vpop.f32.mrb[0].mxu0
        %v2671 = vadd.f32 0.0, %v2670
        %v2672 = vpop.f32.mrb[0].mxu0
        %v2673 = vpop.f32.mrb[0].mxu0
        %v2674 = vadd.f32 0.0, %v2673
        %v2675 = vpop.f32.mrb[0].mxu0
        %2676 = vmatprep.mubr.bf16.mxu0 %v2588
        %2677 = vmatmul.mubr.bf16.gmra.mrb[0].mxu0 %v2536
        %v2678 = vpop.f32.mrb[0].mxu0
        %v2679 = vadd.f32 0.0, %v2678
        %v2680 = vpop.f32.mrb[0].mxu0
        %v2681 = vpop.f32.mrb[0].mxu0
        %v2682 = vadd.f32 0.0, %v2681
        %v2683 = vpop.f32.mrb[0].mxu0
        %2684 = vmatprep.mubr.bf16.mxu0 %v2591
        %2685 = vmatmul.mubr.bf16.gmra.mrb[0].mxu0 %v2538
        %v2686 = vpop.f32.mrb[0].mxu0
        %v2687 = vadd.f32 0.0, %v2686
        %v2688 = vpop.f32.mrb[0].mxu0
        %v2689 = vpop.f32.mrb[0].mxu0
        %v2690 = vadd.f32 0.0, %v2689
        %v2691 = vpop.f32.mrb[0].mxu0
        %2692 = vmatprep.mubr.bf16.mxu0 %v2594
        %2693 = vmatmul.mubr.bf16.gmra.mrb[0].mxu0 %v2540
        %v2694 = vpop.f32.mrb[0].mxu0
        %v2695 = vadd.f32 0.0, %v2694
        %v2696 = vpop.f32.mrb[0].mxu0
        %v2697 = vpop.f32.mrb[0].mxu0
        %v2698 = vadd.f32 0.0, %v2697
        %v2699 = vpop.f32.mrb[0].mxu0
        %2700 = vdwg.mxu0
        %2701 = vrot.lane.b32.xlu0 %v620, 32
        %v2702 = vpop.permute.xlu0 %2701
        %2703 = vrot.lane.b32.xlu0 %v621, 32
        %v2704 = vpop.permute.xlu0 %2703
        %2705 = vrot.lane.b32.xlu0 %v622, 32
        %v2706 = vpop.permute.xlu0 %2705
        %2707 = vrot.lane.b32.xlu0 %v623, 32
        %v2708 = vpop.permute.xlu0 %2707
        %2709 = vrot.lane.b32.xlu0 %v624, 32
        %v2710 = vpop.permute.xlu0 %2709
        %2711 = vrot.lane.b32.xlu0 %v625, 32
        %v2712 = vpop.permute.xlu0 %2711
        %2713 = vrot.lane.b32.xlu0 %v626, 32
        %v2714 = vpop.permute.xlu0 %2713
        %2715 = vrot.lane.b32.xlu0 %v627, 32
        %v2716 = vpop.permute.xlu0 %2715
        %2717 = vrot.lane.b32.xlu0 %v628, 32
        %v2718 = vpop.permute.xlu0 %2717
        %2719 = vrot.lane.b32.xlu0 %v629, 32
        %v2720 = vpop.permute.xlu0 %2719
        %2721 = vrot.lane.b32.xlu0 %v630, 32
        %v2722 = vpop.permute.xlu0 %2721
        %2723 = vrot.lane.b32.xlu0 %v631, 32
        %v2724 = vpop.permute.xlu0 %2723
        %2725 = vrot.lane.b32.xlu0 %v632, 32
        %v2726 = vpop.permute.xlu0 %2725
        %2727 = vrot.lane.b32.xlu0 %v633, 32
        %v2728 = vpop.permute.xlu0 %2727
        %2729 = vrot.lane.b32.xlu0 %v634, 32
        %v2730 = vpop.permute.xlu0 %2729
        %2731 = vrot.lane.b32.xlu0 %v635, 32
        %v2732 = vpop.permute.xlu0 %2731
        %2733 = vrot.lane.b32.xlu0 %v636, 32
        %v2734 = vpop.permute.xlu0 %2733
        %2735 = vrot.lane.b32.xlu0 %v637, 32
        %v2736 = vpop.permute.xlu0 %2735
        %v2738 = vsel %vm647, %v2702, 0
        %v2741 = vsel %vm647, %v2704, 0
        %v2744 = vsel %vm647, %v2706, 0
        %v2747 = vsel %vm647, %v2708, 0
        %v2750 = vsel %vm647, %v2710, 0
        %v2753 = vsel %vm647, %v2712, 0
        %v2756 = vsel %vm647, %v2714, 0
        %v2759 = vsel %vm647, %v2716, 0
        %v2762 = vsel %vm647, %v2718, 0
        %v2765 = vsel %vm647, %v2720, 0
        %v2768 = vsel %vm647, %v2722, 0
        %v2771 = vsel %vm647, %v2724, 0
        %v2774 = vsel %vm647, %v2726, 0
        %v2777 = vsel %vm647, %v2728, 0
        %v2780 = vsel %vm647, %v2730, 0
        %v2783 = vsel %vm647, %v2732, 0
        %v2786 = vsel %vm647, %v2734, 0
        %v2789 = vsel %vm647, %v2736, 0
        %2791 = vmatprep.subr.bf16.mxu0 0
        %2792 = vmatpush1.bf16.xpose.msra.mxu0 %v2765
        %2793 = vmatprep.subr.bf16.mxu0 0
        %2794 = vmatpush1.bf16.xpose.msra.mxu0 %v2768
        %2795 = vmatprep.subr.bf16.mxu0 0
        %2796 = vmatpush1.bf16.xpose.msra.mxu0 %v2771
        %2797 = vmatprep.subr.bf16.mxu0 0
        %2798 = vmatpush1.bf16.xpose.msra.mxu0 %v2774
        %2799 = vmatprep.subr.bf16.mxu0 0
        %2800 = vmatpush1.bf16.xpose.msra.mxu0 %v2777
        %2801 = vmatprep.subr.bf16.mxu0 0
        %2802 = vmatpush1.bf16.xpose.msra.mxu0 %v2780
        %2803 = vmatprep.subr.bf16.mxu0 0
        %2804 = vmatpush1.bf16.xpose.msra.mxu0 %v2783
        %2805 = vmatprep.subr.bf16.mxu0 0
        %2806 = vmatpush1.bf16.xpose.msra.mxu0 %v2786
        %2807 = vmatprep.subr.bf16.mxu0 0
        %2808 = vmatpush1.bf16.xpose.msra.mxu0 %v2789
        %2809 = vmatprep.subr.bf16.mxu0 0
        %2810 = vmatpush1.bf16.xpose.msra.mxu0 0
        %2811 = vmatprep.subr.bf16.mxu0 0
        %2812 = vmatpush1.bf16.xpose.msra.mxu0 0
        %2813 = vmatprep.subr.bf16.mxu0 0
        %2814 = vmatpush1.bf16.xpose.msra.mxu0 0
        %2815 = vmatprep.subr.bf16.mxu0 0
        %2816 = vmatpush1.bf16.xpose.msra.mxu0 0
        %2817 = vmatprep.subr.bf16.mxu0 0
        %2818 = vmatpush1.bf16.xpose.msra.mxu0 0
        %2819 = vmatprep.subr.bf16.mxu0 0
        %2820 = vmatpush1.bf16.xpose.msra.mxu0 0
        %2821 = vmatprep.subr.bf16.mxu0 0
        %2822 = vmatpush1.bf16.xpose.msra.mxu0 0
        %2823 = vmatprep.mubr.bf16.mxu0 0
        %2824 = vmatmul.mubr.bf16.gmra.mrb[0].mxu0 %v2738
        %v2825 = vpop.f32.mrb[0].mxu0
        %v2826 = vadd.f32 0.0, %v2825
        %v2827 = vpop.f32.mrb[0].mxu0
        %v2828 = vadd.f32 0.0, %v2827
        %v2829 = vpop.f32.mrb[0].mxu0
        %v2830 = vadd.f32 0.0, %v2829
        %v2831 = vpop.f32.mrb[0].mxu0
        %v2832 = vadd.f32 0.0, %v2831
        %2833 = vmatprep.mubr.bf16.mxu0 0
        %2834 = vmatmul.mubr.bf16.gmra.mrb[0].mxu0 %v2741
        %v2835 = vpop.f32.mrb[0].mxu0
        %v2836 = vadd.f32 0.0, %v2835
        %v2837 = vpop.f32.mrb[0].mxu0
        %v2838 = vadd.f32 0.0, %v2837
        %v2839 = vpop.f32.mrb[0].mxu0
        %v2840 = vadd.f32 0.0, %v2839
        %v2841 = vpop.f32.mrb[0].mxu0
        %v2842 = vadd.f32 0.0, %v2841
        %2843 = vmatprep.mubr.bf16.mxu0 0
        %2844 = vmatmul.mubr.bf16.gmra.mrb[0].mxu0 %v2744
        %v2845 = vpop.f32.mrb[0].mxu0
        %v2846 = vadd.f32 0.0, %v2845
        %v2847 = vpop.f32.mrb[0].mxu0
        %v2848 = vadd.f32 0.0, %v2847
        %v2849 = vpop.f32.mrb[0].mxu0
        %v2850 = vadd.f32 0.0, %v2849
        %v2851 = vpop.f32.mrb[0].mxu0
        %v2852 = vadd.f32 0.0, %v2851
        %2853 = vmatprep.mubr.bf16.mxu0 0
        %2854 = vmatmul.mubr.bf16.gmra.mrb[0].mxu0 %v2747
        %v2855 = vpop.f32.mrb[0].mxu0
        %v2856 = vadd.f32 0.0, %v2855
        %v2857 = vpop.f32.mrb[0].mxu0
        %v2858 = vadd.f32 0.0, %v2857
        %v2859 = vpop.f32.mrb[0].mxu0
        %v2860 = vadd.f32 0.0, %v2859
        %v2861 = vpop.f32.mrb[0].mxu0
        %v2862 = vadd.f32 0.0, %v2861
        %2863 = vmatprep.mubr.bf16.mxu0 0
        %2864 = vmatmul.mubr.bf16.gmra.mrb[0].mxu0 %v2750
        %v2865 = vpop.f32.mrb[0].mxu0
        %v2866 = vadd.f32 0.0, %v2865
        %v2867 = vpop.f32.mrb[0].mxu0
        %v2868 = vadd.f32 0.0, %v2867
        %v2869 = vpop.f32.mrb[0].mxu0
        %v2870 = vadd.f32 0.0, %v2869
        %v2871 = vpop.f32.mrb[0].mxu0
        %v2872 = vadd.f32 0.0, %v2871
        %2873 = vmatprep.mubr.bf16.mxu0 0
        %2874 = vmatmul.mubr.bf16.gmra.mrb[0].mxu0 %v2753
        %v2875 = vpop.f32.mrb[0].mxu0
        %v2876 = vadd.f32 0.0, %v2875
        %v2877 = vpop.f32.mrb[0].mxu0
        %v2878 = vadd.f32 0.0, %v2877
        %v2879 = vpop.f32.mrb[0].mxu0
        %v2880 = vadd.f32 0.0, %v2879
        %v2881 = vpop.f32.mrb[0].mxu0
        %v2882 = vadd.f32 0.0, %v2881
        %2883 = vmatprep.mubr.bf16.mxu0 0
        %2884 = vmatmul.mubr.bf16.gmra.mrb[0].mxu0 %v2756
        %v2885 = vpop.f32.mrb[0].mxu0
        %v2886 = vadd.f32 0.0, %v2885
        %v2887 = vpop.f32.mrb[0].mxu0
        %v2888 = vadd.f32 0.0, %v2887
        %v2889 = vpop.f32.mrb[0].mxu0
        %v2890 = vadd.f32 0.0, %v2889
        %v2891 = vpop.f32.mrb[0].mxu0
        %v2892 = vadd.f32 0.0, %v2891
        %2893 = vmatprep.mubr.bf16.mxu0 0
        %2894 = vmatmul.mubr.bf16.gmra.mrb[0].mxu0 %v2759
        %v2895 = vpop.f32.mrb[0].mxu0
        %v2896 = vadd.f32 0.0, %v2895
        %v2897 = vpop.f32.mrb[0].mxu0
        %v2898 = vadd.f32 0.0, %v2897
        %v2899 = vpop.f32.mrb[0].mxu0
        %v2900 = vadd.f32 0.0, %v2899
        %v2901 = vpop.f32.mrb[0].mxu0
        %v2902 = vadd.f32 0.0, %v2901
        %2903 = vmatprep.mubr.bf16.mxu0 0
        %2904 = vmatmul.mubr.bf16.gmra.mrb[0].mxu0 %v2762
        %v2905 = vpop.f32.mrb[0].mxu0
        %v2906 = vadd.f32 0.0, %v2905
        %v2907 = vpop.f32.mrb[0].mxu0
        %v2908 = vadd.f32 0.0, %v2907
        %v2909 = vpop.f32.mrb[0].mxu0
        %v2910 = vadd.f32 0.0, %v2909
        %v2911 = vpop.f32.mrb[0].mxu0
        %v2912 = vadd.f32 0.0, %v2911
        %2913 = vdwg.mxu0
        %v2914 = vsel %vm825, %v2828, -inf
        %v2915 = vmax.f32 %v2826, %v2914
        %2916 = vmax.xlane.f32.xlu0 %v2915
        %v2917 = vpop.xlane.xlu0 %2916
        %v2918 = vsel %vm825, %v2832, -inf
        %v2919 = vmax.f32 %v2830, %v2918
        %2920 = vmax.xlane.f32.xlu0 %v2919
        %v2921 = vpop.xlane.xlu0 %2920
        %v2922 = vsel %vm825, %v2838, -inf
        %v2923 = vmax.f32 %v2836, %v2922
        %2924 = vmax.xlane.f32.xlu0 %v2923
        %v2925 = vpop.xlane.xlu0 %2924
        %v2926 = vsel %vm825, %v2842, -inf
        %v2927 = vmax.f32 %v2840, %v2926
        %2928 = vmax.xlane.f32.xlu0 %v2927
        %v2929 = vpop.xlane.xlu0 %2928
        %v2930 = vsel %vm825, %v2848, -inf
        %v2931 = vmax.f32 %v2846, %v2930
        %2932 = vmax.xlane.f32.xlu0 %v2931
        %v2933 = vpop.xlane.xlu0 %2932
        %v2934 = vsel %vm825, %v2852, -inf
        %v2935 = vmax.f32 %v2850, %v2934
        %2936 = vmax.xlane.f32.xlu0 %v2935
        %v2937 = vpop.xlane.xlu0 %2936
        %v2938 = vsel %vm825, %v2858, -inf
        %v2939 = vmax.f32 %v2856, %v2938
        %2940 = vmax.xlane.f32.xlu0 %v2939
        %v2941 = vpop.xlane.xlu0 %2940
        %v2942 = vsel %vm825, %v2862, -inf
        %v2943 = vmax.f32 %v2860, %v2942
        %2944 = vmax.xlane.f32.xlu0 %v2943
        %v2945 = vpop.xlane.xlu0 %2944
        %v2946 = vsel %vm825, %v2868, -inf
        %v2947 = vmax.f32 %v2866, %v2946
        %2948 = vmax.xlane.f32.xlu0 %v2947
        %v2949 = vpop.xlane.xlu0 %2948
        %v2950 = vsel %vm825, %v2872, -inf
        %v2951 = vmax.f32 %v2870, %v2950
        %2952 = vmax.xlane.f32.xlu0 %v2951
        %v2953 = vpop.xlane.xlu0 %2952
        %v2954 = vsel %vm825, %v2878, -inf
        %v2955 = vmax.f32 %v2876, %v2954
        %2956 = vmax.xlane.f32.xlu0 %v2955
        %v2957 = vpop.xlane.xlu0 %2956
        %v2958 = vsel %vm825, %v2882, -inf
        %v2959 = vmax.f32 %v2880, %v2958
        %2960 = vmax.xlane.f32.xlu0 %v2959
        %v2961 = vpop.xlane.xlu0 %2960
        %v2962 = vsel %vm825, %v2888, -inf
        %v2963 = vmax.f32 %v2886, %v2962
        %2964 = vmax.xlane.f32.xlu0 %v2963
        %v2965 = vpop.xlane.xlu0 %2964
        %v2966 = vsel %vm825, %v2892, -inf
        %v2967 = vmax.f32 %v2890, %v2966
        %2968 = vmax.xlane.f32.xlu0 %v2967
        %v2969 = vpop.xlane.xlu0 %2968
        %v2970 = vsel %vm825, %v2898, -inf
        %v2971 = vmax.f32 %v2896, %v2970
        %2972 = vmax.xlane.f32.xlu0 %v2971
        %v2973 = vpop.xlane.xlu0 %2972
        %v2974 = vsel %vm825, %v2902, -inf
        %v2975 = vmax.f32 %v2900, %v2974
        %2976 = vmax.xlane.f32.xlu0 %v2975
        %v2977 = vpop.xlane.xlu0 %2976
        %v2978 = vsel %vm825, %v2908, -inf
        %v2979 = vmax.f32 %v2906, %v2978
        %2980 = vmax.xlane.f32.xlu0 %v2979
        %v2981 = vpop.xlane.xlu0 %2980
        %v2982 = vsel %vm825, %v2912, -inf
        %v2983 = vmax.f32 %v2910, %v2982
        %2984 = vmax.xlane.f32.xlu0 %v2983
        %v2985 = vpop.xlane.xlu0 %2984
        %v2986 = vsub.f32 %v2826, %v2917
        %v2987 = vsub.f32 %v2828, %v2917
        %v2988 = vsub.f32 %v2830, %v2921
        %v2989 = vsub.f32 %v2832, %v2921
        %v2990 = vsub.f32 %v2836, %v2925
        %v2991 = vsub.f32 %v2838, %v2925
        %v2992 = vsub.f32 %v2840, %v2929
        %v2993 = vsub.f32 %v2842, %v2929
        %v2994 = vsub.f32 %v2846, %v2933
        %v2995 = vsub.f32 %v2848, %v2933
        %v2996 = vsub.f32 %v2850, %v2937
        %v2997 = vsub.f32 %v2852, %v2937
        %v2998 = vsub.f32 %v2856, %v2941
        %v2999 = vsub.f32 %v2858, %v2941
        %v3000 = vsub.f32 %v2860, %v2945
        %v3001 = vsub.f32 %v2862, %v2945
        %v3002 = vsub.f32 %v2866, %v2949
        %v3003 = vsub.f32 %v2868, %v2949
        %v3004 = vsub.f32 %v2870, %v2953
        %v3005 = vsub.f32 %v2872, %v2953
        %v3006 = vsub.f32 %v2876, %v2957
        %v3007 = vsub.f32 %v2878, %v2957
        %v3008 = vsub.f32 %v2880, %v2961
        %v3009 = vsub.f32 %v2882, %v2961
        %v3010 = vsub.f32 %v2886, %v2965
        %v3011 = vsub.f32 %v2888, %v2965
        %v3012 = vsub.f32 %v2890, %v2969
        %v3013 = vsub.f32 %v2892, %v2969
        %v3014 = vsub.f32 %v2896, %v2973
        %v3015 = vsub.f32 %v2898, %v2973
        %v3016 = vsub.f32 %v2900, %v2977
        %v3017 = vsub.f32 %v2902, %v2977
        %v3018 = vsub.f32 %v2906, %v2981
        %v3019 = vsub.f32 %v2908, %v2981
        %v3020 = vsub.f32 %v2910, %v2985
        %v3021 = vsub.f32 %v2912, %v2985
        %v3022 = vmul.f32 %v2986, 1.442695
        %v3023 = vpow.pop %v3022
        %v3024 = vmul.f32 %v2987, 1.442695
        %v3025 = vpow.pop %v3024
        %v3026 = vmul.f32 %v2988, 1.442695
        %v3027 = vpow.pop %v3026
        %v3028 = vmul.f32 %v2989, 1.442695
        %v3029 = vpow.pop %v3028
        %v3030 = vmul.f32 %v2990, 1.442695
        %v3031 = vpow.pop %v3030
        %v3032 = vmul.f32 %v2991, 1.442695
        %v3033 = vpow.pop %v3032
        %v3034 = vmul.f32 %v2992, 1.442695
        %v3035 = vpow.pop %v3034
        %v3036 = vmul.f32 %v2993, 1.442695
        %v3037 = vpow.pop %v3036
        %v3038 = vmul.f32 %v2994, 1.442695
        %v3039 = vpow.pop %v3038
        %v3040 = vmul.f32 %v2995, 1.442695
        %v3041 = vpow.pop %v3040
        %v3042 = vmul.f32 %v2996, 1.442695
        %v3043 = vpow.pop %v3042
        %v3044 = vmul.f32 %v2997, 1.442695
        %v3045 = vpow.pop %v3044
        %v3046 = vmul.f32 %v2998, 1.442695
        %v3047 = vpow.pop %v3046
        %v3048 = vmul.f32 %v2999, 1.442695
        %v3049 = vpow.pop %v3048
        %v3050 = vmul.f32 %v3000, 1.442695
        %v3051 = vpow.pop %v3050
        %v3052 = vmul.f32 %v3001, 1.442695
        %v3053 = vpow.pop %v3052
        %v3054 = vmul.f32 %v3002, 1.442695
        %v3055 = vpow.pop %v3054
        %v3056 = vmul.f32 %v3003, 1.442695
        %v3057 = vpow.pop %v3056
        %v3058 = vmul.f32 %v3004, 1.442695
        %v3059 = vpow.pop %v3058
        %v3060 = vmul.f32 %v3005, 1.442695
        %v3061 = vpow.pop %v3060
        %v3062 = vmul.f32 %v3006, 1.442695
        %v3063 = vpow.pop %v3062
        %v3064 = vmul.f32 %v3007, 1.442695
        %v3065 = vpow.pop %v3064
        %v3066 = vmul.f32 %v3008, 1.442695
        %v3067 = vpow.pop %v3066
        %v3068 = vmul.f32 %v3009, 1.442695
        %v3069 = vpow.pop %v3068
        %v3070 = vmul.f32 %v3010, 1.442695
        %v3071 = vpow.pop %v3070
        %v3072 = vmul.f32 %v3011, 1.442695
        %v3073 = vpow.pop %v3072
        %v3074 = vmul.f32 %v3012, 1.442695
        %v3075 = vpow.pop %v3074
        %v3076 = vmul.f32 %v3013, 1.442695
        %v3077 = vpow.pop %v3076
        %v3078 = vmul.f32 %v3014, 1.442695
        %v3079 = vpow.pop %v3078
        %v3080 = vmul.f32 %v3015, 1.442695
        %v3081 = vpow.pop %v3080
        %v3082 = vmul.f32 %v3016, 1.442695
        %v3083 = vpow.pop %v3082
        %v3084 = vmul.f32 %v3017, 1.442695
        %v3085 = vpow.pop %v3084
        %v3086 = vmul.f32 %v3018, 1.442695
        %v3087 = vpow.pop %v3086
        %v3088 = vmul.f32 %v3019, 1.442695
        %v3089 = vpow.pop %v3088
        %v3090 = vmul.f32 %v3020, 1.442695
        %v3091 = vpow.pop %v3090
        %v3092 = vmul.f32 %v3021, 1.442695
        %v3093 = vpow.pop %v3092
        %v3094 = vsel %vm825, %v3025, 0.0
        %v3095 = vadd.f32 %v3023, %v3094
        %3096 = vadd.xlane.f32.xlu0 %v3095
        %v3097 = vpop.xlane.xlu0 %3096
        %v3098 = vsel %vm825, %v3029, 0.0
        %v3099 = vadd.f32 %v3027, %v3098
        %3100 = vadd.xlane.f32.xlu0 %v3099
        %v3101 = vpop.xlane.xlu0 %3100
        %v3102 = vsel %vm825, %v3033, 0.0
        %v3103 = vadd.f32 %v3031, %v3102
        %3104 = vadd.xlane.f32.xlu0 %v3103
        %v3105 = vpop.xlane.xlu0 %3104
        %v3106 = vsel %vm825, %v3037, 0.0
        %v3107 = vadd.f32 %v3035, %v3106
        %3108 = vadd.xlane.f32.xlu0 %v3107
        %v3109 = vpop.xlane.xlu0 %3108
        %v3110 = vsel %vm825, %v3041, 0.0
        %v3111 = vadd.f32 %v3039, %v3110
        %3112 = vadd.xlane.f32.xlu0 %v3111
        %v3113 = vpop.xlane.xlu0 %3112
        %v3114 = vsel %vm825, %v3045, 0.0
        %v3115 = vadd.f32 %v3043, %v3114
        %3116 = vadd.xlane.f32.xlu0 %v3115
        %v3117 = vpop.xlane.xlu0 %3116
        %v3118 = vsel %vm825, %v3049, 0.0
        %v3119 = vadd.f32 %v3047, %v3118
        %3120 = vadd.xlane.f32.xlu0 %v3119
        %v3121 = vpop.xlane.xlu0 %3120
        %v3122 = vsel %vm825, %v3053, 0.0
        %v3123 = vadd.f32 %v3051, %v3122
        %3124 = vadd.xlane.f32.xlu0 %v3123
        %v3125 = vpop.xlane.xlu0 %3124
        %v3126 = vsel %vm825, %v3057, 0.0
        %v3127 = vadd.f32 %v3055, %v3126
        %3128 = vadd.xlane.f32.xlu0 %v3127
        %v3129 = vpop.xlane.xlu0 %3128
        %v3130 = vsel %vm825, %v3061, 0.0
        %v3131 = vadd.f32 %v3059, %v3130
        %3132 = vadd.xlane.f32.xlu0 %v3131
        %v3133 = vpop.xlane.xlu0 %3132
        %v3134 = vsel %vm825, %v3065, 0.0
        %v3135 = vadd.f32 %v3063, %v3134
        %3136 = vadd.xlane.f32.xlu0 %v3135
        %v3137 = vpop.xlane.xlu0 %3136
        %v3138 = vsel %vm825, %v3069, 0.0
        %v3139 = vadd.f32 %v3067, %v3138
        %3140 = vadd.xlane.f32.xlu0 %v3139
        %v3141 = vpop.xlane.xlu0 %3140
        %v3142 = vsel %vm825, %v3073, 0.0
        %v3143 = vadd.f32 %v3071, %v3142
        %3144 = vadd.xlane.f32.xlu0 %v3143
        %v3145 = vpop.xlane.xlu0 %3144
        %v3146 = vsel %vm825, %v3077, 0.0
        %v3147 = vadd.f32 %v3075, %v3146
        %3148 = vadd.xlane.f32.xlu0 %v3147
        %v3149 = vpop.xlane.xlu0 %3148
        %v3150 = vsel %vm825, %v3081, 0.0
        %v3151 = vadd.f32 %v3079, %v3150
        %3152 = vadd.xlane.f32.xlu0 %v3151
        %v3153 = vpop.xlane.xlu0 %3152
        %v3154 = vsel %vm825, %v3085, 0.0
        %v3155 = vadd.f32 %v3083, %v3154
        %3156 = vadd.xlane.f32.xlu0 %v3155
        %v3157 = vpop.xlane.xlu0 %3156
        %v3158 = vsel %vm825, %v3089, 0.0
        %v3159 = vadd.f32 %v3087, %v3158
        %3160 = vadd.xlane.f32.xlu0 %v3159
        %v3161 = vpop.xlane.xlu0 %3160
        %v3162 = vsel %vm825, %v3093, 0.0
        %v3163 = vadd.f32 %v3091, %v3162
        %3164 = vadd.xlane.f32.xlu0 %v3163
        %v3165 = vpop.xlane.xlu0 %3164
        %v3166 = vrcp.pop %v3097
        %v3167 = vrcp.pop %v3101
        %v3168 = vrcp.pop %v3105
        %v3169 = vrcp.pop %v3109
        %v3170 = vrcp.pop %v3113
        %v3171 = vrcp.pop %v3117
        %v3172 = vrcp.pop %v3121
        %v3173 = vrcp.pop %v3125
        %v3174 = vrcp.pop %v3129
        %v3175 = vrcp.pop %v3133
        %v3176 = vrcp.pop %v3137
        %v3177 = vrcp.pop %v3141
        %v3178 = vrcp.pop %v3145
        %v3179 = vrcp.pop %v3149
        %v3180 = vrcp.pop %v3153
        %v3181 = vrcp.pop %v3157
        %v3182 = vrcp.pop %v3161
        %v3183 = vrcp.pop %v3165
        %v3184 = vmul.f32 %v3023, %v3166
        %v3185 = vmul.f32 %v3025, %v3166
        %v3186 = vmul.f32 %v3027, %v3167
        %v3187 = vmul.f32 %v3029, %v3167
        %v3188 = vmul.f32 %v3031, %v3168
        %v3189 = vmul.f32 %v3033, %v3168
        %v3190 = vmul.f32 %v3035, %v3169
        %v3191 = vmul.f32 %v3037, %v3169
        %v3192 = vmul.f32 %v3039, %v3170
        %v3193 = vmul.f32 %v3041, %v3170
        %v3194 = vmul.f32 %v3043, %v3171
        %v3195 = vmul.f32 %v3045, %v3171
        %v3196 = vmul.f32 %v3047, %v3172
        %v3197 = vmul.f32 %v3049, %v3172
        %v3198 = vmul.f32 %v3051, %v3173
        %v3199 = vmul.f32 %v3053, %v3173
        %v3200 = vmul.f32 %v3055, %v3174
        %v3201 = vmul.f32 %v3057, %v3174
        %v3202 = vmul.f32 %v3059, %v3175
        %v3203 = vmul.f32 %v3061, %v3175
        %v3204 = vmul.f32 %v3063, %v3176
        %v3205 = vmul.f32 %v3065, %v3176
        %v3206 = vmul.f32 %v3067, %v3177
        %v3207 = vmul.f32 %v3069, %v3177
        %v3208 = vmul.f32 %v3071, %v3178
        %v3209 = vmul.f32 %v3073, %v3178
        %v3210 = vmul.f32 %v3075, %v3179
        %v3211 = vmul.f32 %v3077, %v3179
        %v3212 = vmul.f32 %v3079, %v3180
        %v3213 = vmul.f32 %v3081, %v3180
        %v3214 = vmul.f32 %v3083, %v3181
        %v3215 = vmul.f32 %v3085, %v3181
        %v3216 = vmul.f32 %v3087, %v3182
        %v3217 = vmul.f32 %v3089, %v3182
        %v3218 = vmul.f32 %v3091, %v3183
        %v3219 = vmul.f32 %v3093, %v3183
        %v3220 = vpack.c.bf16 %v3186, %v3184
        %v3221 = vpack.c.bf16 %v3187, %v3185
        %v3222 = vpack.c.bf16 %v3190, %v3188
        %v3223 = vpack.c.bf16 %v3191, %v3189
        %v3224 = vpack.c.bf16 %v3194, %v3192
        %v3225 = vpack.c.bf16 %v3195, %v3193
        %v3226 = vpack.c.bf16 %v3198, %v3196
        %v3227 = vpack.c.bf16 %v3199, %v3197
        %v3228 = vpack.c.bf16 %v3202, %v3200
        %v3229 = vpack.c.bf16 %v3203, %v3201
        %v3230 = vpack.c.bf16 %v3206, %v3204
        %v3231 = vpack.c.bf16 %v3207, %v3205
        %v3232 = vpack.c.bf16 %v3210, %v3208
        %v3233 = vpack.c.bf16 %v3211, %v3209
        %v3234 = vpack.c.bf16 %v3214, %v3212
        %v3235 = vpack.c.bf16 %v3215, %v3213
        %v3236 = vpack.c.bf16 %v3218, %v3216
        %v3237 = vpack.c.bf16 %v3219, %v3217
        %3238 = vrot.lane.b32.xlu0 %v638, 32
        %v3239 = vpop.permute.xlu0 %3238
        %3240 = vrot.lane.b32.xlu0 %v639, 32
        %v3241 = vpop.permute.xlu0 %3240
        %3242 = vrot.lane.b32.xlu0 %v640, 32
        %v3243 = vpop.permute.xlu0 %3242
        %3244 = vrot.lane.b32.xlu0 %v641, 32
        %v3245 = vpop.permute.xlu0 %3244
        %3246 = vrot.lane.b32.xlu0 %v642, 32
        %v3247 = vpop.permute.xlu0 %3246
        %3248 = vrot.lane.b32.xlu0 %v643, 32
        %v3249 = vpop.permute.xlu0 %3248
        %3250 = vrot.lane.b32.xlu0 %v644, 32
        %v3251 = vpop.permute.xlu0 %3250
        %3252 = vrot.lane.b32.xlu0 %v645, 32
        %v3253 = vpop.permute.xlu0 %3252
        %3254 = vrot.lane.b32.xlu0 %v646, 32
        %v3255 = vpop.permute.xlu0 %3254
        %v3266 = vsel %vm825, %v3221, 0
        %v3269 = vsel %vm825, %v3223, 0
        %v3272 = vsel %vm825, %v3225, 0
        %v3275 = vsel %vm825, %v3227, 0
        %v3278 = vsel %vm825, %v3229, 0
        %v3281 = vsel %vm825, %v3231, 0
        %v3284 = vsel %vm825, %v3233, 0
        %v3287 = vsel %vm825, %v3235, 0
        %v3290 = vsel %vm825, %v3237, 0
        %3292 = vmatprep.subr.bf16.mxu0 0
        %3293 = vmatpush1.bf16.msra.mxu0 %v3239
        %3294 = vmatprep.subr.bf16.mxu0 0
        %3295 = vmatpush1.bf16.msra.mxu0 %v3241
        %3296 = vmatprep.subr.bf16.mxu0 0
        %3297 = vmatpush1.bf16.msra.mxu0 %v3243
        %3298 = vmatprep.subr.bf16.mxu0 0
        %3299 = vmatpush1.bf16.msra.mxu0 %v3245
        %3300 = vmatprep.subr.bf16.mxu0 0
        %3301 = vmatpush1.bf16.msra.mxu0 %v3247
        %3302 = vmatprep.subr.bf16.mxu0 0
        %3303 = vmatpush1.bf16.msra.mxu0 %v3249
        %3304 = vmatprep.subr.bf16.mxu0 0
        %3305 = vmatpush1.bf16.msra.mxu0 %v3251
        %3306 = vmatprep.subr.bf16.mxu0 0
        %3307 = vmatpush1.bf16.msra.mxu0 %v3253
        %3308 = vmatprep.subr.bf16.mxu0 0
        %3309 = vmatpush1.bf16.msra.mxu0 %v3255
        %3310 = vmatprep.subr.bf16.mxu0 0
        %3311 = vmatpush1.bf16.msra.mxu0 0
        %3312 = vmatprep.subr.bf16.mxu0 0
        %3313 = vmatpush1.bf16.msra.mxu0 0
        %3314 = vmatprep.subr.bf16.mxu0 0
        %3315 = vmatpush1.bf16.msra.mxu0 0
        %3316 = vmatprep.subr.bf16.mxu0 0
        %3317 = vmatpush1.bf16.msra.mxu0 0
        %3318 = vmatprep.subr.bf16.mxu0 0
        %3319 = vmatpush1.bf16.msra.mxu0 0
        %3320 = vmatprep.subr.bf16.mxu0 0
        %3321 = vmatpush1.bf16.msra.mxu0 0
        %3322 = vmatprep.subr.bf16.mxu0 0
        %3323 = vmatpush1.bf16.msra.mxu0 0
        %3324 = vmatprep.mubr.bf16.mxu0 %v3266
        %3325 = vmatmul.mubr.bf16.gmra.mrb[0].mxu0 %v3220
        %v3326 = vpop.f32.mrb[0].mxu0
        %v3327 = vadd.f32 0.0, %v3326
        %v3328 = vpop.f32.mrb[0].mxu0
        %v3329 = vpop.f32.mrb[0].mxu0
        %v3330 = vadd.f32 0.0, %v3329
        %v3331 = vpop.f32.mrb[0].mxu0
        %3332 = vmatprep.mubr.bf16.mxu0 %v3269
        %3333 = vmatmul.mubr.bf16.gmra.mrb[0].mxu0 %v3222
        %v3334 = vpop.f32.mrb[0].mxu0
        %v3335 = vadd.f32 0.0, %v3334
        %v3336 = vpop.f32.mrb[0].mxu0
        %v3337 = vpop.f32.mrb[0].mxu0
        %v3338 = vadd.f32 0.0, %v3337
        %v3339 = vpop.f32.mrb[0].mxu0
        %3340 = vmatprep.mubr.bf16.mxu0 %v3272
        %3341 = vmatmul.mubr.bf16.gmra.mrb[0].mxu0 %v3224
        %v3342 = vpop.f32.mrb[0].mxu0
        %v3343 = vadd.f32 0.0, %v3342
        %v3344 = vpop.f32.mrb[0].mxu0
        %v3345 = vpop.f32.mrb[0].mxu0
        %v3346 = vadd.f32 0.0, %v3345
        %v3347 = vpop.f32.mrb[0].mxu0
        %3348 = vmatprep.mubr.bf16.mxu0 %v3275
        %3349 = vmatmul.mubr.bf16.gmra.mrb[0].mxu0 %v3226
        %v3350 = vpop.f32.mrb[0].mxu0
        %v3351 = vadd.f32 0.0, %v3350
        %v3352 = vpop.f32.mrb[0].mxu0
        %v3353 = vpop.f32.mrb[0].mxu0
        %v3354 = vadd.f32 0.0, %v3353
        %v3355 = vpop.f32.mrb[0].mxu0
        %3356 = vmatprep.mubr.bf16.mxu0 %v3278
        %3357 = vmatmul.mubr.bf16.gmra.mrb[0].mxu0 %v3228
        %v3358 = vpop.f32.mrb[0].mxu0
        %v3359 = vadd.f32 0.0, %v3358
        %v3360 = vpop.f32.mrb[0].mxu0
        %v3361 = vpop.f32.mrb[0].mxu0
        %v3362 = vadd.f32 0.0, %v3361
        %v3363 = vpop.f32.mrb[0].mxu0
        %3364 = vmatprep.mubr.bf16.mxu0 %v3281
        %3365 = vmatmul.mubr.bf16.gmra.mrb[0].mxu0 %v3230
        %v3366 = vpop.f32.mrb[0].mxu0
        %v3367 = vadd.f32 0.0, %v3366
        %v3368 = vpop.f32.mrb[0].mxu0
        %v3369 = vpop.f32.mrb[0].mxu0
        %v3370 = vadd.f32 0.0, %v3369
        %v3371 = vpop.f32.mrb[0].mxu0
        %3372 = vmatprep.mubr.bf16.mxu0 %v3284
        %3373 = vmatmul.mubr.bf16.gmra.mrb[0].mxu0 %v3232
        %v3374 = vpop.f32.mrb[0].mxu0
        %v3375 = vadd.f32 0.0, %v3374
        %v3376 = vpop.f32.mrb[0].mxu0
        %v3377 = vpop.f32.mrb[0].mxu0
        %v3378 = vadd.f32 0.0, %v3377
        %v3379 = vpop.f32.mrb[0].mxu0
        %3380 = vmatprep.mubr.bf16.mxu0 %v3287
        %3381 = vmatmul.mubr.bf16.gmra.mrb[0].mxu0 %v3234
        %v3382 = vpop.f32.mrb[0].mxu0
        %v3383 = vadd.f32 0.0, %v3382
        %v3384 = vpop.f32.mrb[0].mxu0
        %v3385 = vpop.f32.mrb[0].mxu0
        %v3386 = vadd.f32 0.0, %v3385
        %v3387 = vpop.f32.mrb[0].mxu0
        %3388 = vmatprep.mubr.bf16.mxu0 %v3290
        %3389 = vmatmul.mubr.bf16.gmra.mrb[0].mxu0 %v3236
        %v3390 = vpop.f32.mrb[0].mxu0
        %v3391 = vadd.f32 0.0, %v3390
        %v3392 = vpop.f32.mrb[0].mxu0
        %v3393 = vpop.f32.mrb[0].mxu0
        %v3394 = vadd.f32 0.0, %v3393
        %v3395 = vpop.f32.mrb[0].mxu0
        %3396 = vdwg.mxu0
        %3415 = vrot.lane.b32.xlu0 %v1935, 32
        %v3416 = vpop.permute.xlu0 %3415
        %3417 = vrot.lane.b32.xlu0 %v1938, 32
        %v3418 = vpop.permute.xlu0 %3417
        %3419 = vrot.lane.b32.xlu0 %v1943, 32
        %v3420 = vpop.permute.xlu0 %3419
        %3421 = vrot.lane.b32.xlu0 %v1946, 32
        %v3422 = vpop.permute.xlu0 %3421
        %3423 = vrot.lane.b32.xlu0 %v1951, 32
        %v3424 = vpop.permute.xlu0 %3423
        %3425 = vrot.lane.b32.xlu0 %v1954, 32
        %v3426 = vpop.permute.xlu0 %3425
        %3427 = vrot.lane.b32.xlu0 %v1959, 32
        %v3428 = vpop.permute.xlu0 %3427
        %3429 = vrot.lane.b32.xlu0 %v1962, 32
        %v3430 = vpop.permute.xlu0 %3429
        %3431 = vrot.lane.b32.xlu0 %v1967, 32
        %v3432 = vpop.permute.xlu0 %3431
        %3433 = vrot.lane.b32.xlu0 %v1970, 32
        %v3434 = vpop.permute.xlu0 %3433
        %3435 = vrot.lane.b32.xlu0 %v1975, 32
        %v3436 = vpop.permute.xlu0 %3435
        %3437 = vrot.lane.b32.xlu0 %v1978, 32
        %v3438 = vpop.permute.xlu0 %3437
        %3439 = vrot.lane.b32.xlu0 %v1983, 32
        %v3440 = vpop.permute.xlu0 %3439
        %3441 = vrot.lane.b32.xlu0 %v1986, 32
        %v3442 = vpop.permute.xlu0 %3441
        %3443 = vrot.lane.b32.xlu0 %v1991, 32
        %v3444 = vpop.permute.xlu0 %3443
        %3445 = vrot.lane.b32.xlu0 %v1994, 32
        %v3446 = vpop.permute.xlu0 %3445
        %3447 = vrot.lane.b32.xlu0 %v1999, 32
        %v3448 = vpop.permute.xlu0 %3447
        %3449 = vrot.lane.b32.xlu0 %v2002, 32
        %v3450 = vpop.permute.xlu0 %3449
        %3487 = vrot.lane.b32.xlu0 %v2631, 64
        %v3488 = vpop.permute.xlu0 %3487
        %3489 = vrot.lane.b32.xlu0 %v2634, 64
        %v3490 = vpop.permute.xlu0 %3489
        %3491 = vrot.lane.b32.xlu0 %v2639, 64
        %v3492 = vpop.permute.xlu0 %3491
        %3493 = vrot.lane.b32.xlu0 %v2642, 64
        %v3494 = vpop.permute.xlu0 %3493
        %3495 = vrot.lane.b32.xlu0 %v2647, 64
        %v3496 = vpop.permute.xlu0 %3495
        %3497 = vrot.lane.b32.xlu0 %v2650, 64
        %v3498 = vpop.permute.xlu0 %3497
        %3499 = vrot.lane.b32.xlu0 %v2655, 64
        %v3500 = vpop.permute.xlu0 %3499
        %3501 = vrot.lane.b32.xlu0 %v2658, 64
        %v3502 = vpop.permute.xlu0 %3501
        %3503 = vrot.lane.b32.xlu0 %v2663, 64
        %v3504 = vpop.permute.xlu0 %3503
        %3505 = vrot.lane.b32.xlu0 %v2666, 64
        %v3506 = vpop.permute.xlu0 %3505
        %3507 = vrot.lane.b32.xlu0 %v2671, 64
        %v3508 = vpop.permute.xlu0 %3507
        %3509 = vrot.lane.b32.xlu0 %v2674, 64
        %v3510 = vpop.permute.xlu0 %3509
        %3511 = vrot.lane.b32.xlu0 %v2679, 64
        %v3512 = vpop.permute.xlu0 %3511
        %3513 = vrot.lane.b32.xlu0 %v2682, 64
        %v3514 = vpop.permute.xlu0 %3513
        %3515 = vrot.lane.b32.xlu0 %v2687, 64
        %v3516 = vpop.permute.xlu0 %3515
        %3517 = vrot.lane.b32.xlu0 %v2690, 64
        %v3518 = vpop.permute.xlu0 %3517
        %3519 = vrot.lane.b32.xlu0 %v2695, 64
        %v3520 = vpop.permute.xlu0 %3519
        %3521 = vrot.lane.b32.xlu0 %v2698, 64
        %v3522 = vpop.permute.xlu0 %3521
        %3559 = vrot.lane.b32.xlu0 %v3327, 96
        %v3560 = vpop.permute.xlu0 %3559
        %3561 = vrot.lane.b32.xlu0 %v3330, 96
        %v3562 = vpop.permute.xlu0 %3561
        %3563 = vrot.lane.b32.xlu0 %v3335, 96
        %v3564 = vpop.permute.xlu0 %3563
        %3565 = vrot.lane.b32.xlu0 %v3338, 96
        %v3566 = vpop.permute.xlu0 %3565
        %3567 = vrot.lane.b32.xlu0 %v3343, 96
        %v3568 = vpop.permute.xlu0 %3567
        %3569 = vrot.lane.b32.xlu0 %v3346, 96
        %v3570 = vpop.permute.xlu0 %3569
        %3571 = vrot.lane.b32.xlu0 %v3351, 96
        %v3572 = vpop.permute.xlu0 %3571
        %3573 = vrot.lane.b32.xlu0 %v3354, 96
        %v3574 = vpop.permute.xlu0 %3573
        %3575 = vrot.lane.b32.xlu0 %v3359, 96
        %v3576 = vpop.permute.xlu0 %3575
        %3577 = vrot.lane.b32.xlu0 %v3362, 96
        %v3578 = vpop.permute.xlu0 %3577
        %3579 = vrot.lane.b32.xlu0 %v3367, 96
        %v3580 = vpop.permute.xlu0 %3579
        %3581 = vrot.lane.b32.xlu0 %v3370, 96
        %v3582 = vpop.permute.xlu0 %3581
        %3583 = vrot.lane.b32.xlu0 %v3375, 96
        %v3584 = vpop.permute.xlu0 %3583
        %3585 = vrot.lane.b32.xlu0 %v3378, 96
        %v3586 = vpop.permute.xlu0 %3585
        %3587 = vrot.lane.b32.xlu0 %v3383, 96
        %v3588 = vpop.permute.xlu0 %3587
        %3589 = vrot.lane.b32.xlu0 %v3386, 96
        %v3590 = vpop.permute.xlu0 %3589
        %3591 = vrot.lane.b32.xlu0 %v3391, 96
        %v3592 = vpop.permute.xlu0 %3591
        %3593 = vrot.lane.b32.xlu0 %v3394, 96
        %v3594 = vpop.permute.xlu0 %3593
        %v3613 = vsel %vm647, %v1212, %v3416
        %v3614 = vsel %vm647, %v1215, %v3418
        %v3615 = vsel %vm647, %v1220, %v3420
        %v3616 = vsel %vm647, %v1223, %v3422
        %v3617 = vsel %vm647, %v1228, %v3424
        %v3618 = vsel %vm647, %v1231, %v3426
        %v3619 = vsel %vm647, %v1236, %v3428
        %v3620 = vsel %vm647, %v1239, %v3430
        %v3621 = vsel %vm647, %v1244, %v3432
        %v3622 = vsel %vm647, %v1247, %v3434
        %v3623 = vsel %vm647, %v1252, %v3436
        %v3624 = vsel %vm647, %v1255, %v3438
        %v3625 = vsel %vm647, %v1260, %v3440
        %v3626 = vsel %vm647, %v1263, %v3442
        %v3627 = vsel %vm647, %v1268, %v3444
        %v3628 = vsel %vm647, %v1271, %v3446
        %v3629 = vsel %vm647, %v1276, %v3448
        %v3630 = vsel %vm647, %v1279, %v3450
        %vm3631 = vcmask 523264
        %v3632 = vsel %vm3631, %v3613, %v3488
        %v3633 = vsel %vm3631, %v3614, %v3490
        %v3634 = vsel %vm3631, %v3615, %v3492
        %v3635 = vsel %vm3631, %v3616, %v3494
        %v3636 = vsel %vm3631, %v3617, %v3496
        %v3637 = vsel %vm3631, %v3618, %v3498
        %v3638 = vsel %vm3631, %v3619, %v3500
        %v3639 = vsel %vm3631, %v3620, %v3502
        %v3640 = vsel %vm3631, %v3621, %v3504
        %v3641 = vsel %vm3631, %v3622, %v3506
        %v3642 = vsel %vm3631, %v3623, %v3508
        %v3643 = vsel %vm3631, %v3624, %v3510
        %v3644 = vsel %vm3631, %v3625, %v3512
        %v3645 = vsel %vm3631, %v3626, %v3514
        %v3646 = vsel %vm3631, %v3627, %v3516
        %v3647 = vsel %vm3631, %v3628, %v3518
        %v3648 = vsel %vm3631, %v3629, %v3520
        %v3649 = vsel %vm3631, %v3630, %v3522
        %vm3650 = vcmask 785408
        %v3651 = vsel %vm3650, %v3632, %v3560
        %v3652 = vsel %vm3650, %v3633, %v3562
        %v3653 = vsel %vm3650, %v3634, %v3564
        %v3654 = vsel %vm3650, %v3635, %v3566
        %v3655 = vsel %vm3650, %v3636, %v3568
        %v3656 = vsel %vm3650, %v3637, %v3570
        %v3657 = vsel %vm3650, %v3638, %v3572
        %v3658 = vsel %vm3650, %v3639, %v3574
        %v3659 = vsel %vm3650, %v3640, %v3576
        %v3660 = vsel %vm3650, %v3641, %v3578
        %v3661 = vsel %vm3650, %v3642, %v3580
        %v3662 = vsel %vm3650, %v3643, %v3582
        %v3663 = vsel %vm3650, %v3644, %v3584
        %v3664 = vsel %vm3650, %v3645, %v3586
        %v3665 = vsel %vm3650, %v3646, %v3588
        %v3666 = vsel %vm3650, %v3647, %v3590
        %v3667 = vsel %vm3650, %v3648, %v3592
        %v3668 = vsel %vm3650, %v3649, %v3594
        %v3669 = vpack.c.bf16 %v3652, %v3651
        %v3670 = vpack.c.bf16 %v3654, %v3653
        %v3671 = vpack.c.bf16 %v3656, %v3655
        %v3672 = vpack.c.bf16 %v3658, %v3657
        %v3673 = vpack.c.bf16 %v3660, %v3659
        %v3674 = vpack.c.bf16 %v3662, %v3661
        %v3675 = vpack.c.bf16 %v3664, %v3663
        %v3676 = vpack.c.bf16 %v3666, %v3665
        %v3677 = vpack.c.bf16 %v3668, %v3667
        %v3678 = vunpack.c.h.b16 %v179
        %v3679 = vunpack.c.h.b16 %v181
        %v3680 = vunpack.c.h.b16 %v183
        %v3681 = vunpack.c.h.b16 %v185
        %v3682 = vunpack.c.h.b16 %v187
        %v3683 = vunpack.c.h.b16 %v189
        %v3684 = vunpack.c.h.b16 %v191
        %v3685 = vunpack.c.h.b16 %v193
        %v3686 = vunpack.c.h.b16 %v195
        %v3687 = vunpack.c.h.b16 %v197
        %v3688 = vunpack.c.h.b16 %v199
        %v3689 = vunpack.c.h.b16 %v201
        %v3690 = vunpack.c.h.b16 %v203
        %v3691 = vunpack.c.h.b16 %v205
        %v3692 = vunpack.c.h.b16 %v207
        %v3693 = vunpack.c.h.b16 %v209
        %v3694 = vpack.c.b16 %v3679, %v3678
        %v3695 = vpack.c.b16 %v3681, %v3680
        %v3696 = vpack.c.b16 %v3683, %v3682
        %v3697 = vpack.c.b16 %v3685, %v3684
        %v3698 = vpack.c.b16 %v3687, %v3686
        %v3699 = vpack.c.b16 %v3689, %v3688
        %v3700 = vpack.c.b16 %v3691, %v3690
        %v3701 = vpack.c.b16 %v3693, %v3692
        %3710 = vmatprep.subr.bf16.mxu0 0
        %3711 = vmatpush1.bf16.msra.mxu0 %v3694
        %3712 = vmatprep.subr.bf16.mxu0 0
        %3713 = vmatpush1.bf16.msra.mxu0 %v3695
        %3714 = vmatprep.subr.bf16.mxu0 0
        %3715 = vmatpush1.bf16.msra.mxu0 %v3696
        %3716 = vmatprep.subr.bf16.mxu0 0
        %3717 = vmatpush1.bf16.msra.mxu0 %v3697
        %3718 = vmatprep.subr.bf16.mxu0 0
        %3719 = vmatpush1.bf16.msra.mxu0 %v3698
        %3720 = vmatprep.subr.bf16.mxu0 0
        %3721 = vmatpush1.bf16.msra.mxu0 %v3699
        %3722 = vmatprep.subr.bf16.mxu0 0
        %3723 = vmatpush1.bf16.msra.mxu0 %v3700
        %3724 = vmatprep.subr.bf16.mxu0 0
        %3725 = vmatpush1.bf16.msra.mxu0 %v3701
        %3726 = vmatprep.subr.bf16.mxu0 0
        %3727 = vmatpush1.bf16.msra.mxu0 0
        %3728 = vmatprep.subr.bf16.mxu0 0
        %3729 = vmatpush1.bf16.msra.mxu0 0
        %3730 = vmatprep.subr.bf16.mxu0 0
        %3731 = vmatpush1.bf16.msra.mxu0 0
        %3732 = vmatprep.subr.bf16.mxu0 0
        %3733 = vmatpush1.bf16.msra.mxu0 0
        %3734 = vmatprep.subr.bf16.mxu0 0
        %3735 = vmatpush1.bf16.msra.mxu0 0
        %3736 = vmatprep.subr.bf16.mxu0 0
        %3737 = vmatpush1.bf16.msra.mxu0 0
        %3738 = vmatprep.subr.bf16.mxu0 0
        %3739 = vmatpush1.bf16.msra.mxu0 0
        %3740 = vmatprep.subr.bf16.mxu0 0
        %3741 = vmatpush1.bf16.msra.mxu0 0
        %3742 = vmatprep.mubr.bf16.mxu0 0
        %3743 = vmatmul.mubr.bf16.gmra.mrb[0].mxu0 %v3669
        %v3744 = vpop.f32.mrb[0].mxu0
        %v3745 = vadd.f32 0.0, %v3744
        %v3746 = vpop.f32.mrb[0].mxu0
        %v3747 = vpop.f32.mrb[0].mxu0
        %v3748 = vadd.f32 0.0, %v3747
        %v3749 = vpop.f32.mrb[0].mxu0
        %3750 = vmatprep.mubr.bf16.mxu0 0
        %3751 = vmatmul.mubr.bf16.gmra.mrb[0].mxu0 %v3670
        %v3752 = vpop.f32.mrb[0].mxu0
        %v3753 = vadd.f32 0.0, %v3752
        %v3754 = vpop.f32.mrb[0].mxu0
        %v3755 = vpop.f32.mrb[0].mxu0
        %v3756 = vadd.f32 0.0, %v3755
        %v3757 = vpop.f32.mrb[0].mxu0
        %3758 = vmatprep.mubr.bf16.mxu0 0
        %3759 = vmatmul.mubr.bf16.gmra.mrb[0].mxu0 %v3671
        %v3760 = vpop.f32.mrb[0].mxu0
        %v3761 = vadd.f32 0.0, %v3760
        %v3762 = vpop.f32.mrb[0].mxu0
        %v3763 = vpop.f32.mrb[0].mxu0
        %v3764 = vadd.f32 0.0, %v3763
        %v3765 = vpop.f32.mrb[0].mxu0
        %3766 = vmatprep.mubr.bf16.mxu0 0
        %3767 = vmatmul.mubr.bf16.gmra.mrb[0].mxu0 %v3672
        %v3768 = vpop.f32.mrb[0].mxu0
        %v3769 = vadd.f32 0.0, %v3768
        %v3770 = vpop.f32.mrb[0].mxu0
        %v3771 = vpop.f32.mrb[0].mxu0
        %v3772 = vadd.f32 0.0, %v3771
        %v3773 = vpop.f32.mrb[0].mxu0
        %3774 = vmatprep.mubr.bf16.mxu0 0
        %3775 = vmatmul.mubr.bf16.gmra.mrb[0].mxu0 %v3673
        %v3776 = vpop.f32.mrb[0].mxu0
        %v3777 = vadd.f32 0.0, %v3776
        %v3778 = vpop.f32.mrb[0].mxu0
        %v3779 = vpop.f32.mrb[0].mxu0
        %v3780 = vadd.f32 0.0, %v3779
        %v3781 = vpop.f32.mrb[0].mxu0
        %3782 = vmatprep.mubr.bf16.mxu0 0
        %3783 = vmatmul.mubr.bf16.gmra.mrb[0].mxu0 %v3674
        %v3784 = vpop.f32.mrb[0].mxu0
        %v3785 = vadd.f32 0.0, %v3784
        %v3786 = vpop.f32.mrb[0].mxu0
        %v3787 = vpop.f32.mrb[0].mxu0
        %v3788 = vadd.f32 0.0, %v3787
        %v3789 = vpop.f32.mrb[0].mxu0
        %3790 = vmatprep.mubr.bf16.mxu0 0
        %3791 = vmatmul.mubr.bf16.gmra.mrb[0].mxu0 %v3675
        %v3792 = vpop.f32.mrb[0].mxu0
        %v3793 = vadd.f32 0.0, %v3792
        %v3794 = vpop.f32.mrb[0].mxu0
        %v3795 = vpop.f32.mrb[0].mxu0
        %v3796 = vadd.f32 0.0, %v3795
        %v3797 = vpop.f32.mrb[0].mxu0
        %3798 = vmatprep.mubr.bf16.mxu0 0
        %3799 = vmatmul.mubr.bf16.gmra.mrb[0].mxu0 %v3676
        %v3800 = vpop.f32.mrb[0].mxu0
        %v3801 = vadd.f32 0.0, %v3800
        %v3802 = vpop.f32.mrb[0].mxu0
        %v3803 = vpop.f32.mrb[0].mxu0
        %v3804 = vadd.f32 0.0, %v3803
        %v3805 = vpop.f32.mrb[0].mxu0
        %3806 = vmatprep.mubr.bf16.mxu0 0
        %3807 = vmatmul.mubr.bf16.gmra.mrb[0].mxu0 %v3677
        %v3808 = vpop.f32.mrb[0].mxu0
        %v3809 = vadd.f32 0.0, %v3808
        %v3810 = vpop.f32.mrb[0].mxu0
        %v3811 = vpop.f32.mrb[0].mxu0
        %v3812 = vadd.f32 0.0, %v3811
        %v3813 = vpop.f32.mrb[0].mxu0
        %3814 = vdwg.mxu0
        %v3815 = vmax.f32 %v3745, 0.0
        %v3816 = vmax.f32 %v3748, 0.0
        %v3817 = vmax.f32 %v3753, 0.0
        %v3818 = vmax.f32 %v3756, 0.0
        %v3819 = vmax.f32 %v3761, 0.0
        %v3820 = vmax.f32 %v3764, 0.0
        %v3821 = vmax.f32 %v3769, 0.0
        %v3822 = vmax.f32 %v3772, 0.0
        %v3823 = vmax.f32 %v3777, 0.0
        %v3824 = vmax.f32 %v3780, 0.0
        %v3825 = vmax.f32 %v3785, 0.0
        %v3826 = vmax.f32 %v3788, 0.0
        %v3827 = vmax.f32 %v3793, 0.0
        %v3828 = vmax.f32 %v3796, 0.0
        %v3829 = vmax.f32 %v3801, 0.0
        %v3830 = vmax.f32 %v3804, 0.0
        %v3831 = vmax.f32 %v3809, 0.0
        %v3832 = vmax.f32 %v3812, 0.0
        %v3833 = vpack.c.bf16 %v3816, %v3815
        %v3834 = vpack.c.bf16 %v3818, %v3817
        %v3835 = vpack.c.bf16 %v3820, %v3819
        %v3836 = vpack.c.bf16 %v3822, %v3821
        %v3837 = vpack.c.bf16 %v3824, %v3823
        %v3838 = vpack.c.bf16 %v3826, %v3825
        %v3839 = vpack.c.bf16 %v3828, %v3827
        %v3840 = vpack.c.bf16 %v3830, %v3829
        %v3841 = vpack.c.bf16 %v3832, %v3831
        %v3851 = vunpack.c.l.b16 %v3833
        %v3852 = vunpack.c.h.b16 %v3833
        %v3853 = vunpack.c.l.b16 %v3834
        %v3854 = vunpack.c.h.b16 %v3834
        %v3855 = vunpack.c.l.b16 %v3835
        %v3856 = vunpack.c.h.b16 %v3835
        %v3857 = vunpack.c.l.b16 %v3836
        %v3858 = vunpack.c.h.b16 %v3836
        %v3859 = vunpack.c.l.b16 %v3837
        %v3860 = vunpack.c.h.b16 %v3837
        %v3861 = vunpack.c.l.b16 %v3838
        %v3862 = vunpack.c.h.b16 %v3838
        %v3863 = vunpack.c.l.b16 %v3839
        %v3864 = vunpack.c.h.b16 %v3839
        %v3865 = vunpack.c.l.b16 %v3840
        %v3866 = vunpack.c.h.b16 %v3840
        %v3867 = vunpack.c.l.b16 %v3841
        %v3868 = vunpack.c.h.b16 %v3841
        %v3869 = vpack.c.b16 %v3851, %v3851
        %v3870 = vpack.c.b16 %v3852, %v3852
        %v3871 = vpack.c.b16 %v3853, %v3853
        %v3872 = vpack.c.b16 %v3854, %v3854
        %v3873 = vpack.c.b16 %v3855, %v3855
        %v3874 = vpack.c.b16 %v3856, %v3856
        %v3875 = vpack.c.b16 %v3857, %v3857
        %v3876 = vpack.c.b16 %v3858, %v3858
        %v3877 = vpack.c.b16 %v3859, %v3859
        %v3878 = vpack.c.b16 %v3860, %v3860
        %v3879 = vpack.c.b16 %v3861, %v3861
        %v3880 = vpack.c.b16 %v3862, %v3862
        %v3881 = vpack.c.b16 %v3863, %v3863
        %v3882 = vpack.c.b16 %v3864, %v3864
        %v3883 = vpack.c.b16 %v3865, %v3865
        %v3884 = vpack.c.b16 %v3866, %v3866
        %v3885 = vpack.c.b16 %v3867, %v3867
        %v3886 = vpack.c.b16 %v3868, %v3868
        %3905 = vst [vmem:[%s158] sm:$0xf] %v3869
        %3906 = vst [vmem:[%s158 + $0x4] sm:$0xf] %v3870
        %3907 = vst [vmem:[%s158 + $0x8] sm:$0xf] %v3871
        %3908 = vst [vmem:[%s158 + $0xc] sm:$0xf] %v3872
        %3909 = vst [vmem:[%s158 + $0x10] sm:$0xf] %v3873
        %3910 = vst [vmem:[%s158 + $0x14] sm:$0xf] %v3874
        %3911 = vst [vmem:[%s158 + $0x18] sm:$0xf] %v3875
        %3912 = vst [vmem:[%s158 + $0x1c] sm:$0xf] %v3876
        %3913 = vst [vmem:[%s158 + $0x20] sm:$0xf] %v3877
        %3914 = vst [vmem:[%s158 + $0x24] sm:$0xf] %v3878
        %3915 = vst [vmem:[%s158 + $0x28] sm:$0xf] %v3879
        %3916 = vst [vmem:[%s158 + $0x2c] sm:$0xf] %v3880
        %3917 = vst [vmem:[%s158 + $0x30] sm:$0xf] %v3881
        %3918 = vst [vmem:[%s158 + $0x34] sm:$0xf] %v3882
        %3919 = vst [vmem:[%s158 + $0x38] sm:$0xf] %v3883
        %3920 = vst [vmem:[%s158 + $0x3c] sm:$0xf] %v3884
        %3921 = vst [vmem:[%s158 + $0x40] sm:$0xf] %v3885
        %3922 = vst [vmem:[%s158 + $0x44] sm:$0xf] %v3886
        %p3923 = scmp.lt.s32.totalorder %s14, 1
        %s3924 = scalar_select %p3923, %s14, 1
        %s3925 = smul.addr %s3924, 18
        %s3926 = smul.addr %s3925, 4
        %s3927 = scalar_lea.vmem %s2, %s3926
        // Predicated region
        $region33: #{net_forward.5} parent=27 // pred_check
          %p3928 = pneg %p79
        $region34: #{net_forward.5} parent=27 // pred_check_branch
          %3930 = sbr.rel (%p3928) target = $region36
        $region35: #{net_forward.5} parent=27 // pred_region
          _
        $region36: #{net_forward.5} parent=27 // pred_fallthru
          _
      $region28: #{net_forward.5} parent=5 // pred_fallthru
        _
      %p3931 = scmp.le.s32.totalorder 2, %s9
      // Predicated region
      $region37: #{net_forward.5} parent=5 // pred_check
        %p3932 = pneg %p3931
      $region38: #{net_forward.5} parent=5 // pred_check_branch
        %3934 = sbr.rel (%p3932) target = $region40
      $region39: #{net_forward.5} parent=5 // pred_region
        %s3935 = ssub.s32 %s9, 2
        // Predicated region
        $region41: #{net_forward.5} parent=39 // pred_check
          %p3936 = pneg %p85
        $region42: #{net_forward.5} parent=39 // pred_check_branch
          %3938 = sbr.rel (%p3936) target = $region44
        $region43: #{net_forward.5} parent=39 // pred_region
          %p3939 = scmp.lt.s32.totalorder %s15, 1
          %s3940 = scalar_select %p3939, %s15, 1
          %s3941 = smul.addr %s3940, 18
          %s3942 = smul.addr %s3941, 4
          %s3943 = scalar_lea.vmem %s2, %s3942
        $region44: #{net_forward.5} parent=39 // pred_fallthru
          _
      $region40: #{net_forward.5} parent=5 // pred_fallthru
        _
    $region6: #{net_forward.5} parent=1 // loop_footer
      %s13 = sadd.s32 1, %s9
    $region7: #{net_forward.5} parent=1 // loop_footer_branch
      %8 = sbr.rel target = $region3
    $region8: #{net_forward.5} parent=1 // loop_exit
      _
    %3944 = vsyncpa [#allocation3], 1
    %s3945 = scalar_lea.sflag [#allocation3], 1
    %3946 = vsyncpa %s3945, 1

// kernel: net_forward.6
$region0: #{net_forward.6}
  #allocation0 [shape = 'u32[]', space=smem, size = 0x4, offset = 0x4, fixed_abs, tag = 'smem constant byte address 0x4 - core index']
  #allocation1 [shape = 'u32[144,128]{1,0:T(1,128)}', space=vmem, size = 0x12000, scoped, tag = 'internal scratch']
  #allocation2 [shape = 'f32[2,128]{1,0:T(2,128)}', space=vmem, size = 0x400, scoped, tag = 'scratch operand']
  %s0 = inlined_call_operand.vmem [shape: bf16[2,18432], index: 0, kind: input, shape index: {}]
  %s1 = inlined_call_operand.hbm [shape: bf16[18432,256], index: 1, kind: input, shape index: {}]
  %s2 = inlined_call_operand.hbm [shape: f32[1,256], index: 2, kind: input, shape index: {}]
  %s3 = inlined_call_operand.vmem [shape: bf16[2,256], index: 3, kind: output, shape index: {}]
  %s4 = sld [smem:[#allocation0]]
  $region61: #{net_forward.6} parent=0
    _
  %s6 = ssub.s32 1, %s4
  %s7 = scalar_select 0, %s6, %s4
  $region1: #{net_forward.6} parent=0
    #allocation3 [shape = 'u8[4718592]{0}', space=vmem, size = 0x480000, scoped, tag = 'input window, operand 1']
    #allocation4 [shape = 's32[2]{0}', space=sflag, size = 0x8, scoped, tag = 'scoped memory for net_forward.6']
    #allocation5 [shape = 'u8[1024]{0}', space=vmem, size = 0x400, scoped, tag = 'input window, operand 2']
    #allocation6 [shape = 's32[2]{0}', space=sflag, size = 0x8, scoped, tag = 'scoped memory for net_forward.6']
    %8 = vsyncpa [#allocation4], 0
    %s9 = scalar_lea.sflag [#allocation4], 1
    %10 = vsyncpa %s9, 0
    %11 = vsyncpa [#allocation6], 0
    %s12 = scalar_lea.sflag [#allocation6], 1
    %13 = vsyncpa %s12, 0
    loop: start=0, step=1, limit=6
    $region2: #{net_forward.6} parent=1 // loop_pre_header
      _
    $region3: #{net_forward.6} parent=1 // loop_header
      %s15 = sphi 0, %s19
      %p16 = scmp.ge.s32.totalorder %s15, 6
      %s22 = sphi 0, %s34
      %s23 = sphi 0, %s30
      %s24 = sphi 0, %s22
      %s25 = sphi 0, %s23
      %s26 = sphi 0, %s24
      %s27 = sphi 0, %s25
      %s37 = sphi 0, %s39
      %s40 = sphi 0, %s37
      %s41 = sphi 0, %s40
      %s57 = sphi 0, %s41
      %s65 = sphi 0, %s67
      %s68 = sphi 0, %s65
      %s69 = sphi 0, %s68
      %s85 = sphi 0, %s69
      %s91 = sphi 0, %s93
      %s94 = sphi 0, %s91
      %s95 = sphi 0, %s94
      %s111 = sphi 0, %s95
      %s117 = sphi 0, %s119
      %s120 = sphi 0, %s117
      %s121 = sphi 0, %s120
      %s137 = sphi 0, %s121
    $region4: #{net_forward.6} parent=1 // loop_header_branch
      %18 = sbr.rel (%p16) target = $region8
    $region5: #{net_forward.6} parent=1 // loop_body
      %s20 = ssub.s32 %s15, 1
      %s21 = ssub.s32 %s15, 2
      %s28 = sadd.s32 1, %s23
      %p29 = scmp.ge.s32.totalorder %s28, 2
      %s30 = scalar_select %p29, 0, %s28
      %s31 = sadd.s32 1, %s22
      %s32 = scalar_select %p29, %s31, %s22
      %p33 = scmp.ge.s32.totalorder %s32, 2
      %s34 = scalar_select %p33, 0, %s32
      %s35 = ssub.s32 %s23, %s30
      %p36 = scmp.eq.s32.totalorder %s35, 0
      %s38 = sadd.s32 %s37, 1
      %s39 = scalar_select %p36, %s37, %s38
      %p42 = pneg %p36
      %p43 = scmp.eq.s32.totalorder %s15, 3
      %p44 = por %p42, %p43
      %p45 = scmp.ne.s32.totalorder %s37, %s40
      %p46 = scmp.eq.s32.totalorder %s15, 0
      %p47 = por %p45, %p46
      %p48 = scmp.ne.s32.totalorder %s37, %s40
      %p49 = scmp.eq.s32.totalorder %s20, 3
      %p50 = por %p48, %p49
      %p51 = scmp.ne.s32.totalorder %s40, %s41
      %p52 = scmp.eq.s32.totalorder %s20, 0
      %p53 = por %p51, %p52
      %p54 = scmp.ne.s32.totalorder %s40, %s41
      %p55 = scmp.eq.s32.totalorder %s21, 3
      %p56 = por %p54, %p55
      %p58 = scmp.ne.s32.totalorder %s41, %s57
      %p59 = scmp.eq.s32.totalorder %s21, 0
      %p60 = por %p58, %p59
      %s61 = ssub.s32 %s23, %s30
      %s62 = ssub.s32 %s22, %s34
      %s63 = sor.u32 %s61, %s62
      %p64 = scmp.eq.s32.totalorder %s63, 0
      %s66 = sadd.s32 %s65, 1
      %s67 = scalar_select %p64, %s65, %s66
      %p70 = pneg %p64
      %p71 = scmp.eq.s32.totalorder %s15, 3
      %p72 = por %p70, %p71
      %p73 = scmp.ne.s32.totalorder %s65, %s68
      %p74 = scmp.eq.s32.totalorder %s15, 0
      %p75 = por %p73, %p74
      %p76 = scmp.ne.s32.totalorder %s65, %s68
      %p77 = scmp.eq.s32.totalorder %s20, 3
      %p78 = por %p76, %p77
      %p79 = scmp.ne.s32.totalorder %s68, %s69
      %p80 = scmp.eq.s32.totalorder %s20, 0
      %p81 = por %p79, %p80
      %p82 = scmp.ne.s32.totalorder %s68, %s69
      %p83 = scmp.eq.s32.totalorder %s21, 3
      %p84 = por %p82, %p83
      %p86 = scmp.ne.s32.totalorder %s69, %s85
      %p87 = scmp.eq.s32.totalorder %s21, 0
      %p88 = por %p86, %p87
      %s89 = ssub.s32 %s22, %s34
      %p90 = scmp.eq.s32.totalorder %s89, 0
      %s92 = sadd.s32 %s91, 1
      %s93 = scalar_select %p90, %s91, %s92
      %p96 = pneg %p90
      %p97 = scmp.eq.s32.totalorder %s15, 3
      %p98 = por %p96, %p97
      %p99 = scmp.ne.s32.totalorder %s91, %s94
      %p100 = scmp.eq.s32.totalorder %s15, 0
      %p101 = por %p99, %p100
      %p102 = scmp.ne.s32.totalorder %s91, %s94
      %p103 = scmp.eq.s32.totalorder %s20, 3
      %p104 = por %p102, %p103
      %p105 = scmp.ne.s32.totalorder %s94, %s95
      %p106 = scmp.eq.s32.totalorder %s20, 0
      %p107 = por %p105, %p106
      %p108 = scmp.ne.s32.totalorder %s94, %s95
      %p109 = scmp.eq.s32.totalorder %s21, 3
      %p110 = por %p108, %p109
      %p112 = scmp.ne.s32.totalorder %s95, %s111
      %p113 = scmp.eq.s32.totalorder %s21, 0
      %p114 = por %p112, %p113
      %s115 = ssub.s32 %s22, %s34
      %p116 = scmp.eq.s32.totalorder %s115, 0
      %s118 = sadd.s32 %s117, 1
      %s119 = scalar_select %p116, %s117, %s118
      %p122 = pneg %p116
      %p123 = scmp.eq.s32.totalorder %s15, 3
      %p124 = por %p122, %p123
      %p125 = scmp.ne.s32.totalorder %s117, %s120
      %p126 = scmp.eq.s32.totalorder %s15, 0
      %p127 = por %p125, %p126
      %p128 = scmp.ne.s32.totalorder %s117, %s120
      %p129 = scmp.eq.s32.totalorder %s20, 3
      %p130 = por %p128, %p129
      %p131 = scmp.ne.s32.totalorder %s120, %s121
      %p132 = scmp.eq.s32.totalorder %s20, 0
      %p133 = por %p131, %p132
      %p134 = scmp.ne.s32.totalorder %s120, %s121
      %p135 = scmp.eq.s32.totalorder %s21, 3
      %p136 = por %p134, %p135
      %p138 = scmp.ne.s32.totalorder %s121, %s137
      %p139 = scmp.eq.s32.totalorder %s21, 0
      %p140 = por %p138, %p139
      %p141 = scmp.le.s32.totalorder 1, %s15
      %p142 = scmp.lt.s32.totalorder %s15, 5
      %p143 = pnand %p141, %p142
      %p144 = pneg %p143
      // Predicated region
      $region9: #{net_forward.6} parent=5 // pred_check
        _
      $region10: #{net_forward.6} parent=5 // pred_check_branch
        %146 = sbr.rel (%p143) target = $region12
      $region11: #{net_forward.6} parent=5 // pred_region
        %s147 = ssub.s32 %s15, 1
      $region12: #{net_forward.6} parent=5 // pred_fallthru
        _
      %p148 = scmp.lt.s32.totalorder %s15, 4
      // Predicated region
      $region13: #{net_forward.6} parent=5 // pred_check
        %p149 = pneg %p148
      $region14: #{net_forward.6} parent=5 // pred_check_branch
        %151 = sbr.rel (%p149) target = $region16
      $region15: #{net_forward.6} parent=5 // pred_region
        // Predicated region
        $region17: #{net_forward.6} parent=15 // pred_check
          %p152 = pneg %p47
        $region18: #{net_forward.6} parent=15 // pred_check_branch
          %154 = sbr.rel (%p152) target = $region20
        $region19: #{net_forward.6} parent=15 // pred_region
          %s155 = smul.u32 72, %s23
          %p156 = scmp.lt.s32.totalorder %s155, 143
          %s157 = scalar_select %p156, %s155, 143
          %s158 = scalar_lea.vmem %s0, %s157
          %s159 = smul.u32 72, %s23
        $region20: #{net_forward.6} parent=15 // pred_fallthru
          _
        // Predicated region
        $region21: #{net_forward.6} parent=15 // pred_check
          %p160 = pneg %p75
        $region22: #{net_forward.6} parent=15 // pred_check_branch
          %162 = sbr.rel (%p160) target = $region24
        $region23: #{net_forward.6} parent=15 // pred_region
          %s163 = sand.u32 %s65, 1
          %s164 = scalar_lea.sflag [#allocation4], %s163
          %s165 = sand.u32 %s65, 1
          %s166 = smul.addr %s165, 4608
          %s167 = scalar_lea.vmem [#allocation3], %s166
          %s168 = smul.u32 1152, %s23
          %s170 = ssub.s32 73728, 73728
          %171 = vsyncadd %s164, %s170
          %s172 = smul.addr %s168, 2
          %s173 = sadd.s32 %s22, %s172
          %s174 = smul.addr %s173, 64
          %s175 = scalar_lea.hbm %s1, %s174
          %s176 = sshll.u32 %s167, 4
          %s177 = int_to_ptr.vmem [resolvable:$true] %s176
          %182 = dma.hbm_to_vmem [thread:$0]  %s175, 73728, %s177, %s164, 128, 64, 4
        $region24: #{net_forward.6} parent=15 // pred_fallthru
          _
        // Predicated region
        $region25: #{net_forward.6} parent=15 // pred_check
          %p183 = pneg %p101
        $region26: #{net_forward.6} parent=15 // pred_check_branch
          %185 = sbr.rel (%p183) target = $region28
        $region27: #{net_forward.6} parent=15 // pred_region
          %s186 = sand.u32 %s91, 1
          %s187 = scalar_lea.sflag [#allocation6], %s186
          %s188 = sand.u32 %s91, 1
          %s189 = scalar_lea.vmem [#allocation5], %s188
          %s191 = ssub.s32 16, 16
          %192 = vsyncadd %s187, %s191
          %s193 = smul.addr %s22, 16
          %s194 = scalar_lea.hbm %s2, %s193
          %s196 = sshll.u32 %s189, 4
          %s197 = int_to_ptr.vmem [resolvable:$true] %s196
          %199 = dma.hbm_to_vmem [thread:$0]  %s194, 16, %s197, %s187
        $region28: #{net_forward.6} parent=15 // pred_fallthru
          _
      $region16: #{net_forward.6} parent=5 // pred_fallthru
        _
      %p200 = scmp.le.s32.totalorder 1, %s15
      %p201 = scmp.lt.s32.totalorder %s15, 5
      %p202 = pnand %p200, %p201
      %p203 = pneg %p202
      // Predicated region
      $region29: #{net_forward.6} parent=5 // pred_check
        _
      $region30: #{net_forward.6} parent=5 // pred_check_branch
        %205 = sbr.rel (%p202) target = $region32
      $region31: #{net_forward.6} parent=5 // pred_region
        %s206 = ssub.s32 %s15, 1
        %s207 = sand.u32 %s68, 1
        %s208 = scalar_lea.sflag [#allocation4], %s207
        %s209 = sand.u32 %s68, 1
        %s210 = smul.addr %s209, 4608
        %s211 = scalar_lea.vmem [#allocation3], %s210
        // Predicated region
        $region33: #{net_forward.6} parent=31 // pred_check
          %p212 = pneg %p81
        $region34: #{net_forward.6} parent=31 // pred_check_branch
          %214 = sbr.rel (%p212) target = $region36
        $region35: #{net_forward.6} parent=31 // pred_region
          %215 = dma.done %s208, 73728
        $region36: #{net_forward.6} parent=31 // pred_fallthru
          _
        %s216 = sand.u32 %s94, 1
        %s217 = scalar_lea.sflag [#allocation6], %s216
        %s218 = sand.u32 %s94, 1
        %s219 = scalar_lea.vmem [#allocation5], %s218
        // Predicated region
        $region37: #{net_forward.6} parent=31 // pred_check
          %p220 = pneg %p107
        $region38: #{net_forward.6} parent=31 // pred_check_branch
          %222 = sbr.rel (%p220) target = $region40
        $region39: #{net_forward.6} parent=31 // pred_region
          %223 = dma.done %s217, 16
        $region40: #{net_forward.6} parent=31 // pred_fallthru
          _
        %s224 = smul.u32 72, %s25
        %p225 = scmp.lt.s32.totalorder %s224, 143
        %s226 = scalar_select %p225, %s224, 143
        %s227 = scalar_lea.vmem %s0, %s226
        %p228 = pneg %p53
        %p229 = pneg %p50
        %s230 = sand.u32 %s68, 1
        %s231 = scalar_lea.sflag [#allocation4], %s230
        %s232 = sand.u32 %s68, 1
        %s233 = smul.addr %s232, 4608
        %s234 = scalar_lea.vmem [#allocation3], %s233
        %p235 = pneg %p81
        %p236 = pneg %p78
        %s237 = sand.u32 %s94, 1
        %s238 = scalar_lea.sflag [#allocation6], %s237
        %s239 = sand.u32 %s94, 1
        %s240 = scalar_lea.vmem [#allocation5], %s239
        %p241 = pneg %p107
        %p242 = pneg %p104
        %p243 = pneg %p133
        %p244 = pneg %p130
        %p245 = scmp.lt.s32.totalorder %s24, 1
        %s246 = scalar_select %p245, %s24, 1
        %s247 = scalar_lea.vmem %s3, %s246
        %s248 = smul.u32 72, %s25
        %p249 = scmp.lt.s32.totalorder %s248, 143
        %s250 = scalar_select %p249, %s248, 143
        %s251 = scalar_lea.vmem %s0, %s250
        %s252 = smul.u32 72, %s25
        %s253 = smul.u32 1152, %s25
        %p254 = scmp.lt.s32.totalorder %s24, 1
        %s255 = scalar_select %p254, %s24, 1
        %s256 = scalar_lea.vmem %s3, %s255
        %p258 = scmp.eq.s32.totalorder %s25, 0
        // Predicated region
        $region41: #{net_forward.6} parent=31 // pred_check
          %p259 = pneg %p258
        $region42: #{net_forward.6} parent=31 // pred_check_branch
          %261 = sbr.rel (%p259) target = $region44
        $region43: #{net_forward.6} parent=31 // pred_region
          %262 = vst [vmem:[#allocation2] sm:$0x3] 0.0
        $region44: #{net_forward.6} parent=31 // pred_fallthru
          _
        %v263 = vld [vmem:[#allocation2] sm:$0x3]
        %v264 = vld [vmem:[%s251] sm:$0xff]
        %v265 = vld [vmem:[%s251 + $0x8] sm:$0xff]
        %v266 = vld [vmem:[%s251 + $0x10] sm:$0xff]
        %v267 = vld [vmem:[%s251 + $0x18] sm:$0xff]
        %v268 = vld [vmem:[%s251 + $0x20] sm:$0xff]
        %v269 = vld [vmem:[%s251 + $0x28] sm:$0xff]
        %v270 = vld [vmem:[%s251 + $0x30] sm:$0xff]
        %v271 = vld [vmem:[%s251 + $0x38] sm:$0xff]
        %v272 = vld [vmem:[%s251 + $0x40] sm:$0xff]
        %v273 = vld [vmem:[%s211] sm:$0xf]
        %v274 = vld [vmem:[%s211 + $0x4] sm:$0xf]
        %v275 = vld [vmem:[%s211 + $0x8] sm:$0xf]
        %v276 = vld [vmem:[%s211 + $0xc] sm:$0xf]
        %v277 = vld [vmem:[%s211 + $0x10] sm:$0xf]
        %v278 = vld [vmem:[%s211 + $0x14] sm:$0xf]
        %v279 = vld [vmem:[%s211 + $0x18] sm:$0xf]
        %v280 = vld [vmem:[%s211 + $0x1c] sm:$0xf]
        %v281 = vld [vmem:[%s211 + $0x20] sm:$0xf]
        %v282 = vld [vmem:[%s211 + $0x24] sm:$0xf]
        %v283 = vld [vmem:[%s211 + $0x28] sm:$0xf]
        %v284 = vld [vmem:[%s211 + $0x2c] sm:$0xf]
        %v285 = vld [vmem:[%s211 + $0x30] sm:$0xf]
        %v286 = vld [vmem:[%s211 + $0x34] sm:$0xf]
        %v287 = vld [vmem:[%s211 + $0x38] sm:$0xf]
        %v288 = vld [vmem:[%s211 + $0x3c] sm:$0xf]
        %v289 = vld [vmem:[%s211 + $0x40] sm:$0xf]
        %v290 = vld [vmem:[%s211 + $0x44] sm:$0xf]
        %v291 = vld [vmem:[%s211 + $0x48] sm:$0xf]
        %v292 = vld [vmem:[%s211 + $0x4c] sm:$0xf]
        %v293 = vld [vmem:[%s211 + $0x50] sm:$0xf]
        %v294 = vld [vmem:[%s211 + $0x54] sm:$0xf]
        %v295 = vld [vmem:[%s211 + $0x58] sm:$0xf]
        %v296 = vld [vmem:[%s211 + $0x5c] sm:$0xf]
        %v297 = vld [vmem:[%s211 + $0x60] sm:$0xf]
        %v298 = vld [vmem:[%s211 + $0x64] sm:$0xf]
        %v299 = vld [vmem:[%s211 + $0x68] sm:$0xf]
        %v300 = vld [vmem:[%s211 + $0x6c] sm:$0xf]
        %v301 = vld [vmem:[%s211 + $0x70] sm:$0xf]
        %v302 = vld [vmem:[%s211 + $0x74] sm:$0xf]
        %v303 = vld [vmem:[%s211 + $0x78] sm:$0xf]
        %v304 = vld [vmem:[%s211 + $0x7c] sm:$0xf]
        %v305 = vld [vmem:[%s211 + $0x80] sm:$0xf]
        %v306 = vld [vmem:[%s211 + $0x84] sm:$0xf]
        %v307 = vld [vmem:[%s211 + $0x88] sm:$0xf]
        %v308 = vld [vmem:[%s211 + $0x8c] sm:$0xf]
        %v309 = vld [vmem:[%s211 + $0x90] sm:$0xf]
        %v310 = vld [vmem:[%s211 + $0x94] sm:$0xf]
        %v311 = vld [vmem:[%s211 + $0x98] sm:$0xf]
        %v312 = vld [vmem:[%s211 + $0x9c] sm:$0xf]
        %v313 = vld [vmem:[%s211 + $0xa0] sm:$0xf]
        %v314 = vld [vmem:[%s211 + $0xa4] sm:$0xf]
        %v315 = vld [vmem:[%s211 + $0xa8] sm:$0xf]
        %v316 = vld [vmem:[%s211 + $0xac] sm:$0xf]
        %v317 = vld [vmem:[%s211 + $0xb0] sm:$0xf]
        %v318 = vld [vmem:[%s211 + $0xb4] sm:$0xf]
        %v319 = vld [vmem:[%s211 + $0xb8] sm:$0xf]
        %v320 = vld [vmem:[%s211 + $0xbc] sm:$0xf]
        %v321 = vld [vmem:[%s211 + $0xc0] sm:$0xf]
        %v322 = vld [vmem:[%s211 + $0xc4] sm:$0xf]
        %v323 = vld [vmem:[%s211 + $0xc8] sm:$0xf]
        %v324 = vld [vmem:[%s211 + $0xcc] sm:$0xf]
        %v325 = vld [vmem:[%s211 + $0xd0] sm:$0xf]
        %v326 = vld [vmem:[%s211 + $0xd4] sm:$0xf]
        %v327 = vld [vmem:[%s211 + $0xd8] sm:$0xf]
        %v328 = vld [vmem:[%s211 + $0xdc] sm:$0xf]
        %v329 = vld [vmem:[%s211 + $0xe0] sm:$0xf]
        %v330 = vld [vmem:[%s211 + $0xe4] sm:$0xf]
        %v331 = vld [vmem:[%s211 + $0xe8] sm:$0xf]
        %v332 = vld [vmem:[%s211 + $0xec] sm:$0xf]
        %v333 = vld [vmem:[%s211 + $0xf0] sm:$0xf]
        %v334 = vld [vmem:[%s211 + $0xf4] sm:$0xf]
        %v335 = vld [vmem:[%s211 + $0xf8] sm:$0xf]
        %v336 = vld [vmem:[%s211 + $0xfc] sm:$0xf]
        %v337 = vld [vmem:[%s211 + $0x100] sm:$0xf]
        %v338 = vld [vmem:[%s211 + $0x104] sm:$0xf]
        %v339 = vld [vmem:[%s211 + $0x108] sm:$0xf]
        %v340 = vld [vmem:[%s211 + $0x10c] sm:$0xf]
        %v341 = vld [vmem:[%s211 + $0x110] sm:$0xf]
        %v342 = vld [vmem:[%s211 + $0x114] sm:$0xf]
        %v343 = vld [vmem:[%s211 + $0x118] sm:$0xf]
        %v344 = vld [vmem:[%s211 + $0x11c] sm:$0xf]
        %v345 = vld [vmem:[%s211 + $0x120] sm:$0xf]
        %v346 = vld [vmem:[%s211 + $0x124] sm:$0xf]
        %v347 = vld [vmem:[%s211 + $0x128] sm:$0xf]
        %v348 = vld [vmem:[%s211 + $0x12c] sm:$0xf]
        %v349 = vld [vmem:[%s211 + $0x130] sm:$0xf]
        %v350 = vld [vmem:[%s211 + $0x134] sm:$0xf]
        %v351 = vld [vmem:[%s211 + $0x138] sm:$0xf]
        %v352 = vld [vmem:[%s211 + $0x13c] sm:$0xf]
        %v353 = vld [vmem:[%s211 + $0x140] sm:$0xf]
        %v354 = vld [vmem:[%s211 + $0x144] sm:$0xf]
        %v355 = vld [vmem:[%s211 + $0x148] sm:$0xf]
        %v356 = vld [vmem:[%s211 + $0x14c] sm:$0xf]
        %v357 = vld [vmem:[%s211 + $0x150] sm:$0xf]
        %v358 = vld [vmem:[%s211 + $0x154] sm:$0xf]
        %v359 = vld [vmem:[%s211 + $0x158] sm:$0xf]
        %v360 = vld [vmem:[%s211 + $0x15c] sm:$0xf]
        %v361 = vld [vmem:[%s211 + $0x160] sm:$0xf]
        %v362 = vld [vmem:[%s211 + $0x164] sm:$0xf]
        %v363 = vld [vmem:[%s211 + $0x168] sm:$0xf]
        %v364 = vld [vmem:[%s211 + $0x16c] sm:$0xf]
        %v365 = vld [vmem:[%s211 + $0x170] sm:$0xf]
        %v366 = vld [vmem:[%s211 + $0x174] sm:$0xf]
        %v367 = vld [vmem:[%s211 + $0x178] sm:$0xf]
        %v368 = vld [vmem:[%s211 + $0x17c] sm:$0xf]
        %v369 = vld [vmem:[%s211 + $0x180] sm:$0xf]
        %v370 = vld [vmem:[%s211 + $0x184] sm:$0xf]
        %v371 = vld [vmem:[%s211 + $0x188] sm:$0xf]
        %v372 = vld [vmem:[%s211 + $0x18c] sm:$0xf]
        %v373 = vld [vmem:[%s211 + $0x190] sm:$0xf]
        %v374 = vld [vmem:[%s211 + $0x194] sm:$0xf]
        %v375 = vld [vmem:[%s211 + $0x198] sm:$0xf]
        %v376 = vld [vmem:[%s211 + $0x19c] sm:$0xf]
        %v377 = vld [vmem:[%s211 + $0x1a0] sm:$0xf]
        %v378 = vld [vmem:[%s211 + $0x1a4] sm:$0xf]
        %v379 = vld [vmem:[%s211 + $0x1a8] sm:$0xf]
        %v380 = vld [vmem:[%s211 + $0x1ac] sm:$0xf]
        %v381 = vld [vmem:[%s211 + $0x1b0] sm:$0xf]
        %v382 = vld [vmem:[%s211 + $0x1b4] sm:$0xf]
        %v383 = vld [vmem:[%s211 + $0x1b8] sm:$0xf]
        %v384 = vld [vmem:[%s211 + $0x1bc] sm:$0xf]
        %v385 = vld [vmem:[%s211 + $0x1c0] sm:$0xf]
        %v386 = vld [vmem:[%s211 + $0x1c4] sm:$0xf]
        %v387 = vld [vmem:[%s211 + $0x1c8] sm:$0xf]
        %v388 = vld [vmem:[%s211 + $0x1cc] sm:$0xf]
        %v389 = vld [vmem:[%s211 + $0x1d0] sm:$0xf]
        %v390 = vld [vmem:[%s211 + $0x1d4] sm:$0xf]
        %v391 = vld [vmem:[%s211 + $0x1d8] sm:$0xf]
        %v392 = vld [vmem:[%s211 + $0x1dc] sm:$0xf]
        %v393 = vld [vmem:[%s211 + $0x1e0] sm:$0xf]
        %v394 = vld [vmem:[%s211 + $0x1e4] sm:$0xf]
        %v395 = vld [vmem:[%s211 + $0x1e8] sm:$0xf]
        %v396 = vld [vmem:[%s211 + $0x1ec] sm:$0xf]
        %v397 = vld [vmem:[%s211 + $0x1f0] sm:$0xf]
        %v398 = vld [vmem:[%s211 + $0x1f4] sm:$0xf]
        %v399 = vld [vmem:[%s211 + $0x1f8] sm:$0xf]
        %v400 = vld [vmem:[%s211 + $0x1fc] sm:$0xf]
        %v401 = vld [vmem:[%s211 + $0x200] sm:$0xf]
        %v402 = vld [vmem:[%s211 + $0x204] sm:$0xf]
        %v403 = vld [vmem:[%s211 + $0x208] sm:$0xf]
        %v404 = vld [vmem:[%s211 + $0x20c] sm:$0xf]
        %v405 = vld [vmem:[%s211 + $0x210] sm:$0xf]
        %v406 = vld [vmem:[%s211 + $0x214] sm:$0xf]
        %v407 = vld [vmem:[%s211 + $0x218] sm:$0xf]
        %v408 = vld [vmem:[%s211 + $0x21c] sm:$0xf]
        %v409 = vld [vmem:[%s211 + $0x220] sm:$0xf]
        %v410 = vld [vmem:[%s211 + $0x224] sm:$0xf]
        %v411 = vld [vmem:[%s211 + $0x228] sm:$0xf]
        %v412 = vld [vmem:[%s211 + $0x22c] sm:$0xf]
        %v413 = vld [vmem:[%s211 + $0x230] sm:$0xf]
        %v414 = vld [vmem:[%s211 + $0x234] sm:$0xf]
        %v415 = vld [vmem:[%s211 + $0x238] sm:$0xf]
        %v416 = vld [vmem:[%s211 + $0x23c] sm:$0xf]
        %v417 = vld [vmem:[%s211 + $0x240] sm:$0xf]
        %v418 = vld [vmem:[%s211 + $0x244] sm:$0xf]
        %v419 = vld [vmem:[%s211 + $0x248] sm:$0xf]
        %v420 = vld [vmem:[%s211 + $0x24c] sm:$0xf]
        %v421 = vld [vmem:[%s211 + $0x250] sm:$0xf]
        %v422 = vld [vmem:[%s211 + $0x254] sm:$0xf]
        %v423 = vld [vmem:[%s211 + $0x258] sm:$0xf]
        %v424 = vld [vmem:[%s211 + $0x25c] sm:$0xf]
        %v425 = vld [vmem:[%s211 + $0x260] sm:$0xf]
        %v426 = vld [vmem:[%s211 + $0x264] sm:$0xf]
        %v427 = vld [vmem:[%s211 + $0x268] sm:$0xf]
        %v428 = vld [vmem:[%s211 + $0x26c] sm:$0xf]
        %v429 = vld [vmem:[%s211 + $0x270] sm:$0xf]
        %v430 = vld [vmem:[%s211 + $0x274] sm:$0xf]
        %v431 = vld [vmem:[%s211 + $0x278] sm:$0xf]
        %v432 = vld [vmem:[%s211 + $0x27c] sm:$0xf]
        %v433 = vld [vmem:[%s211 + $0x280] sm:$0xf]
        %v434 = vld [vmem:[%s211 + $0x284] sm:$0xf]
        %v435 = vld [vmem:[%s211 + $0x288] sm:$0xf]
        %v436 = vld [vmem:[%s211 + $0x28c] sm:$0xf]
        %v437 = vld [vmem:[%s211 + $0x290] sm:$0xf]
        %v438 = vld [vmem:[%s211 + $0x294] sm:$0xf]
        %v439 = vld [vmem:[%s211 + $0x298] sm:$0xf]
        %v440 = vld [vmem:[%s211 + $0x29c] sm:$0xf]
        %v441 = vld [vmem:[%s211 + $0x2a0] sm:$0xf]
        %v442 = vld [vmem:[%s211 + $0x2a4] sm:$0xf]
        %v443 = vld [vmem:[%s211 + $0x2a8] sm:$0xf]
        %v444 = vld [vmem:[%s211 + $0x2ac] sm:$0xf]
        %v445 = vld [vmem:[%s211 + $0x2b0] sm:$0xf]
        %v446 = vld [vmem:[%s211 + $0x2b4] sm:$0xf]
        %v447 = vld [vmem:[%s211 + $0x2b8] sm:$0xf]
        %v448 = vld [vmem:[%s211 + $0x2bc] sm:$0xf]
        %v449 = vld [vmem:[%s211 + $0x2c0] sm:$0xf]
        %v450 = vld [vmem:[%s211 + $0x2c4] sm:$0xf]
        %v451 = vld [vmem:[%s211 + $0x2c8] sm:$0xf]
        %v452 = vld [vmem:[%s211 + $0x2cc] sm:$0xf]
        %v453 = vld [vmem:[%s211 + $0x2d0] sm:$0xf]
        %v454 = vld [vmem:[%s211 + $0x2d4] sm:$0xf]
        %v455 = vld [vmem:[%s211 + $0x2d8] sm:$0xf]
        %v456 = vld [vmem:[%s211 + $0x2dc] sm:$0xf]
        %v457 = vld [vmem:[%s211 + $0x2e0] sm:$0xf]
        %v458 = vld [vmem:[%s211 + $0x2e4] sm:$0xf]
        %v459 = vld [vmem:[%s211 + $0x2e8] sm:$0xf]
        %v460 = vld [vmem:[%s211 + $0x2ec] sm:$0xf]
        %v461 = vld [vmem:[%s211 + $0x2f0] sm:$0xf]
        %v462 = vld [vmem:[%s211 + $0x2f4] sm:$0xf]
        %v463 = vld [vmem:[%s211 + $0x2f8] sm:$0xf]
        %v464 = vld [vmem:[%s211 + $0x2fc] sm:$0xf]
        %v465 = vld [vmem:[%s211 + $0x300] sm:$0xf]
        %v466 = vld [vmem:[%s211 + $0x304] sm:$0xf]
        %v467 = vld [vmem:[%s211 + $0x308] sm:$0xf]
        %v468 = vld [vmem:[%s211 + $0x30c] sm:$0xf]
        %v469 = vld [vmem:[%s211 + $0x310] sm:$0xf]
        %v470 = vld [vmem:[%s211 + $0x314] sm:$0xf]
        %v471 = vld [vmem:[%s211 + $0x318] sm:$0xf]
        %v472 = vld [vmem:[%s211 + $0x31c] sm:$0xf]
        %v473 = vld [vmem:[%s211 + $0x320] sm:$0xf]
        %v474 = vld [vmem:[%s211 + $0x324] sm:$0xf]
        %v475 = vld [vmem:[%s211 + $0x328] sm:$0xf]
        %v476 = vld [vmem:[%s211 + $0x32c] sm:$0xf]
        %v477 = vld [vmem:[%s211 + $0x330] sm:$0xf]
        %v478 = vld [vmem:[%s211 + $0x334] sm:$0xf]
        %v479 = vld [vmem:[%s211 + $0x338] sm:$0xf]
        %v480 = vld [vmem:[%s211 + $0x33c] sm:$0xf]
        %v481 = vld [vmem:[%s211 + $0x340] sm:$0xf]
        %v482 = vld [vmem:[%s211 + $0x344] sm:$0xf]
        %v483 = vld [vmem:[%s211 + $0x348] sm:$0xf]
        %v484 = vld [vmem:[%s211 + $0x34c] sm:$0xf]
        %v485 = vld [vmem:[%s211 + $0x350] sm:$0xf]
        %v486 = vld [vmem:[%s211 + $0x354] sm:$0xf]
        %v487 = vld [vmem:[%s211 + $0x358] sm:$0xf]
        %v488 = vld [vmem:[%s211 + $0x35c] sm:$0xf]
        %v489 = vld [vmem:[%s211 + $0x360] sm:$0xf]
        %v490 = vld [vmem:[%s211 + $0x364] sm:$0xf]
        %v491 = vld [vmem:[%s211 + $0x368] sm:$0xf]
        %v492 = vld [vmem:[%s211 + $0x36c] sm:$0xf]
        %v493 = vld [vmem:[%s211 + $0x370] sm:$0xf]
        %v494 = vld [vmem:[%s211 + $0x374] sm:$0xf]
        %v495 = vld [vmem:[%s211 + $0x378] sm:$0xf]
        %v496 = vld [vmem:[%s211 + $0x37c] sm:$0xf]
        %v497 = vld [vmem:[%s211 + $0x380] sm:$0xf]
        %v498 = vld [vmem:[%s211 + $0x384] sm:$0xf]
        %v499 = vld [vmem:[%s211 + $0x388] sm:$0xf]
        %v500 = vld [vmem:[%s211 + $0x38c] sm:$0xf]
        %v501 = vld [vmem:[%s211 + $0x390] sm:$0xf]
        %v502 = vld [vmem:[%s211 + $0x394] sm:$0xf]
        %v503 = vld [vmem:[%s211 + $0x398] sm:$0xf]
        %v504 = vld [vmem:[%s211 + $0x39c] sm:$0xf]
        %v505 = vld [vmem:[%s211 + $0x3a0] sm:$0xf]
        %v506 = vld [vmem:[%s211 + $0x3a4] sm:$0xf]
        %v507 = vld [vmem:[%s211 + $0x3a8] sm:$0xf]
        %v508 = vld [vmem:[%s211 + $0x3ac] sm:$0xf]
        %v509 = vld [vmem:[%s211 + $0x3b0] sm:$0xf]
        %v510 = vld [vmem:[%s211 + $0x3b4] sm:$0xf]
        %v511 = vld [vmem:[%s211 + $0x3b8] sm:$0xf]
        %v512 = vld [vmem:[%s211 + $0x3bc] sm:$0xf]
        %v513 = vld [vmem:[%s211 + $0x3c0] sm:$0xf]
        %v514 = vld [vmem:[%s211 + $0x3c4] sm:$0xf]
        %v515 = vld [vmem:[%s211 + $0x3c8] sm:$0xf]
        %v516 = vld [vmem:[%s211 + $0x3cc] sm:$0xf]
        %v517 = vld [vmem:[%s211 + $0x3d0] sm:$0xf]
        %v518 = vld [vmem:[%s211 + $0x3d4] sm:$0xf]
        %v519 = vld [vmem:[%s211 + $0x3d8] sm:$0xf]
        %v520 = vld [vmem:[%s211 + $0x3dc] sm:$0xf]
        %v521 = vld [vmem:[%s211 + $0x3e0] sm:$0xf]
        %v522 = vld [vmem:[%s211 + $0x3e4] sm:$0xf]
        %v523 = vld [vmem:[%s211 + $0x3e8] sm:$0xf]
        %v524 = vld [vmem:[%s211 + $0x3ec] sm:$0xf]
        %v525 = vld [vmem:[%s211 + $0x3f0] sm:$0xf]
        %v526 = vld [vmem:[%s211 + $0x3f4] sm:$0xf]
        %v527 = vld [vmem:[%s211 + $0x3f8] sm:$0xf]
        %v528 = vld [vmem:[%s211 + $0x3fc] sm:$0xf]
        %v529 = vld [vmem:[%s211 + $0x400] sm:$0xf]
        %v530 = vld [vmem:[%s211 + $0x404] sm:$0xf]
        %v531 = vld [vmem:[%s211 + $0x408] sm:$0xf]
        %v532 = vld [vmem:[%s211 + $0x40c] sm:$0xf]
        %v533 = vld [vmem:[%s211 + $0x410] sm:$0xf]
        %v534 = vld [vmem:[%s211 + $0x414] sm:$0xf]
        %v535 = vld [vmem:[%s211 + $0x418] sm:$0xf]
        %v536 = vld [vmem:[%s211 + $0x41c] sm:$0xf]
        %v537 = vld [vmem:[%s211 + $0x420] sm:$0xf]
        %v538 = vld [vmem:[%s211 + $0x424] sm:$0xf]
        %v539 = vld [vmem:[%s211 + $0x428] sm:$0xf]
        %v540 = vld [vmem:[%s211 + $0x42c] sm:$0xf]
        %v541 = vld [vmem:[%s211 + $0x430] sm:$0xf]
        %v542 = vld [vmem:[%s211 + $0x434] sm:$0xf]
        %v543 = vld [vmem:[%s211 + $0x438] sm:$0xf]
        %v544 = vld [vmem:[%s211 + $0x43c] sm:$0xf]
        %v545 = vld [vmem:[%s211 + $0x440] sm:$0xf]
        %v546 = vld [vmem:[%s211 + $0x444] sm:$0xf]
        %v547 = vld [vmem:[%s211 + $0x448] sm:$0xf]
        %v548 = vld [vmem:[%s211 + $0x44c] sm:$0xf]
        %v549 = vld [vmem:[%s211 + $0x450] sm:$0xf]
        %v550 = vld [vmem:[%s211 + $0x454] sm:$0xf]
        %v551 = vld [vmem:[%s211 + $0x458] sm:$0xf]
        %v552 = vld [vmem:[%s211 + $0x45c] sm:$0xf]
        %v553 = vld [vmem:[%s211 + $0x460] sm:$0xf]
        %v554 = vld [vmem:[%s211 + $0x464] sm:$0xf]
        %v555 = vld [vmem:[%s211 + $0x468] sm:$0xf]
        %v556 = vld [vmem:[%s211 + $0x46c] sm:$0xf]
        %v557 = vld [vmem:[%s211 + $0x470] sm:$0xf]
        %v558 = vld [vmem:[%s211 + $0x474] sm:$0xf]
        %v559 = vld [vmem:[%s211 + $0x478] sm:$0xf]
        %v560 = vld [vmem:[%s211 + $0x47c] sm:$0xf]
        %v561 = vld [vmem:[%s211 + $0x480] sm:$0xf]
        %v562 = vld [vmem:[%s211 + $0x484] sm:$0xf]
        %v563 = vld [vmem:[%s211 + $0x488] sm:$0xf]
        %v564 = vld [vmem:[%s211 + $0x48c] sm:$0xf]
        %v565 = vld [vmem:[%s211 + $0x490] sm:$0xf]
        %v566 = vld [vmem:[%s211 + $0x494] sm:$0xf]
        %v567 = vld [vmem:[%s211 + $0x498] sm:$0xf]
        %v568 = vld [vmem:[%s211 + $0x49c] sm:$0xf]
        %v569 = vld [vmem:[%s211 + $0x4a0] sm:$0xf]
        %v570 = vld [vmem:[%s211 + $0x4a4] sm:$0xf]
        %v571 = vld [vmem:[%s211 + $0x4a8] sm:$0xf]
        %v572 = vld [vmem:[%s211 + $0x4ac] sm:$0xf]
        %v573 = vld [vmem:[%s211 + $0x4b0] sm:$0xf]
        %v574 = vld [vmem:[%s211 + $0x4b4] sm:$0xf]
        %v575 = vld [vmem:[%s211 + $0x4b8] sm:$0xf]
        %v576 = vld [vmem:[%s211 + $0x4bc] sm:$0xf]
        %v577 = vld [vmem:[%s211 + $0x4c0] sm:$0xf]
        %v578 = vld [vmem:[%s211 + $0x4c4] sm:$0xf]
        %v579 = vld [vmem:[%s211 + $0x4c8] sm:$0xf]
        %v580 = vld [vmem:[%s211 + $0x4cc] sm:$0xf]
        %v581 = vld [vmem:[%s211 + $0x4d0] sm:$0xf]
        %v582 = vld [vmem:[%s211 + $0x4d4] sm:$0xf]
        %v583 = vld [vmem:[%s211 + $0x4d8] sm:$0xf]
        %v584 = vld [vmem:[%s211 + $0x4dc] sm:$0xf]
        %v585 = vld [vmem:[%s211 + $0x4e0] sm:$0xf]
        %v586 = vld [vmem:[%s211 + $0x4e4] sm:$0xf]
        %v587 = vld [vmem:[%s211 + $0x4e8] sm:$0xf]
        %v588 = vld [vmem:[%s211 + $0x4ec] sm:$0xf]
        %v589 = vld [vmem:[%s211 + $0x4f0] sm:$0xf]
        %v590 = vld [vmem:[%s211 + $0x4f4] sm:$0xf]
        %v591 = vld [vmem:[%s211 + $0x4f8] sm:$0xf]
        %v592 = vld [vmem:[%s211 + $0x4fc] sm:$0xf]
        %v593 = vld [vmem:[%s211 + $0x500] sm:$0xf]
        %v594 = vld [vmem:[%s211 + $0x504] sm:$0xf]
        %v595 = vld [vmem:[%s211 + $0x508] sm:$0xf]
        %v596 = vld [vmem:[%s211 + $0x50c] sm:$0xf]
        %v597 = vld [vmem:[%s211 + $0x510] sm:$0xf]
        %v598 = vld [vmem:[%s211 + $0x514] sm:$0xf]
        %v599 = vld [vmem:[%s211 + $0x518] sm:$0xf]
        %v600 = vld [vmem:[%s211 + $0x51c] sm:$0xf]
        %v601 = vld [vmem:[%s211 + $0x520] sm:$0xf]
        %v602 = vld [vmem:[%s211 + $0x524] sm:$0xf]
        %v603 = vld [vmem:[%s211 + $0x528] sm:$0xf]
        %v604 = vld [vmem:[%s211 + $0x52c] sm:$0xf]
        %v605 = vld [vmem:[%s211 + $0x530] sm:$0xf]
        %v606 = vld [vmem:[%s211 + $0x534] sm:$0xf]
        %v607 = vld [vmem:[%s211 + $0x538] sm:$0xf]
        %v608 = vld [vmem:[%s211 + $0x53c] sm:$0xf]
        %v609 = vld [vmem:[%s211 + $0x540] sm:$0xf]
        %v610 = vld [vmem:[%s211 + $0x544] sm:$0xf]
        %v611 = vld [vmem:[%s211 + $0x548] sm:$0xf]
        %v612 = vld [vmem:[%s211 + $0x54c] sm:$0xf]
        %v613 = vld [vmem:[%s211 + $0x550] sm:$0xf]
        %v614 = vld [vmem:[%s211 + $0x554] sm:$0xf]
        %v615 = vld [vmem:[%s211 + $0x558] sm:$0xf]
        %v616 = vld [vmem:[%s211 + $0x55c] sm:$0xf]
        %v617 = vld [vmem:[%s211 + $0x560] sm:$0xf]
        %v618 = vld [vmem:[%s211 + $0x564] sm:$0xf]
        %v619 = vld [vmem:[%s211 + $0x568] sm:$0xf]
        %v620 = vld [vmem:[%s211 + $0x56c] sm:$0xf]
        %v621 = vld [vmem:[%s211 + $0x570] sm:$0xf]
        %v622 = vld [vmem:[%s211 + $0x574] sm:$0xf]
        %v623 = vld [vmem:[%s211 + $0x578] sm:$0xf]
        %v624 = vld [vmem:[%s211 + $0x57c] sm:$0xf]
        %v625 = vld [vmem:[%s211 + $0x580] sm:$0xf]
        %v626 = vld [vmem:[%s211 + $0x584] sm:$0xf]
        %v627 = vld [vmem:[%s211 + $0x588] sm:$0xf]
        %v628 = vld [vmem:[%s211 + $0x58c] sm:$0xf]
        %v629 = vld [vmem:[%s211 + $0x590] sm:$0xf]
        %v630 = vld [vmem:[%s211 + $0x594] sm:$0xf]
        %v631 = vld [vmem:[%s211 + $0x598] sm:$0xf]
        %v632 = vld [vmem:[%s211 + $0x59c] sm:$0xf]
        %v633 = vld [vmem:[%s211 + $0x5a0] sm:$0xf]
        %v634 = vld [vmem:[%s211 + $0x5a4] sm:$0xf]
        %v635 = vld [vmem:[%s211 + $0x5a8] sm:$0xf]
        %v636 = vld [vmem:[%s211 + $0x5ac] sm:$0xf]
        %v637 = vld [vmem:[%s211 + $0x5b0] sm:$0xf]
        %v638 = vld [vmem:[%s211 + $0x5b4] sm:$0xf]
        %v639 = vld [vmem:[%s211 + $0x5b8] sm:$0xf]
        %v640 = vld [vmem:[%s211 + $0x5bc] sm:$0xf]
        %v641 = vld [vmem:[%s211 + $0x5c0] sm:$0xf]
        %v642 = vld [vmem:[%s211 + $0x5c4] sm:$0xf]
        %v643 = vld [vmem:[%s211 + $0x5c8] sm:$0xf]
        %v644 = vld [vmem:[%s211 + $0x5cc] sm:$0xf]
        %v645 = vld [vmem:[%s211 + $0x5d0] sm:$0xf]
        %v646 = vld [vmem:[%s211 + $0x5d4] sm:$0xf]
        %v647 = vld [vmem:[%s211 + $0x5d8] sm:$0xf]
        %v648 = vld [vmem:[%s211 + $0x5dc] sm:$0xf]
        %v649 = vld [vmem:[%s211 + $0x5e0] sm:$0xf]
        %v650 = vld [vmem:[%s211 + $0x5e4] sm:$0xf]
        %v651 = vld [vmem:[%s211 + $0x5e8] sm:$0xf]
        %v652 = vld [vmem:[%s211 + $0x5ec] sm:$0xf]
        %v653 = vld [vmem:[%s211 + $0x5f0] sm:$0xf]
        %v654 = vld [vmem:[%s211 + $0x5f4] sm:$0xf]
        %v655 = vld [vmem:[%s211 + $0x5f8] sm:$0xf]
        %v656 = vld [vmem:[%s211 + $0x5fc] sm:$0xf]
        %v657 = vld [vmem:[%s211 + $0x600] sm:$0xf]
        %v658 = vld [vmem:[%s211 + $0x604] sm:$0xf]
        %v659 = vld [vmem:[%s211 + $0x608] sm:$0xf]
        %v660 = vld [vmem:[%s211 + $0x60c] sm:$0xf]
        %v661 = vld [vmem:[%s211 + $0x610] sm:$0xf]
        %v662 = vld [vmem:[%s211 + $0x614] sm:$0xf]
        %v663 = vld [vmem:[%s211 + $0x618] sm:$0xf]
        %v664 = vld [vmem:[%s211 + $0x61c] sm:$0xf]
        %v665 = vld [vmem:[%s211 + $0x620] sm:$0xf]
        %v666 = vld [vmem:[%s211 + $0x624] sm:$0xf]
        %v667 = vld [vmem:[%s211 + $0x628] sm:$0xf]
        %v668 = vld [vmem:[%s211 + $0x62c] sm:$0xf]
        %v669 = vld [vmem:[%s211 + $0x630] sm:$0xf]
        %v670 = vld [vmem:[%s211 + $0x634] sm:$0xf]
        %v671 = vld [vmem:[%s211 + $0x638] sm:$0xf]
        %v672 = vld [vmem:[%s211 + $0x63c] sm:$0xf]
        %v673 = vld [vmem:[%s211 + $0x640] sm:$0xf]
        %v674 = vld [vmem:[%s211 + $0x644] sm:$0xf]
        %v675 = vld [vmem:[%s211 + $0x648] sm:$0xf]
        %v676 = vld [vmem:[%s211 + $0x64c] sm:$0xf]
        %v677 = vld [vmem:[%s211 + $0x650] sm:$0xf]
        %v678 = vld [vmem:[%s211 + $0x654] sm:$0xf]
        %v679 = vld [vmem:[%s211 + $0x658] sm:$0xf]
        %v680 = vld [vmem:[%s211 + $0x65c] sm:$0xf]
        %v681 = vld [vmem:[%s211 + $0x660] sm:$0xf]
        %v682 = vld [vmem:[%s211 + $0x664] sm:$0xf]
        %v683 = vld [vmem:[%s211 + $0x668] sm:$0xf]
        %v684 = vld [vmem:[%s211 + $0x66c] sm:$0xf]
        %v685 = vld [vmem:[%s211 + $0x670] sm:$0xf]
        %v686 = vld [vmem:[%s211 + $0x674] sm:$0xf]
        %v687 = vld [vmem:[%s211 + $0x678] sm:$0xf]
        %v688 = vld [vmem:[%s211 + $0x67c] sm:$0xf]
        %v689 = vld [vmem:[%s211 + $0x680] sm:$0xf]
        %v690 = vld [vmem:[%s211 + $0x684] sm:$0xf]
        %v691 = vld [vmem:[%s211 + $0x688] sm:$0xf]
        %v692 = vld [vmem:[%s211 + $0x68c] sm:$0xf]
        %v693 = vld [vmem:[%s211 + $0x690] sm:$0xf]
        %v694 = vld [vmem:[%s211 + $0x694] sm:$0xf]
        %v695 = vld [vmem:[%s211 + $0x698] sm:$0xf]
        %v696 = vld [vmem:[%s211 + $0x69c] sm:$0xf]
        %v697 = vld [vmem:[%s211 + $0x6a0] sm:$0xf]
        %v698 = vld [vmem:[%s211 + $0x6a4] sm:$0xf]
        %v699 = vld [vmem:[%s211 + $0x6a8] sm:$0xf]
        %v700 = vld [vmem:[%s211 + $0x6ac] sm:$0xf]
        %v701 = vld [vmem:[%s211 + $0x6b0] sm:$0xf]
        %v702 = vld [vmem:[%s211 + $0x6b4] sm:$0xf]
        %v703 = vld [vmem:[%s211 + $0x6b8] sm:$0xf]
        %v704 = vld [vmem:[%s211 + $0x6bc] sm:$0xf]
        %v705 = vld [vmem:[%s211 + $0x6c0] sm:$0xf]
        %v706 = vld [vmem:[%s211 + $0x6c4] sm:$0xf]
        %v707 = vld [vmem:[%s211 + $0x6c8] sm:$0xf]
        %v708 = vld [vmem:[%s211 + $0x6cc] sm:$0xf]
        %v709 = vld [vmem:[%s211 + $0x6d0] sm:$0xf]
        %v710 = vld [vmem:[%s211 + $0x6d4] sm:$0xf]
        %v711 = vld [vmem:[%s211 + $0x6d8] sm:$0xf]
        %v712 = vld [vmem:[%s211 + $0x6dc] sm:$0xf]
        %v713 = vld [vmem:[%s211 + $0x6e0] sm:$0xf]
        %v714 = vld [vmem:[%s211 + $0x6e4] sm:$0xf]
        %v715 = vld [vmem:[%s211 + $0x6e8] sm:$0xf]
        %v716 = vld [vmem:[%s211 + $0x6ec] sm:$0xf]
        %v717 = vld [vmem:[%s211 + $0x6f0] sm:$0xf]
        %v718 = vld [vmem:[%s211 + $0x6f4] sm:$0xf]
        %v719 = vld [vmem:[%s211 + $0x6f8] sm:$0xf]
        %v720 = vld [vmem:[%s211 + $0x6fc] sm:$0xf]
        %v721 = vld [vmem:[%s211 + $0x700] sm:$0xf]
        %v722 = vld [vmem:[%s211 + $0x704] sm:$0xf]
        %v723 = vld [vmem:[%s211 + $0x708] sm:$0xf]
        %v724 = vld [vmem:[%s211 + $0x70c] sm:$0xf]
        %v725 = vld [vmem:[%s211 + $0x710] sm:$0xf]
        %v726 = vld [vmem:[%s211 + $0x714] sm:$0xf]
        %v727 = vld [vmem:[%s211 + $0x718] sm:$0xf]
        %v728 = vld [vmem:[%s211 + $0x71c] sm:$0xf]
        %v729 = vld [vmem:[%s211 + $0x720] sm:$0xf]
        %v730 = vld [vmem:[%s211 + $0x724] sm:$0xf]
        %v731 = vld [vmem:[%s211 + $0x728] sm:$0xf]
        %v732 = vld [vmem:[%s211 + $0x72c] sm:$0xf]
        %v733 = vld [vmem:[%s211 + $0x730] sm:$0xf]
        %v734 = vld [vmem:[%s211 + $0x734] sm:$0xf]
        %v735 = vld [vmem:[%s211 + $0x738] sm:$0xf]
        %v736 = vld [vmem:[%s211 + $0x73c] sm:$0xf]
        %v737 = vld [vmem:[%s211 + $0x740] sm:$0xf]
        %v738 = vld [vmem:[%s211 + $0x744] sm:$0xf]
        %v739 = vld [vmem:[%s211 + $0x748] sm:$0xf]
        %v740 = vld [vmem:[%s211 + $0x74c] sm:$0xf]
        %v741 = vld [vmem:[%s211 + $0x750] sm:$0xf]
        %v742 = vld [vmem:[%s211 + $0x754] sm:$0xf]
        %v743 = vld [vmem:[%s211 + $0x758] sm:$0xf]
        %v744 = vld [vmem:[%s211 + $0x75c] sm:$0xf]
        %v745 = vld [vmem:[%s211 + $0x760] sm:$0xf]
        %v746 = vld [vmem:[%s211 + $0x764] sm:$0xf]
        %v747 = vld [vmem:[%s211 + $0x768] sm:$0xf]
        %v748 = vld [vmem:[%s211 + $0x76c] sm:$0xf]
        %v749 = vld [vmem:[%s211 + $0x770] sm:$0xf]
        %v750 = vld [vmem:[%s211 + $0x774] sm:$0xf]
        %v751 = vld [vmem:[%s211 + $0x778] sm:$0xf]
        %v752 = vld [vmem:[%s211 + $0x77c] sm:$0xf]
        %v753 = vld [vmem:[%s211 + $0x780] sm:$0xf]
        %v754 = vld [vmem:[%s211 + $0x784] sm:$0xf]
        %v755 = vld [vmem:[%s211 + $0x788] sm:$0xf]
        %v756 = vld [vmem:[%s211 + $0x78c] sm:$0xf]
        %v757 = vld [vmem:[%s211 + $0x790] sm:$0xf]
        %v758 = vld [vmem:[%s211 + $0x794] sm:$0xf]
        %v759 = vld [vmem:[%s211 + $0x798] sm:$0xf]
        %v760 = vld [vmem:[%s211 + $0x79c] sm:$0xf]
        %v761 = vld [vmem:[%s211 + $0x7a0] sm:$0xf]
        %v762 = vld [vmem:[%s211 + $0x7a4] sm:$0xf]
        %v763 = vld [vmem:[%s211 + $0x7a8] sm:$0xf]
        %v764 = vld [vmem:[%s211 + $0x7ac] sm:$0xf]
        %v765 = vld [vmem:[%s211 + $0x7b0] sm:$0xf]
        %v766 = vld [vmem:[%s211 + $0x7b4] sm:$0xf]
        %v767 = vld [vmem:[%s211 + $0x7b8] sm:$0xf]
        %v768 = vld [vmem:[%s211 + $0x7bc] sm:$0xf]
        %v769 = vld [vmem:[%s211 + $0x7c0] sm:$0xf]
        %v770 = vld [vmem:[%s211 + $0x7c4] sm:$0xf]
        %v771 = vld [vmem:[%s211 + $0x7c8] sm:$0xf]
        %v772 = vld [vmem:[%s211 + $0x7cc] sm:$0xf]
        %v773 = vld [vmem:[%s211 + $0x7d0] sm:$0xf]
        %v774 = vld [vmem:[%s211 + $0x7d4] sm:$0xf]
        %v775 = vld [vmem:[%s211 + $0x7d8] sm:$0xf]
        %v776 = vld [vmem:[%s211 + $0x7dc] sm:$0xf]
        %v777 = vld [vmem:[%s211 + $0x7e0] sm:$0xf]
        %v778 = vld [vmem:[%s211 + $0x7e4] sm:$0xf]
        %v779 = vld [vmem:[%s211 + $0x7e8] sm:$0xf]
        %v780 = vld [vmem:[%s211 + $0x7ec] sm:$0xf]
        %v781 = vld [vmem:[%s211 + $0x7f0] sm:$0xf]
        %v782 = vld [vmem:[%s211 + $0x7f4] sm:$0xf]
        %v783 = vld [vmem:[%s211 + $0x7f8] sm:$0xf]
        %v784 = vld [vmem:[%s211 + $0x7fc] sm:$0xf]
        %v785 = vld [vmem:[%s211 + $0x800] sm:$0xf]
        %v786 = vld [vmem:[%s211 + $0x804] sm:$0xf]
        %v787 = vld [vmem:[%s211 + $0x808] sm:$0xf]
        %v788 = vld [vmem:[%s211 + $0x80c] sm:$0xf]
        %v789 = vld [vmem:[%s211 + $0x810] sm:$0xf]
        %v790 = vld [vmem:[%s211 + $0x814] sm:$0xf]
        %v791 = vld [vmem:[%s211 + $0x818] sm:$0xf]
        %v792 = vld [vmem:[%s211 + $0x81c] sm:$0xf]
        %v793 = vld [vmem:[%s211 + $0x820] sm:$0xf]
        %v794 = vld [vmem:[%s211 + $0x824] sm:$0xf]
        %v795 = vld [vmem:[%s211 + $0x828] sm:$0xf]
        %v796 = vld [vmem:[%s211 + $0x82c] sm:$0xf]
        %v797 = vld [vmem:[%s211 + $0x830] sm:$0xf]
        %v798 = vld [vmem:[%s211 + $0x834] sm:$0xf]
        %v799 = vld [vmem:[%s211 + $0x838] sm:$0xf]
        %v800 = vld [vmem:[%s211 + $0x83c] sm:$0xf]
        %v801 = vld [vmem:[%s211 + $0x840] sm:$0xf]
        %v802 = vld [vmem:[%s211 + $0x844] sm:$0xf]
        %v803 = vld [vmem:[%s211 + $0x848] sm:$0xf]
        %v804 = vld [vmem:[%s211 + $0x84c] sm:$0xf]
        %v805 = vld [vmem:[%s211 + $0x850] sm:$0xf]
        %v806 = vld [vmem:[%s211 + $0x854] sm:$0xf]
        %v807 = vld [vmem:[%s211 + $0x858] sm:$0xf]
        %v808 = vld [vmem:[%s211 + $0x85c] sm:$0xf]
        %v809 = vld [vmem:[%s211 + $0x860] sm:$0xf]
        %v810 = vld [vmem:[%s211 + $0x864] sm:$0xf]
        %v811 = vld [vmem:[%s211 + $0x868] sm:$0xf]
        %v812 = vld [vmem:[%s211 + $0x86c] sm:$0xf]
        %v813 = vld [vmem:[%s211 + $0x870] sm:$0xf]
        %v814 = vld [vmem:[%s211 + $0x874] sm:$0xf]
        %v815 = vld [vmem:[%s211 + $0x878] sm:$0xf]
        %v816 = vld [vmem:[%s211 + $0x87c] sm:$0xf]
        %v817 = vld [vmem:[%s211 + $0x880] sm:$0xf]
        %v818 = vld [vmem:[%s211 + $0x884] sm:$0xf]
        %v819 = vld [vmem:[%s211 + $0x888] sm:$0xf]
        %v820 = vld [vmem:[%s211 + $0x88c] sm:$0xf]
        %v821 = vld [vmem:[%s211 + $0x890] sm:$0xf]
        %v822 = vld [vmem:[%s211 + $0x894] sm:$0xf]
        %v823 = vld [vmem:[%s211 + $0x898] sm:$0xf]
        %v824 = vld [vmem:[%s211 + $0x89c] sm:$0xf]
        %v825 = vld [vmem:[%s211 + $0x8a0] sm:$0xf]
        %v826 = vld [vmem:[%s211 + $0x8a4] sm:$0xf]
        %v827 = vld [vmem:[%s211 + $0x8a8] sm:$0xf]
        %v828 = vld [vmem:[%s211 + $0x8ac] sm:$0xf]
        %v829 = vld [vmem:[%s211 + $0x8b0] sm:$0xf]
        %v830 = vld [vmem:[%s211 + $0x8b4] sm:$0xf]
        %v831 = vld [vmem:[%s211 + $0x8b8] sm:$0xf]
        %v832 = vld [vmem:[%s211 + $0x8bc] sm:$0xf]
        %v833 = vld [vmem:[%s211 + $0x8c0] sm:$0xf]
        %v834 = vld [vmem:[%s211 + $0x8c4] sm:$0xf]
        %v835 = vld [vmem:[%s211 + $0x8c8] sm:$0xf]
        %v836 = vld [vmem:[%s211 + $0x8cc] sm:$0xf]
        %v837 = vld [vmem:[%s211 + $0x8d0] sm:$0xf]
        %v838 = vld [vmem:[%s211 + $0x8d4] sm:$0xf]
        %v839 = vld [vmem:[%s211 + $0x8d8] sm:$0xf]
        %v840 = vld [vmem:[%s211 + $0x8dc] sm:$0xf]
        %v841 = vld [vmem:[%s211 + $0x8e0] sm:$0xf]
        %v842 = vld [vmem:[%s211 + $0x8e4] sm:$0xf]
        %v843 = vld [vmem:[%s211 + $0x8e8] sm:$0xf]
        %v844 = vld [vmem:[%s211 + $0x8ec] sm:$0xf]
        %v845 = vld [vmem:[%s211 + $0x8f0] sm:$0xf]
        %v846 = vld [vmem:[%s211 + $0x8f4] sm:$0xf]
        %v847 = vld [vmem:[%s211 + $0x8f8] sm:$0xf]
        %v848 = vld [vmem:[%s211 + $0x8fc] sm:$0xf]
        %v849 = vld [vmem:[%s211 + $0x900] sm:$0xf]
        %v850 = vld [vmem:[%s211 + $0x904] sm:$0xf]
        %v851 = vld [vmem:[%s211 + $0x908] sm:$0xf]
        %v852 = vld [vmem:[%s211 + $0x90c] sm:$0xf]
        %v853 = vld [vmem:[%s211 + $0x910] sm:$0xf]
        %v854 = vld [vmem:[%s211 + $0x914] sm:$0xf]
        %v855 = vld [vmem:[%s211 + $0x918] sm:$0xf]
        %v856 = vld [vmem:[%s211 + $0x91c] sm:$0xf]
        %v857 = vld [vmem:[%s211 + $0x920] sm:$0xf]
        %v858 = vld [vmem:[%s211 + $0x924] sm:$0xf]
        %v859 = vld [vmem:[%s211 + $0x928] sm:$0xf]
        %v860 = vld [vmem:[%s211 + $0x92c] sm:$0xf]
        %v861 = vld [vmem:[%s211 + $0x930] sm:$0xf]
        %v862 = vld [vmem:[%s211 + $0x934] sm:$0xf]
        %v863 = vld [vmem:[%s211 + $0x938] sm:$0xf]
        %v864 = vld [vmem:[%s211 + $0x93c] sm:$0xf]
        %v865 = vld [vmem:[%s211 + $0x940] sm:$0xf]
        %v866 = vld [vmem:[%s211 + $0x944] sm:$0xf]
        %v867 = vld [vmem:[%s211 + $0x948] sm:$0xf]
        %v868 = vld [vmem:[%s211 + $0x94c] sm:$0xf]
        %v869 = vld [vmem:[%s211 + $0x950] sm:$0xf]
        %v870 = vld [vmem:[%s211 + $0x954] sm:$0xf]
        %v871 = vld [vmem:[%s211 + $0x958] sm:$0xf]
        %v872 = vld [vmem:[%s211 + $0x95c] sm:$0xf]
        %v873 = vld [vmem:[%s211 + $0x960] sm:$0xf]
        %v874 = vld [vmem:[%s211 + $0x964] sm:$0xf]
        %v875 = vld [vmem:[%s211 + $0x968] sm:$0xf]
        %v876 = vld [vmem:[%s211 + $0x96c] sm:$0xf]
        %v877 = vld [vmem:[%s211 + $0x970] sm:$0xf]
        %v878 = vld [vmem:[%s211 + $0x974] sm:$0xf]
        %v879 = vld [vmem:[%s211 + $0x978] sm:$0xf]
        %v880 = vld [vmem:[%s211 + $0x97c] sm:$0xf]
        %v881 = vld [vmem:[%s211 + $0x980] sm:$0xf]
        %v882 = vld [vmem:[%s211 + $0x984] sm:$0xf]
        %v883 = vld [vmem:[%s211 + $0x988] sm:$0xf]
        %v884 = vld [vmem:[%s211 + $0x98c] sm:$0xf]
        %v885 = vld [vmem:[%s211 + $0x990] sm:$0xf]
        %v886 = vld [vmem:[%s211 + $0x994] sm:$0xf]
        %v887 = vld [vmem:[%s211 + $0x998] sm:$0xf]
        %v888 = vld [vmem:[%s211 + $0x99c] sm:$0xf]
        %v889 = vld [vmem:[%s211 + $0x9a0] sm:$0xf]
        %v890 = vld [vmem:[%s211 + $0x9a4] sm:$0xf]
        %v891 = vld [vmem:[%s211 + $0x9a8] sm:$0xf]
        %v892 = vld [vmem:[%s211 + $0x9ac] sm:$0xf]
        %v893 = vld [vmem:[%s211 + $0x9b0] sm:$0xf]
        %v894 = vld [vmem:[%s211 + $0x9b4] sm:$0xf]
        %v895 = vld [vmem:[%s211 + $0x9b8] sm:$0xf]
        %v896 = vld [vmem:[%s211 + $0x9bc] sm:$0xf]
        %v897 = vld [vmem:[%s211 + $0x9c0] sm:$0xf]
        %v898 = vld [vmem:[%s211 + $0x9c4] sm:$0xf]
        %v899 = vld [vmem:[%s211 + $0x9c8] sm:$0xf]
        %v900 = vld [vmem:[%s211 + $0x9cc] sm:$0xf]
        %v901 = vld [vmem:[%s211 + $0x9d0] sm:$0xf]
        %v902 = vld [vmem:[%s211 + $0x9d4] sm:$0xf]
        %v903 = vld [vmem:[%s211 + $0x9d8] sm:$0xf]
        %v904 = vld [vmem:[%s211 + $0x9dc] sm:$0xf]
        %v905 = vld [vmem:[%s211 + $0x9e0] sm:$0xf]
        %v906 = vld [vmem:[%s211 + $0x9e4] sm:$0xf]
        %v907 = vld [vmem:[%s211 + $0x9e8] sm:$0xf]
        %v908 = vld [vmem:[%s211 + $0x9ec] sm:$0xf]
        %v909 = vld [vmem:[%s211 + $0x9f0] sm:$0xf]
        %v910 = vld [vmem:[%s211 + $0x9f4] sm:$0xf]
        %v911 = vld [vmem:[%s211 + $0x9f8] sm:$0xf]
        %v912 = vld [vmem:[%s211 + $0x9fc] sm:$0xf]
        %v913 = vld [vmem:[%s211 + $0xa00] sm:$0xf]
        %v914 = vld [vmem:[%s211 + $0xa04] sm:$0xf]
        %v915 = vld [vmem:[%s211 + $0xa08] sm:$0xf]
        %v916 = vld [vmem:[%s211 + $0xa0c] sm:$0xf]
        %v917 = vld [vmem:[%s211 + $0xa10] sm:$0xf]
        %v918 = vld [vmem:[%s211 + $0xa14] sm:$0xf]
        %v919 = vld [vmem:[%s211 + $0xa18] sm:$0xf]
        %v920 = vld [vmem:[%s211 + $0xa1c] sm:$0xf]
        %v921 = vld [vmem:[%s211 + $0xa20] sm:$0xf]
        %v922 = vld [vmem:[%s211 + $0xa24] sm:$0xf]
        %v923 = vld [vmem:[%s211 + $0xa28] sm:$0xf]
        %v924 = vld [vmem:[%s211 + $0xa2c] sm:$0xf]
        %v925 = vld [vmem:[%s211 + $0xa30] sm:$0xf]
        %v926 = vld [vmem:[%s211 + $0xa34] sm:$0xf]
        %v927 = vld [vmem:[%s211 + $0xa38] sm:$0xf]
        %v928 = vld [vmem:[%s211 + $0xa3c] sm:$0xf]
        %v929 = vld [vmem:[%s211 + $0xa40] sm:$0xf]
        %v930 = vld [vmem:[%s211 + $0xa44] sm:$0xf]
        %v931 = vld [vmem:[%s211 + $0xa48] sm:$0xf]
        %v932 = vld [vmem:[%s211 + $0xa4c] sm:$0xf]
        %v933 = vld [vmem:[%s211 + $0xa50] sm:$0xf]
        %v934 = vld [vmem:[%s211 + $0xa54] sm:$0xf]
        %v935 = vld [vmem:[%s211 + $0xa58] sm:$0xf]
        %v936 = vld [vmem:[%s211 + $0xa5c] sm:$0xf]
        %v937 = vld [vmem:[%s211 + $0xa60] sm:$0xf]
        %v938 = vld [vmem:[%s211 + $0xa64] sm:$0xf]
        %v939 = vld [vmem:[%s211 + $0xa68] sm:$0xf]
        %v940 = vld [vmem:[%s211 + $0xa6c] sm:$0xf]
        %v941 = vld [vmem:[%s211 + $0xa70] sm:$0xf]
        %v942 = vld [vmem:[%s211 + $0xa74] sm:$0xf]
        %v943 = vld [vmem:[%s211 + $0xa78] sm:$0xf]
        %v944 = vld [vmem:[%s211 + $0xa7c] sm:$0xf]
        %v945 = vld [vmem:[%s211 + $0xa80] sm:$0xf]
        %v946 = vld [vmem:[%s211 + $0xa84] sm:$0xf]
        %v947 = vld [vmem:[%s211 + $0xa88] sm:$0xf]
        %v948 = vld [vmem:[%s211 + $0xa8c] sm:$0xf]
        %v949 = vld [vmem:[%s211 + $0xa90] sm:$0xf]
        %v950 = vld [vmem:[%s211 + $0xa94] sm:$0xf]
        %v951 = vld [vmem:[%s211 + $0xa98] sm:$0xf]
        %v952 = vld [vmem:[%s211 + $0xa9c] sm:$0xf]
        %v953 = vld [vmem:[%s211 + $0xaa0] sm:$0xf]
        %v954 = vld [vmem:[%s211 + $0xaa4] sm:$0xf]
        %v955 = vld [vmem:[%s211 + $0xaa8] sm:$0xf]
        %v956 = vld [vmem:[%s211 + $0xaac] sm:$0xf]
        %v957 = vld [vmem:[%s211 + $0xab0] sm:$0xf]
        %v958 = vld [vmem:[%s211 + $0xab4] sm:$0xf]
        %v959 = vld [vmem:[%s211 + $0xab8] sm:$0xf]
        %v960 = vld [vmem:[%s211 + $0xabc] sm:$0xf]
        %v961 = vld [vmem:[%s211 + $0xac0] sm:$0xf]
        %v962 = vld [vmem:[%s211 + $0xac4] sm:$0xf]
        %v963 = vld [vmem:[%s211 + $0xac8] sm:$0xf]
        %v964 = vld [vmem:[%s211 + $0xacc] sm:$0xf]
        %v965 = vld [vmem:[%s211 + $0xad0] sm:$0xf]
        %v966 = vld [vmem:[%s211 + $0xad4] sm:$0xf]
        %v967 = vld [vmem:[%s211 + $0xad8] sm:$0xf]
        %v968 = vld [vmem:[%s211 + $0xadc] sm:$0xf]
        %v969 = vld [vmem:[%s211 + $0xae0] sm:$0xf]
        %v970 = vld [vmem:[%s211 + $0xae4] sm:$0xf]
        %v971 = vld [vmem:[%s211 + $0xae8] sm:$0xf]
        %v972 = vld [vmem:[%s211 + $0xaec] sm:$0xf]
        %v973 = vld [vmem:[%s211 + $0xaf0] sm:$0xf]
        %v974 = vld [vmem:[%s211 + $0xaf4] sm:$0xf]
        %v975 = vld [vmem:[%s211 + $0xaf8] sm:$0xf]
        %v976 = vld [vmem:[%s211 + $0xafc] sm:$0xf]
        %v977 = vld [vmem:[%s211 + $0xb00] sm:$0xf]
        %v978 = vld [vmem:[%s211 + $0xb04] sm:$0xf]
        %v979 = vld [vmem:[%s211 + $0xb08] sm:$0xf]
        %v980 = vld [vmem:[%s211 + $0xb0c] sm:$0xf]
        %v981 = vld [vmem:[%s211 + $0xb10] sm:$0xf]
        %v982 = vld [vmem:[%s211 + $0xb14] sm:$0xf]
        %v983 = vld [vmem:[%s211 + $0xb18] sm:$0xf]
        %v984 = vld [vmem:[%s211 + $0xb1c] sm:$0xf]
        %v985 = vld [vmem:[%s211 + $0xb20] sm:$0xf]
        %v986 = vld [vmem:[%s211 + $0xb24] sm:$0xf]
        %v987 = vld [vmem:[%s211 + $0xb28] sm:$0xf]
        %v988 = vld [vmem:[%s211 + $0xb2c] sm:$0xf]
        %v989 = vld [vmem:[%s211 + $0xb30] sm:$0xf]
        %v990 = vld [vmem:[%s211 + $0xb34] sm:$0xf]
        %v991 = vld [vmem:[%s211 + $0xb38] sm:$0xf]
        %v992 = vld [vmem:[%s211 + $0xb3c] sm:$0xf]
        %v993 = vld [vmem:[%s211 + $0xb40] sm:$0xf]
        %v994 = vld [vmem:[%s211 + $0xb44] sm:$0xf]
        %v995 = vld [vmem:[%s211 + $0xb48] sm:$0xf]
        %v996 = vld [vmem:[%s211 + $0xb4c] sm:$0xf]
        %v997 = vld [vmem:[%s211 + $0xb50] sm:$0xf]
        %v998 = vld [vmem:[%s211 + $0xb54] sm:$0xf]
        %v999 = vld [vmem:[%s211 + $0xb58] sm:$0xf]
        %v1000 = vld [vmem:[%s211 + $0xb5c] sm:$0xf]
        %v1001 = vld [vmem:[%s211 + $0xb60] sm:$0xf]
        %v1002 = vld [vmem:[%s211 + $0xb64] sm:$0xf]
        %v1003 = vld [vmem:[%s211 + $0xb68] sm:$0xf]
        %v1004 = vld [vmem:[%s211 + $0xb6c] sm:$0xf]
        %v1005 = vld [vmem:[%s211 + $0xb70] sm:$0xf]
        %v1006 = vld [vmem:[%s211 + $0xb74] sm:$0xf]
        %v1007 = vld [vmem:[%s211 + $0xb78] sm:$0xf]
        %v1008 = vld [vmem:[%s211 + $0xb7c] sm:$0xf]
        %v1009 = vld [vmem:[%s211 + $0xb80] sm:$0xf]
        %v1010 = vld [vmem:[%s211 + $0xb84] sm:$0xf]
        %v1011 = vld [vmem:[%s211 + $0xb88] sm:$0xf]
        %v1012 = vld [vmem:[%s211 + $0xb8c] sm:$0xf]
        %v1013 = vld [vmem:[%s211 + $0xb90] sm:$0xf]
        %v1014 = vld [vmem:[%s211 + $0xb94] sm:$0xf]
        %v1015 = vld [vmem:[%s211 + $0xb98] sm:$0xf]
        %v1016 = vld [vmem:[%s211 + $0xb9c] sm:$0xf]
        %v1017 = vld [vmem:[%s211 + $0xba0] sm:$0xf]
        %v1018 = vld [vmem:[%s211 + $0xba4] sm:$0xf]
        %v1019 = vld [vmem:[%s211 + $0xba8] sm:$0xf]
        %v1020 = vld [vmem:[%s211 + $0xbac] sm:$0xf]
        %v1021 = vld [vmem:[%s211 + $0xbb0] sm:$0xf]
        %v1022 = vld [vmem:[%s211 + $0xbb4] sm:$0xf]
        %v1023 = vld [vmem:[%s211 + $0xbb8] sm:$0xf]
        %v1024 = vld [vmem:[%s211 + $0xbbc] sm:$0xf]
        %v1025 = vld [vmem:[%s211 + $0xbc0] sm:$0xf]
        %v1026 = vld [vmem:[%s211 + $0xbc4] sm:$0xf]
        %v1027 = vld [vmem:[%s211 + $0xbc8] sm:$0xf]
        %v1028 = vld [vmem:[%s211 + $0xbcc] sm:$0xf]
        %v1029 = vld [vmem:[%s211 + $0xbd0] sm:$0xf]
        %v1030 = vld [vmem:[%s211 + $0xbd4] sm:$0xf]
        %v1031 = vld [vmem:[%s211 + $0xbd8] sm:$0xf]
        %v1032 = vld [vmem:[%s211 + $0xbdc] sm:$0xf]
        %v1033 = vld [vmem:[%s211 + $0xbe0] sm:$0xf]
        %v1034 = vld [vmem:[%s211 + $0xbe4] sm:$0xf]
        %v1035 = vld [vmem:[%s211 + $0xbe8] sm:$0xf]
        %v1036 = vld [vmem:[%s211 + $0xbec] sm:$0xf]
        %v1037 = vld [vmem:[%s211 + $0xbf0] sm:$0xf]
        %v1038 = vld [vmem:[%s211 + $0xbf4] sm:$0xf]
        %v1039 = vld [vmem:[%s211 + $0xbf8] sm:$0xf]
        %v1040 = vld [vmem:[%s211 + $0xbfc] sm:$0xf]
        %v1041 = vld [vmem:[%s211 + $0xc00] sm:$0xf]
        %v1042 = vld [vmem:[%s211 + $0xc04] sm:$0xf]
        %v1043 = vld [vmem:[%s211 + $0xc08] sm:$0xf]
        %v1044 = vld [vmem:[%s211 + $0xc0c] sm:$0xf]
        %v1045 = vld [vmem:[%s211 + $0xc10] sm:$0xf]
        %v1046 = vld [vmem:[%s211 + $0xc14] sm:$0xf]
        %v1047 = vld [vmem:[%s211 + $0xc18] sm:$0xf]
        %v1048 = vld [vmem:[%s211 + $0xc1c] sm:$0xf]
        %v1049 = vld [vmem:[%s211 + $0xc20] sm:$0xf]
        %v1050 = vld [vmem:[%s211 + $0xc24] sm:$0xf]
        %v1051 = vld [vmem:[%s211 + $0xc28] sm:$0xf]
        %v1052 = vld [vmem:[%s211 + $0xc2c] sm:$0xf]
        %v1053 = vld [vmem:[%s211 + $0xc30] sm:$0xf]
        %v1054 = vld [vmem:[%s211 + $0xc34] sm:$0xf]
        %v1055 = vld [vmem:[%s211 + $0xc38] sm:$0xf]
        %v1056 = vld [vmem:[%s211 + $0xc3c] sm:$0xf]
        %v1057 = vld [vmem:[%s211 + $0xc40] sm:$0xf]
        %v1058 = vld [vmem:[%s211 + $0xc44] sm:$0xf]
        %v1059 = vld [vmem:[%s211 + $0xc48] sm:$0xf]
        %v1060 = vld [vmem:[%s211 + $0xc4c] sm:$0xf]
        %v1061 = vld [vmem:[%s211 + $0xc50] sm:$0xf]
        %v1062 = vld [vmem:[%s211 + $0xc54] sm:$0xf]
        %v1063 = vld [vmem:[%s211 + $0xc58] sm:$0xf]
        %v1064 = vld [vmem:[%s211 + $0xc5c] sm:$0xf]
        %v1065 = vld [vmem:[%s211 + $0xc60] sm:$0xf]
        %v1066 = vld [vmem:[%s211 + $0xc64] sm:$0xf]
        %v1067 = vld [vmem:[%s211 + $0xc68] sm:$0xf]
        %v1068 = vld [vmem:[%s211 + $0xc6c] sm:$0xf]
        %v1069 = vld [vmem:[%s211 + $0xc70] sm:$0xf]
        %v1070 = vld [vmem:[%s211 + $0xc74] sm:$0xf]
        %v1071 = vld [vmem:[%s211 + $0xc78] sm:$0xf]
        %v1072 = vld [vmem:[%s211 + $0xc7c] sm:$0xf]
        %v1073 = vld [vmem:[%s211 + $0xc80] sm:$0xf]
        %v1074 = vld [vmem:[%s211 + $0xc84] sm:$0xf]
        %v1075 = vld [vmem:[%s211 + $0xc88] sm:$0xf]
        %v1076 = vld [vmem:[%s211 + $0xc8c] sm:$0xf]
        %v1077 = vld [vmem:[%s211 + $0xc90] sm:$0xf]
        %v1078 = vld [vmem:[%s211 + $0xc94] sm:$0xf]
        %v1079 = vld [vmem:[%s211 + $0xc98] sm:$0xf]
        %v1080 = vld [vmem:[%s211 + $0xc9c] sm:$0xf]
        %v1081 = vld [vmem:[%s211 + $0xca0] sm:$0xf]
        %v1082 = vld [vmem:[%s211 + $0xca4] sm:$0xf]
        %v1083 = vld [vmem:[%s211 + $0xca8] sm:$0xf]
        %v1084 = vld [vmem:[%s211 + $0xcac] sm:$0xf]
        %v1085 = vld [vmem:[%s211 + $0xcb0] sm:$0xf]
        %v1086 = vld [vmem:[%s211 + $0xcb4] sm:$0xf]
        %v1087 = vld [vmem:[%s211 + $0xcb8] sm:$0xf]
        %v1088 = vld [vmem:[%s211 + $0xcbc] sm:$0xf]
        %v1089 = vld [vmem:[%s211 + $0xcc0] sm:$0xf]
        %v1090 = vld [vmem:[%s211 + $0xcc4] sm:$0xf]
        %v1091 = vld [vmem:[%s211 + $0xcc8] sm:$0xf]
        %v1092 = vld [vmem:[%s211 + $0xccc] sm:$0xf]
        %v1093 = vld [vmem:[%s211 + $0xcd0] sm:$0xf]
        %v1094 = vld [vmem:[%s211 + $0xcd4] sm:$0xf]
        %v1095 = vld [vmem:[%s211 + $0xcd8] sm:$0xf]
        %v1096 = vld [vmem:[%s211 + $0xcdc] sm:$0xf]
        %v1097 = vld [vmem:[%s211 + $0xce0] sm:$0xf]
        %v1098 = vld [vmem:[%s211 + $0xce4] sm:$0xf]
        %v1099 = vld [vmem:[%s211 + $0xce8] sm:$0xf]
        %v1100 = vld [vmem:[%s211 + $0xcec] sm:$0xf]
        %v1101 = vld [vmem:[%s211 + $0xcf0] sm:$0xf]
        %v1102 = vld [vmem:[%s211 + $0xcf4] sm:$0xf]
        %v1103 = vld [vmem:[%s211 + $0xcf8] sm:$0xf]
        %v1104 = vld [vmem:[%s211 + $0xcfc] sm:$0xf]
        %v1105 = vld [vmem:[%s211 + $0xd00] sm:$0xf]
        %v1106 = vld [vmem:[%s211 + $0xd04] sm:$0xf]
        %v1107 = vld [vmem:[%s211 + $0xd08] sm:$0xf]
        %v1108 = vld [vmem:[%s211 + $0xd0c] sm:$0xf]
        %v1109 = vld [vmem:[%s211 + $0xd10] sm:$0xf]
        %v1110 = vld [vmem:[%s211 + $0xd14] sm:$0xf]
        %v1111 = vld [vmem:[%s211 + $0xd18] sm:$0xf]
        %v1112 = vld [vmem:[%s211 + $0xd1c] sm:$0xf]
        %v1113 = vld [vmem:[%s211 + $0xd20] sm:$0xf]
        %v1114 = vld [vmem:[%s211 + $0xd24] sm:$0xf]
        %v1115 = vld [vmem:[%s211 + $0xd28] sm:$0xf]
        %v1116 = vld [vmem:[%s211 + $0xd2c] sm:$0xf]
        %v1117 = vld [vmem:[%s211 + $0xd30] sm:$0xf]
        %v1118 = vld [vmem:[%s211 + $0xd34] sm:$0xf]
        %v1119 = vld [vmem:[%s211 + $0xd38] sm:$0xf]
        %v1120 = vld [vmem:[%s211 + $0xd3c] sm:$0xf]
        %v1121 = vld [vmem:[%s211 + $0xd40] sm:$0xf]
        %v1122 = vld [vmem:[%s211 + $0xd44] sm:$0xf]
        %v1123 = vld [vmem:[%s211 + $0xd48] sm:$0xf]
        %v1124 = vld [vmem:[%s211 + $0xd4c] sm:$0xf]
        %v1125 = vld [vmem:[%s211 + $0xd50] sm:$0xf]
        %v1126 = vld [vmem:[%s211 + $0xd54] sm:$0xf]
        %v1127 = vld [vmem:[%s211 + $0xd58] sm:$0xf]
        %v1128 = vld [vmem:[%s211 + $0xd5c] sm:$0xf]
        %v1129 = vld [vmem:[%s211 + $0xd60] sm:$0xf]
        %v1130 = vld [vmem:[%s211 + $0xd64] sm:$0xf]
        %v1131 = vld [vmem:[%s211 + $0xd68] sm:$0xf]
        %v1132 = vld [vmem:[%s211 + $0xd6c] sm:$0xf]
        %v1133 = vld [vmem:[%s211 + $0xd70] sm:$0xf]
        %v1134 = vld [vmem:[%s211 + $0xd74] sm:$0xf]
        %v1135 = vld [vmem:[%s211 + $0xd78] sm:$0xf]
        %v1136 = vld [vmem:[%s211 + $0xd7c] sm:$0xf]
        %v1137 = vld [vmem:[%s211 + $0xd80] sm:$0xf]
        %v1138 = vld [vmem:[%s211 + $0xd84] sm:$0xf]
        %v1139 = vld [vmem:[%s211 + $0xd88] sm:$0xf]
        %v1140 = vld [vmem:[%s211 + $0xd8c] sm:$0xf]
        %v1141 = vld [vmem:[%s211 + $0xd90] sm:$0xf]
        %v1142 = vld [vmem:[%s211 + $0xd94] sm:$0xf]
        %v1143 = vld [vmem:[%s211 + $0xd98] sm:$0xf]
        %v1144 = vld [vmem:[%s211 + $0xd9c] sm:$0xf]
        %v1145 = vld [vmem:[%s211 + $0xda0] sm:$0xf]
        %v1146 = vld [vmem:[%s211 + $0xda4] sm:$0xf]
        %v1147 = vld [vmem:[%s211 + $0xda8] sm:$0xf]
        %v1148 = vld [vmem:[%s211 + $0xdac] sm:$0xf]
        %v1149 = vld [vmem:[%s211 + $0xdb0] sm:$0xf]
        %v1150 = vld [vmem:[%s211 + $0xdb4] sm:$0xf]
        %v1151 = vld [vmem:[%s211 + $0xdb8] sm:$0xf]
        %v1152 = vld [vmem:[%s211 + $0xdbc] sm:$0xf]
        %v1153 = vld [vmem:[%s211 + $0xdc0] sm:$0xf]
        %v1154 = vld [vmem:[%s211 + $0xdc4] sm:$0xf]
        %v1155 = vld [vmem:[%s211 + $0xdc8] sm:$0xf]
        %v1156 = vld [vmem:[%s211 + $0xdcc] sm:$0xf]
        %v1157 = vld [vmem:[%s211 + $0xdd0] sm:$0xf]
        %v1158 = vld [vmem:[%s211 + $0xdd4] sm:$0xf]
        %v1159 = vld [vmem:[%s211 + $0xdd8] sm:$0xf]
        %v1160 = vld [vmem:[%s211 + $0xddc] sm:$0xf]
        %v1161 = vld [vmem:[%s211 + $0xde0] sm:$0xf]
        %v1162 = vld [vmem:[%s211 + $0xde4] sm:$0xf]
        %v1163 = vld [vmem:[%s211 + $0xde8] sm:$0xf]
        %v1164 = vld [vmem:[%s211 + $0xdec] sm:$0xf]
        %v1165 = vld [vmem:[%s211 + $0xdf0] sm:$0xf]
        %v1166 = vld [vmem:[%s211 + $0xdf4] sm:$0xf]
        %v1167 = vld [vmem:[%s211 + $0xdf8] sm:$0xf]
        %v1168 = vld [vmem:[%s211 + $0xdfc] sm:$0xf]
        %v1169 = vld [vmem:[%s211 + $0xe00] sm:$0xf]
        %v1170 = vld [vmem:[%s211 + $0xe04] sm:$0xf]
        %v1171 = vld [vmem:[%s211 + $0xe08] sm:$0xf]
        %v1172 = vld [vmem:[%s211 + $0xe0c] sm:$0xf]
        %v1173 = vld [vmem:[%s211 + $0xe10] sm:$0xf]
        %v1174 = vld [vmem:[%s211 + $0xe14] sm:$0xf]
        %v1175 = vld [vmem:[%s211 + $0xe18] sm:$0xf]
        %v1176 = vld [vmem:[%s211 + $0xe1c] sm:$0xf]
        %v1177 = vld [vmem:[%s211 + $0xe20] sm:$0xf]
        %v1178 = vld [vmem:[%s211 + $0xe24] sm:$0xf]
        %v1179 = vld [vmem:[%s211 + $0xe28] sm:$0xf]
        %v1180 = vld [vmem:[%s211 + $0xe2c] sm:$0xf]
        %v1181 = vld [vmem:[%s211 + $0xe30] sm:$0xf]
        %v1182 = vld [vmem:[%s211 + $0xe34] sm:$0xf]
        %v1183 = vld [vmem:[%s211 + $0xe38] sm:$0xf]
        %v1184 = vld [vmem:[%s211 + $0xe3c] sm:$0xf]
        %v1185 = vld [vmem:[%s211 + $0xe40] sm:$0xf]
        %v1186 = vld [vmem:[%s211 + $0xe44] sm:$0xf]
        %v1187 = vld [vmem:[%s211 + $0xe48] sm:$0xf]
        %v1188 = vld [vmem:[%s211 + $0xe4c] sm:$0xf]
        %v1189 = vld [vmem:[%s211 + $0xe50] sm:$0xf]
        %v1190 = vld [vmem:[%s211 + $0xe54] sm:$0xf]
        %v1191 = vld [vmem:[%s211 + $0xe58] sm:$0xf]
        %v1192 = vld [vmem:[%s211 + $0xe5c] sm:$0xf]
        %v1193 = vld [vmem:[%s211 + $0xe60] sm:$0xf]
        %v1194 = vld [vmem:[%s211 + $0xe64] sm:$0xf]
        %v1195 = vld [vmem:[%s211 + $0xe68] sm:$0xf]
        %v1196 = vld [vmem:[%s211 + $0xe6c] sm:$0xf]
        %v1197 = vld [vmem:[%s211 + $0xe70] sm:$0xf]
        %v1198 = vld [vmem:[%s211 + $0xe74] sm:$0xf]
        %v1199 = vld [vmem:[%s211 + $0xe78] sm:$0xf]
        %v1200 = vld [vmem:[%s211 + $0xe7c] sm:$0xf]
        %v1201 = vld [vmem:[%s211 + $0xe80] sm:$0xf]
        %v1202 = vld [vmem:[%s211 + $0xe84] sm:$0xf]
        %v1203 = vld [vmem:[%s211 + $0xe88] sm:$0xf]
        %v1204 = vld [vmem:[%s211 + $0xe8c] sm:$0xf]
        %v1205 = vld [vmem:[%s211 + $0xe90] sm:$0xf]
        %v1206 = vld [vmem:[%s211 + $0xe94] sm:$0xf]
        %v1207 = vld [vmem:[%s211 + $0xe98] sm:$0xf]
        %v1208 = vld [vmem:[%s211 + $0xe9c] sm:$0xf]
        %v1209 = vld [vmem:[%s211 + $0xea0] sm:$0xf]
        %v1210 = vld [vmem:[%s211 + $0xea4] sm:$0xf]
        %v1211 = vld [vmem:[%s211 + $0xea8] sm:$0xf]
        %v1212 = vld [vmem:[%s211 + $0xeac] sm:$0xf]
        %v1213 = vld [vmem:[%s211 + $0xeb0] sm:$0xf]
        %v1214 = vld [vmem:[%s211 + $0xeb4] sm:$0xf]
        %v1215 = vld [vmem:[%s211 + $0xeb8] sm:$0xf]
        %v1216 = vld [vmem:[%s211 + $0xebc] sm:$0xf]
        %v1217 = vld [vmem:[%s211 + $0xec0] sm:$0xf]
        %v1218 = vld [vmem:[%s211 + $0xec4] sm:$0xf]
        %v1219 = vld [vmem:[%s211 + $0xec8] sm:$0xf]
        %v1220 = vld [vmem:[%s211 + $0xecc] sm:$0xf]
        %v1221 = vld [vmem:[%s211 + $0xed0] sm:$0xf]
        %v1222 = vld [vmem:[%s211 + $0xed4] sm:$0xf]
        %v1223 = vld [vmem:[%s211 + $0xed8] sm:$0xf]
        %v1224 = vld [vmem:[%s211 + $0xedc] sm:$0xf]
        %v1225 = vld [vmem:[%s211 + $0xee0] sm:$0xf]
        %v1226 = vld [vmem:[%s211 + $0xee4] sm:$0xf]
        %v1227 = vld [vmem:[%s211 + $0xee8] sm:$0xf]
        %v1228 = vld [vmem:[%s211 + $0xeec] sm:$0xf]
        %v1229 = vld [vmem:[%s211 + $0xef0] sm:$0xf]
        %v1230 = vld [vmem:[%s211 + $0xef4] sm:$0xf]
        %v1231 = vld [vmem:[%s211 + $0xef8] sm:$0xf]
        %v1232 = vld [vmem:[%s211 + $0xefc] sm:$0xf]
        %v1233 = vld [vmem:[%s211 + $0xf00] sm:$0xf]
        %v1234 = vld [vmem:[%s211 + $0xf04] sm:$0xf]
        %v1235 = vld [vmem:[%s211 + $0xf08] sm:$0xf]
        %v1236 = vld [vmem:[%s211 + $0xf0c] sm:$0xf]
        %v1237 = vld [vmem:[%s211 + $0xf10] sm:$0xf]
        %v1238 = vld [vmem:[%s211 + $0xf14] sm:$0xf]
        %v1239 = vld [vmem:[%s211 + $0xf18] sm:$0xf]
        %v1240 = vld [vmem:[%s211 + $0xf1c] sm:$0xf]
        %v1241 = vld [vmem:[%s211 + $0xf20] sm:$0xf]
        %v1242 = vld [vmem:[%s211 + $0xf24] sm:$0xf]
        %v1243 = vld [vmem:[%s211 + $0xf28] sm:$0xf]
        %v1244 = vld [vmem:[%s211 + $0xf2c] sm:$0xf]
        %v1245 = vld [vmem:[%s211 + $0xf30] sm:$0xf]
        %v1246 = vld [vmem:[%s211 + $0xf34] sm:$0xf]
        %v1247 = vld [vmem:[%s211 + $0xf38] sm:$0xf]
        %v1248 = vld [vmem:[%s211 + $0xf3c] sm:$0xf]
        %v1249 = vld [vmem:[%s211 + $0xf40] sm:$0xf]
        %v1250 = vld [vmem:[%s211 + $0xf44] sm:$0xf]
        %v1251 = vld [vmem:[%s211 + $0xf48] sm:$0xf]
        %v1252 = vld [vmem:[%s211 + $0xf4c] sm:$0xf]
        %v1253 = vld [vmem:[%s211 + $0xf50] sm:$0xf]
        %v1254 = vld [vmem:[%s211 + $0xf54] sm:$0xf]
        %v1255 = vld [vmem:[%s211 + $0xf58] sm:$0xf]
        %v1256 = vld [vmem:[%s211 + $0xf5c] sm:$0xf]
        %v1257 = vld [vmem:[%s211 + $0xf60] sm:$0xf]
        %v1258 = vld [vmem:[%s211 + $0xf64] sm:$0xf]
        %v1259 = vld [vmem:[%s211 + $0xf68] sm:$0xf]
        %v1260 = vld [vmem:[%s211 + $0xf6c] sm:$0xf]
        %v1261 = vld [vmem:[%s211 + $0xf70] sm:$0xf]
        %v1262 = vld [vmem:[%s211 + $0xf74] sm:$0xf]
        %v1263 = vld [vmem:[%s211 + $0xf78] sm:$0xf]
        %v1264 = vld [vmem:[%s211 + $0xf7c] sm:$0xf]
        %v1265 = vld [vmem:[%s211 + $0xf80] sm:$0xf]
        %v1266 = vld [vmem:[%s211 + $0xf84] sm:$0xf]
        %v1267 = vld [vmem:[%s211 + $0xf88] sm:$0xf]
        %v1268 = vld [vmem:[%s211 + $0xf8c] sm:$0xf]
        %v1269 = vld [vmem:[%s211 + $0xf90] sm:$0xf]
        %v1270 = vld [vmem:[%s211 + $0xf94] sm:$0xf]
        %v1271 = vld [vmem:[%s211 + $0xf98] sm:$0xf]
        %v1272 = vld [vmem:[%s211 + $0xf9c] sm:$0xf]
        %v1273 = vld [vmem:[%s211 + $0xfa0] sm:$0xf]
        %v1274 = vld [vmem:[%s211 + $0xfa4] sm:$0xf]
        %v1275 = vld [vmem:[%s211 + $0xfa8] sm:$0xf]
        %v1276 = vld [vmem:[%s211 + $0xfac] sm:$0xf]
        %v1277 = vld [vmem:[%s211 + $0xfb0] sm:$0xf]
        %v1278 = vld [vmem:[%s211 + $0xfb4] sm:$0xf]
        %v1279 = vld [vmem:[%s211 + $0xfb8] sm:$0xf]
        %v1280 = vld [vmem:[%s211 + $0xfbc] sm:$0xf]
        %v1281 = vld [vmem:[%s211 + $0xfc0] sm:$0xf]
        %v1282 = vld [vmem:[%s211 + $0xfc4] sm:$0xf]
        %v1283 = vld [vmem:[%s211 + $0xfc8] sm:$0xf]
        %v1284 = vld [vmem:[%s211 + $0xfcc] sm:$0xf]
        %v1285 = vld [vmem:[%s211 + $0xfd0] sm:$0xf]
        %v1286 = vld [vmem:[%s211 + $0xfd4] sm:$0xf]
        %v1287 = vld [vmem:[%s211 + $0xfd8] sm:$0xf]
        %v1288 = vld [vmem:[%s211 + $0xfdc] sm:$0xf]
        %v1289 = vld [vmem:[%s211 + $0xfe0] sm:$0xf]
        %v1290 = vld [vmem:[%s211 + $0xfe4] sm:$0xf]
        %v1291 = vld [vmem:[%s211 + $0xfe8] sm:$0xf]
        %v1292 = vld [vmem:[%s211 + $0xfec] sm:$0xf]
        %v1293 = vld [vmem:[%s211 + $0xff0] sm:$0xf]
        %v1294 = vld [vmem:[%s211 + $0xff4] sm:$0xf]
        %v1295 = vld [vmem:[%s211 + $0xff8] sm:$0xf]
        %v1296 = vld [vmem:[%s211 + $0xffc] sm:$0xf]
        %v1297 = vld [vmem:[%s211 + $0x1000] sm:$0xf]
        %v1298 = vld [vmem:[%s211 + $0x1004] sm:$0xf]
        %v1299 = vld [vmem:[%s211 + $0x1008] sm:$0xf]
        %v1300 = vld [vmem:[%s211 + $0x100c] sm:$0xf]
        %v1301 = vld [vmem:[%s211 + $0x1010] sm:$0xf]
        %v1302 = vld [vmem:[%s211 + $0x1014] sm:$0xf]
        %v1303 = vld [vmem:[%s211 + $0x1018] sm:$0xf]
        %v1304 = vld [vmem:[%s211 + $0x101c] sm:$0xf]
        %v1305 = vld [vmem:[%s211 + $0x1020] sm:$0xf]
        %v1306 = vld [vmem:[%s211 + $0x1024] sm:$0xf]
        %v1307 = vld [vmem:[%s211 + $0x1028] sm:$0xf]
        %v1308 = vld [vmem:[%s211 + $0x102c] sm:$0xf]
        %v1309 = vld [vmem:[%s211 + $0x1030] sm:$0xf]
        %v1310 = vld [vmem:[%s211 + $0x1034] sm:$0xf]
        %v1311 = vld [vmem:[%s211 + $0x1038] sm:$0xf]
        %v1312 = vld [vmem:[%s211 + $0x103c] sm:$0xf]
        %v1313 = vld [vmem:[%s211 + $0x1040] sm:$0xf]
        %v1314 = vld [vmem:[%s211 + $0x1044] sm:$0xf]
        %v1315 = vld [vmem:[%s211 + $0x1048] sm:$0xf]
        %v1316 = vld [vmem:[%s211 + $0x104c] sm:$0xf]
        %v1317 = vld [vmem:[%s211 + $0x1050] sm:$0xf]
        %v1318 = vld [vmem:[%s211 + $0x1054] sm:$0xf]
        %v1319 = vld [vmem:[%s211 + $0x1058] sm:$0xf]
        %v1320 = vld [vmem:[%s211 + $0x105c] sm:$0xf]
        %v1321 = vld [vmem:[%s211 + $0x1060] sm:$0xf]
        %v1322 = vld [vmem:[%s211 + $0x1064] sm:$0xf]
        %v1323 = vld [vmem:[%s211 + $0x1068] sm:$0xf]
        %v1324 = vld [vmem:[%s211 + $0x106c] sm:$0xf]
        %v1325 = vld [vmem:[%s211 + $0x1070] sm:$0xf]
        %v1326 = vld [vmem:[%s211 + $0x1074] sm:$0xf]
        %v1327 = vld [vmem:[%s211 + $0x1078] sm:$0xf]
        %v1328 = vld [vmem:[%s211 + $0x107c] sm:$0xf]
        %v1329 = vld [vmem:[%s211 + $0x1080] sm:$0xf]
        %v1330 = vld [vmem:[%s211 + $0x1084] sm:$0xf]
        %v1331 = vld [vmem:[%s211 + $0x1088] sm:$0xf]
        %v1332 = vld [vmem:[%s211 + $0x108c] sm:$0xf]
        %v1333 = vld [vmem:[%s211 + $0x1090] sm:$0xf]
        %v1334 = vld [vmem:[%s211 + $0x1094] sm:$0xf]
        %v1335 = vld [vmem:[%s211 + $0x1098] sm:$0xf]
        %v1336 = vld [vmem:[%s211 + $0x109c] sm:$0xf]
        %v1337 = vld [vmem:[%s211 + $0x10a0] sm:$0xf]
        %v1338 = vld [vmem:[%s211 + $0x10a4] sm:$0xf]
        %v1339 = vld [vmem:[%s211 + $0x10a8] sm:$0xf]
        %v1340 = vld [vmem:[%s211 + $0x10ac] sm:$0xf]
        %v1341 = vld [vmem:[%s211 + $0x10b0] sm:$0xf]
        %v1342 = vld [vmem:[%s211 + $0x10b4] sm:$0xf]
        %v1343 = vld [vmem:[%s211 + $0x10b8] sm:$0xf]
        %v1344 = vld [vmem:[%s211 + $0x10bc] sm:$0xf]
        %v1345 = vld [vmem:[%s211 + $0x10c0] sm:$0xf]
        %v1346 = vld [vmem:[%s211 + $0x10c4] sm:$0xf]
        %v1347 = vld [vmem:[%s211 + $0x10c8] sm:$0xf]
        %v1348 = vld [vmem:[%s211 + $0x10cc] sm:$0xf]
        %v1349 = vld [vmem:[%s211 + $0x10d0] sm:$0xf]
        %v1350 = vld [vmem:[%s211 + $0x10d4] sm:$0xf]
        %v1351 = vld [vmem:[%s211 + $0x10d8] sm:$0xf]
        %v1352 = vld [vmem:[%s211 + $0x10dc] sm:$0xf]
        %v1353 = vld [vmem:[%s211 + $0x10e0] sm:$0xf]
        %v1354 = vld [vmem:[%s211 + $0x10e4] sm:$0xf]
        %v1355 = vld [vmem:[%s211 + $0x10e8] sm:$0xf]
        %v1356 = vld [vmem:[%s211 + $0x10ec] sm:$0xf]
        %v1357 = vld [vmem:[%s211 + $0x10f0] sm:$0xf]
        %v1358 = vld [vmem:[%s211 + $0x10f4] sm:$0xf]
        %v1359 = vld [vmem:[%s211 + $0x10f8] sm:$0xf]
        %v1360 = vld [vmem:[%s211 + $0x10fc] sm:$0xf]
        %v1361 = vld [vmem:[%s211 + $0x1100] sm:$0xf]
        %v1362 = vld [vmem:[%s211 + $0x1104] sm:$0xf]
        %v1363 = vld [vmem:[%s211 + $0x1108] sm:$0xf]
        %v1364 = vld [vmem:[%s211 + $0x110c] sm:$0xf]
        %v1365 = vld [vmem:[%s211 + $0x1110] sm:$0xf]
        %v1366 = vld [vmem:[%s211 + $0x1114] sm:$0xf]
        %v1367 = vld [vmem:[%s211 + $0x1118] sm:$0xf]
        %v1368 = vld [vmem:[%s211 + $0x111c] sm:$0xf]
        %v1369 = vld [vmem:[%s211 + $0x1120] sm:$0xf]
        %v1370 = vld [vmem:[%s211 + $0x1124] sm:$0xf]
        %v1371 = vld [vmem:[%s211 + $0x1128] sm:$0xf]
        %v1372 = vld [vmem:[%s211 + $0x112c] sm:$0xf]
        %v1373 = vld [vmem:[%s211 + $0x1130] sm:$0xf]
        %v1374 = vld [vmem:[%s211 + $0x1134] sm:$0xf]
        %v1375 = vld [vmem:[%s211 + $0x1138] sm:$0xf]
        %v1376 = vld [vmem:[%s211 + $0x113c] sm:$0xf]
        %v1377 = vld [vmem:[%s211 + $0x1140] sm:$0xf]
        %v1378 = vld [vmem:[%s211 + $0x1144] sm:$0xf]
        %v1379 = vld [vmem:[%s211 + $0x1148] sm:$0xf]
        %v1380 = vld [vmem:[%s211 + $0x114c] sm:$0xf]
        %v1381 = vld [vmem:[%s211 + $0x1150] sm:$0xf]
        %v1382 = vld [vmem:[%s211 + $0x1154] sm:$0xf]
        %v1383 = vld [vmem:[%s211 + $0x1158] sm:$0xf]
        %v1384 = vld [vmem:[%s211 + $0x115c] sm:$0xf]
        %v1385 = vld [vmem:[%s211 + $0x1160] sm:$0xf]
        %v1386 = vld [vmem:[%s211 + $0x1164] sm:$0xf]
        %v1387 = vld [vmem:[%s211 + $0x1168] sm:$0xf]
        %v1388 = vld [vmem:[%s211 + $0x116c] sm:$0xf]
        %v1389 = vld [vmem:[%s211 + $0x1170] sm:$0xf]
        %v1390 = vld [vmem:[%s211 + $0x1174] sm:$0xf]
        %v1391 = vld [vmem:[%s211 + $0x1178] sm:$0xf]
        %v1392 = vld [vmem:[%s211 + $0x117c] sm:$0xf]
        %v1393 = vld [vmem:[%s211 + $0x1180] sm:$0xf]
        %v1394 = vld [vmem:[%s211 + $0x1184] sm:$0xf]
        %v1395 = vld [vmem:[%s211 + $0x1188] sm:$0xf]
        %v1396 = vld [vmem:[%s211 + $0x118c] sm:$0xf]
        %v1397 = vld [vmem:[%s211 + $0x1190] sm:$0xf]
        %v1398 = vld [vmem:[%s211 + $0x1194] sm:$0xf]
        %v1399 = vld [vmem:[%s211 + $0x1198] sm:$0xf]
        %v1400 = vld [vmem:[%s211 + $0x119c] sm:$0xf]
        %v1401 = vld [vmem:[%s211 + $0x11a0] sm:$0xf]
        %v1402 = vld [vmem:[%s211 + $0x11a4] sm:$0xf]
        %v1403 = vld [vmem:[%s211 + $0x11a8] sm:$0xf]
        %v1404 = vld [vmem:[%s211 + $0x11ac] sm:$0xf]
        %v1405 = vld [vmem:[%s211 + $0x11b0] sm:$0xf]
        %v1406 = vld [vmem:[%s211 + $0x11b4] sm:$0xf]
        %v1407 = vld [vmem:[%s211 + $0x11b8] sm:$0xf]
        %v1408 = vld [vmem:[%s211 + $0x11bc] sm:$0xf]
        %v1409 = vld [vmem:[%s211 + $0x11c0] sm:$0xf]
        %v1410 = vld [vmem:[%s211 + $0x11c4] sm:$0xf]
        %v1411 = vld [vmem:[%s211 + $0x11c8] sm:$0xf]
        %v1412 = vld [vmem:[%s211 + $0x11cc] sm:$0xf]
        %v1413 = vld [vmem:[%s211 + $0x11d0] sm:$0xf]
        %v1414 = vld [vmem:[%s211 + $0x11d4] sm:$0xf]
        %v1415 = vld [vmem:[%s211 + $0x11d8] sm:$0xf]
        %v1416 = vld [vmem:[%s211 + $0x11dc] sm:$0xf]
        %v1417 = vld [vmem:[%s211 + $0x11e0] sm:$0xf]
        %v1418 = vld [vmem:[%s211 + $0x11e4] sm:$0xf]
        %v1419 = vld [vmem:[%s211 + $0x11e8] sm:$0xf]
        %v1420 = vld [vmem:[%s211 + $0x11ec] sm:$0xf]
        %v1421 = vld [vmem:[%s211 + $0x11f0] sm:$0xf]
        %v1422 = vld [vmem:[%s211 + $0x11f4] sm:$0xf]
        %v1423 = vld [vmem:[%s211 + $0x11f8] sm:$0xf]
        %v1424 = vld [vmem:[%s211 + $0x11fc] sm:$0xf]
        %v1434 = vcombine.high %v264, %v264
        %v1436 = vunpack.c.l.s4 1966171168
        %v1437 = vunpack.c.0.s8 %v1436
        %v1438 = vlaneseq
        %v1439 = vshrl.u32 %v1438, 7
        %v1440 = vsub.s32 %v1437, %v1439
        %v1441 = vrot.slane %v264, %v1440
        %v1443 = vunpack.c.l.s4 1966171168
        %v1444 = vunpack.c.0.s8 %v1443
        %v1445 = vlaneseq
        %v1446 = vshrl.u32 %v1445, 7
        %v1447 = vsub.s32 %v1444, %v1446
        %v1448 = vrot.slane %v1434, %v1447
        %v1449 = vcombine.high %v1441, %v1441
        %v1450 = vcombine.high %v1448, %v1448
        %v1452 = vunpack.c.l.s4 1966171168
        %v1453 = vunpack.c.0.s8 %v1452
        %v1454 = vlaneseq
        %v1455 = vshrl.u32 %v1454, 7
        %v1456 = vsub.s32 %v1453, %v1455
        %v1457 = vrot.slane %v1441, %v1456
        %v1459 = vunpack.c.l.s4 1966171168
        %v1460 = vunpack.c.0.s8 %v1459
        %v1461 = vlaneseq
        %v1462 = vshrl.u32 %v1461, 7
        %v1463 = vsub.s32 %v1460, %v1462
        %v1464 = vrot.slane %v1448, %v1463
        %v1466 = vunpack.c.l.s4 1966171168
        %v1467 = vunpack.c.0.s8 %v1466
        %v1468 = vlaneseq
        %v1469 = vshrl.u32 %v1468, 7
        %v1470 = vsub.s32 %v1467, %v1469
        %v1471 = vrot.slane %v1449, %v1470
        %v1473 = vunpack.c.l.s4 1966171168
        %v1474 = vunpack.c.0.s8 %v1473
        %v1475 = vlaneseq
        %v1476 = vshrl.u32 %v1475, 7
        %v1477 = vsub.s32 %v1474, %v1476
        %v1478 = vrot.slane %v1450, %v1477
        %v1479 = vcombine.high %v1457, %v1457
        %v1480 = vcombine.high %v1464, %v1464
        %v1481 = vcombine.high %v1471, %v1471
        %v1482 = vcombine.high %v1478, %v1478
        %v1483 = vcombine.high %v265, %v265
        %v1485 = vunpack.c.l.s4 1966171168
        %v1486 = vunpack.c.0.s8 %v1485
        %v1487 = vlaneseq
        %v1488 = vshrl.u32 %v1487, 7
        %v1489 = vsub.s32 %v1486, %v1488
        %v1490 = vrot.slane %v265, %v1489
        %v1492 = vunpack.c.l.s4 1966171168
        %v1493 = vunpack.c.0.s8 %v1492
        %v1494 = vlaneseq
        %v1495 = vshrl.u32 %v1494, 7
        %v1496 = vsub.s32 %v1493, %v1495
        %v1497 = vrot.slane %v1483, %v1496
        %v1498 = vcombine.high %v1490, %v1490
        %v1499 = vcombine.high %v1497, %v1497
        %v1501 = vunpack.c.l.s4 1966171168
        %v1502 = vunpack.c.0.s8 %v1501
        %v1503 = vlaneseq
        %v1504 = vshrl.u32 %v1503, 7
        %v1505 = vsub.s32 %v1502, %v1504
        %v1506 = vrot.slane %v1490, %v1505
        %v1508 = vunpack.c.l.s4 1966171168
        %v1509 = vunpack.c.0.s8 %v1508
        %v1510 = vlaneseq
        %v1511 = vshrl.u32 %v1510, 7
        %v1512 = vsub.s32 %v1509, %v1511
        %v1513 = vrot.slane %v1497, %v1512
        %v1515 = vunpack.c.l.s4 1966171168
        %v1516 = vunpack.c.0.s8 %v1515
        %v1517 = vlaneseq
        %v1518 = vshrl.u32 %v1517, 7
        %v1519 = vsub.s32 %v1516, %v1518
        %v1520 = vrot.slane %v1498, %v1519
        %v1522 = vunpack.c.l.s4 1966171168
        %v1523 = vunpack.c.0.s8 %v1522
        %v1524 = vlaneseq
        %v1525 = vshrl.u32 %v1524, 7
        %v1526 = vsub.s32 %v1523, %v1525
        %v1527 = vrot.slane %v1499, %v1526
        %v1528 = vcombine.high %v1506, %v1506
        %v1529 = vcombine.high %v1513, %v1513
        %v1530 = vcombine.high %v1520, %v1520
        %v1531 = vcombine.high %v1527, %v1527
        %v1532 = vcombine.high %v266, %v266
        %v1534 = vunpack.c.l.s4 1966171168
        %v1535 = vunpack.c.0.s8 %v1534
        %v1536 = vlaneseq
        %v1537 = vshrl.u32 %v1536, 7
        %v1538 = vsub.s32 %v1535, %v1537
        %v1539 = vrot.slane %v266, %v1538
        %v1541 = vunpack.c.l.s4 1966171168
        %v1542 = vunpack.c.0.s8 %v1541
        %v1543 = vlaneseq
        %v1544 = vshrl.u32 %v1543, 7
        %v1545 = vsub.s32 %v1542, %v1544
        %v1546 = vrot.slane %v1532, %v1545
        %v1547 = vcombine.high %v1539, %v1539
        %v1548 = vcombine.high %v1546, %v1546
        %v1550 = vunpack.c.l.s4 1966171168
        %v1551 = vunpack.c.0.s8 %v1550
        %v1552 = vlaneseq
        %v1553 = vshrl.u32 %v1552, 7
        %v1554 = vsub.s32 %v1551, %v1553
        %v1555 = vrot.slane %v1539, %v1554
        %v1557 = vunpack.c.l.s4 1966171168
        %v1558 = vunpack.c.0.s8 %v1557
        %v1559 = vlaneseq
        %v1560 = vshrl.u32 %v1559, 7
        %v1561 = vsub.s32 %v1558, %v1560
        %v1562 = vrot.slane %v1546, %v1561
        %v1564 = vunpack.c.l.s4 1966171168
        %v1565 = vunpack.c.0.s8 %v1564
        %v1566 = vlaneseq
        %v1567 = vshrl.u32 %v1566, 7
        %v1568 = vsub.s32 %v1565, %v1567
        %v1569 = vrot.slane %v1547, %v1568
        %v1571 = vunpack.c.l.s4 1966171168
        %v1572 = vunpack.c.0.s8 %v1571
        %v1573 = vlaneseq
        %v1574 = vshrl.u32 %v1573, 7
        %v1575 = vsub.s32 %v1572, %v1574
        %v1576 = vrot.slane %v1548, %v1575
        %v1577 = vcombine.high %v1555, %v1555
        %v1578 = vcombine.high %v1562, %v1562
        %v1579 = vcombine.high %v1569, %v1569
        %v1580 = vcombine.high %v1576, %v1576
        %v1581 = vcombine.high %v267, %v267
        %v1583 = vunpack.c.l.s4 1966171168
        %v1584 = vunpack.c.0.s8 %v1583
        %v1585 = vlaneseq
        %v1586 = vshrl.u32 %v1585, 7
        %v1587 = vsub.s32 %v1584, %v1586
        %v1588 = vrot.slane %v267, %v1587
        %v1590 = vunpack.c.l.s4 1966171168
        %v1591 = vunpack.c.0.s8 %v1590
        %v1592 = vlaneseq
        %v1593 = vshrl.u32 %v1592, 7
        %v1594 = vsub.s32 %v1591, %v1593
        %v1595 = vrot.slane %v1581, %v1594
        %v1596 = vcombine.high %v1588, %v1588
        %v1597 = vcombine.high %v1595, %v1595
        %v1599 = vunpack.c.l.s4 1966171168
        %v1600 = vunpack.c.0.s8 %v1599
        %v1601 = vlaneseq
        %v1602 = vshrl.u32 %v1601, 7
        %v1603 = vsub.s32 %v1600, %v1602
        %v1604 = vrot.slane %v1588, %v1603
        %v1606 = vunpack.c.l.s4 1966171168
        %v1607 = vunpack.c.0.s8 %v1606
        %v1608 = vlaneseq
        %v1609 = vshrl.u32 %v1608, 7
        %v1610 = vsub.s32 %v1607, %v1609
        %v1611 = vrot.slane %v1595, %v1610
        %v1613 = vunpack.c.l.s4 1966171168
        %v1614 = vunpack.c.0.s8 %v1613
        %v1615 = vlaneseq
        %v1616 = vshrl.u32 %v1615, 7
        %v1617 = vsub.s32 %v1614, %v1616
        %v1618 = vrot.slane %v1596, %v1617
        %v1620 = vunpack.c.l.s4 1966171168
        %v1621 = vunpack.c.0.s8 %v1620
        %v1622 = vlaneseq
        %v1623 = vshrl.u32 %v1622, 7
        %v1624 = vsub.s32 %v1621, %v1623
        %v1625 = vrot.slane %v1597, %v1624
        %v1626 = vcombine.high %v1604, %v1604
        %v1627 = vcombine.high %v1611, %v1611
        %v1628 = vcombine.high %v1618, %v1618
        %v1629 = vcombine.high %v1625, %v1625
        %v1630 = vcombine.high %v268, %v268
        %v1632 = vunpack.c.l.s4 1966171168
        %v1633 = vunpack.c.0.s8 %v1632
        %v1634 = vlaneseq
        %v1635 = vshrl.u32 %v1634, 7
        %v1636 = vsub.s32 %v1633, %v1635
        %v1637 = vrot.slane %v268, %v1636
        %v1639 = vunpack.c.l.s4 1966171168
        %v1640 = vunpack.c.0.s8 %v1639
        %v1641 = vlaneseq
        %v1642 = vshrl.u32 %v1641, 7
        %v1643 = vsub.s32 %v1640, %v1642
        %v1644 = vrot.slane %v1630, %v1643
        %v1645 = vcombine.high %v1637, %v1637
        %v1646 = vcombine.high %v1644, %v1644
        %v1648 = vunpack.c.l.s4 1966171168
        %v1649 = vunpack.c.0.s8 %v1648
        %v1650 = vlaneseq
        %v1651 = vshrl.u32 %v1650, 7
        %v1652 = vsub.s32 %v1649, %v1651
        %v1653 = vrot.slane %v1637, %v1652
        %v1655 = vunpack.c.l.s4 1966171168
        %v1656 = vunpack.c.0.s8 %v1655
        %v1657 = vlaneseq
        %v1658 = vshrl.u32 %v1657, 7
        %v1659 = vsub.s32 %v1656, %v1658
        %v1660 = vrot.slane %v1644, %v1659
        %v1662 = vunpack.c.l.s4 1966171168
        %v1663 = vunpack.c.0.s8 %v1662
        %v1664 = vlaneseq
        %v1665 = vshrl.u32 %v1664, 7
        %v1666 = vsub.s32 %v1663, %v1665
        %v1667 = vrot.slane %v1645, %v1666
        %v1669 = vunpack.c.l.s4 1966171168
        %v1670 = vunpack.c.0.s8 %v1669
        %v1671 = vlaneseq
        %v1672 = vshrl.u32 %v1671, 7
        %v1673 = vsub.s32 %v1670, %v1672
        %v1674 = vrot.slane %v1646, %v1673
        %v1675 = vcombine.high %v1653, %v1653
        %v1676 = vcombine.high %v1660, %v1660
        %v1677 = vcombine.high %v1667, %v1667
        %v1678 = vcombine.high %v1674, %v1674
        %v1679 = vcombine.high %v269, %v269
        %v1681 = vunpack.c.l.s4 1966171168
        %v1682 = vunpack.c.0.s8 %v1681
        %v1683 = vlaneseq
        %v1684 = vshrl.u32 %v1683, 7
        %v1685 = vsub.s32 %v1682, %v1684
        %v1686 = vrot.slane %v269, %v1685
        %v1688 = vunpack.c.l.s4 1966171168
        %v1689 = vunpack.c.0.s8 %v1688
        %v1690 = vlaneseq
        %v1691 = vshrl.u32 %v1690, 7
        %v1692 = vsub.s32 %v1689, %v1691
        %v1693 = vrot.slane %v1679, %v1692
        %v1694 = vcombine.high %v1686, %v1686
        %v1695 = vcombine.high %v1693, %v1693
        %v1697 = vunpack.c.l.s4 1966171168
        %v1698 = vunpack.c.0.s8 %v1697
        %v1699 = vlaneseq
        %v1700 = vshrl.u32 %v1699, 7
        %v1701 = vsub.s32 %v1698, %v1700
        %v1702 = vrot.slane %v1686, %v1701
        %v1704 = vunpack.c.l.s4 1966171168
        %v1705 = vunpack.c.0.s8 %v1704
        %v1706 = vlaneseq
        %v1707 = vshrl.u32 %v1706, 7
        %v1708 = vsub.s32 %v1705, %v1707
        %v1709 = vrot.slane %v1693, %v1708
        %v1711 = vunpack.c.l.s4 1966171168
        %v1712 = vunpack.c.0.s8 %v1711
        %v1713 = vlaneseq
        %v1714 = vshrl.u32 %v1713, 7
        %v1715 = vsub.s32 %v1712, %v1714
        %v1716 = vrot.slane %v1694, %v1715
        %v1718 = vunpack.c.l.s4 1966171168
        %v1719 = vunpack.c.0.s8 %v1718
        %v1720 = vlaneseq
        %v1721 = vshrl.u32 %v1720, 7
        %v1722 = vsub.s32 %v1719, %v1721
        %v1723 = vrot.slane %v1695, %v1722
        %v1724 = vcombine.high %v1702, %v1702
        %v1725 = vcombine.high %v1709, %v1709
        %v1726 = vcombine.high %v1716, %v1716
        %v1727 = vcombine.high %v1723, %v1723
        %v1728 = vcombine.high %v270, %v270
        %v1730 = vunpack.c.l.s4 1966171168
        %v1731 = vunpack.c.0.s8 %v1730
        %v1732 = vlaneseq
        %v1733 = vshrl.u32 %v1732, 7
        %v1734 = vsub.s32 %v1731, %v1733
        %v1735 = vrot.slane %v270, %v1734
        %v1737 = vunpack.c.l.s4 1966171168
        %v1738 = vunpack.c.0.s8 %v1737
        %v1739 = vlaneseq
        %v1740 = vshrl.u32 %v1739, 7
        %v1741 = vsub.s32 %v1738, %v1740
        %v1742 = vrot.slane %v1728, %v1741
        %v1743 = vcombine.high %v1735, %v1735
        %v1744 = vcombine.high %v1742, %v1742
        %v1746 = vunpack.c.l.s4 1966171168
        %v1747 = vunpack.c.0.s8 %v1746
        %v1748 = vlaneseq
        %v1749 = vshrl.u32 %v1748, 7
        %v1750 = vsub.s32 %v1747, %v1749
        %v1751 = vrot.slane %v1735, %v1750
        %v1753 = vunpack.c.l.s4 1966171168
        %v1754 = vunpack.c.0.s8 %v1753
        %v1755 = vlaneseq
        %v1756 = vshrl.u32 %v1755, 7
        %v1757 = vsub.s32 %v1754, %v1756
        %v1758 = vrot.slane %v1742, %v1757
        %v1760 = vunpack.c.l.s4 1966171168
        %v1761 = vunpack.c.0.s8 %v1760
        %v1762 = vlaneseq
        %v1763 = vshrl.u32 %v1762, 7
        %v1764 = vsub.s32 %v1761, %v1763
        %v1765 = vrot.slane %v1743, %v1764
        %v1767 = vunpack.c.l.s4 1966171168
        %v1768 = vunpack.c.0.s8 %v1767
        %v1769 = vlaneseq
        %v1770 = vshrl.u32 %v1769, 7
        %v1771 = vsub.s32 %v1768, %v1770
        %v1772 = vrot.slane %v1744, %v1771
        %v1773 = vcombine.high %v1751, %v1751
        %v1774 = vcombine.high %v1758, %v1758
        %v1775 = vcombine.high %v1765, %v1765
        %v1776 = vcombine.high %v1772, %v1772
        %v1777 = vcombine.high %v271, %v271
        %v1779 = vunpack.c.l.s4 1966171168
        %v1780 = vunpack.c.0.s8 %v1779
        %v1781 = vlaneseq
        %v1782 = vshrl.u32 %v1781, 7
        %v1783 = vsub.s32 %v1780, %v1782
        %v1784 = vrot.slane %v271, %v1783
        %v1786 = vunpack.c.l.s4 1966171168
        %v1787 = vunpack.c.0.s8 %v1786
        %v1788 = vlaneseq
        %v1789 = vshrl.u32 %v1788, 7
        %v1790 = vsub.s32 %v1787, %v1789
        %v1791 = vrot.slane %v1777, %v1790
        %v1792 = vcombine.high %v1784, %v1784
        %v1793 = vcombine.high %v1791, %v1791
        %v1795 = vunpack.c.l.s4 1966171168
        %v1796 = vunpack.c.0.s8 %v1795
        %v1797 = vlaneseq
        %v1798 = vshrl.u32 %v1797, 7
        %v1799 = vsub.s32 %v1796, %v1798
        %v1800 = vrot.slane %v1784, %v1799
        %v1802 = vunpack.c.l.s4 1966171168
        %v1803 = vunpack.c.0.s8 %v1802
        %v1804 = vlaneseq
        %v1805 = vshrl.u32 %v1804, 7
        %v1806 = vsub.s32 %v1803, %v1805
        %v1807 = vrot.slane %v1791, %v1806
        %v1809 = vunpack.c.l.s4 1966171168
        %v1810 = vunpack.c.0.s8 %v1809
        %v1811 = vlaneseq
        %v1812 = vshrl.u32 %v1811, 7
        %v1813 = vsub.s32 %v1810, %v1812
        %v1814 = vrot.slane %v1792, %v1813
        %v1816 = vunpack.c.l.s4 1966171168
        %v1817 = vunpack.c.0.s8 %v1816
        %v1818 = vlaneseq
        %v1819 = vshrl.u32 %v1818, 7
        %v1820 = vsub.s32 %v1817, %v1819
        %v1821 = vrot.slane %v1793, %v1820
        %v1822 = vcombine.high %v1800, %v1800
        %v1823 = vcombine.high %v1807, %v1807
        %v1824 = vcombine.high %v1814, %v1814
        %v1825 = vcombine.high %v1821, %v1821
        %v1826 = vcombine.high %v272, %v272
        %v1828 = vunpack.c.l.s4 1966171168
        %v1829 = vunpack.c.0.s8 %v1828
        %v1830 = vlaneseq
        %v1831 = vshrl.u32 %v1830, 7
        %v1832 = vsub.s32 %v1829, %v1831
        %v1833 = vrot.slane %v272, %v1832
        %v1835 = vunpack.c.l.s4 1966171168
        %v1836 = vunpack.c.0.s8 %v1835
        %v1837 = vlaneseq
        %v1838 = vshrl.u32 %v1837, 7
        %v1839 = vsub.s32 %v1836, %v1838
        %v1840 = vrot.slane %v1826, %v1839
        %v1841 = vcombine.high %v1833, %v1833
        %v1842 = vcombine.high %v1840, %v1840
        %v1844 = vunpack.c.l.s4 1966171168
        %v1845 = vunpack.c.0.s8 %v1844
        %v1846 = vlaneseq
        %v1847 = vshrl.u32 %v1846, 7
        %v1848 = vsub.s32 %v1845, %v1847
        %v1849 = vrot.slane %v1833, %v1848
        %v1851 = vunpack.c.l.s4 1966171168
        %v1852 = vunpack.c.0.s8 %v1851
        %v1853 = vlaneseq
        %v1854 = vshrl.u32 %v1853, 7
        %v1855 = vsub.s32 %v1852, %v1854
        %v1856 = vrot.slane %v1840, %v1855
        %v1858 = vunpack.c.l.s4 1966171168
        %v1859 = vunpack.c.0.s8 %v1858
        %v1860 = vlaneseq
        %v1861 = vshrl.u32 %v1860, 7
        %v1862 = vsub.s32 %v1859, %v1861
        %v1863 = vrot.slane %v1841, %v1862
        %v1865 = vunpack.c.l.s4 1966171168
        %v1866 = vunpack.c.0.s8 %v1865
        %v1867 = vlaneseq
        %v1868 = vshrl.u32 %v1867, 7
        %v1869 = vsub.s32 %v1866, %v1868
        %v1870 = vrot.slane %v1842, %v1869
        %v1871 = vcombine.high %v1849, %v1849
        %v1872 = vcombine.high %v1856, %v1856
        %v1873 = vcombine.high %v1863, %v1863
        %v1874 = vcombine.high %v1870, %v1870
        %v3099 = vunpack.c.l.b16 %v273
        %v3100 = vunpack.c.l.b16 %v274
        %v3101 = vunpack.c.l.b16 %v275
        %v3102 = vunpack.c.l.b16 %v276
        %v3103 = vunpack.c.l.b16 %v277
        %v3104 = vunpack.c.l.b16 %v278
        %v3105 = vunpack.c.l.b16 %v279
        %v3106 = vunpack.c.l.b16 %v280
        %v3107 = vunpack.c.l.b16 %v281
        %v3108 = vunpack.c.l.b16 %v282
        %v3109 = vunpack.c.l.b16 %v283
        %v3110 = vunpack.c.l.b16 %v284
        %v3111 = vunpack.c.l.b16 %v285
        %v3112 = vunpack.c.l.b16 %v286
        %v3113 = vunpack.c.l.b16 %v287
        %v3114 = vunpack.c.l.b16 %v288
        %v3115 = vunpack.c.l.b16 %v289
        %v3116 = vunpack.c.l.b16 %v290
        %v3117 = vunpack.c.l.b16 %v291
        %v3118 = vunpack.c.l.b16 %v292
        %v3119 = vunpack.c.l.b16 %v293
        %v3120 = vunpack.c.l.b16 %v294
        %v3121 = vunpack.c.l.b16 %v295
        %v3122 = vunpack.c.l.b16 %v296
        %v3123 = vunpack.c.l.b16 %v297
        %v3124 = vunpack.c.l.b16 %v298
        %v3125 = vunpack.c.l.b16 %v299
        %v3126 = vunpack.c.l.b16 %v300
        %v3127 = vunpack.c.l.b16 %v301
        %v3128 = vunpack.c.l.b16 %v302
        %v3129 = vunpack.c.l.b16 %v303
        %v3130 = vunpack.c.l.b16 %v304
        %v3131 = vunpack.c.l.b16 %v305
        %v3132 = vunpack.c.l.b16 %v306
        %v3133 = vunpack.c.l.b16 %v307
        %v3134 = vunpack.c.l.b16 %v308
        %v3135 = vunpack.c.l.b16 %v309
        %v3136 = vunpack.c.l.b16 %v310
        %v3137 = vunpack.c.l.b16 %v311
        %v3138 = vunpack.c.l.b16 %v312
        %v3139 = vunpack.c.l.b16 %v313
        %v3140 = vunpack.c.l.b16 %v314
        %v3141 = vunpack.c.l.b16 %v315
        %v3142 = vunpack.c.l.b16 %v316
        %v3143 = vunpack.c.l.b16 %v317
        %v3144 = vunpack.c.l.b16 %v318
        %v3145 = vunpack.c.l.b16 %v319
        %v3146 = vunpack.c.l.b16 %v320
        %v3147 = vunpack.c.l.b16 %v321
        %v3148 = vunpack.c.l.b16 %v322
        %v3149 = vunpack.c.l.b16 %v323
        %v3150 = vunpack.c.l.b16 %v324
        %v3151 = vunpack.c.l.b16 %v325
        %v3152 = vunpack.c.l.b16 %v326
        %v3153 = vunpack.c.l.b16 %v327
        %v3154 = vunpack.c.l.b16 %v328
        %v3155 = vunpack.c.l.b16 %v329
        %v3156 = vunpack.c.l.b16 %v330
        %v3157 = vunpack.c.l.b16 %v331
        %v3158 = vunpack.c.l.b16 %v332
        %v3159 = vunpack.c.l.b16 %v333
        %v3160 = vunpack.c.l.b16 %v334
        %v3161 = vunpack.c.l.b16 %v335
        %v3162 = vunpack.c.l.b16 %v336
        %v3163 = vunpack.c.l.b16 %v337
        %v3164 = vunpack.c.l.b16 %v338
        %v3165 = vunpack.c.l.b16 %v339
        %v3166 = vunpack.c.l.b16 %v340
        %v3167 = vunpack.c.l.b16 %v341
        %v3168 = vunpack.c.l.b16 %v342
        %v3169 = vunpack.c.l.b16 %v343
        %v3170 = vunpack.c.l.b16 %v344
        %v3171 = vunpack.c.l.b16 %v345
        %v3172 = vunpack.c.l.b16 %v346
        %v3173 = vunpack.c.l.b16 %v347
        %v3174 = vunpack.c.l.b16 %v348
        %v3175 = vunpack.c.l.b16 %v349
        %v3176 = vunpack.c.l.b16 %v350
        %v3177 = vunpack.c.l.b16 %v351
        %v3178 = vunpack.c.l.b16 %v352
        %v3179 = vunpack.c.l.b16 %v353
        %v3180 = vunpack.c.l.b16 %v354
        %v3181 = vunpack.c.l.b16 %v355
        %v3182 = vunpack.c.l.b16 %v356
        %v3183 = vunpack.c.l.b16 %v357
        %v3184 = vunpack.c.l.b16 %v358
        %v3185 = vunpack.c.l.b16 %v359
        %v3186 = vunpack.c.l.b16 %v360
        %v3187 = vunpack.c.l.b16 %v361
        %v3188 = vunpack.c.l.b16 %v362
        %v3189 = vunpack.c.l.b16 %v363
        %v3190 = vunpack.c.l.b16 %v364
        %v3191 = vunpack.c.l.b16 %v365
        %v3192 = vunpack.c.l.b16 %v366
        %v3193 = vunpack.c.l.b16 %v367
        %v3194 = vunpack.c.l.b16 %v368
        %v3195 = vunpack.c.l.b16 %v369
        %v3196 = vunpack.c.l.b16 %v370
        %v3197 = vunpack.c.l.b16 %v371
        %v3198 = vunpack.c.l.b16 %v372
        %v3199 = vunpack.c.l.b16 %v373
        %v3200 = vunpack.c.l.b16 %v374
        %v3201 = vunpack.c.l.b16 %v375
        %v3202 = vunpack.c.l.b16 %v376
        %v3203 = vunpack.c.l.b16 %v377
        %v3204 = vunpack.c.l.b16 %v378
        %v3205 = vunpack.c.l.b16 %v379
        %v3206 = vunpack.c.l.b16 %v380
        %v3207 = vunpack.c.l.b16 %v381
        %v3208 = vunpack.c.l.b16 %v382
        %v3209 = vunpack.c.l.b16 %v383
        %v3210 = vunpack.c.l.b16 %v384
        %v3211 = vunpack.c.l.b16 %v385
        %v3212 = vunpack.c.l.b16 %v386
        %v3213 = vunpack.c.l.b16 %v387
        %v3214 = vunpack.c.l.b16 %v388
        %v3215 = vunpack.c.l.b16 %v389
        %v3216 = vunpack.c.l.b16 %v390
        %v3217 = vunpack.c.l.b16 %v391
        %v3218 = vunpack.c.l.b16 %v392
        %v3219 = vunpack.c.l.b16 %v393
        %v3220 = vunpack.c.l.b16 %v394
        %v3221 = vunpack.c.l.b16 %v395
        %v3222 = vunpack.c.l.b16 %v396
        %v3223 = vunpack.c.l.b16 %v397
        %v3224 = vunpack.c.l.b16 %v398
        %v3225 = vunpack.c.l.b16 %v399
        %v3226 = vunpack.c.l.b16 %v400
        %v3227 = vunpack.c.l.b16 %v401
        %v3228 = vunpack.c.l.b16 %v402
        %v3229 = vunpack.c.l.b16 %v403
        %v3230 = vunpack.c.l.b16 %v404
        %v3231 = vunpack.c.l.b16 %v405
        %v3232 = vunpack.c.l.b16 %v406
        %v3233 = vunpack.c.l.b16 %v407
        %v3234 = vunpack.c.l.b16 %v408
        %v3235 = vunpack.c.l.b16 %v409
        %v3236 = vunpack.c.l.b16 %v410
        %v3237 = vunpack.c.l.b16 %v411
        %v3238 = vunpack.c.l.b16 %v412
        %v3239 = vunpack.c.l.b16 %v413
        %v3240 = vunpack.c.l.b16 %v414
        %v3241 = vunpack.c.l.b16 %v415
        %v3242 = vunpack.c.l.b16 %v416
        %v3243 = vunpack.c.l.b16 %v417
        %v3244 = vunpack.c.l.b16 %v418
        %v3245 = vunpack.c.l.b16 %v419
        %v3246 = vunpack.c.l.b16 %v420
        %v3247 = vunpack.c.l.b16 %v421
        %v3248 = vunpack.c.l.b16 %v422
        %v3249 = vunpack.c.l.b16 %v423
        %v3250 = vunpack.c.l.b16 %v424
        %v3251 = vunpack.c.l.b16 %v425
        %v3252 = vunpack.c.l.b16 %v426
        %v3253 = vunpack.c.l.b16 %v427
        %v3254 = vunpack.c.l.b16 %v428
        %v3255 = vunpack.c.l.b16 %v429
        %v3256 = vunpack.c.l.b16 %v430
        %v3257 = vunpack.c.l.b16 %v431
        %v3258 = vunpack.c.l.b16 %v432
        %v3259 = vunpack.c.l.b16 %v433
        %v3260 = vunpack.c.l.b16 %v434
        %v3261 = vunpack.c.l.b16 %v435
        %v3262 = vunpack.c.l.b16 %v436
        %v3263 = vunpack.c.l.b16 %v437
        %v3264 = vunpack.c.l.b16 %v438
        %v3265 = vunpack.c.l.b16 %v439
        %v3266 = vunpack.c.l.b16 %v440
        %v3267 = vunpack.c.l.b16 %v441
        %v3268 = vunpack.c.l.b16 %v442
        %v3269 = vunpack.c.l.b16 %v443
        %v3270 = vunpack.c.l.b16 %v444
        %v3271 = vunpack.c.l.b16 %v445
        %v3272 = vunpack.c.l.b16 %v446
        %v3273 = vunpack.c.l.b16 %v447
        %v3274 = vunpack.c.l.b16 %v448
        %v3275 = vunpack.c.l.b16 %v449
        %v3276 = vunpack.c.l.b16 %v450
        %v3277 = vunpack.c.l.b16 %v451
        %v3278 = vunpack.c.l.b16 %v452
        %v3279 = vunpack.c.l.b16 %v453
        %v3280 = vunpack.c.l.b16 %v454
        %v3281 = vunpack.c.l.b16 %v455
        %v3282 = vunpack.c.l.b16 %v456
        %v3283 = vunpack.c.l.b16 %v457
        %v3284 = vunpack.c.l.b16 %v458
        %v3285 = vunpack.c.l.b16 %v459
        %v3286 = vunpack.c.l.b16 %v460
        %v3287 = vunpack.c.l.b16 %v461
        %v3288 = vunpack.c.l.b16 %v462
        %v3289 = vunpack.c.l.b16 %v463
        %v3290 = vunpack.c.l.b16 %v464
        %v3291 = vunpack.c.l.b16 %v465
        %v3292 = vunpack.c.l.b16 %v466
        %v3293 = vunpack.c.l.b16 %v467
        %v3294 = vunpack.c.l.b16 %v468
        %v3295 = vunpack.c.l.b16 %v469
        %v3296 = vunpack.c.l.b16 %v470
        %v3297 = vunpack.c.l.b16 %v471
        %v3298 = vunpack.c.l.b16 %v472
        %v3299 = vunpack.c.l.b16 %v473
        %v3300 = vunpack.c.l.b16 %v474
        %v3301 = vunpack.c.l.b16 %v475
        %v3302 = vunpack.c.l.b16 %v476
        %v3303 = vunpack.c.l.b16 %v477
        %v3304 = vunpack.c.l.b16 %v478
        %v3305 = vunpack.c.l.b16 %v479
        %v3306 = vunpack.c.l.b16 %v480
        %v3307 = vunpack.c.l.b16 %v481
        %v3308 = vunpack.c.l.b16 %v482
        %v3309 = vunpack.c.l.b16 %v483
        %v3310 = vunpack.c.l.b16 %v484
        %v3311 = vunpack.c.l.b16 %v485
        %v3312 = vunpack.c.l.b16 %v486
        %v3313 = vunpack.c.l.b16 %v487
        %v3314 = vunpack.c.l.b16 %v488
        %v3315 = vunpack.c.l.b16 %v489
        %v3316 = vunpack.c.l.b16 %v490
        %v3317 = vunpack.c.l.b16 %v491
        %v3318 = vunpack.c.l.b16 %v492
        %v3319 = vunpack.c.l.b16 %v493
        %v3320 = vunpack.c.l.b16 %v494
        %v3321 = vunpack.c.l.b16 %v495
        %v3322 = vunpack.c.l.b16 %v496
        %v3323 = vunpack.c.l.b16 %v497
        %v3324 = vunpack.c.l.b16 %v498
        %v3325 = vunpack.c.l.b16 %v499
        %v3326 = vunpack.c.l.b16 %v500
        %v3327 = vunpack.c.l.b16 %v501
        %v3328 = vunpack.c.l.b16 %v502
        %v3329 = vunpack.c.l.b16 %v503
        %v3330 = vunpack.c.l.b16 %v504
        %v3331 = vunpack.c.l.b16 %v505
        %v3332 = vunpack.c.l.b16 %v506
        %v3333 = vunpack.c.l.b16 %v507
        %v3334 = vunpack.c.l.b16 %v508
        %v3335 = vunpack.c.l.b16 %v509
        %v3336 = vunpack.c.l.b16 %v510
        %v3337 = vunpack.c.l.b16 %v511
        %v3338 = vunpack.c.l.b16 %v512
        %v3339 = vunpack.c.l.b16 %v513
        %v3340 = vunpack.c.l.b16 %v514
        %v3341 = vunpack.c.l.b16 %v515
        %v3342 = vunpack.c.l.b16 %v516
        %v3343 = vunpack.c.l.b16 %v517
        %v3344 = vunpack.c.l.b16 %v518
        %v3345 = vunpack.c.l.b16 %v519
        %v3346 = vunpack.c.l.b16 %v520
        %v3347 = vunpack.c.l.b16 %v521
        %v3348 = vunpack.c.l.b16 %v522
        %v3349 = vunpack.c.l.b16 %v523
        %v3350 = vunpack.c.l.b16 %v524
        %v3351 = vunpack.c.l.b16 %v525
        %v3352 = vunpack.c.l.b16 %v526
        %v3353 = vunpack.c.l.b16 %v527
        %v3354 = vunpack.c.l.b16 %v528
        %v3355 = vunpack.c.l.b16 %v529
        %v3356 = vunpack.c.l.b16 %v530
        %v3357 = vunpack.c.l.b16 %v531
        %v3358 = vunpack.c.l.b16 %v532
        %v3359 = vunpack.c.l.b16 %v533
        %v3360 = vunpack.c.l.b16 %v534
        %v3361 = vunpack.c.l.b16 %v535
        %v3362 = vunpack.c.l.b16 %v536
        %v3363 = vunpack.c.l.b16 %v537
        %v3364 = vunpack.c.l.b16 %v538
        %v3365 = vunpack.c.l.b16 %v539
        %v3366 = vunpack.c.l.b16 %v540
        %v3367 = vunpack.c.l.b16 %v541
        %v3368 = vunpack.c.l.b16 %v542
        %v3369 = vunpack.c.l.b16 %v543
        %v3370 = vunpack.c.l.b16 %v544
        %v3371 = vunpack.c.l.b16 %v545
        %v3372 = vunpack.c.l.b16 %v546
        %v3373 = vunpack.c.l.b16 %v547
        %v3374 = vunpack.c.l.b16 %v548
        %v3375 = vunpack.c.l.b16 %v549
        %v3376 = vunpack.c.l.b16 %v550
        %v3377 = vunpack.c.l.b16 %v551
        %v3378 = vunpack.c.l.b16 %v552
        %v3379 = vunpack.c.l.b16 %v553
        %v3380 = vunpack.c.l.b16 %v554
        %v3381 = vunpack.c.l.b16 %v555
        %v3382 = vunpack.c.l.b16 %v556
        %v3383 = vunpack.c.l.b16 %v557
        %v3384 = vunpack.c.l.b16 %v558
        %v3385 = vunpack.c.l.b16 %v559
        %v3386 = vunpack.c.l.b16 %v560
        %v3387 = vunpack.c.l.b16 %v561
        %v3388 = vunpack.c.l.b16 %v562
        %v3389 = vunpack.c.l.b16 %v563
        %v3390 = vunpack.c.l.b16 %v564
        %v3391 = vunpack.c.l.b16 %v565
        %v3392 = vunpack.c.l.b16 %v566
        %v3393 = vunpack.c.l.b16 %v567
        %v3394 = vunpack.c.l.b16 %v568
        %v3395 = vunpack.c.l.b16 %v569
        %v3396 = vunpack.c.l.b16 %v570
        %v3397 = vunpack.c.l.b16 %v571
        %v3398 = vunpack.c.l.b16 %v572
        %v3399 = vunpack.c.l.b16 %v573
        %v3400 = vunpack.c.l.b16 %v574
        %v3401 = vunpack.c.l.b16 %v575
        %v3402 = vunpack.c.l.b16 %v576
        %v3403 = vunpack.c.l.b16 %v577
        %v3404 = vunpack.c.l.b16 %v578
        %v3405 = vunpack.c.l.b16 %v579
        %v3406 = vunpack.c.l.b16 %v580
        %v3407 = vunpack.c.l.b16 %v581
        %v3408 = vunpack.c.l.b16 %v582
        %v3409 = vunpack.c.l.b16 %v583
        %v3410 = vunpack.c.l.b16 %v584
        %v3411 = vunpack.c.l.b16 %v585
        %v3412 = vunpack.c.l.b16 %v586
        %v3413 = vunpack.c.l.b16 %v587
        %v3414 = vunpack.c.l.b16 %v588
        %v3415 = vunpack.c.l.b16 %v589
        %v3416 = vunpack.c.l.b16 %v590
        %v3417 = vunpack.c.l.b16 %v591
        %v3418 = vunpack.c.l.b16 %v592
        %v3419 = vunpack.c.l.b16 %v593
        %v3420 = vunpack.c.l.b16 %v594
        %v3421 = vunpack.c.l.b16 %v595
        %v3422 = vunpack.c.l.b16 %v596
        %v3423 = vunpack.c.l.b16 %v597
        %v3424 = vunpack.c.l.b16 %v598
        %v3425 = vunpack.c.l.b16 %v599
        %v3426 = vunpack.c.l.b16 %v600
        %v3427 = vunpack.c.l.b16 %v601
        %v3428 = vunpack.c.l.b16 %v602
        %v3429 = vunpack.c.l.b16 %v603
        %v3430 = vunpack.c.l.b16 %v604
        %v3431 = vunpack.c.l.b16 %v605
        %v3432 = vunpack.c.l.b16 %v606
        %v3433 = vunpack.c.l.b16 %v607
        %v3434 = vunpack.c.l.b16 %v608
        %v3435 = vunpack.c.l.b16 %v609
        %v3436 = vunpack.c.l.b16 %v610
        %v3437 = vunpack.c.l.b16 %v611
        %v3438 = vunpack.c.l.b16 %v612
        %v3439 = vunpack.c.l.b16 %v613
        %v3440 = vunpack.c.l.b16 %v614
        %v3441 = vunpack.c.l.b16 %v615
        %v3442 = vunpack.c.l.b16 %v616
        %v3443 = vunpack.c.l.b16 %v617
        %v3444 = vunpack.c.l.b16 %v618
        %v3445 = vunpack.c.l.b16 %v619
        %v3446 = vunpack.c.l.b16 %v620
        %v3447 = vunpack.c.l.b16 %v621
        %v3448 = vunpack.c.l.b16 %v622
        %v3449 = vunpack.c.l.b16 %v623
        %v3450 = vunpack.c.l.b16 %v624
        %v3451 = vunpack.c.l.b16 %v625
        %v3452 = vunpack.c.l.b16 %v626
        %v3453 = vunpack.c.l.b16 %v627
        %v3454 = vunpack.c.l.b16 %v628
        %v3455 = vunpack.c.l.b16 %v629
        %v3456 = vunpack.c.l.b16 %v630
        %v3457 = vunpack.c.l.b16 %v631
        %v3458 = vunpack.c.l.b16 %v632
        %v3459 = vunpack.c.l.b16 %v633
        %v3460 = vunpack.c.l.b16 %v634
        %v3461 = vunpack.c.l.b16 %v635
        %v3462 = vunpack.c.l.b16 %v636
        %v3463 = vunpack.c.l.b16 %v637
        %v3464 = vunpack.c.l.b16 %v638
        %v3465 = vunpack.c.l.b16 %v639
        %v3466 = vunpack.c.l.b16 %v640
        %v3467 = vunpack.c.l.b16 %v641
        %v3468 = vunpack.c.l.b16 %v642
        %v3469 = vunpack.c.l.b16 %v643
        %v3470 = vunpack.c.l.b16 %v644
        %v3471 = vunpack.c.l.b16 %v645
        %v3472 = vunpack.c.l.b16 %v646
        %v3473 = vunpack.c.l.b16 %v647
        %v3474 = vunpack.c.l.b16 %v648
        %v3475 = vunpack.c.l.b16 %v649
        %v3476 = vunpack.c.l.b16 %v650
        %v3477 = vunpack.c.l.b16 %v651
        %v3478 = vunpack.c.l.b16 %v652
        %v3479 = vunpack.c.l.b16 %v653
        %v3480 = vunpack.c.l.b16 %v654
        %v3481 = vunpack.c.l.b16 %v655
        %v3482 = vunpack.c.l.b16 %v656
        %v3483 = vunpack.c.l.b16 %v657
        %v3484 = vunpack.c.l.b16 %v658
        %v3485 = vunpack.c.l.b16 %v659
        %v3486 = vunpack.c.l.b16 %v660
        %v3487 = vunpack.c.l.b16 %v661
        %v3488 = vunpack.c.l.b16 %v662
        %v3489 = vunpack.c.l.b16 %v663
        %v3490 = vunpack.c.l.b16 %v664
        %v3491 = vunpack.c.l.b16 %v665
        %v3492 = vunpack.c.l.b16 %v666
        %v3493 = vunpack.c.l.b16 %v667
        %v3494 = vunpack.c.l.b16 %v668
        %v3495 = vunpack.c.l.b16 %v669
        %v3496 = vunpack.c.l.b16 %v670
        %v3497 = vunpack.c.l.b16 %v671
        %v3498 = vunpack.c.l.b16 %v672
        %v3499 = vunpack.c.l.b16 %v673
        %v3500 = vunpack.c.l.b16 %v674
        %v3501 = vunpack.c.l.b16 %v675
        %v3502 = vunpack.c.l.b16 %v676
        %v3503 = vunpack.c.l.b16 %v677
        %v3504 = vunpack.c.l.b16 %v678
        %v3505 = vunpack.c.l.b16 %v679
        %v3506 = vunpack.c.l.b16 %v680
        %v3507 = vunpack.c.l.b16 %v681
        %v3508 = vunpack.c.l.b16 %v682
        %v3509 = vunpack.c.l.b16 %v683
        %v3510 = vunpack.c.l.b16 %v684
        %v3511 = vunpack.c.l.b16 %v685
        %v3512 = vunpack.c.l.b16 %v686
        %v3513 = vunpack.c.l.b16 %v687
        %v3514 = vunpack.c.l.b16 %v688
        %v3515 = vunpack.c.l.b16 %v689
        %v3516 = vunpack.c.l.b16 %v690
        %v3517 = vunpack.c.l.b16 %v691
        %v3518 = vunpack.c.l.b16 %v692
        %v3519 = vunpack.c.l.b16 %v693
        %v3520 = vunpack.c.l.b16 %v694
        %v3521 = vunpack.c.l.b16 %v695
        %v3522 = vunpack.c.l.b16 %v696
        %v3523 = vunpack.c.l.b16 %v697
        %v3524 = vunpack.c.l.b16 %v698
        %v3525 = vunpack.c.l.b16 %v699
        %v3526 = vunpack.c.l.b16 %v700
        %v3527 = vunpack.c.l.b16 %v701
        %v3528 = vunpack.c.l.b16 %v702
        %v3529 = vunpack.c.l.b16 %v703
        %v3530 = vunpack.c.l.b16 %v704
        %v3531 = vunpack.c.l.b16 %v705
        %v3532 = vunpack.c.l.b16 %v706
        %v3533 = vunpack.c.l.b16 %v707
        %v3534 = vunpack.c.l.b16 %v708
        %v3535 = vunpack.c.l.b16 %v709
        %v3536 = vunpack.c.l.b16 %v710
        %v3537 = vunpack.c.l.b16 %v711
        %v3538 = vunpack.c.l.b16 %v712
        %v3539 = vunpack.c.l.b16 %v713
        %v3540 = vunpack.c.l.b16 %v714
        %v3541 = vunpack.c.l.b16 %v715
        %v3542 = vunpack.c.l.b16 %v716
        %v3543 = vunpack.c.l.b16 %v717
        %v3544 = vunpack.c.l.b16 %v718
        %v3545 = vunpack.c.l.b16 %v719
        %v3546 = vunpack.c.l.b16 %v720
        %v3547 = vunpack.c.l.b16 %v721
        %v3548 = vunpack.c.l.b16 %v722
        %v3549 = vunpack.c.l.b16 %v723
        %v3550 = vunpack.c.l.b16 %v724
        %v3551 = vunpack.c.l.b16 %v725
        %v3552 = vunpack.c.l.b16 %v726
        %v3553 = vunpack.c.l.b16 %v727
        %v3554 = vunpack.c.l.b16 %v728
        %v3555 = vunpack.c.l.b16 %v729
        %v3556 = vunpack.c.l.b16 %v730
        %v3557 = vunpack.c.l.b16 %v731
        %v3558 = vunpack.c.l.b16 %v732
        %v3559 = vunpack.c.l.b16 %v733
        %v3560 = vunpack.c.l.b16 %v734
        %v3561 = vunpack.c.l.b16 %v735
        %v3562 = vunpack.c.l.b16 %v736
        %v3563 = vunpack.c.l.b16 %v737
        %v3564 = vunpack.c.l.b16 %v738
        %v3565 = vunpack.c.l.b16 %v739
        %v3566 = vunpack.c.l.b16 %v740
        %v3567 = vunpack.c.l.b16 %v741
        %v3568 = vunpack.c.l.b16 %v742
        %v3569 = vunpack.c.l.b16 %v743
        %v3570 = vunpack.c.l.b16 %v744
        %v3571 = vunpack.c.l.b16 %v745
        %v3572 = vunpack.c.l.b16 %v746
        %v3573 = vunpack.c.l.b16 %v747
        %v3574 = vunpack.c.l.b16 %v748
        %v3575 = vunpack.c.l.b16 %v749
        %v3576 = vunpack.c.l.b16 %v750
        %v3577 = vunpack.c.l.b16 %v751
        %v3578 = vunpack.c.l.b16 %v752
        %v3579 = vunpack.c.l.b16 %v753
        %v3580 = vunpack.c.l.b16 %v754
        %v3581 = vunpack.c.l.b16 %v755
        %v3582 = vunpack.c.l.b16 %v756
        %v3583 = vunpack.c.l.b16 %v757
        %v3584 = vunpack.c.l.b16 %v758
        %v3585 = vunpack.c.l.b16 %v759
        %v3586 = vunpack.c.l.b16 %v760
        %v3587 = vunpack.c.l.b16 %v761
        %v3588 = vunpack.c.l.b16 %v762
        %v3589 = vunpack.c.l.b16 %v763
        %v3590 = vunpack.c.l.b16 %v764
        %v3591 = vunpack.c.l.b16 %v765
        %v3592 = vunpack.c.l.b16 %v766
        %v3593 = vunpack.c.l.b16 %v767
        %v3594 = vunpack.c.l.b16 %v768
        %v3595 = vunpack.c.l.b16 %v769
        %v3596 = vunpack.c.l.b16 %v770
        %v3597 = vunpack.c.l.b16 %v771
        %v3598 = vunpack.c.l.b16 %v772
        %v3599 = vunpack.c.l.b16 %v773
        %v3600 = vunpack.c.l.b16 %v774
        %v3601 = vunpack.c.l.b16 %v775
        %v3602 = vunpack.c.l.b16 %v776
        %v3603 = vunpack.c.l.b16 %v777
        %v3604 = vunpack.c.l.b16 %v778
        %v3605 = vunpack.c.l.b16 %v779
        %v3606 = vunpack.c.l.b16 %v780
        %v3607 = vunpack.c.l.b16 %v781
        %v3608 = vunpack.c.l.b16 %v782
        %v3609 = vunpack.c.l.b16 %v783
        %v3610 = vunpack.c.l.b16 %v784
        %v3611 = vunpack.c.l.b16 %v785
        %v3612 = vunpack.c.l.b16 %v786
        %v3613 = vunpack.c.l.b16 %v787
        %v3614 = vunpack.c.l.b16 %v788
        %v3615 = vunpack.c.l.b16 %v789
        %v3616 = vunpack.c.l.b16 %v790
        %v3617 = vunpack.c.l.b16 %v791
        %v3618 = vunpack.c.l.b16 %v792
        %v3619 = vunpack.c.l.b16 %v793
        %v3620 = vunpack.c.l.b16 %v794
        %v3621 = vunpack.c.l.b16 %v795
        %v3622 = vunpack.c.l.b16 %v796
        %v3623 = vunpack.c.l.b16 %v797
        %v3624 = vunpack.c.l.b16 %v798
        %v3625 = vunpack.c.l.b16 %v799
        %v3626 = vunpack.c.l.b16 %v800
        %v3627 = vunpack.c.l.b16 %v801
        %v3628 = vunpack.c.l.b16 %v802
        %v3629 = vunpack.c.l.b16 %v803
        %v3630 = vunpack.c.l.b16 %v804
        %v3631 = vunpack.c.l.b16 %v805
        %v3632 = vunpack.c.l.b16 %v806
        %v3633 = vunpack.c.l.b16 %v807
        %v3634 = vunpack.c.l.b16 %v808
        %v3635 = vunpack.c.l.b16 %v809
        %v3636 = vunpack.c.l.b16 %v810
        %v3637 = vunpack.c.l.b16 %v811
        %v3638 = vunpack.c.l.b16 %v812
        %v3639 = vunpack.c.l.b16 %v813
        %v3640 = vunpack.c.l.b16 %v814
        %v3641 = vunpack.c.l.b16 %v815
        %v3642 = vunpack.c.l.b16 %v816
        %v3643 = vunpack.c.l.b16 %v817
        %v3644 = vunpack.c.l.b16 %v818
        %v3645 = vunpack.c.l.b16 %v819
        %v3646 = vunpack.c.l.b16 %v820
        %v3647 = vunpack.c.l.b16 %v821
        %v3648 = vunpack.c.l.b16 %v822
        %v3649 = vunpack.c.l.b16 %v823
        %v3650 = vunpack.c.l.b16 %v824
        %v3651 = vunpack.c.l.b16 %v825
        %v3652 = vunpack.c.l.b16 %v826
        %v3653 = vunpack.c.l.b16 %v827
        %v3654 = vunpack.c.l.b16 %v828
        %v3655 = vunpack.c.l.b16 %v829
        %v3656 = vunpack.c.l.b16 %v830
        %v3657 = vunpack.c.l.b16 %v831
        %v3658 = vunpack.c.l.b16 %v832
        %v3659 = vunpack.c.l.b16 %v833
        %v3660 = vunpack.c.l.b16 %v834
        %v3661 = vunpack.c.l.b16 %v835
        %v3662 = vunpack.c.l.b16 %v836
        %v3663 = vunpack.c.l.b16 %v837
        %v3664 = vunpack.c.l.b16 %v838
        %v3665 = vunpack.c.l.b16 %v839
        %v3666 = vunpack.c.l.b16 %v840
        %v3667 = vunpack.c.l.b16 %v841
        %v3668 = vunpack.c.l.b16 %v842
        %v3669 = vunpack.c.l.b16 %v843
        %v3670 = vunpack.c.l.b16 %v844
        %v3671 = vunpack.c.l.b16 %v845
        %v3672 = vunpack.c.l.b16 %v846
        %v3673 = vunpack.c.l.b16 %v847
        %v3674 = vunpack.c.l.b16 %v848
        %v3675 = vunpack.c.l.b16 %v849
        %v3676 = vunpack.c.l.b16 %v850
        %v3677 = vunpack.c.l.b16 %v851
        %v3678 = vunpack.c.l.b16 %v852
        %v3679 = vunpack.c.l.b16 %v853
        %v3680 = vunpack.c.l.b16 %v854
        %v3681 = vunpack.c.l.b16 %v855
        %v3682 = vunpack.c.l.b16 %v856
        %v3683 = vunpack.c.l.b16 %v857
        %v3684 = vunpack.c.l.b16 %v858
        %v3685 = vunpack.c.l.b16 %v859
        %v3686 = vunpack.c.l.b16 %v860
        %v3687 = vunpack.c.l.b16 %v861
        %v3688 = vunpack.c.l.b16 %v862
        %v3689 = vunpack.c.l.b16 %v863
        %v3690 = vunpack.c.l.b16 %v864
        %v3691 = vunpack.c.l.b16 %v865
        %v3692 = vunpack.c.l.b16 %v866
        %v3693 = vunpack.c.l.b16 %v867
        %v3694 = vunpack.c.l.b16 %v868
        %v3695 = vunpack.c.l.b16 %v869
        %v3696 = vunpack.c.l.b16 %v870
        %v3697 = vunpack.c.l.b16 %v871
        %v3698 = vunpack.c.l.b16 %v872
        %v3699 = vunpack.c.l.b16 %v873
        %v3700 = vunpack.c.l.b16 %v874
        %v3701 = vunpack.c.l.b16 %v875
        %v3702 = vunpack.c.l.b16 %v876
        %v3703 = vunpack.c.l.b16 %v877
        %v3704 = vunpack.c.l.b16 %v878
        %v3705 = vunpack.c.l.b16 %v879
        %v3706 = vunpack.c.l.b16 %v880
        %v3707 = vunpack.c.l.b16 %v881
        %v3708 = vunpack.c.l.b16 %v882
        %v3709 = vunpack.c.l.b16 %v883
        %v3710 = vunpack.c.l.b16 %v884
        %v3711 = vunpack.c.l.b16 %v885
        %v3712 = vunpack.c.l.b16 %v886
        %v3713 = vunpack.c.l.b16 %v887
        %v3714 = vunpack.c.l.b16 %v888
        %v3715 = vunpack.c.l.b16 %v889
        %v3716 = vunpack.c.l.b16 %v890
        %v3717 = vunpack.c.l.b16 %v891
        %v3718 = vunpack.c.l.b16 %v892
        %v3719 = vunpack.c.l.b16 %v893
        %v3720 = vunpack.c.l.b16 %v894
        %v3721 = vunpack.c.l.b16 %v895
        %v3722 = vunpack.c.l.b16 %v896
        %v3723 = vunpack.c.l.b16 %v897
        %v3724 = vunpack.c.l.b16 %v898
        %v3725 = vunpack.c.l.b16 %v899
        %v3726 = vunpack.c.l.b16 %v900
        %v3727 = vunpack.c.l.b16 %v901
        %v3728 = vunpack.c.l.b16 %v902
        %v3729 = vunpack.c.l.b16 %v903
        %v3730 = vunpack.c.l.b16 %v904
        %v3731 = vunpack.c.l.b16 %v905
        %v3732 = vunpack.c.l.b16 %v906
        %v3733 = vunpack.c.l.b16 %v907
        %v3734 = vunpack.c.l.b16 %v908
        %v3735 = vunpack.c.l.b16 %v909
        %v3736 = vunpack.c.l.b16 %v910
        %v3737 = vunpack.c.l.b16 %v911
        %v3738 = vunpack.c.l.b16 %v912
        %v3739 = vunpack.c.l.b16 %v913
        %v3740 = vunpack.c.l.b16 %v914
        %v3741 = vunpack.c.l.b16 %v915
        %v3742 = vunpack.c.l.b16 %v916
        %v3743 = vunpack.c.l.b16 %v917
        %v3744 = vunpack.c.l.b16 %v918
        %v3745 = vunpack.c.l.b16 %v919
        %v3746 = vunpack.c.l.b16 %v920
        %v3747 = vunpack.c.l.b16 %v921
        %v3748 = vunpack.c.l.b16 %v922
        %v3749 = vunpack.c.l.b16 %v923
        %v3750 = vunpack.c.l.b16 %v924
        %v3751 = vunpack.c.l.b16 %v925
        %v3752 = vunpack.c.l.b16 %v926
        %v3753 = vunpack.c.l.b16 %v927
        %v3754 = vunpack.c.l.b16 %v928
        %v3755 = vunpack.c.l.b16 %v929
        %v3756 = vunpack.c.l.b16 %v930
        %v3757 = vunpack.c.l.b16 %v931
        %v3758 = vunpack.c.l.b16 %v932
        %v3759 = vunpack.c.l.b16 %v933
        %v3760 = vunpack.c.l.b16 %v934
        %v3761 = vunpack.c.l.b16 %v935
        %v3762 = vunpack.c.l.b16 %v936
        %v3763 = vunpack.c.l.b16 %v937
        %v3764 = vunpack.c.l.b16 %v938
        %v3765 = vunpack.c.l.b16 %v939
        %v3766 = vunpack.c.l.b16 %v940
        %v3767 = vunpack.c.l.b16 %v941
        %v3768 = vunpack.c.l.b16 %v942
        %v3769 = vunpack.c.l.b16 %v943
        %v3770 = vunpack.c.l.b16 %v944
        %v3771 = vunpack.c.l.b16 %v945
        %v3772 = vunpack.c.l.b16 %v946
        %v3773 = vunpack.c.l.b16 %v947
        %v3774 = vunpack.c.l.b16 %v948
        %v3775 = vunpack.c.l.b16 %v949
        %v3776 = vunpack.c.l.b16 %v950
        %v3777 = vunpack.c.l.b16 %v951
        %v3778 = vunpack.c.l.b16 %v952
        %v3779 = vunpack.c.l.b16 %v953
        %v3780 = vunpack.c.l.b16 %v954
        %v3781 = vunpack.c.l.b16 %v955
        %v3782 = vunpack.c.l.b16 %v956
        %v3783 = vunpack.c.l.b16 %v957
        %v3784 = vunpack.c.l.b16 %v958
        %v3785 = vunpack.c.l.b16 %v959
        %v3786 = vunpack.c.l.b16 %v960
        %v3787 = vunpack.c.l.b16 %v961
        %v3788 = vunpack.c.l.b16 %v962
        %v3789 = vunpack.c.l.b16 %v963
        %v3790 = vunpack.c.l.b16 %v964
        %v3791 = vunpack.c.l.b16 %v965
        %v3792 = vunpack.c.l.b16 %v966
        %v3793 = vunpack.c.l.b16 %v967
        %v3794 = vunpack.c.l.b16 %v968
        %v3795 = vunpack.c.l.b16 %v969
        %v3796 = vunpack.c.l.b16 %v970
        %v3797 = vunpack.c.l.b16 %v971
        %v3798 = vunpack.c.l.b16 %v972
        %v3799 = vunpack.c.l.b16 %v973
        %v3800 = vunpack.c.l.b16 %v974
        %v3801 = vunpack.c.l.b16 %v975
        %v3802 = vunpack.c.l.b16 %v976
        %v3803 = vunpack.c.l.b16 %v977
        %v3804 = vunpack.c.l.b16 %v978
        %v3805 = vunpack.c.l.b16 %v979
        %v3806 = vunpack.c.l.b16 %v980
        %v3807 = vunpack.c.l.b16 %v981
        %v3808 = vunpack.c.l.b16 %v982
        %v3809 = vunpack.c.l.b16 %v983
        %v3810 = vunpack.c.l.b16 %v984
        %v3811 = vunpack.c.l.b16 %v985
        %v3812 = vunpack.c.l.b16 %v986
        %v3813 = vunpack.c.l.b16 %v987
        %v3814 = vunpack.c.l.b16 %v988
        %v3815 = vunpack.c.l.b16 %v989
        %v3816 = vunpack.c.l.b16 %v990
        %v3817 = vunpack.c.l.b16 %v991
        %v3818 = vunpack.c.l.b16 %v992
        %v3819 = vunpack.c.l.b16 %v993
        %v3820 = vunpack.c.l.b16 %v994
        %v3821 = vunpack.c.l.b16 %v995
        %v3822 = vunpack.c.l.b16 %v996
        %v3823 = vunpack.c.l.b16 %v997
        %v3824 = vunpack.c.l.b16 %v998
        %v3825 = vunpack.c.l.b16 %v999
        %v3826 = vunpack.c.l.b16 %v1000
        %v3827 = vunpack.c.l.b16 %v1001
        %v3828 = vunpack.c.l.b16 %v1002
        %v3829 = vunpack.c.l.b16 %v1003
        %v3830 = vunpack.c.l.b16 %v1004
        %v3831 = vunpack.c.l.b16 %v1005
        %v3832 = vunpack.c.l.b16 %v1006
        %v3833 = vunpack.c.l.b16 %v1007
        %v3834 = vunpack.c.l.b16 %v1008
        %v3835 = vunpack.c.l.b16 %v1009
        %v3836 = vunpack.c.l.b16 %v1010
        %v3837 = vunpack.c.l.b16 %v1011
        %v3838 = vunpack.c.l.b16 %v1012
        %v3839 = vunpack.c.l.b16 %v1013
        %v3840 = vunpack.c.l.b16 %v1014
        %v3841 = vunpack.c.l.b16 %v1015
        %v3842 = vunpack.c.l.b16 %v1016
        %v3843 = vunpack.c.l.b16 %v1017
        %v3844 = vunpack.c.l.b16 %v1018
        %v3845 = vunpack.c.l.b16 %v1019
        %v3846 = vunpack.c.l.b16 %v1020
        %v3847 = vunpack.c.l.b16 %v1021
        %v3848 = vunpack.c.l.b16 %v1022
        %v3849 = vunpack.c.l.b16 %v1023
        %v3850 = vunpack.c.l.b16 %v1024
        %v3851 = vunpack.c.l.b16 %v1025
        %v3852 = vunpack.c.l.b16 %v1026
        %v3853 = vunpack.c.l.b16 %v1027
        %v3854 = vunpack.c.l.b16 %v1028
        %v3855 = vunpack.c.l.b16 %v1029
        %v3856 = vunpack.c.l.b16 %v1030
        %v3857 = vunpack.c.l.b16 %v1031
        %v3858 = vunpack.c.l.b16 %v1032
        %v3859 = vunpack.c.l.b16 %v1033
        %v3860 = vunpack.c.l.b16 %v1034
        %v3861 = vunpack.c.l.b16 %v1035
        %v3862 = vunpack.c.l.b16 %v1036
        %v3863 = vunpack.c.l.b16 %v1037
        %v3864 = vunpack.c.l.b16 %v1038
        %v3865 = vunpack.c.l.b16 %v1039
        %v3866 = vunpack.c.l.b16 %v1040
        %v3867 = vunpack.c.l.b16 %v1041
        %v3868 = vunpack.c.l.b16 %v1042
        %v3869 = vunpack.c.l.b16 %v1043
        %v3870 = vunpack.c.l.b16 %v1044
        %v3871 = vunpack.c.l.b16 %v1045
        %v3872 = vunpack.c.l.b16 %v1046
        %v3873 = vunpack.c.l.b16 %v1047
        %v3874 = vunpack.c.l.b16 %v1048
        %v3875 = vunpack.c.l.b16 %v1049
        %v3876 = vunpack.c.l.b16 %v1050
        %v3877 = vunpack.c.l.b16 %v1051
        %v3878 = vunpack.c.l.b16 %v1052
        %v3879 = vunpack.c.l.b16 %v1053
        %v3880 = vunpack.c.l.b16 %v1054
        %v3881 = vunpack.c.l.b16 %v1055
        %v3882 = vunpack.c.l.b16 %v1056
        %v3883 = vunpack.c.l.b16 %v1057
        %v3884 = vunpack.c.l.b16 %v1058
        %v3885 = vunpack.c.l.b16 %v1059
        %v3886 = vunpack.c.l.b16 %v1060
        %v3887 = vunpack.c.l.b16 %v1061
        %v3888 = vunpack.c.l.b16 %v1062
        %v3889 = vunpack.c.l.b16 %v1063
        %v3890 = vunpack.c.l.b16 %v1064
        %v3891 = vunpack.c.l.b16 %v1065
        %v3892 = vunpack.c.l.b16 %v1066
        %v3893 = vunpack.c.l.b16 %v1067
        %v3894 = vunpack.c.l.b16 %v1068
        %v3895 = vunpack.c.l.b16 %v1069
        %v3896 = vunpack.c.l.b16 %v1070
        %v3897 = vunpack.c.l.b16 %v1071
        %v3898 = vunpack.c.l.b16 %v1072
        %v3899 = vunpack.c.l.b16 %v1073
        %v3900 = vunpack.c.l.b16 %v1074
        %v3901 = vunpack.c.l.b16 %v1075
        %v3902 = vunpack.c.l.b16 %v1076
        %v3903 = vunpack.c.l.b16 %v1077
        %v3904 = vunpack.c.l.b16 %v1078
        %v3905 = vunpack.c.l.b16 %v1079
        %v3906 = vunpack.c.l.b16 %v1080
        %v3907 = vunpack.c.l.b16 %v1081
        %v3908 = vunpack.c.l.b16 %v1082
        %v3909 = vunpack.c.l.b16 %v1083
        %v3910 = vunpack.c.l.b16 %v1084
        %v3911 = vunpack.c.l.b16 %v1085
        %v3912 = vunpack.c.l.b16 %v1086
        %v3913 = vunpack.c.l.b16 %v1087
        %v3914 = vunpack.c.l.b16 %v1088
        %v3915 = vunpack.c.l.b16 %v1089
        %v3916 = vunpack.c.l.b16 %v1090
        %v3917 = vunpack.c.l.b16 %v1091
        %v3918 = vunpack.c.l.b16 %v1092
        %v3919 = vunpack.c.l.b16 %v1093
        %v3920 = vunpack.c.l.b16 %v1094
        %v3921 = vunpack.c.l.b16 %v1095
        %v3922 = vunpack.c.l.b16 %v1096
        %v3923 = vunpack.c.l.b16 %v1097
        %v3924 = vunpack.c.l.b16 %v1098
        %v3925 = vunpack.c.l.b16 %v1099
        %v3926 = vunpack.c.l.b16 %v1100
        %v3927 = vunpack.c.l.b16 %v1101
        %v3928 = vunpack.c.l.b16 %v1102
        %v3929 = vunpack.c.l.b16 %v1103
        %v3930 = vunpack.c.l.b16 %v1104
        %v3931 = vunpack.c.l.b16 %v1105
        %v3932 = vunpack.c.l.b16 %v1106
        %v3933 = vunpack.c.l.b16 %v1107
        %v3934 = vunpack.c.l.b16 %v1108
        %v3935 = vunpack.c.l.b16 %v1109
        %v3936 = vunpack.c.l.b16 %v1110
        %v3937 = vunpack.c.l.b16 %v1111
        %v3938 = vunpack.c.l.b16 %v1112
        %v3939 = vunpack.c.l.b16 %v1113
        %v3940 = vunpack.c.l.b16 %v1114
        %v3941 = vunpack.c.l.b16 %v1115
        %v3942 = vunpack.c.l.b16 %v1116
        %v3943 = vunpack.c.l.b16 %v1117
        %v3944 = vunpack.c.l.b16 %v1118
        %v3945 = vunpack.c.l.b16 %v1119
        %v3946 = vunpack.c.l.b16 %v1120
        %v3947 = vunpack.c.l.b16 %v1121
        %v3948 = vunpack.c.l.b16 %v1122
        %v3949 = vunpack.c.l.b16 %v1123
        %v3950 = vunpack.c.l.b16 %v1124
        %v3951 = vunpack.c.l.b16 %v1125
        %v3952 = vunpack.c.l.b16 %v1126
        %v3953 = vunpack.c.l.b16 %v1127
        %v3954 = vunpack.c.l.b16 %v1128
        %v3955 = vunpack.c.l.b16 %v1129
        %v3956 = vunpack.c.l.b16 %v1130
        %v3957 = vunpack.c.l.b16 %v1131
        %v3958 = vunpack.c.l.b16 %v1132
        %v3959 = vunpack.c.l.b16 %v1133
        %v3960 = vunpack.c.l.b16 %v1134
        %v3961 = vunpack.c.l.b16 %v1135
        %v3962 = vunpack.c.l.b16 %v1136
        %v3963 = vunpack.c.l.b16 %v1137
        %v3964 = vunpack.c.l.b16 %v1138
        %v3965 = vunpack.c.l.b16 %v1139
        %v3966 = vunpack.c.l.b16 %v1140
        %v3967 = vunpack.c.l.b16 %v1141
        %v3968 = vunpack.c.l.b16 %v1142
        %v3969 = vunpack.c.l.b16 %v1143
        %v3970 = vunpack.c.l.b16 %v1144
        %v3971 = vunpack.c.l.b16 %v1145
        %v3972 = vunpack.c.l.b16 %v1146
        %v3973 = vunpack.c.l.b16 %v1147
        %v3974 = vunpack.c.l.b16 %v1148
        %v3975 = vunpack.c.l.b16 %v1149
        %v3976 = vunpack.c.l.b16 %v1150
        %v3977 = vunpack.c.l.b16 %v1151
        %v3978 = vunpack.c.l.b16 %v1152
        %v3979 = vunpack.c.l.b16 %v1153
        %v3980 = vunpack.c.l.b16 %v1154
        %v3981 = vunpack.c.l.b16 %v1155
        %v3982 = vunpack.c.l.b16 %v1156
        %v3983 = vunpack.c.l.b16 %v1157
        %v3984 = vunpack.c.l.b16 %v1158
        %v3985 = vunpack.c.l.b16 %v1159
        %v3986 = vunpack.c.l.b16 %v1160
        %v3987 = vunpack.c.l.b16 %v1161
        %v3988 = vunpack.c.l.b16 %v1162
        %v3989 = vunpack.c.l.b16 %v1163
        %v3990 = vunpack.c.l.b16 %v1164
        %v3991 = vunpack.c.l.b16 %v1165
        %v3992 = vunpack.c.l.b16 %v1166
        %v3993 = vunpack.c.l.b16 %v1167
        %v3994 = vunpack.c.l.b16 %v1168
        %v3995 = vunpack.c.l.b16 %v1169
        %v3996 = vunpack.c.l.b16 %v1170
        %v3997 = vunpack.c.l.b16 %v1171
        %v3998 = vunpack.c.l.b16 %v1172
        %v3999 = vunpack.c.l.b16 %v1173
        %v4000 = vunpack.c.l.b16 %v1174
        %v4001 = vunpack.c.l.b16 %v1175
        %v4002 = vunpack.c.l.b16 %v1176
        %v4003 = vunpack.c.l.b16 %v1177
        %v4004 = vunpack.c.l.b16 %v1178
        %v4005 = vunpack.c.l.b16 %v1179
        %v4006 = vunpack.c.l.b16 %v1180
        %v4007 = vunpack.c.l.b16 %v1181
        %v4008 = vunpack.c.l.b16 %v1182
        %v4009 = vunpack.c.l.b16 %v1183
        %v4010 = vunpack.c.l.b16 %v1184
        %v4011 = vunpack.c.l.b16 %v1185
        %v4012 = vunpack.c.l.b16 %v1186
        %v4013 = vunpack.c.l.b16 %v1187
        %v4014 = vunpack.c.l.b16 %v1188
        %v4015 = vunpack.c.l.b16 %v1189
        %v4016 = vunpack.c.l.b16 %v1190
        %v4017 = vunpack.c.l.b16 %v1191
        %v4018 = vunpack.c.l.b16 %v1192
        %v4019 = vunpack.c.l.b16 %v1193
        %v4020 = vunpack.c.l.b16 %v1194
        %v4021 = vunpack.c.l.b16 %v1195
        %v4022 = vunpack.c.l.b16 %v1196
        %v4023 = vunpack.c.l.b16 %v1197
        %v4024 = vunpack.c.l.b16 %v1198
        %v4025 = vunpack.c.l.b16 %v1199
        %v4026 = vunpack.c.l.b16 %v1200
        %v4027 = vunpack.c.l.b16 %v1201
        %v4028 = vunpack.c.l.b16 %v1202
        %v4029 = vunpack.c.l.b16 %v1203
        %v4030 = vunpack.c.l.b16 %v1204
        %v4031 = vunpack.c.l.b16 %v1205
        %v4032 = vunpack.c.l.b16 %v1206
        %v4033 = vunpack.c.l.b16 %v1207
        %v4034 = vunpack.c.l.b16 %v1208
        %v4035 = vunpack.c.l.b16 %v1209
        %v4036 = vunpack.c.l.b16 %v1210
        %v4037 = vunpack.c.l.b16 %v1211
        %v4038 = vunpack.c.l.b16 %v1212
        %v4039 = vunpack.c.l.b16 %v1213
        %v4040 = vunpack.c.l.b16 %v1214
        %v4041 = vunpack.c.l.b16 %v1215
        %v4042 = vunpack.c.l.b16 %v1216
        %v4043 = vunpack.c.l.b16 %v1217
        %v4044 = vunpack.c.l.b16 %v1218
        %v4045 = vunpack.c.l.b16 %v1219
        %v4046 = vunpack.c.l.b16 %v1220
        %v4047 = vunpack.c.l.b16 %v1221
        %v4048 = vunpack.c.l.b16 %v1222
        %v4049 = vunpack.c.l.b16 %v1223
        %v4050 = vunpack.c.l.b16 %v1224
        %v4051 = vunpack.c.l.b16 %v1225
        %v4052 = vunpack.c.l.b16 %v1226
        %v4053 = vunpack.c.l.b16 %v1227
        %v4054 = vunpack.c.l.b16 %v1228
        %v4055 = vunpack.c.l.b16 %v1229
        %v4056 = vunpack.c.l.b16 %v1230
        %v4057 = vunpack.c.l.b16 %v1231
        %v4058 = vunpack.c.l.b16 %v1232
        %v4059 = vunpack.c.l.b16 %v1233
        %v4060 = vunpack.c.l.b16 %v1234
        %v4061 = vunpack.c.l.b16 %v1235
        %v4062 = vunpack.c.l.b16 %v1236
        %v4063 = vunpack.c.l.b16 %v1237
        %v4064 = vunpack.c.l.b16 %v1238
        %v4065 = vunpack.c.l.b16 %v1239
        %v4066 = vunpack.c.l.b16 %v1240
        %v4067 = vunpack.c.l.b16 %v1241
        %v4068 = vunpack.c.l.b16 %v1242
        %v4069 = vunpack.c.l.b16 %v1243
        %v4070 = vunpack.c.l.b16 %v1244
        %v4071 = vunpack.c.l.b16 %v1245
        %v4072 = vunpack.c.l.b16 %v1246
        %v4073 = vunpack.c.l.b16 %v1247
        %v4074 = vunpack.c.l.b16 %v1248
        %v4075 = vunpack.c.l.b16 %v1249
        %v4076 = vunpack.c.l.b16 %v1250
        %v4077 = vunpack.c.l.b16 %v1251
        %v4078 = vunpack.c.l.b16 %v1252
        %v4079 = vunpack.c.l.b16 %v1253
        %v4080 = vunpack.c.l.b16 %v1254
        %v4081 = vunpack.c.l.b16 %v1255
        %v4082 = vunpack.c.l.b16 %v1256
        %v4083 = vunpack.c.l.b16 %v1257
        %v4084 = vunpack.c.l.b16 %v1258
        %v4085 = vunpack.c.l.b16 %v1259
        %v4086 = vunpack.c.l.b16 %v1260
        %v4087 = vunpack.c.l.b16 %v1261
        %v4088 = vunpack.c.l.b16 %v1262
        %v4089 = vunpack.c.l.b16 %v1263
        %v4090 = vunpack.c.l.b16 %v1264
        %v4091 = vunpack.c.l.b16 %v1265
        %v4092 = vunpack.c.l.b16 %v1266
        %v4093 = vunpack.c.l.b16 %v1267
        %v4094 = vunpack.c.l.b16 %v1268
        %v4095 = vunpack.c.l.b16 %v1269
        %v4096 = vunpack.c.l.b16 %v1270
        %v4097 = vunpack.c.l.b16 %v1271
        %v4098 = vunpack.c.l.b16 %v1272
        %v4099 = vunpack.c.l.b16 %v1273
        %v4100 = vunpack.c.l.b16 %v1274
        %v4101 = vunpack.c.l.b16 %v1275
        %v4102 = vunpack.c.l.b16 %v1276
        %v4103 = vunpack.c.l.b16 %v1277
        %v4104 = vunpack.c.l.b16 %v1278
        %v4105 = vunpack.c.l.b16 %v1279
        %v4106 = vunpack.c.l.b16 %v1280
        %v4107 = vunpack.c.l.b16 %v1281
        %v4108 = vunpack.c.l.b16 %v1282
        %v4109 = vunpack.c.l.b16 %v1283
        %v4110 = vunpack.c.l.b16 %v1284
        %v4111 = vunpack.c.l.b16 %v1285
        %v4112 = vunpack.c.l.b16 %v1286
        %v4113 = vunpack.c.l.b16 %v1287
        %v4114 = vunpack.c.l.b16 %v1288
        %v4115 = vunpack.c.l.b16 %v1289
        %v4116 = vunpack.c.l.b16 %v1290
        %v4117 = vunpack.c.l.b16 %v1291
        %v4118 = vunpack.c.l.b16 %v1292
        %v4119 = vunpack.c.l.b16 %v1293
        %v4120 = vunpack.c.l.b16 %v1294
        %v4121 = vunpack.c.l.b16 %v1295
        %v4122 = vunpack.c.l.b16 %v1296
        %v4123 = vunpack.c.l.b16 %v1297
        %v4124 = vunpack.c.l.b16 %v1298
        %v4125 = vunpack.c.l.b16 %v1299
        %v4126 = vunpack.c.l.b16 %v1300
        %v4127 = vunpack.c.l.b16 %v1301
        %v4128 = vunpack.c.l.b16 %v1302
        %v4129 = vunpack.c.l.b16 %v1303
        %v4130 = vunpack.c.l.b16 %v1304
        %v4131 = vunpack.c.l.b16 %v1305
        %v4132 = vunpack.c.l.b16 %v1306
        %v4133 = vunpack.c.l.b16 %v1307
        %v4134 = vunpack.c.l.b16 %v1308
        %v4135 = vunpack.c.l.b16 %v1309
        %v4136 = vunpack.c.l.b16 %v1310
        %v4137 = vunpack.c.l.b16 %v1311
        %v4138 = vunpack.c.l.b16 %v1312
        %v4139 = vunpack.c.l.b16 %v1313
        %v4140 = vunpack.c.l.b16 %v1314
        %v4141 = vunpack.c.l.b16 %v1315
        %v4142 = vunpack.c.l.b16 %v1316
        %v4143 = vunpack.c.l.b16 %v1317
        %v4144 = vunpack.c.l.b16 %v1318
        %v4145 = vunpack.c.l.b16 %v1319
        %v4146 = vunpack.c.l.b16 %v1320
        %v4147 = vunpack.c.l.b16 %v1321
        %v4148 = vunpack.c.l.b16 %v1322
        %v4149 = vunpack.c.l.b16 %v1323
        %v4150 = vunpack.c.l.b16 %v1324
        %v4151 = vunpack.c.l.b16 %v1325
        %v4152 = vunpack.c.l.b16 %v1326
        %v4153 = vunpack.c.l.b16 %v1327
        %v4154 = vunpack.c.l.b16 %v1328
        %v4155 = vunpack.c.l.b16 %v1329
        %v4156 = vunpack.c.l.b16 %v1330
        %v4157 = vunpack.c.l.b16 %v1331
        %v4158 = vunpack.c.l.b16 %v1332
        %v4159 = vunpack.c.l.b16 %v1333
        %v4160 = vunpack.c.l.b16 %v1334
        %v4161 = vunpack.c.l.b16 %v1335
        %v4162 = vunpack.c.l.b16 %v1336
        %v4163 = vunpack.c.l.b16 %v1337
        %v4164 = vunpack.c.l.b16 %v1338
        %v4165 = vunpack.c.l.b16 %v1339
        %v4166 = vunpack.c.l.b16 %v1340
        %v4167 = vunpack.c.l.b16 %v1341
        %v4168 = vunpack.c.l.b16 %v1342
        %v4169 = vunpack.c.l.b16 %v1343
        %v4170 = vunpack.c.l.b16 %v1344
        %v4171 = vunpack.c.l.b16 %v1345
        %v4172 = vunpack.c.l.b16 %v1346
        %v4173 = vunpack.c.l.b16 %v1347
        %v4174 = vunpack.c.l.b16 %v1348
        %v4175 = vunpack.c.l.b16 %v1349
        %v4176 = vunpack.c.l.b16 %v1350
        %v4177 = vunpack.c.l.b16 %v1351
        %v4178 = vunpack.c.l.b16 %v1352
        %v4179 = vunpack.c.l.b16 %v1353
        %v4180 = vunpack.c.l.b16 %v1354
        %v4181 = vunpack.c.l.b16 %v1355
        %v4182 = vunpack.c.l.b16 %v1356
        %v4183 = vunpack.c.l.b16 %v1357
        %v4184 = vunpack.c.l.b16 %v1358
        %v4185 = vunpack.c.l.b16 %v1359
        %v4186 = vunpack.c.l.b16 %v1360
        %v4187 = vunpack.c.l.b16 %v1361
        %v4188 = vunpack.c.l.b16 %v1362
        %v4189 = vunpack.c.l.b16 %v1363
        %v4190 = vunpack.c.l.b16 %v1364
        %v4191 = vunpack.c.l.b16 %v1365
        %v4192 = vunpack.c.l.b16 %v1366
        %v4193 = vunpack.c.l.b16 %v1367
        %v4194 = vunpack.c.l.b16 %v1368
        %v4195 = vunpack.c.l.b16 %v1369
        %v4196 = vunpack.c.l.b16 %v1370
        %v4197 = vunpack.c.l.b16 %v1371
        %v4198 = vunpack.c.l.b16 %v1372
        %v4199 = vunpack.c.l.b16 %v1373
        %v4200 = vunpack.c.l.b16 %v1374
        %v4201 = vunpack.c.l.b16 %v1375
        %v4202 = vunpack.c.l.b16 %v1376
        %v4203 = vunpack.c.l.b16 %v1377
        %v4204 = vunpack.c.l.b16 %v1378
        %v4205 = vunpack.c.l.b16 %v1379
        %v4206 = vunpack.c.l.b16 %v1380
        %v4207 = vunpack.c.l.b16 %v1381
        %v4208 = vunpack.c.l.b16 %v1382
        %v4209 = vunpack.c.l.b16 %v1383
        %v4210 = vunpack.c.l.b16 %v1384
        %v4211 = vunpack.c.l.b16 %v1385
        %v4212 = vunpack.c.l.b16 %v1386
        %v4213 = vunpack.c.l.b16 %v1387
        %v4214 = vunpack.c.l.b16 %v1388
        %v4215 = vunpack.c.l.b16 %v1389
        %v4216 = vunpack.c.l.b16 %v1390
        %v4217 = vunpack.c.l.b16 %v1391
        %v4218 = vunpack.c.l.b16 %v1392
        %v4219 = vunpack.c.l.b16 %v1393
        %v4220 = vunpack.c.l.b16 %v1394
        %v4221 = vunpack.c.l.b16 %v1395
        %v4222 = vunpack.c.l.b16 %v1396
        %v4223 = vunpack.c.l.b16 %v1397
        %v4224 = vunpack.c.l.b16 %v1398
        %v4225 = vunpack.c.l.b16 %v1399
        %v4226 = vunpack.c.l.b16 %v1400
        %v4227 = vunpack.c.l.b16 %v1401
        %v4228 = vunpack.c.l.b16 %v1402
        %v4229 = vunpack.c.l.b16 %v1403
        %v4230 = vunpack.c.l.b16 %v1404
        %v4231 = vunpack.c.l.b16 %v1405
        %v4232 = vunpack.c.l.b16 %v1406
        %v4233 = vunpack.c.l.b16 %v1407
        %v4234 = vunpack.c.l.b16 %v1408
        %v4235 = vunpack.c.l.b16 %v1409
        %v4236 = vunpack.c.l.b16 %v1410
        %v4237 = vunpack.c.l.b16 %v1411
        %v4238 = vunpack.c.l.b16 %v1412
        %v4239 = vunpack.c.l.b16 %v1413
        %v4240 = vunpack.c.l.b16 %v1414
        %v4241 = vunpack.c.l.b16 %v1415
        %v4242 = vunpack.c.l.b16 %v1416
        %v4243 = vunpack.c.l.b16 %v1417
        %v4244 = vunpack.c.l.b16 %v1418
        %v4245 = vunpack.c.l.b16 %v1419
        %v4246 = vunpack.c.l.b16 %v1420
        %v4247 = vunpack.c.l.b16 %v1421
        %v4248 = vunpack.c.l.b16 %v1422
        %v4249 = vunpack.c.l.b16 %v1423
        %v4250 = vunpack.c.l.b16 %v1424
        %v4251 = vpack.c.b16 %v3100, %v3099
        %v4252 = vpack.c.b16 %v3102, %v3101
        %v4253 = vpack.c.b16 %v3104, %v3103
        %v4254 = vpack.c.b16 %v3106, %v3105
        %v4255 = vpack.c.b16 %v3108, %v3107
        %v4256 = vpack.c.b16 %v3110, %v3109
        %v4257 = vpack.c.b16 %v3112, %v3111
        %v4258 = vpack.c.b16 %v3114, %v3113
        %v4259 = vpack.c.b16 %v3116, %v3115
        %v4260 = vpack.c.b16 %v3118, %v3117
        %v4261 = vpack.c.b16 %v3120, %v3119
        %v4262 = vpack.c.b16 %v3122, %v3121
        %v4263 = vpack.c.b16 %v3124, %v3123
        %v4264 = vpack.c.b16 %v3126, %v3125
        %v4265 = vpack.c.b16 %v3128, %v3127
        %v4266 = vpack.c.b16 %v3130, %v3129
        %v4267 = vpack.c.b16 %v3132, %v3131
        %v4268 = vpack.c.b16 %v3134, %v3133
        %v4269 = vpack.c.b16 %v3136, %v3135
        %v4270 = vpack.c.b16 %v3138, %v3137
        %v4271 = vpack.c.b16 %v3140, %v3139
        %v4272 = vpack.c.b16 %v3142, %v3141
        %v4273 = vpack.c.b16 %v3144, %v3143
        %v4274 = vpack.c.b16 %v3146, %v3145
        %v4275 = vpack.c.b16 %v3148, %v3147
        %v4276 = vpack.c.b16 %v3150, %v3149
        %v4277 = vpack.c.b16 %v3152, %v3151
        %v4278 = vpack.c.b16 %v3154, %v3153
        %v4279 = vpack.c.b16 %v3156, %v3155
        %v4280 = vpack.c.b16 %v3158, %v3157
        %v4281 = vpack.c.b16 %v3160, %v3159
        %v4282 = vpack.c.b16 %v3162, %v3161
        %v4283 = vpack.c.b16 %v3164, %v3163
        %v4284 = vpack.c.b16 %v3166, %v3165
        %v4285 = vpack.c.b16 %v3168, %v3167
        %v4286 = vpack.c.b16 %v3170, %v3169
        %v4287 = vpack.c.b16 %v3172, %v3171
        %v4288 = vpack.c.b16 %v3174, %v3173
        %v4289 = vpack.c.b16 %v3176, %v3175
        %v4290 = vpack.c.b16 %v3178, %v3177
        %v4291 = vpack.c.b16 %v3180, %v3179
        %v4292 = vpack.c.b16 %v3182, %v3181
        %v4293 = vpack.c.b16 %v3184, %v3183
        %v4294 = vpack.c.b16 %v3186, %v3185
        %v4295 = vpack.c.b16 %v3188, %v3187
        %v4296 = vpack.c.b16 %v3190, %v3189
        %v4297 = vpack.c.b16 %v3192, %v3191
        %v4298 = vpack.c.b16 %v3194, %v3193
        %v4299 = vpack.c.b16 %v3196, %v3195
        %v4300 = vpack.c.b16 %v3198, %v3197
        %v4301 = vpack.c.b16 %v3200, %v3199
        %v4302 = vpack.c.b16 %v3202, %v3201
        %v4303 = vpack.c.b16 %v3204, %v3203
        %v4304 = vpack.c.b16 %v3206, %v3205
        %v4305 = vpack.c.b16 %v3208, %v3207
        %v4306 = vpack.c.b16 %v3210, %v3209
        %v4307 = vpack.c.b16 %v3212, %v3211
        %v4308 = vpack.c.b16 %v3214, %v3213
        %v4309 = vpack.c.b16 %v3216, %v3215
        %v4310 = vpack.c.b16 %v3218, %v3217
        %v4311 = vpack.c.b16 %v3220, %v3219
        %v4312 = vpack.c.b16 %v3222, %v3221
        %v4313 = vpack.c.b16 %v3224, %v3223
        %v4314 = vpack.c.b16 %v3226, %v3225
        %v4315 = vpack.c.b16 %v3228, %v3227
        %v4316 = vpack.c.b16 %v3230, %v3229
        %v4317 = vpack.c.b16 %v3232, %v3231
        %v4318 = vpack.c.b16 %v3234, %v3233
        %v4319 = vpack.c.b16 %v3236, %v3235
        %v4320 = vpack.c.b16 %v3238, %v3237
        %v4321 = vpack.c.b16 %v3240, %v3239
        %v4322 = vpack.c.b16 %v3242, %v3241
        %v4323 = vpack.c.b16 %v3244, %v3243
        %v4324 = vpack.c.b16 %v3246, %v3245
        %v4325 = vpack.c.b16 %v3248, %v3247
        %v4326 = vpack.c.b16 %v3250, %v3249
        %v4327 = vpack.c.b16 %v3252, %v3251
        %v4328 = vpack.c.b16 %v3254, %v3253
        %v4329 = vpack.c.b16 %v3256, %v3255
        %v4330 = vpack.c.b16 %v3258, %v3257
        %v4331 = vpack.c.b16 %v3260, %v3259
        %v4332 = vpack.c.b16 %v3262, %v3261
        %v4333 = vpack.c.b16 %v3264, %v3263
        %v4334 = vpack.c.b16 %v3266, %v3265
        %v4335 = vpack.c.b16 %v3268, %v3267
        %v4336 = vpack.c.b16 %v3270, %v3269
        %v4337 = vpack.c.b16 %v3272, %v3271
        %v4338 = vpack.c.b16 %v3274, %v3273
        %v4339 = vpack.c.b16 %v3276, %v3275
        %v4340 = vpack.c.b16 %v3278, %v3277
        %v4341 = vpack.c.b16 %v3280, %v3279
        %v4342 = vpack.c.b16 %v3282, %v3281
        %v4343 = vpack.c.b16 %v3284, %v3283
        %v4344 = vpack.c.b16 %v3286, %v3285
        %v4345 = vpack.c.b16 %v3288, %v3287
        %v4346 = vpack.c.b16 %v3290, %v3289
        %v4347 = vpack.c.b16 %v3292, %v3291
        %v4348 = vpack.c.b16 %v3294, %v3293
        %v4349 = vpack.c.b16 %v3296, %v3295
        %v4350 = vpack.c.b16 %v3298, %v3297
        %v4351 = vpack.c.b16 %v3300, %v3299
        %v4352 = vpack.c.b16 %v3302, %v3301
        %v4353 = vpack.c.b16 %v3304, %v3303
        %v4354 = vpack.c.b16 %v3306, %v3305
        %v4355 = vpack.c.b16 %v3308, %v3307
        %v4356 = vpack.c.b16 %v3310, %v3309
        %v4357 = vpack.c.b16 %v3312, %v3311
        %v4358 = vpack.c.b16 %v3314, %v3313
        %v4359 = vpack.c.b16 %v3316, %v3315
        %v4360 = vpack.c.b16 %v3318, %v3317
        %v4361 = vpack.c.b16 %v3320, %v3319
        %v4362 = vpack.c.b16 %v3322, %v3321
        %v4363 = vpack.c.b16 %v3324, %v3323
        %v4364 = vpack.c.b16 %v3326, %v3325
        %v4365 = vpack.c.b16 %v3328, %v3327
        %v4366 = vpack.c.b16 %v3330, %v3329
        %v4367 = vpack.c.b16 %v3332, %v3331
        %v4368 = vpack.c.b16 %v3334, %v3333
        %v4369 = vpack.c.b16 %v3336, %v3335
        %v4370 = vpack.c.b16 %v3338, %v3337
        %v4371 = vpack.c.b16 %v3340, %v3339
        %v4372 = vpack.c.b16 %v3342, %v3341
        %v4373 = vpack.c.b16 %v3344, %v3343
        %v4374 = vpack.c.b16 %v3346, %v3345
        %v4375 = vpack.c.b16 %v3348, %v3347
        %v4376 = vpack.c.b16 %v3350, %v3349
        %v4377 = vpack.c.b16 %v3352, %v3351
        %v4378 = vpack.c.b16 %v3354, %v3353
        %v4379 = vpack.c.b16 %v3356, %v3355
        %v4380 = vpack.c.b16 %v3358, %v3357
        %v4381 = vpack.c.b16 %v3360, %v3359
        %v4382 = vpack.c.b16 %v3362, %v3361
        %v4383 = vpack.c.b16 %v3364, %v3363
        %v4384 = vpack.c.b16 %v3366, %v3365
        %v4385 = vpack.c.b16 %v3368, %v3367
        %v4386 = vpack.c.b16 %v3370, %v3369
        %v4387 = vpack.c.b16 %v3372, %v3371
        %v4388 = vpack.c.b16 %v3374, %v3373
        %v4389 = vpack.c.b16 %v3376, %v3375
        %v4390 = vpack.c.b16 %v3378, %v3377
        %v4391 = vpack.c.b16 %v3380, %v3379
        %v4392 = vpack.c.b16 %v3382, %v3381
        %v4393 = vpack.c.b16 %v3384, %v3383
        %v4394 = vpack.c.b16 %v3386, %v3385
        %v4395 = vpack.c.b16 %v3388, %v3387
        %v4396 = vpack.c.b16 %v3390, %v3389
        %v4397 = vpack.c.b16 %v3392, %v3391
        %v4398 = vpack.c.b16 %v3394, %v3393
        %v4399 = vpack.c.b16 %v3396, %v3395
        %v4400 = vpack.c.b16 %v3398, %v3397
        %v4401 = vpack.c.b16 %v3400, %v3399
        %v4402 = vpack.c.b16 %v3402, %v3401
        %v4403 = vpack.c.b16 %v3404, %v3403
        %v4404 = vpack.c.b16 %v3406, %v3405
        %v4405 = vpack.c.b16 %v3408, %v3407
        %v4406 = vpack.c.b16 %v3410, %v3409
        %v4407 = vpack.c.b16 %v3412, %v3411
        %v4408 = vpack.c.b16 %v3414, %v3413
        %v4409 = vpack.c.b16 %v3416, %v3415
        %v4410 = vpack.c.b16 %v3418, %v3417
        %v4411 = vpack.c.b16 %v3420, %v3419
        %v4412 = vpack.c.b16 %v3422, %v3421
        %v4413 = vpack.c.b16 %v3424, %v3423
        %v4414 = vpack.c.b16 %v3426, %v3425
        %v4415 = vpack.c.b16 %v3428, %v3427
        %v4416 = vpack.c.b16 %v3430, %v3429
        %v4417 = vpack.c.b16 %v3432, %v3431
        %v4418 = vpack.c.b16 %v3434, %v3433
        %v4419 = vpack.c.b16 %v3436, %v3435
        %v4420 = vpack.c.b16 %v3438, %v3437
        %v4421 = vpack.c.b16 %v3440, %v3439
        %v4422 = vpack.c.b16 %v3442, %v3441
        %v4423 = vpack.c.b16 %v3444, %v3443
        %v4424 = vpack.c.b16 %v3446, %v3445
        %v4425 = vpack.c.b16 %v3448, %v3447
        %v4426 = vpack.c.b16 %v3450, %v3449
        %v4427 = vpack.c.b16 %v3452, %v3451
        %v4428 = vpack.c.b16 %v3454, %v3453
        %v4429 = vpack.c.b16 %v3456, %v3455
        %v4430 = vpack.c.b16 %v3458, %v3457
        %v4431 = vpack.c.b16 %v3460, %v3459
        %v4432 = vpack.c.b16 %v3462, %v3461
        %v4433 = vpack.c.b16 %v3464, %v3463
        %v4434 = vpack.c.b16 %v3466, %v3465
        %v4435 = vpack.c.b16 %v3468, %v3467
        %v4436 = vpack.c.b16 %v3470, %v3469
        %v4437 = vpack.c.b16 %v3472, %v3471
        %v4438 = vpack.c.b16 %v3474, %v3473
        %v4439 = vpack.c.b16 %v3476, %v3475
        %v4440 = vpack.c.b16 %v3478, %v3477
        %v4441 = vpack.c.b16 %v3480, %v3479
        %v4442 = vpack.c.b16 %v3482, %v3481
        %v4443 = vpack.c.b16 %v3484, %v3483
        %v4444 = vpack.c.b16 %v3486, %v3485
        %v4445 = vpack.c.b16 %v3488, %v3487
        %v4446 = vpack.c.b16 %v3490, %v3489
        %v4447 = vpack.c.b16 %v3492, %v3491
        %v4448 = vpack.c.b16 %v3494, %v3493
        %v4449 = vpack.c.b16 %v3496, %v3495
        %v4450 = vpack.c.b16 %v3498, %v3497
        %v4451 = vpack.c.b16 %v3500, %v3499
        %v4452 = vpack.c.b16 %v3502, %v3501
        %v4453 = vpack.c.b16 %v3504, %v3503
        %v4454 = vpack.c.b16 %v3506, %v3505
        %v4455 = vpack.c.b16 %v3508, %v3507
        %v4456 = vpack.c.b16 %v3510, %v3509
        %v4457 = vpack.c.b16 %v3512, %v3511
        %v4458 = vpack.c.b16 %v3514, %v3513
        %v4459 = vpack.c.b16 %v3516, %v3515
        %v4460 = vpack.c.b16 %v3518, %v3517
        %v4461 = vpack.c.b16 %v3520, %v3519
        %v4462 = vpack.c.b16 %v3522, %v3521
        %v4463 = vpack.c.b16 %v3524, %v3523
        %v4464 = vpack.c.b16 %v3526, %v3525
        %v4465 = vpack.c.b16 %v3528, %v3527
        %v4466 = vpack.c.b16 %v3530, %v3529
        %v4467 = vpack.c.b16 %v3532, %v3531
        %v4468 = vpack.c.b16 %v3534, %v3533
        %v4469 = vpack.c.b16 %v3536, %v3535
        %v4470 = vpack.c.b16 %v3538, %v3537
        %v4471 = vpack.c.b16 %v3540, %v3539
        %v4472 = vpack.c.b16 %v3542, %v3541
        %v4473 = vpack.c.b16 %v3544, %v3543
        %v4474 = vpack.c.b16 %v3546, %v3545
        %v4475 = vpack.c.b16 %v3548, %v3547
        %v4476 = vpack.c.b16 %v3550, %v3549
        %v4477 = vpack.c.b16 %v3552, %v3551
        %v4478 = vpack.c.b16 %v3554, %v3553
        %v4479 = vpack.c.b16 %v3556, %v3555
        %v4480 = vpack.c.b16 %v3558, %v3557
        %v4481 = vpack.c.b16 %v3560, %v3559
        %v4482 = vpack.c.b16 %v3562, %v3561
        %v4483 = vpack.c.b16 %v3564, %v3563
        %v4484 = vpack.c.b16 %v3566, %v3565
        %v4485 = vpack.c.b16 %v3568, %v3567
        %v4486 = vpack.c.b16 %v3570, %v3569
        %v4487 = vpack.c.b16 %v3572, %v3571
        %v4488 = vpack.c.b16 %v3574, %v3573
        %v4489 = vpack.c.b16 %v3576, %v3575
        %v4490 = vpack.c.b16 %v3578, %v3577
        %v4491 = vpack.c.b16 %v3580, %v3579
        %v4492 = vpack.c.b16 %v3582, %v3581
        %v4493 = vpack.c.b16 %v3584, %v3583
        %v4494 = vpack.c.b16 %v3586, %v3585
        %v4495 = vpack.c.b16 %v3588, %v3587
        %v4496 = vpack.c.b16 %v3590, %v3589
        %v4497 = vpack.c.b16 %v3592, %v3591
        %v4498 = vpack.c.b16 %v3594, %v3593
        %v4499 = vpack.c.b16 %v3596, %v3595
        %v4500 = vpack.c.b16 %v3598, %v3597
        %v4501 = vpack.c.b16 %v3600, %v3599
        %v4502 = vpack.c.b16 %v3602, %v3601
        %v4503 = vpack.c.b16 %v3604, %v3603
        %v4504 = vpack.c.b16 %v3606, %v3605
        %v4505 = vpack.c.b16 %v3608, %v3607
        %v4506 = vpack.c.b16 %v3610, %v3609
        %v4507 = vpack.c.b16 %v3612, %v3611
        %v4508 = vpack.c.b16 %v3614, %v3613
        %v4509 = vpack.c.b16 %v3616, %v3615
        %v4510 = vpack.c.b16 %v3618, %v3617
        %v4511 = vpack.c.b16 %v3620, %v3619
        %v4512 = vpack.c.b16 %v3622, %v3621
        %v4513 = vpack.c.b16 %v3624, %v3623
        %v4514 = vpack.c.b16 %v3626, %v3625
        %v4515 = vpack.c.b16 %v3628, %v3627
        %v4516 = vpack.c.b16 %v3630, %v3629
        %v4517 = vpack.c.b16 %v3632, %v3631
        %v4518 = vpack.c.b16 %v3634, %v3633
        %v4519 = vpack.c.b16 %v3636, %v3635
        %v4520 = vpack.c.b16 %v3638, %v3637
        %v4521 = vpack.c.b16 %v3640, %v3639
        %v4522 = vpack.c.b16 %v3642, %v3641
        %v4523 = vpack.c.b16 %v3644, %v3643
        %v4524 = vpack.c.b16 %v3646, %v3645
        %v4525 = vpack.c.b16 %v3648, %v3647
        %v4526 = vpack.c.b16 %v3650, %v3649
        %v4527 = vpack.c.b16 %v3652, %v3651
        %v4528 = vpack.c.b16 %v3654, %v3653
        %v4529 = vpack.c.b16 %v3656, %v3655
        %v4530 = vpack.c.b16 %v3658, %v3657
        %v4531 = vpack.c.b16 %v3660, %v3659
        %v4532 = vpack.c.b16 %v3662, %v3661
        %v4533 = vpack.c.b16 %v3664, %v3663
        %v4534 = vpack.c.b16 %v3666, %v3665
        %v4535 = vpack.c.b16 %v3668, %v3667
        %v4536 = vpack.c.b16 %v3670, %v3669
        %v4537 = vpack.c.b16 %v3672, %v3671
        %v4538 = vpack.c.b16 %v3674, %v3673
        %v4539 = vpack.c.b16 %v3676, %v3675
        %v4540 = vpack.c.b16 %v3678, %v3677
        %v4541 = vpack.c.b16 %v3680, %v3679
        %v4542 = vpack.c.b16 %v3682, %v3681
        %v4543 = vpack.c.b16 %v3684, %v3683
        %v4544 = vpack.c.b16 %v3686, %v3685
        %v4545 = vpack.c.b16 %v3688, %v3687
        %v4546 = vpack.c.b16 %v3690, %v3689
        %v4547 = vpack.c.b16 %v3692, %v3691
        %v4548 = vpack.c.b16 %v3694, %v3693
        %v4549 = vpack.c.b16 %v3696, %v3695
        %v4550 = vpack.c.b16 %v3698, %v3697
        %v4551 = vpack.c.b16 %v3700, %v3699
        %v4552 = vpack.c.b16 %v3702, %v3701
        %v4553 = vpack.c.b16 %v3704, %v3703
        %v4554 = vpack.c.b16 %v3706, %v3705
        %v4555 = vpack.c.b16 %v3708, %v3707
        %v4556 = vpack.c.b16 %v3710, %v3709
        %v4557 = vpack.c.b16 %v3712, %v3711
        %v4558 = vpack.c.b16 %v3714, %v3713
        %v4559 = vpack.c.b16 %v3716, %v3715
        %v4560 = vpack.c.b16 %v3718, %v3717
        %v4561 = vpack.c.b16 %v3720, %v3719
        %v4562 = vpack.c.b16 %v3722, %v3721
        %v4563 = vpack.c.b16 %v3724, %v3723
        %v4564 = vpack.c.b16 %v3726, %v3725
        %v4565 = vpack.c.b16 %v3728, %v3727
        %v4566 = vpack.c.b16 %v3730, %v3729
        %v4567 = vpack.c.b16 %v3732, %v3731
        %v4568 = vpack.c.b16 %v3734, %v3733
        %v4569 = vpack.c.b16 %v3736, %v3735
        %v4570 = vpack.c.b16 %v3738, %v3737
        %v4571 = vpack.c.b16 %v3740, %v3739
        %v4572 = vpack.c.b16 %v3742, %v3741
        %v4573 = vpack.c.b16 %v3744, %v3743
        %v4574 = vpack.c.b16 %v3746, %v3745
        %v4575 = vpack.c.b16 %v3748, %v3747
        %v4576 = vpack.c.b16 %v3750, %v3749
        %v4577 = vpack.c.b16 %v3752, %v3751
        %v4578 = vpack.c.b16 %v3754, %v3753
        %v4579 = vpack.c.b16 %v3756, %v3755
        %v4580 = vpack.c.b16 %v3758, %v3757
        %v4581 = vpack.c.b16 %v3760, %v3759
        %v4582 = vpack.c.b16 %v3762, %v3761
        %v4583 = vpack.c.b16 %v3764, %v3763
        %v4584 = vpack.c.b16 %v3766, %v3765
        %v4585 = vpack.c.b16 %v3768, %v3767
        %v4586 = vpack.c.b16 %v3770, %v3769
        %v4587 = vpack.c.b16 %v3772, %v3771
        %v4588 = vpack.c.b16 %v3774, %v3773
        %v4589 = vpack.c.b16 %v3776, %v3775
        %v4590 = vpack.c.b16 %v3778, %v3777
        %v4591 = vpack.c.b16 %v3780, %v3779
        %v4592 = vpack.c.b16 %v3782, %v3781
        %v4593 = vpack.c.b16 %v3784, %v3783
        %v4594 = vpack.c.b16 %v3786, %v3785
        %v4595 = vpack.c.b16 %v3788, %v3787
        %v4596 = vpack.c.b16 %v3790, %v3789
        %v4597 = vpack.c.b16 %v3792, %v3791
        %v4598 = vpack.c.b16 %v3794, %v3793
        %v4599 = vpack.c.b16 %v3796, %v3795
        %v4600 = vpack.c.b16 %v3798, %v3797
        %v4601 = vpack.c.b16 %v3800, %v3799
        %v4602 = vpack.c.b16 %v3802, %v3801
        %v4603 = vpack.c.b16 %v3804, %v3803
        %v4604 = vpack.c.b16 %v3806, %v3805
        %v4605 = vpack.c.b16 %v3808, %v3807
        %v4606 = vpack.c.b16 %v3810, %v3809
        %v4607 = vpack.c.b16 %v3812, %v3811
        %v4608 = vpack.c.b16 %v3814, %v3813
        %v4609 = vpack.c.b16 %v3816, %v3815
        %v4610 = vpack.c.b16 %v3818, %v3817
        %v4611 = vpack.c.b16 %v3820, %v3819
        %v4612 = vpack.c.b16 %v3822, %v3821
        %v4613 = vpack.c.b16 %v3824, %v3823
        %v4614 = vpack.c.b16 %v3826, %v3825
        %v4615 = vpack.c.b16 %v3828, %v3827
        %v4616 = vpack.c.b16 %v3830, %v3829
        %v4617 = vpack.c.b16 %v3832, %v3831
        %v4618 = vpack.c.b16 %v3834, %v3833
        %v4619 = vpack.c.b16 %v3836, %v3835
        %v4620 = vpack.c.b16 %v3838, %v3837
        %v4621 = vpack.c.b16 %v3840, %v3839
        %v4622 = vpack.c.b16 %v3842, %v3841
        %v4623 = vpack.c.b16 %v3844, %v3843
        %v4624 = vpack.c.b16 %v3846, %v3845
        %v4625 = vpack.c.b16 %v3848, %v3847
        %v4626 = vpack.c.b16 %v3850, %v3849
        %v4627 = vpack.c.b16 %v3852, %v3851
        %v4628 = vpack.c.b16 %v3854, %v3853
        %v4629 = vpack.c.b16 %v3856, %v3855
        %v4630 = vpack.c.b16 %v3858, %v3857
        %v4631 = vpack.c.b16 %v3860, %v3859
        %v4632 = vpack.c.b16 %v3862, %v3861
        %v4633 = vpack.c.b16 %v3864, %v3863
        %v4634 = vpack.c.b16 %v3866, %v3865
        %v4635 = vpack.c.b16 %v3868, %v3867
        %v4636 = vpack.c.b16 %v3870, %v3869
        %v4637 = vpack.c.b16 %v3872, %v3871
        %v4638 = vpack.c.b16 %v3874, %v3873
        %v4639 = vpack.c.b16 %v3876, %v3875
        %v4640 = vpack.c.b16 %v3878, %v3877
        %v4641 = vpack.c.b16 %v3880, %v3879
        %v4642 = vpack.c.b16 %v3882, %v3881
        %v4643 = vpack.c.b16 %v3884, %v3883
        %v4644 = vpack.c.b16 %v3886, %v3885
        %v4645 = vpack.c.b16 %v3888, %v3887
        %v4646 = vpack.c.b16 %v3890, %v3889
        %v4647 = vpack.c.b16 %v3892, %v3891
        %v4648 = vpack.c.b16 %v3894, %v3893
        %v4649 = vpack.c.b16 %v3896, %v3895
        %v4650 = vpack.c.b16 %v3898, %v3897
        %v4651 = vpack.c.b16 %v3900, %v3899
        %v4652 = vpack.c.b16 %v3902, %v3901
        %v4653 = vpack.c.b16 %v3904, %v3903
        %v4654 = vpack.c.b16 %v3906, %v3905
        %v4655 = vpack.c.b16 %v3908, %v3907
        %v4656 = vpack.c.b16 %v3910, %v3909
        %v4657 = vpack.c.b16 %v3912, %v3911
        %v4658 = vpack.c.b16 %v3914, %v3913
        %v4659 = vpack.c.b16 %v3916, %v3915
        %v4660 = vpack.c.b16 %v3918, %v3917
        %v4661 = vpack.c.b16 %v3920, %v3919
        %v4662 = vpack.c.b16 %v3922, %v3921
        %v4663 = vpack.c.b16 %v3924, %v3923
        %v4664 = vpack.c.b16 %v3926, %v3925
        %v4665 = vpack.c.b16 %v3928, %v3927
        %v4666 = vpack.c.b16 %v3930, %v3929
        %v4667 = vpack.c.b16 %v3932, %v3931
        %v4668 = vpack.c.b16 %v3934, %v3933
        %v4669 = vpack.c.b16 %v3936, %v3935
        %v4670 = vpack.c.b16 %v3938, %v3937
        %v4671 = vpack.c.b16 %v3940, %v3939
        %v4672 = vpack.c.b16 %v3942, %v3941
        %v4673 = vpack.c.b16 %v3944, %v3943
        %v4674 = vpack.c.b16 %v3946, %v3945
        %v4675 = vpack.c.b16 %v3948, %v3947
        %v4676 = vpack.c.b16 %v3950, %v3949
        %v4677 = vpack.c.b16 %v3952, %v3951
        %v4678 = vpack.c.b16 %v3954, %v3953
        %v4679 = vpack.c.b16 %v3956, %v3955
        %v4680 = vpack.c.b16 %v3958, %v3957
        %v4681 = vpack.c.b16 %v3960, %v3959
        %v4682 = vpack.c.b16 %v3962, %v3961
        %v4683 = vpack.c.b16 %v3964, %v3963
        %v4684 = vpack.c.b16 %v3966, %v3965
        %v4685 = vpack.c.b16 %v3968, %v3967
        %v4686 = vpack.c.b16 %v3970, %v3969
        %v4687 = vpack.c.b16 %v3972, %v3971
        %v4688 = vpack.c.b16 %v3974, %v3973
        %v4689 = vpack.c.b16 %v3976, %v3975
        %v4690 = vpack.c.b16 %v3978, %v3977
        %v4691 = vpack.c.b16 %v3980, %v3979
        %v4692 = vpack.c.b16 %v3982, %v3981
        %v4693 = vpack.c.b16 %v3984, %v3983
        %v4694 = vpack.c.b16 %v3986, %v3985
        %v4695 = vpack.c.b16 %v3988, %v3987
        %v4696 = vpack.c.b16 %v3990, %v3989
        %v4697 = vpack.c.b16 %v3992, %v3991
        %v4698 = vpack.c.b16 %v3994, %v3993
        %v4699 = vpack.c.b16 %v3996, %v3995
        %v4700 = vpack.c.b16 %v3998, %v3997
        %v4701 = vpack.c.b16 %v4000, %v3999
        %v4702 = vpack.c.b16 %v4002, %v4001
        %v4703 = vpack.c.b16 %v4004, %v4003
        %v4704 = vpack.c.b16 %v4006, %v4005
        %v4705 = vpack.c.b16 %v4008, %v4007
        %v4706 = vpack.c.b16 %v4010, %v4009
        %v4707 = vpack.c.b16 %v4012, %v4011
        %v4708 = vpack.c.b16 %v4014, %v4013
        %v4709 = vpack.c.b16 %v4016, %v4015
        %v4710 = vpack.c.b16 %v4018, %v4017
        %v4711 = vpack.c.b16 %v4020, %v4019
        %v4712 = vpack.c.b16 %v4022, %v4021
        %v4713 = vpack.c.b16 %v4024, %v4023
        %v4714 = vpack.c.b16 %v4026, %v4025
        %v4715 = vpack.c.b16 %v4028, %v4027
        %v4716 = vpack.c.b16 %v4030, %v4029
        %v4717 = vpack.c.b16 %v4032, %v4031
        %v4718 = vpack.c.b16 %v4034, %v4033
        %v4719 = vpack.c.b16 %v4036, %v4035
        %v4720 = vpack.c.b16 %v4038, %v4037
        %v4721 = vpack.c.b16 %v4040, %v4039
        %v4722 = vpack.c.b16 %v4042, %v4041
        %v4723 = vpack.c.b16 %v4044, %v4043
        %v4724 = vpack.c.b16 %v4046, %v4045
        %v4725 = vpack.c.b16 %v4048, %v4047
        %v4726 = vpack.c.b16 %v4050, %v4049
        %v4727 = vpack.c.b16 %v4052, %v4051
        %v4728 = vpack.c.b16 %v4054, %v4053
        %v4729 = vpack.c.b16 %v4056, %v4055
        %v4730 = vpack.c.b16 %v4058, %v4057
        %v4731 = vpack.c.b16 %v4060, %v4059
        %v4732 = vpack.c.b16 %v4062, %v4061
        %v4733 = vpack.c.b16 %v4064, %v4063
        %v4734 = vpack.c.b16 %v4066, %v4065
        %v4735 = vpack.c.b16 %v4068, %v4067
        %v4736 = vpack.c.b16 %v4070, %v4069
        %v4737 = vpack.c.b16 %v4072, %v4071
        %v4738 = vpack.c.b16 %v4074, %v4073
        %v4739 = vpack.c.b16 %v4076, %v4075
        %v4740 = vpack.c.b16 %v4078, %v4077
        %v4741 = vpack.c.b16 %v4080, %v4079
        %v4742 = vpack.c.b16 %v4082, %v4081
        %v4743 = vpack.c.b16 %v4084, %v4083
        %v4744 = vpack.c.b16 %v4086, %v4085
        %v4745 = vpack.c.b16 %v4088, %v4087
        %v4746 = vpack.c.b16 %v4090, %v4089
        %v4747 = vpack.c.b16 %v4092, %v4091
        %v4748 = vpack.c.b16 %v4094, %v4093
        %v4749 = vpack.c.b16 %v4096, %v4095
        %v4750 = vpack.c.b16 %v4098, %v4097
        %v4751 = vpack.c.b16 %v4100, %v4099
        %v4752 = vpack.c.b16 %v4102, %v4101
        %v4753 = vpack.c.b16 %v4104, %v4103
        %v4754 = vpack.c.b16 %v4106, %v4105
        %v4755 = vpack.c.b16 %v4108, %v4107
        %v4756 = vpack.c.b16 %v4110, %v4109
        %v4757 = vpack.c.b16 %v4112, %v4111
        %v4758 = vpack.c.b16 %v4114, %v4113
        %v4759 = vpack.c.b16 %v4116, %v4115
        %v4760 = vpack.c.b16 %v4118, %v4117
        %v4761 = vpack.c.b16 %v4120, %v4119
        %v4762 = vpack.c.b16 %v4122, %v4121
        %v4763 = vpack.c.b16 %v4124, %v4123
        %v4764 = vpack.c.b16 %v4126, %v4125
        %v4765 = vpack.c.b16 %v4128, %v4127
        %v4766 = vpack.c.b16 %v4130, %v4129
        %v4767 = vpack.c.b16 %v4132, %v4131
        %v4768 = vpack.c.b16 %v4134, %v4133
        %v4769 = vpack.c.b16 %v4136, %v4135
        %v4770 = vpack.c.b16 %v4138, %v4137
        %v4771 = vpack.c.b16 %v4140, %v4139
        %v4772 = vpack.c.b16 %v4142, %v4141
        %v4773 = vpack.c.b16 %v4144, %v4143
        %v4774 = vpack.c.b16 %v4146, %v4145
        %v4775 = vpack.c.b16 %v4148, %v4147
        %v4776 = vpack.c.b16 %v4150, %v4149
        %v4777 = vpack.c.b16 %v4152, %v4151
        %v4778 = vpack.c.b16 %v4154, %v4153
        %v4779 = vpack.c.b16 %v4156, %v4155
        %v4780 = vpack.c.b16 %v4158, %v4157
        %v4781 = vpack.c.b16 %v4160, %v4159
        %v4782 = vpack.c.b16 %v4162, %v4161
        %v4783 = vpack.c.b16 %v4164, %v4163
        %v4784 = vpack.c.b16 %v4166, %v4165
        %v4785 = vpack.c.b16 %v4168, %v4167
        %v4786 = vpack.c.b16 %v4170, %v4169
        %v4787 = vpack.c.b16 %v4172, %v4171
        %v4788 = vpack.c.b16 %v4174, %v4173
        %v4789 = vpack.c.b16 %v4176, %v4175
        %v4790 = vpack.c.b16 %v4178, %v4177
        %v4791 = vpack.c.b16 %v4180, %v4179
        %v4792 = vpack.c.b16 %v4182, %v4181
        %v4793 = vpack.c.b16 %v4184, %v4183
        %v4794 = vpack.c.b16 %v4186, %v4185
        %v4795 = vpack.c.b16 %v4188, %v4187
        %v4796 = vpack.c.b16 %v4190, %v4189
        %v4797 = vpack.c.b16 %v4192, %v4191
        %v4798 = vpack.c.b16 %v4194, %v4193
        %v4799 = vpack.c.b16 %v4196, %v4195
        %v4800 = vpack.c.b16 %v4198, %v4197
        %v4801 = vpack.c.b16 %v4200, %v4199
        %v4802 = vpack.c.b16 %v4202, %v4201
        %v4803 = vpack.c.b16 %v4204, %v4203
        %v4804 = vpack.c.b16 %v4206, %v4205
        %v4805 = vpack.c.b16 %v4208, %v4207
        %v4806 = vpack.c.b16 %v4210, %v4209
        %v4807 = vpack.c.b16 %v4212, %v4211
        %v4808 = vpack.c.b16 %v4214, %v4213
        %v4809 = vpack.c.b16 %v4216, %v4215
        %v4810 = vpack.c.b16 %v4218, %v4217
        %v4811 = vpack.c.b16 %v4220, %v4219
        %v4812 = vpack.c.b16 %v4222, %v4221
        %v4813 = vpack.c.b16 %v4224, %v4223
        %v4814 = vpack.c.b16 %v4226, %v4225
        %v4815 = vpack.c.b16 %v4228, %v4227
        %v4816 = vpack.c.b16 %v4230, %v4229
        %v4817 = vpack.c.b16 %v4232, %v4231
        %v4818 = vpack.c.b16 %v4234, %v4233
        %v4819 = vpack.c.b16 %v4236, %v4235
        %v4820 = vpack.c.b16 %v4238, %v4237
        %v4821 = vpack.c.b16 %v4240, %v4239
        %v4822 = vpack.c.b16 %v4242, %v4241
        %v4823 = vpack.c.b16 %v4244, %v4243
        %v4824 = vpack.c.b16 %v4246, %v4245
        %v4825 = vpack.c.b16 %v4248, %v4247
        %v4826 = vpack.c.b16 %v4250, %v4249
        %5403 = vmatprep.subr.bf16.mxu0 0
        %5404 = vmatpush1.bf16.msra.mxu0 %v4251
        %5405 = vmatprep.subr.bf16.mxu0 0
        %5406 = vmatpush1.bf16.msra.mxu0 %v4252
        %5407 = vmatprep.subr.bf16.mxu0 0
        %5408 = vmatpush1.bf16.msra.mxu0 %v4253
        %5409 = vmatprep.subr.bf16.mxu0 0
        %5410 = vmatpush1.bf16.msra.mxu0 %v4254
        %5411 = vmatprep.subr.bf16.mxu0 0
        %5412 = vmatpush1.bf16.msra.mxu0 %v4255
        %5413 = vmatprep.subr.bf16.mxu0 0
        %5414 = vmatpush1.bf16.msra.mxu0 %v4256
        %5415 = vmatprep.subr.bf16.mxu0 0
        %5416 = vmatpush1.bf16.msra.mxu0 %v4257
        %5417 = vmatprep.subr.bf16.mxu0 0
        %5418 = vmatpush1.bf16.msra.mxu0 %v4258
        %5419 = vmatprep.subr.bf16.mxu0 0
        %5420 = vmatpush1.bf16.msra.mxu0 %v4259
        %5421 = vmatprep.subr.bf16.mxu0 0
        %5422 = vmatpush1.bf16.msra.mxu0 %v4260
        %5423 = vmatprep.subr.bf16.mxu0 0
        %5424 = vmatpush1.bf16.msra.mxu0 %v4261
        %5425 = vmatprep.subr.bf16.mxu0 0
        %5426 = vmatpush1.bf16.msra.mxu0 %v4262
        %5427 = vmatprep.subr.bf16.mxu0 0
        %5428 = vmatpush1.bf16.msra.mxu0 %v4263
        %5429 = vmatprep.subr.bf16.mxu0 0
        %5430 = vmatpush1.bf16.msra.mxu0 %v4264
        %5431 = vmatprep.subr.bf16.mxu0 0
        %5432 = vmatpush1.bf16.msra.mxu0 %v4265
        %5433 = vmatprep.subr.bf16.mxu0 0
        %5434 = vmatpush1.bf16.msra.mxu0 %v4266
        %5435 = vmatprep.mubr.bf16.mxu0 %v1471
        %5436 = vmatmul.mubr.bf16.gmra.mrb[0].mxu0 %v1457
        %v5437 = vpop.f32.mrb[0].mxu0
        %v5438 = vadd.f32 0.0, %v5437
        %v5439 = vpop.f32.mrb[0].mxu0
        %v5440 = vpop.f32.mrb[0].mxu0
        %v5441 = vpop.f32.mrb[0].mxu0
        %5442 = vdwg.mxu0
        %5443 = vmatprep.subr.bf16.mxu0 0
        %5444 = vmatpush1.bf16.msra.mxu0 %v4267
        %5445 = vmatprep.subr.bf16.mxu0 0
        %5446 = vmatpush1.bf16.msra.mxu0 %v4268
        %5447 = vmatprep.subr.bf16.mxu0 0
        %5448 = vmatpush1.bf16.msra.mxu0 %v4269
        %5449 = vmatprep.subr.bf16.mxu0 0
        %5450 = vmatpush1.bf16.msra.mxu0 %v4270
        %5451 = vmatprep.subr.bf16.mxu0 0
        %5452 = vmatpush1.bf16.msra.mxu0 %v4271
        %5453 = vmatprep.subr.bf16.mxu0 0
        %5454 = vmatpush1.bf16.msra.mxu0 %v4272
        %5455 = vmatprep.subr.bf16.mxu0 0
        %5456 = vmatpush1.bf16.msra.mxu0 %v4273
        %5457 = vmatprep.subr.bf16.mxu0 0
        %5458 = vmatpush1.bf16.msra.mxu0 %v4274
        %5459 = vmatprep.subr.bf16.mxu0 0
        %5460 = vmatpush1.bf16.msra.mxu0 %v4275
        %5461 = vmatprep.subr.bf16.mxu0 0
        %5462 = vmatpush1.bf16.msra.mxu0 %v4276
        %5463 = vmatprep.subr.bf16.mxu0 0
        %5464 = vmatpush1.bf16.msra.mxu0 %v4277
        %5465 = vmatprep.subr.bf16.mxu0 0
        %5466 = vmatpush1.bf16.msra.mxu0 %v4278
        %5467 = vmatprep.subr.bf16.mxu0 0
        %5468 = vmatpush1.bf16.msra.mxu0 %v4279
        %5469 = vmatprep.subr.bf16.mxu0 0
        %5470 = vmatpush1.bf16.msra.mxu0 %v4280
        %5471 = vmatprep.subr.bf16.mxu0 0
        %5472 = vmatpush1.bf16.msra.mxu0 %v4281
        %5473 = vmatprep.subr.bf16.mxu0 0
        %5474 = vmatpush1.bf16.msra.mxu0 %v4282
        %5475 = vmatprep.mubr.bf16.mxu0 %v1481
        %5476 = vmatmul.mubr.bf16.gmra.mrb[0].mxu0 %v1479
        %v5477 = vpop.f32.mrb[0].mxu0
        %v5478 = vadd.f32 %v5438, %v5477
        %v5479 = vpop.f32.mrb[0].mxu0
        %v5480 = vpop.f32.mrb[0].mxu0
        %v5481 = vpop.f32.mrb[0].mxu0
        %5482 = vdwg.mxu0
        %5483 = vmatprep.subr.bf16.mxu0 0
        %5484 = vmatpush1.bf16.msra.mxu0 %v4283
        %5485 = vmatprep.subr.bf16.mxu0 0
        %5486 = vmatpush1.bf16.msra.mxu0 %v4284
        %5487 = vmatprep.subr.bf16.mxu0 0
        %5488 = vmatpush1.bf16.msra.mxu0 %v4285
        %5489 = vmatprep.subr.bf16.mxu0 0
        %5490 = vmatpush1.bf16.msra.mxu0 %v4286
        %5491 = vmatprep.subr.bf16.mxu0 0
        %5492 = vmatpush1.bf16.msra.mxu0 %v4287
        %5493 = vmatprep.subr.bf16.mxu0 0
        %5494 = vmatpush1.bf16.msra.mxu0 %v4288
        %5495 = vmatprep.subr.bf16.mxu0 0
        %5496 = vmatpush1.bf16.msra.mxu0 %v4289
        %5497 = vmatprep.subr.bf16.mxu0 0
        %5498 = vmatpush1.bf16.msra.mxu0 %v4290
        %5499 = vmatprep.subr.bf16.mxu0 0
        %5500 = vmatpush1.bf16.msra.mxu0 %v4291
        %5501 = vmatprep.subr.bf16.mxu0 0
        %5502 = vmatpush1.bf16.msra.mxu0 %v4292
        %5503 = vmatprep.subr.bf16.mxu0 0
        %5504 = vmatpush1.bf16.msra.mxu0 %v4293
        %5505 = vmatprep.subr.bf16.mxu0 0
        %5506 = vmatpush1.bf16.msra.mxu0 %v4294
        %5507 = vmatprep.subr.bf16.mxu0 0
        %5508 = vmatpush1.bf16.msra.mxu0 %v4295
        %5509 = vmatprep.subr.bf16.mxu0 0
        %5510 = vmatpush1.bf16.msra.mxu0 %v4296
        %5511 = vmatprep.subr.bf16.mxu0 0
        %5512 = vmatpush1.bf16.msra.mxu0 %v4297
        %5513 = vmatprep.subr.bf16.mxu0 0
        %5514 = vmatpush1.bf16.msra.mxu0 %v4298
        %5515 = vmatprep.mubr.bf16.mxu0 %v1478
        %5516 = vmatmul.mubr.bf16.gmra.mrb[0].mxu0 %v1464
        %v5517 = vpop.f32.mrb[0].mxu0
        %v5518 = vadd.f32 %v5478, %v5517
        %v5519 = vpop.f32.mrb[0].mxu0
        %v5520 = vpop.f32.mrb[0].mxu0
        %v5521 = vpop.f32.mrb[0].mxu0
        %5522 = vdwg.mxu0
        %5523 = vmatprep.subr.bf16.mxu0 0
        %5524 = vmatpush1.bf16.msra.mxu0 %v4299
        %5525 = vmatprep.subr.bf16.mxu0 0
        %5526 = vmatpush1.bf16.msra.mxu0 %v4300
        %5527 = vmatprep.subr.bf16.mxu0 0
        %5528 = vmatpush1.bf16.msra.mxu0 %v4301
        %5529 = vmatprep.subr.bf16.mxu0 0
        %5530 = vmatpush1.bf16.msra.mxu0 %v4302
        %5531 = vmatprep.subr.bf16.mxu0 0
        %5532 = vmatpush1.bf16.msra.mxu0 %v4303
        %5533 = vmatprep.subr.bf16.mxu0 0
        %5534 = vmatpush1.bf16.msra.mxu0 %v4304
        %5535 = vmatprep.subr.bf16.mxu0 0
        %5536 = vmatpush1.bf16.msra.mxu0 %v4305
        %5537 = vmatprep.subr.bf16.mxu0 0
        %5538 = vmatpush1.bf16.msra.mxu0 %v4306
        %5539 = vmatprep.subr.bf16.mxu0 0
        %5540 = vmatpush1.bf16.msra.mxu0 %v4307
        %5541 = vmatprep.subr.bf16.mxu0 0
        %5542 = vmatpush1.bf16.msra.mxu0 %v4308
        %5543 = vmatprep.subr.bf16.mxu0 0
        %5544 = vmatpush1.bf16.msra.mxu0 %v4309
        %5545 = vmatprep.subr.bf16.mxu0 0
        %5546 = vmatpush1.bf16.msra.mxu0 %v4310
        %5547 = vmatprep.subr.bf16.mxu0 0
        %5548 = vmatpush1.bf16.msra.mxu0 %v4311
        %5549 = vmatprep.subr.bf16.mxu0 0
        %5550 = vmatpush1.bf16.msra.mxu0 %v4312
        %5551 = vmatprep.subr.bf16.mxu0 0
        %5552 = vmatpush1.bf16.msra.mxu0 %v4313
        %5553 = vmatprep.subr.bf16.mxu0 0
        %5554 = vmatpush1.bf16.msra.mxu0 %v4314
        %5555 = vmatprep.mubr.bf16.mxu0 %v1482
        %5556 = vmatmul.mubr.bf16.gmra.mrb[0].mxu0 %v1480
        %v5557 = vpop.f32.mrb[0].mxu0
        %v5558 = vadd.f32 %v5518, %v5557
        %v5559 = vpop.f32.mrb[0].mxu0
        %v5560 = vpop.f32.mrb[0].mxu0
        %v5561 = vpop.f32.mrb[0].mxu0
        %5562 = vdwg.mxu0
        %5563 = vmatprep.subr.bf16.mxu0 0
        %5564 = vmatpush1.bf16.msra.mxu0 %v4315
        %5565 = vmatprep.subr.bf16.mxu0 0
        %5566 = vmatpush1.bf16.msra.mxu0 %v4316
        %5567 = vmatprep.subr.bf16.mxu0 0
        %5568 = vmatpush1.bf16.msra.mxu0 %v4317
        %5569 = vmatprep.subr.bf16.mxu0 0
        %5570 = vmatpush1.bf16.msra.mxu0 %v4318
        %5571 = vmatprep.subr.bf16.mxu0 0
        %5572 = vmatpush1.bf16.msra.mxu0 %v4319
        %5573 = vmatprep.subr.bf16.mxu0 0
        %5574 = vmatpush1.bf16.msra.mxu0 %v4320
        %5575 = vmatprep.subr.bf16.mxu0 0
        %5576 = vmatpush1.bf16.msra.mxu0 %v4321
        %5577 = vmatprep.subr.bf16.mxu0 0
        %5578 = vmatpush1.bf16.msra.mxu0 %v4322
        %5579 = vmatprep.subr.bf16.mxu0 0
        %5580 = vmatpush1.bf16.msra.mxu0 %v4323
        %5581 = vmatprep.subr.bf16.mxu0 0
        %5582 = vmatpush1.bf16.msra.mxu0 %v4324
        %5583 = vmatprep.subr.bf16.mxu0 0
        %5584 = vmatpush1.bf16.msra.mxu0 %v4325
        %5585 = vmatprep.subr.bf16.mxu0 0
        %5586 = vmatpush1.bf16.msra.mxu0 %v4326
        %5587 = vmatprep.subr.bf16.mxu0 0
        %5588 = vmatpush1.bf16.msra.mxu0 %v4327
        %5589 = vmatprep.subr.bf16.mxu0 0
        %5590 = vmatpush1.bf16.msra.mxu0 %v4328
        %5591 = vmatprep.subr.bf16.mxu0 0
        %5592 = vmatpush1.bf16.msra.mxu0 %v4329
        %5593 = vmatprep.subr.bf16.mxu0 0
        %5594 = vmatpush1.bf16.msra.mxu0 %v4330
        %5595 = vmatprep.mubr.bf16.mxu0 %v1520
        %5596 = vmatmul.mubr.bf16.gmra.mrb[0].mxu0 %v1506
        %v5597 = vpop.f32.mrb[0].mxu0
        %v5598 = vadd.f32 %v5558, %v5597
        %v5599 = vpop.f32.mrb[0].mxu0
        %v5600 = vpop.f32.mrb[0].mxu0
        %v5601 = vpop.f32.mrb[0].mxu0
        %5602 = vdwg.mxu0
        %5603 = vmatprep.subr.bf16.mxu0 0
        %5604 = vmatpush1.bf16.msra.mxu0 %v4331
        %5605 = vmatprep.subr.bf16.mxu0 0
        %5606 = vmatpush1.bf16.msra.mxu0 %v4332
        %5607 = vmatprep.subr.bf16.mxu0 0
        %5608 = vmatpush1.bf16.msra.mxu0 %v4333
        %5609 = vmatprep.subr.bf16.mxu0 0
        %5610 = vmatpush1.bf16.msra.mxu0 %v4334
        %5611 = vmatprep.subr.bf16.mxu0 0
        %5612 = vmatpush1.bf16.msra.mxu0 %v4335
        %5613 = vmatprep.subr.bf16.mxu0 0
        %5614 = vmatpush1.bf16.msra.mxu0 %v4336
        %5615 = vmatprep.subr.bf16.mxu0 0
        %5616 = vmatpush1.bf16.msra.mxu0 %v4337
        %5617 = vmatprep.subr.bf16.mxu0 0
        %5618 = vmatpush1.bf16.msra.mxu0 %v4338
        %5619 = vmatprep.subr.bf16.mxu0 0
        %5620 = vmatpush1.bf16.msra.mxu0 %v4339
        %5621 = vmatprep.subr.bf16.mxu0 0
        %5622 = vmatpush1.bf16.msra.mxu0 %v4340
        %5623 = vmatprep.subr.bf16.mxu0 0
        %5624 = vmatpush1.bf16.msra.mxu0 %v4341
        %5625 = vmatprep.subr.bf16.mxu0 0
        %5626 = vmatpush1.bf16.msra.mxu0 %v4342
        %5627 = vmatprep.subr.bf16.mxu0 0
        %5628 = vmatpush1.bf16.msra.mxu0 %v4343
        %5629 = vmatprep.subr.bf16.mxu0 0
        %5630 = vmatpush1.bf16.msra.mxu0 %v4344
        %5631 = vmatprep.subr.bf16.mxu0 0
        %5632 = vmatpush1.bf16.msra.mxu0 %v4345
        %5633 = vmatprep.subr.bf16.mxu0 0
        %5634 = vmatpush1.bf16.msra.mxu0 %v4346
        %5635 = vmatprep.mubr.bf16.mxu0 %v1530
        %5636 = vmatmul.mubr.bf16.gmra.mrb[0].mxu0 %v1528
        %v5637 = vpop.f32.mrb[0].mxu0
        %v5638 = vadd.f32 %v5598, %v5637
        %v5639 = vpop.f32.mrb[0].mxu0
        %v5640 = vpop.f32.mrb[0].mxu0
        %v5641 = vpop.f32.mrb[0].mxu0
        %5642 = vdwg.mxu0
        %5643 = vmatprep.subr.bf16.mxu0 0
        %5644 = vmatpush1.bf16.msra.mxu0 %v4347
        %5645 = vmatprep.subr.bf16.mxu0 0
        %5646 = vmatpush1.bf16.msra.mxu0 %v4348
        %5647 = vmatprep.subr.bf16.mxu0 0
        %5648 = vmatpush1.bf16.msra.mxu0 %v4349
        %5649 = vmatprep.subr.bf16.mxu0 0
        %5650 = vmatpush1.bf16.msra.mxu0 %v4350
        %5651 = vmatprep.subr.bf16.mxu0 0
        %5652 = vmatpush1.bf16.msra.mxu0 %v4351
        %5653 = vmatprep.subr.bf16.mxu0 0
        %5654 = vmatpush1.bf16.msra.mxu0 %v4352
        %5655 = vmatprep.subr.bf16.mxu0 0
        %5656 = vmatpush1.bf16.msra.mxu0 %v4353
        %5657 = vmatprep.subr.bf16.mxu0 0
        %5658 = vmatpush1.bf16.msra.mxu0 %v4354
        %5659 = vmatprep.subr.bf16.mxu0 0
        %5660 = vmatpush1.bf16.msra.mxu0 %v4355
        %5661 = vmatprep.subr.bf16.mxu0 0
        %5662 = vmatpush1.bf16.msra.mxu0 %v4356
        %5663 = vmatprep.subr.bf16.mxu0 0
        %5664 = vmatpush1.bf16.msra.mxu0 %v4357
        %5665 = vmatprep.subr.bf16.mxu0 0
        %5666 = vmatpush1.bf16.msra.mxu0 %v4358
        %5667 = vmatprep.subr.bf16.mxu0 0
        %5668 = vmatpush1.bf16.msra.mxu0 %v4359
        %5669 = vmatprep.subr.bf16.mxu0 0
        %5670 = vmatpush1.bf16.msra.mxu0 %v4360
        %5671 = vmatprep.subr.bf16.mxu0 0
        %5672 = vmatpush1.bf16.msra.mxu0 %v4361
        %5673 = vmatprep.subr.bf16.mxu0 0
        %5674 = vmatpush1.bf16.msra.mxu0 %v4362
        %5675 = vmatprep.mubr.bf16.mxu0 %v1527
        %5676 = vmatmul.mubr.bf16.gmra.mrb[0].mxu0 %v1513
        %v5677 = vpop.f32.mrb[0].mxu0
        %v5678 = vadd.f32 %v5638, %v5677
        %v5679 = vpop.f32.mrb[0].mxu0
        %v5680 = vpop.f32.mrb[0].mxu0
        %v5681 = vpop.f32.mrb[0].mxu0
        %5682 = vdwg.mxu0
        %5683 = vmatprep.subr.bf16.mxu0 0
        %5684 = vmatpush1.bf16.msra.mxu0 %v4363
        %5685 = vmatprep.subr.bf16.mxu0 0
        %5686 = vmatpush1.bf16.msra.mxu0 %v4364
        %5687 = vmatprep.subr.bf16.mxu0 0
        %5688 = vmatpush1.bf16.msra.mxu0 %v4365
        %5689 = vmatprep.subr.bf16.mxu0 0
        %5690 = vmatpush1.bf16.msra.mxu0 %v4366
        %5691 = vmatprep.subr.bf16.mxu0 0
        %5692 = vmatpush1.bf16.msra.mxu0 %v4367
        %5693 = vmatprep.subr.bf16.mxu0 0
        %5694 = vmatpush1.bf16.msra.mxu0 %v4368
        %5695 = vmatprep.subr.bf16.mxu0 0
        %5696 = vmatpush1.bf16.msra.mxu0 %v4369
        %5697 = vmatprep.subr.bf16.mxu0 0
        %5698 = vmatpush1.bf16.msra.mxu0 %v4370
        %5699 = vmatprep.subr.bf16.mxu0 0
        %5700 = vmatpush1.bf16.msra.mxu0 %v4371
        %5701 = vmatprep.subr.bf16.mxu0 0
        %5702 = vmatpush1.bf16.msra.mxu0 %v4372
        %5703 = vmatprep.subr.bf16.mxu0 0
        %5704 = vmatpush1.bf16.msra.mxu0 %v4373
        %5705 = vmatprep.subr.bf16.mxu0 0
        %5706 = vmatpush1.bf16.msra.mxu0 %v4374
        %5707 = vmatprep.subr.bf16.mxu0 0
        %5708 = vmatpush1.bf16.msra.mxu0 %v4375
        %5709 = vmatprep.subr.bf16.mxu0 0
        %5710 = vmatpush1.bf16.msra.mxu0 %v4376
        %5711 = vmatprep.subr.bf16.mxu0 0
        %5712 = vmatpush1.bf16.msra.mxu0 %v4377
        %5713 = vmatprep.subr.bf16.mxu0 0
        %5714 = vmatpush1.bf16.msra.mxu0 %v4378
        %5715 = vmatprep.mubr.bf16.mxu0 %v1531
        %5716 = vmatmul.mubr.bf16.gmra.mrb[0].mxu0 %v1529
        %v5717 = vpop.f32.mrb[0].mxu0
        %v5718 = vadd.f32 %v5678, %v5717
        %v5719 = vpop.f32.mrb[0].mxu0
        %v5720 = vpop.f32.mrb[0].mxu0
        %v5721 = vpop.f32.mrb[0].mxu0
        %5722 = vdwg.mxu0
        %5723 = vmatprep.subr.bf16.mxu0 0
        %5724 = vmatpush1.bf16.msra.mxu0 %v4379
        %5725 = vmatprep.subr.bf16.mxu0 0
        %5726 = vmatpush1.bf16.msra.mxu0 %v4380
        %5727 = vmatprep.subr.bf16.mxu0 0
        %5728 = vmatpush1.bf16.msra.mxu0 %v4381
        %5729 = vmatprep.subr.bf16.mxu0 0
        %5730 = vmatpush1.bf16.msra.mxu0 %v4382
        %5731 = vmatprep.subr.bf16.mxu0 0
        %5732 = vmatpush1.bf16.msra.mxu0 %v4383
        %5733 = vmatprep.subr.bf16.mxu0 0
        %5734 = vmatpush1.bf16.msra.mxu0 %v4384
        %5735 = vmatprep.subr.bf16.mxu0 0
        %5736 = vmatpush1.bf16.msra.mxu0 %v4385
        %5737 = vmatprep.subr.bf16.mxu0 0
        %5738 = vmatpush1.bf16.msra.mxu0 %v4386
        %5739 = vmatprep.subr.bf16.mxu0 0
        %5740 = vmatpush1.bf16.msra.mxu0 %v4387
        %5741 = vmatprep.subr.bf16.mxu0 0
        %5742 = vmatpush1.bf16.msra.mxu0 %v4388
        %5743 = vmatprep.subr.bf16.mxu0 0
        %5744 = vmatpush1.bf16.msra.mxu0 %v4389
        %5745 = vmatprep.subr.bf16.mxu0 0
        %5746 = vmatpush1.bf16.msra.mxu0 %v4390
        %5747 = vmatprep.subr.bf16.mxu0 0
        %5748 = vmatpush1.bf16.msra.mxu0 %v4391
        %5749 = vmatprep.subr.bf16.mxu0 0
        %5750 = vmatpush1.bf16.msra.mxu0 %v4392
        %5751 = vmatprep.subr.bf16.mxu0 0
        %5752 = vmatpush1.bf16.msra.mxu0 %v4393
        %5753 = vmatprep.subr.bf16.mxu0 0
        %5754 = vmatpush1.bf16.msra.mxu0 %v4394
        %5755 = vmatprep.mubr.bf16.mxu0 %v1569
        %5756 = vmatmul.mubr.bf16.gmra.mrb[0].mxu0 %v1555
        %v5757 = vpop.f32.mrb[0].mxu0
        %v5758 = vadd.f32 %v5718, %v5757
        %v5759 = vpop.f32.mrb[0].mxu0
        %v5760 = vpop.f32.mrb[0].mxu0
        %v5761 = vpop.f32.mrb[0].mxu0
        %5762 = vdwg.mxu0
        %5763 = vmatprep.subr.bf16.mxu0 0
        %5764 = vmatpush1.bf16.msra.mxu0 %v4395
        %5765 = vmatprep.subr.bf16.mxu0 0
        %5766 = vmatpush1.bf16.msra.mxu0 %v4396
        %5767 = vmatprep.subr.bf16.mxu0 0
        %5768 = vmatpush1.bf16.msra.mxu0 %v4397
        %5769 = vmatprep.subr.bf16.mxu0 0
        %5770 = vmatpush1.bf16.msra.mxu0 %v4398
        %5771 = vmatprep.subr.bf16.mxu0 0
        %5772 = vmatpush1.bf16.msra.mxu0 %v4399
        %5773 = vmatprep.subr.bf16.mxu0 0
        %5774 = vmatpush1.bf16.msra.mxu0 %v4400
        %5775 = vmatprep.subr.bf16.mxu0 0
        %5776 = vmatpush1.bf16.msra.mxu0 %v4401
        %5777 = vmatprep.subr.bf16.mxu0 0
        %5778 = vmatpush1.bf16.msra.mxu0 %v4402
        %5779 = vmatprep.subr.bf16.mxu0 0
        %5780 = vmatpush1.bf16.msra.mxu0 %v4403
        %5781 = vmatprep.subr.bf16.mxu0 0
        %5782 = vmatpush1.bf16.msra.mxu0 %v4404
        %5783 = vmatprep.subr.bf16.mxu0 0
        %5784 = vmatpush1.bf16.msra.mxu0 %v4405
        %5785 = vmatprep.subr.bf16.mxu0 0
        %5786 = vmatpush1.bf16.msra.mxu0 %v4406
        %5787 = vmatprep.subr.bf16.mxu0 0
        %5788 = vmatpush1.bf16.msra.mxu0 %v4407
        %5789 = vmatprep.subr.bf16.mxu0 0
        %5790 = vmatpush1.bf16.msra.mxu0 %v4408
        %5791 = vmatprep.subr.bf16.mxu0 0
        %5792 = vmatpush1.bf16.msra.mxu0 %v4409
        %5793 = vmatprep.subr.bf16.mxu0 0
        %5794 = vmatpush1.bf16.msra.mxu0 %v4410
        %5795 = vmatprep.mubr.bf16.mxu0 %v1579
        %5796 = vmatmul.mubr.bf16.gmra.mrb[0].mxu0 %v1577
        %v5797 = vpop.f32.mrb[0].mxu0
        %v5798 = vadd.f32 %v5758, %v5797
        %v5799 = vpop.f32.mrb[0].mxu0
        %v5800 = vpop.f32.mrb[0].mxu0
        %v5801 = vpop.f32.mrb[0].mxu0
        %5802 = vdwg.mxu0
        %5803 = vmatprep.subr.bf16.mxu0 0
        %5804 = vmatpush1.bf16.msra.mxu0 %v4411
        %5805 = vmatprep.subr.bf16.mxu0 0
        %5806 = vmatpush1.bf16.msra.mxu0 %v4412
        %5807 = vmatprep.subr.bf16.mxu0 0
        %5808 = vmatpush1.bf16.msra.mxu0 %v4413
        %5809 = vmatprep.subr.bf16.mxu0 0
        %5810 = vmatpush1.bf16.msra.mxu0 %v4414
        %5811 = vmatprep.subr.bf16.mxu0 0
        %5812 = vmatpush1.bf16.msra.mxu0 %v4415
        %5813 = vmatprep.subr.bf16.mxu0 0
        %5814 = vmatpush1.bf16.msra.mxu0 %v4416
        %5815 = vmatprep.subr.bf16.mxu0 0
        %5816 = vmatpush1.bf16.msra.mxu0 %v4417
        %5817 = vmatprep.subr.bf16.mxu0 0
        %5818 = vmatpush1.bf16.msra.mxu0 %v4418
        %5819 = vmatprep.subr.bf16.mxu0 0
        %5820 = vmatpush1.bf16.msra.mxu0 %v4419
        %5821 = vmatprep.subr.bf16.mxu0 0
        %5822 = vmatpush1.bf16.msra.mxu0 %v4420
        %5823 = vmatprep.subr.bf16.mxu0 0
        %5824 = vmatpush1.bf16.msra.mxu0 %v4421
        %5825 = vmatprep.subr.bf16.mxu0 0
        %5826 = vmatpush1.bf16.msra.mxu0 %v4422
        %5827 = vmatprep.subr.bf16.mxu0 0
        %5828 = vmatpush1.bf16.msra.mxu0 %v4423
        %5829 = vmatprep.subr.bf16.mxu0 0
        %5830 = vmatpush1.bf16.msra.mxu0 %v4424
        %5831 = vmatprep.subr.bf16.mxu0 0
        %5832 = vmatpush1.bf16.msra.mxu0 %v4425
        %5833 = vmatprep.subr.bf16.mxu0 0
        %5834 = vmatpush1.bf16.msra.mxu0 %v4426
        %5835 = vmatprep.mubr.bf16.mxu0 %v1576
        %5836 = vmatmul.mubr.bf16.gmra.mrb[0].mxu0 %v1562
        %v5837 = vpop.f32.mrb[0].mxu0
        %v5838 = vadd.f32 %v5798, %v5837
        %v5839 = vpop.f32.mrb[0].mxu0
        %v5840 = vpop.f32.mrb[0].mxu0
        %v5841 = vpop.f32.mrb[0].mxu0
        %5842 = vdwg.mxu0
        %5843 = vmatprep.subr.bf16.mxu0 0
        %5844 = vmatpush1.bf16.msra.mxu0 %v4427
        %5845 = vmatprep.subr.bf16.mxu0 0
        %5846 = vmatpush1.bf16.msra.mxu0 %v4428
        %5847 = vmatprep.subr.bf16.mxu0 0
        %5848 = vmatpush1.bf16.msra.mxu0 %v4429
        %5849 = vmatprep.subr.bf16.mxu0 0
        %5850 = vmatpush1.bf16.msra.mxu0 %v4430
        %5851 = vmatprep.subr.bf16.mxu0 0
        %5852 = vmatpush1.bf16.msra.mxu0 %v4431
        %5853 = vmatprep.subr.bf16.mxu0 0
        %5854 = vmatpush1.bf16.msra.mxu0 %v4432
        %5855 = vmatprep.subr.bf16.mxu0 0
        %5856 = vmatpush1.bf16.msra.mxu0 %v4433
        %5857 = vmatprep.subr.bf16.mxu0 0
        %5858 = vmatpush1.bf16.msra.mxu0 %v4434
        %5859 = vmatprep.subr.bf16.mxu0 0
        %5860 = vmatpush1.bf16.msra.mxu0 %v4435
        %5861 = vmatprep.subr.bf16.mxu0 0
        %5862 = vmatpush1.bf16.msra.mxu0 %v4436
        %5863 = vmatprep.subr.bf16.mxu0 0
        %5864 = vmatpush1.bf16.msra.mxu0 %v4437
        %5865 = vmatprep.subr.bf16.mxu0 0
        %5866 = vmatpush1.bf16.msra.mxu0 %v4438
        %5867 = vmatprep.subr.bf16.mxu0 0
        %5868 = vmatpush1.bf16.msra.mxu0 %v4439
        %5869 = vmatprep.subr.bf16.mxu0 0
        %5870 = vmatpush1.bf16.msra.mxu0 %v4440
        %5871 = vmatprep.subr.bf16.mxu0 0
        %5872 = vmatpush1.bf16.msra.mxu0 %v4441
        %5873 = vmatprep.subr.bf16.mxu0 0
        %5874 = vmatpush1.bf16.msra.mxu0 %v4442
        %5875 = vmatprep.mubr.bf16.mxu0 %v1580
        %5876 = vmatmul.mubr.bf16.gmra.mrb[0].mxu0 %v1578
        %v5877 = vpop.f32.mrb[0].mxu0
        %v5878 = vadd.f32 %v5838, %v5877
        %v5879 = vpop.f32.mrb[0].mxu0
        %v5880 = vpop.f32.mrb[0].mxu0
        %v5881 = vpop.f32.mrb[0].mxu0
        %5882 = vdwg.mxu0
        %5883 = vmatprep.subr.bf16.mxu0 0
        %5884 = vmatpush1.bf16.msra.mxu0 %v4443
        %5885 = vmatprep.subr.bf16.mxu0 0
        %5886 = vmatpush1.bf16.msra.mxu0 %v4444
        %5887 = vmatprep.subr.bf16.mxu0 0
        %5888 = vmatpush1.bf16.msra.mxu0 %v4445
        %5889 = vmatprep.subr.bf16.mxu0 0
        %5890 = vmatpush1.bf16.msra.mxu0 %v4446
        %5891 = vmatprep.subr.bf16.mxu0 0
        %5892 = vmatpush1.bf16.msra.mxu0 %v4447
        %5893 = vmatprep.subr.bf16.mxu0 0
        %5894 = vmatpush1.bf16.msra.mxu0 %v4448
        %5895 = vmatprep.subr.bf16.mxu0 0
        %5896 = vmatpush1.bf16.msra.mxu0 %v4449
        %5897 = vmatprep.subr.bf16.mxu0 0
        %5898 = vmatpush1.bf16.msra.mxu0 %v4450
        %5899 = vmatprep.subr.bf16.mxu0 0
        %5900 = vmatpush1.bf16.msra.mxu0 %v4451
        %5901 = vmatprep.subr.bf16.mxu0 0
        %5902 = vmatpush1.bf16.msra.mxu0 %v4452
        %5903 = vmatprep.subr.bf16.mxu0 0
        %5904 = vmatpush1.bf16.msra.mxu0 %v4453
        %5905 = vmatprep.subr.bf16.mxu0 0
        %5906 = vmatpush1.bf16.msra.mxu0 %v4454
        %5907 = vmatprep.subr.bf16.mxu0 0
        %5908 = vmatpush1.bf16.msra.mxu0 %v4455
        %5909 = vmatprep.subr.bf16.mxu0 0
        %5910 = vmatpush1.bf16.msra.mxu0 %v4456
        %5911 = vmatprep.subr.bf16.mxu0 0
        %5912 = vmatpush1.bf16.msra.mxu0 %v4457
        %5913 = vmatprep.subr.bf16.mxu0 0
        %5914 = vmatpush1.bf16.msra.mxu0 %v4458
        %5915 = vmatprep.mubr.bf16.mxu0 %v1618
        %5916 = vmatmul.mubr.bf16.gmra.mrb[0].mxu0 %v1604
        %v5917 = vpop.f32.mrb[0].mxu0
        %v5918 = vadd.f32 %v5878, %v5917
        %v5919 = vpop.f32.mrb[0].mxu0
        %v5920 = vpop.f32.mrb[0].mxu0
        %v5921 = vpop.f32.mrb[0].mxu0
        %5922 = vdwg.mxu0
        %5923 = vmatprep.subr.bf16.mxu0 0
        %5924 = vmatpush1.bf16.msra.mxu0 %v4459
        %5925 = vmatprep.subr.bf16.mxu0 0
        %5926 = vmatpush1.bf16.msra.mxu0 %v4460
        %5927 = vmatprep.subr.bf16.mxu0 0
        %5928 = vmatpush1.bf16.msra.mxu0 %v4461
        %5929 = vmatprep.subr.bf16.mxu0 0
        %5930 = vmatpush1.bf16.msra.mxu0 %v4462
        %5931 = vmatprep.subr.bf16.mxu0 0
        %5932 = vmatpush1.bf16.msra.mxu0 %v4463
        %5933 = vmatprep.subr.bf16.mxu0 0
        %5934 = vmatpush1.bf16.msra.mxu0 %v4464
        %5935 = vmatprep.subr.bf16.mxu0 0
        %5936 = vmatpush1.bf16.msra.mxu0 %v4465
        %5937 = vmatprep.subr.bf16.mxu0 0
        %5938 = vmatpush1.bf16.msra.mxu0 %v4466
        %5939 = vmatprep.subr.bf16.mxu0 0
        %5940 = vmatpush1.bf16.msra.mxu0 %v4467
        %5941 = vmatprep.subr.bf16.mxu0 0
        %5942 = vmatpush1.bf16.msra.mxu0 %v4468
        %5943 = vmatprep.subr.bf16.mxu0 0
        %5944 = vmatpush1.bf16.msra.mxu0 %v4469
        %5945 = vmatprep.subr.bf16.mxu0 0
        %5946 = vmatpush1.bf16.msra.mxu0 %v4470
        %5947 = vmatprep.subr.bf16.mxu0 0
        %5948 = vmatpush1.bf16.msra.mxu0 %v4471
        %5949 = vmatprep.subr.bf16.mxu0 0
        %5950 = vmatpush1.bf16.msra.mxu0 %v4472
        %5951 = vmatprep.subr.bf16.mxu0 0
        %5952 = vmatpush1.bf16.msra.mxu0 %v4473
        %5953 = vmatprep.subr.bf16.mxu0 0
        %5954 = vmatpush1.bf16.msra.mxu0 %v4474
        %5955 = vmatprep.mubr.bf16.mxu0 %v1628
        %5956 = vmatmul.mubr.bf16.gmra.mrb[0].mxu0 %v1626
        %v5957 = vpop.f32.mrb[0].mxu0
        %v5958 = vadd.f32 %v5918, %v5957
        %v5959 = vpop.f32.mrb[0].mxu0
        %v5960 = vpop.f32.mrb[0].mxu0
        %v5961 = vpop.f32.mrb[0].mxu0
        %5962 = vdwg.mxu0
        %5963 = vmatprep.subr.bf16.mxu0 0
        %5964 = vmatpush1.bf16.msra.mxu0 %v4475
        %5965 = vmatprep.subr.bf16.mxu0 0
        %5966 = vmatpush1.bf16.msra.mxu0 %v4476
        %5967 = vmatprep.subr.bf16.mxu0 0
        %5968 = vmatpush1.bf16.msra.mxu0 %v4477
        %5969 = vmatprep.subr.bf16.mxu0 0
        %5970 = vmatpush1.bf16.msra.mxu0 %v4478
        %5971 = vmatprep.subr.bf16.mxu0 0
        %5972 = vmatpush1.bf16.msra.mxu0 %v4479
        %5973 = vmatprep.subr.bf16.mxu0 0
        %5974 = vmatpush1.bf16.msra.mxu0 %v4480
        %5975 = vmatprep.subr.bf16.mxu0 0
        %5976 = vmatpush1.bf16.msra.mxu0 %v4481
        %5977 = vmatprep.subr.bf16.mxu0 0
        %5978 = vmatpush1.bf16.msra.mxu0 %v4482
        %5979 = vmatprep.subr.bf16.mxu0 0
        %5980 = vmatpush1.bf16.msra.mxu0 %v4483
        %5981 = vmatprep.subr.bf16.mxu0 0
        %5982 = vmatpush1.bf16.msra.mxu0 %v4484
        %5983 = vmatprep.subr.bf16.mxu0 0
        %5984 = vmatpush1.bf16.msra.mxu0 %v4485
        %5985 = vmatprep.subr.bf16.mxu0 0
        %5986 = vmatpush1.bf16.msra.mxu0 %v4486
        %5987 = vmatprep.subr.bf16.mxu0 0
        %5988 = vmatpush1.bf16.msra.mxu0 %v4487
        %5989 = vmatprep.subr.bf16.mxu0 0
        %5990 = vmatpush1.bf16.msra.mxu0 %v4488
        %5991 = vmatprep.subr.bf16.mxu0 0
        %5992 = vmatpush1.bf16.msra.mxu0 %v4489
        %5993 = vmatprep.subr.bf16.mxu0 0
        %5994 = vmatpush1.bf16.msra.mxu0 %v4490
        %5995 = vmatprep.mubr.bf16.mxu0 %v1625
        %5996 = vmatmul.mubr.bf16.gmra.mrb[0].mxu0 %v1611
        %v5997 = vpop.f32.mrb[0].mxu0
        %v5998 = vadd.f32 %v5958, %v5997
        %v5999 = vpop.f32.mrb[0].mxu0
        %v6000 = vpop.f32.mrb[0].mxu0
        %v6001 = vpop.f32.mrb[0].mxu0
        %6002 = vdwg.mxu0
        %6003 = vmatprep.subr.bf16.mxu0 0
        %6004 = vmatpush1.bf16.msra.mxu0 %v4491
        %6005 = vmatprep.subr.bf16.mxu0 0
        %6006 = vmatpush1.bf16.msra.mxu0 %v4492
        %6007 = vmatprep.subr.bf16.mxu0 0
        %6008 = vmatpush1.bf16.msra.mxu0 %v4493
        %6009 = vmatprep.subr.bf16.mxu0 0
        %6010 = vmatpush1.bf16.msra.mxu0 %v4494
        %6011 = vmatprep.subr.bf16.mxu0 0
        %6012 = vmatpush1.bf16.msra.mxu0 %v4495
        %6013 = vmatprep.subr.bf16.mxu0 0
        %6014 = vmatpush1.bf16.msra.mxu0 %v4496
        %6015 = vmatprep.subr.bf16.mxu0 0
        %6016 = vmatpush1.bf16.msra.mxu0 %v4497
        %6017 = vmatprep.subr.bf16.mxu0 0
        %6018 = vmatpush1.bf16.msra.mxu0 %v4498
        %6019 = vmatprep.subr.bf16.mxu0 0
        %6020 = vmatpush1.bf16.msra.mxu0 %v4499
        %6021 = vmatprep.subr.bf16.mxu0 0
        %6022 = vmatpush1.bf16.msra.mxu0 %v4500
        %6023 = vmatprep.subr.bf16.mxu0 0
        %6024 = vmatpush1.bf16.msra.mxu0 %v4501
        %6025 = vmatprep.subr.bf16.mxu0 0
        %6026 = vmatpush1.bf16.msra.mxu0 %v4502
        %6027 = vmatprep.subr.bf16.mxu0 0
        %6028 = vmatpush1.bf16.msra.mxu0 %v4503
        %6029 = vmatprep.subr.bf16.mxu0 0
        %6030 = vmatpush1.bf16.msra.mxu0 %v4504
        %6031 = vmatprep.subr.bf16.mxu0 0
        %6032 = vmatpush1.bf16.msra.mxu0 %v4505
        %6033 = vmatprep.subr.bf16.mxu0 0
        %6034 = vmatpush1.bf16.msra.mxu0 %v4506
        %6035 = vmatprep.mubr.bf16.mxu0 %v1629
        %6036 = vmatmul.mubr.bf16.gmra.mrb[0].mxu0 %v1627
        %v6037 = vpop.f32.mrb[0].mxu0
        %v6038 = vadd.f32 %v5998, %v6037
        %v6039 = vpop.f32.mrb[0].mxu0
        %v6040 = vpop.f32.mrb[0].mxu0
        %v6041 = vpop.f32.mrb[0].mxu0
        %6042 = vdwg.mxu0
        %6043 = vmatprep.subr.bf16.mxu0 0
        %6044 = vmatpush1.bf16.msra.mxu0 %v4507
        %6045 = vmatprep.subr.bf16.mxu0 0
        %6046 = vmatpush1.bf16.msra.mxu0 %v4508
        %6047 = vmatprep.subr.bf16.mxu0 0
        %6048 = vmatpush1.bf16.msra.mxu0 %v4509
        %6049 = vmatprep.subr.bf16.mxu0 0
        %6050 = vmatpush1.bf16.msra.mxu0 %v4510
        %6051 = vmatprep.subr.bf16.mxu0 0
        %6052 = vmatpush1.bf16.msra.mxu0 %v4511
        %6053 = vmatprep.subr.bf16.mxu0 0
        %6054 = vmatpush1.bf16.msra.mxu0 %v4512
        %6055 = vmatprep.subr.bf16.mxu0 0
        %6056 = vmatpush1.bf16.msra.mxu0 %v4513
        %6057 = vmatprep.subr.bf16.mxu0 0
        %6058 = vmatpush1.bf16.msra.mxu0 %v4514
        %6059 = vmatprep.subr.bf16.mxu0 0
        %6060 = vmatpush1.bf16.msra.mxu0 %v4515
        %6061 = vmatprep.subr.bf16.mxu0 0
        %6062 = vmatpush1.bf16.msra.mxu0 %v4516
        %6063 = vmatprep.subr.bf16.mxu0 0
        %6064 = vmatpush1.bf16.msra.mxu0 %v4517
        %6065 = vmatprep.subr.bf16.mxu0 0
        %6066 = vmatpush1.bf16.msra.mxu0 %v4518
        %6067 = vmatprep.subr.bf16.mxu0 0
        %6068 = vmatpush1.bf16.msra.mxu0 %v4519
        %6069 = vmatprep.subr.bf16.mxu0 0
        %6070 = vmatpush1.bf16.msra.mxu0 %v4520
        %6071 = vmatprep.subr.bf16.mxu0 0
        %6072 = vmatpush1.bf16.msra.mxu0 %v4521
        %6073 = vmatprep.subr.bf16.mxu0 0
        %6074 = vmatpush1.bf16.msra.mxu0 %v4522
        %6075 = vmatprep.mubr.bf16.mxu0 %v1667
        %6076 = vmatmul.mubr.bf16.gmra.mrb[0].mxu0 %v1653
        %v6077 = vpop.f32.mrb[0].mxu0
        %v6078 = vadd.f32 %v6038, %v6077
        %v6079 = vpop.f32.mrb[0].mxu0
        %v6080 = vpop.f32.mrb[0].mxu0
        %v6081 = vpop.f32.mrb[0].mxu0
        %6082 = vdwg.mxu0
        %6083 = vmatprep.subr.bf16.mxu0 0
        %6084 = vmatpush1.bf16.msra.mxu0 %v4523
        %6085 = vmatprep.subr.bf16.mxu0 0
        %6086 = vmatpush1.bf16.msra.mxu0 %v4524
        %6087 = vmatprep.subr.bf16.mxu0 0
        %6088 = vmatpush1.bf16.msra.mxu0 %v4525
        %6089 = vmatprep.subr.bf16.mxu0 0
        %6090 = vmatpush1.bf16.msra.mxu0 %v4526
        %6091 = vmatprep.subr.bf16.mxu0 0
        %6092 = vmatpush1.bf16.msra.mxu0 %v4527
        %6093 = vmatprep.subr.bf16.mxu0 0
        %6094 = vmatpush1.bf16.msra.mxu0 %v4528
        %6095 = vmatprep.subr.bf16.mxu0 0
        %6096 = vmatpush1.bf16.msra.mxu0 %v4529
        %6097 = vmatprep.subr.bf16.mxu0 0
        %6098 = vmatpush1.bf16.msra.mxu0 %v4530
        %6099 = vmatprep.subr.bf16.mxu0 0
        %6100 = vmatpush1.bf16.msra.mxu0 %v4531
        %6101 = vmatprep.subr.bf16.mxu0 0
        %6102 = vmatpush1.bf16.msra.mxu0 %v4532
        %6103 = vmatprep.subr.bf16.mxu0 0
        %6104 = vmatpush1.bf16.msra.mxu0 %v4533
        %6105 = vmatprep.subr.bf16.mxu0 0
        %6106 = vmatpush1.bf16.msra.mxu0 %v4534
        %6107 = vmatprep.subr.bf16.mxu0 0
        %6108 = vmatpush1.bf16.msra.mxu0 %v4535
        %6109 = vmatprep.subr.bf16.mxu0 0
        %6110 = vmatpush1.bf16.msra.mxu0 %v4536
        %6111 = vmatprep.subr.bf16.mxu0 0
        %6112 = vmatpush1.bf16.msra.mxu0 %v4537
        %6113 = vmatprep.subr.bf16.mxu0 0
        %6114 = vmatpush1.bf16.msra.mxu0 %v4538
        %6115 = vmatprep.mubr.bf16.mxu0 %v1677
        %6116 = vmatmul.mubr.bf16.gmra.mrb[0].mxu0 %v1675
        %v6117 = vpop.f32.mrb[0].mxu0
        %v6118 = vadd.f32 %v6078, %v6117
        %v6119 = vpop.f32.mrb[0].mxu0
        %v6120 = vpop.f32.mrb[0].mxu0
        %v6121 = vpop.f32.mrb[0].mxu0
        %6122 = vdwg.mxu0
        %6123 = vmatprep.subr.bf16.mxu0 0
        %6124 = vmatpush1.bf16.msra.mxu0 %v4539
        %6125 = vmatprep.subr.bf16.mxu0 0
        %6126 = vmatpush1.bf16.msra.mxu0 %v4540
        %6127 = vmatprep.subr.bf16.mxu0 0
        %6128 = vmatpush1.bf16.msra.mxu0 %v4541
        %6129 = vmatprep.subr.bf16.mxu0 0
        %6130 = vmatpush1.bf16.msra.mxu0 %v4542
        %6131 = vmatprep.subr.bf16.mxu0 0
        %6132 = vmatpush1.bf16.msra.mxu0 %v4543
        %6133 = vmatprep.subr.bf16.mxu0 0
        %6134 = vmatpush1.bf16.msra.mxu0 %v4544
        %6135 = vmatprep.subr.bf16.mxu0 0
        %6136 = vmatpush1.bf16.msra.mxu0 %v4545
        %6137 = vmatprep.subr.bf16.mxu0 0
        %6138 = vmatpush1.bf16.msra.mxu0 %v4546
        %6139 = vmatprep.subr.bf16.mxu0 0
        %6140 = vmatpush1.bf16.msra.mxu0 %v4547
        %6141 = vmatprep.subr.bf16.mxu0 0
        %6142 = vmatpush1.bf16.msra.mxu0 %v4548
        %6143 = vmatprep.subr.bf16.mxu0 0
        %6144 = vmatpush1.bf16.msra.mxu0 %v4549
        %6145 = vmatprep.subr.bf16.mxu0 0
        %6146 = vmatpush1.bf16.msra.mxu0 %v4550
        %6147 = vmatprep.subr.bf16.mxu0 0
        %6148 = vmatpush1.bf16.msra.mxu0 %v4551
        %6149 = vmatprep.subr.bf16.mxu0 0
        %6150 = vmatpush1.bf16.msra.mxu0 %v4552
        %6151 = vmatprep.subr.bf16.mxu0 0
        %6152 = vmatpush1.bf16.msra.mxu0 %v4553
        %6153 = vmatprep.subr.bf16.mxu0 0
        %6154 = vmatpush1.bf16.msra.mxu0 %v4554
        %6155 = vmatprep.mubr.bf16.mxu0 %v1674
        %6156 = vmatmul.mubr.bf16.gmra.mrb[0].mxu0 %v1660
        %v6157 = vpop.f32.mrb[0].mxu0
        %v6158 = vadd.f32 %v6118, %v6157
        %v6159 = vpop.f32.mrb[0].mxu0
        %v6160 = vpop.f32.mrb[0].mxu0
        %v6161 = vpop.f32.mrb[0].mxu0
        %6162 = vdwg.mxu0
        %6163 = vmatprep.subr.bf16.mxu0 0
        %6164 = vmatpush1.bf16.msra.mxu0 %v4555
        %6165 = vmatprep.subr.bf16.mxu0 0
        %6166 = vmatpush1.bf16.msra.mxu0 %v4556
        %6167 = vmatprep.subr.bf16.mxu0 0
        %6168 = vmatpush1.bf16.msra.mxu0 %v4557
        %6169 = vmatprep.subr.bf16.mxu0 0
        %6170 = vmatpush1.bf16.msra.mxu0 %v4558
        %6171 = vmatprep.subr.bf16.mxu0 0
        %6172 = vmatpush1.bf16.msra.mxu0 %v4559
        %6173 = vmatprep.subr.bf16.mxu0 0
        %6174 = vmatpush1.bf16.msra.mxu0 %v4560
        %6175 = vmatprep.subr.bf16.mxu0 0
        %6176 = vmatpush1.bf16.msra.mxu0 %v4561
        %6177 = vmatprep.subr.bf16.mxu0 0
        %6178 = vmatpush1.bf16.msra.mxu0 %v4562
        %6179 = vmatprep.subr.bf16.mxu0 0
        %6180 = vmatpush1.bf16.msra.mxu0 %v4563
        %6181 = vmatprep.subr.bf16.mxu0 0
        %6182 = vmatpush1.bf16.msra.mxu0 %v4564
        %6183 = vmatprep.subr.bf16.mxu0 0
        %6184 = vmatpush1.bf16.msra.mxu0 %v4565
        %6185 = vmatprep.subr.bf16.mxu0 0
        %6186 = vmatpush1.bf16.msra.mxu0 %v4566
        %6187 = vmatprep.subr.bf16.mxu0 0
        %6188 = vmatpush1.bf16.msra.mxu0 %v4567
        %6189 = vmatprep.subr.bf16.mxu0 0
        %6190 = vmatpush1.bf16.msra.mxu0 %v4568
        %6191 = vmatprep.subr.bf16.mxu0 0
        %6192 = vmatpush1.bf16.msra.mxu0 %v4569
        %6193 = vmatprep.subr.bf16.mxu0 0
        %6194 = vmatpush1.bf16.msra.mxu0 %v4570
        %6195 = vmatprep.mubr.bf16.mxu0 %v1678
        %6196 = vmatmul.mubr.bf16.gmra.mrb[0].mxu0 %v1676
        %v6197 = vpop.f32.mrb[0].mxu0
        %v6198 = vadd.f32 %v6158, %v6197
        %v6199 = vpop.f32.mrb[0].mxu0
        %v6200 = vpop.f32.mrb[0].mxu0
        %v6201 = vpop.f32.mrb[0].mxu0
        %6202 = vdwg.mxu0
        %6203 = vmatprep.subr.bf16.mxu0 0
        %6204 = vmatpush1.bf16.msra.mxu0 %v4571
        %6205 = vmatprep.subr.bf16.mxu0 0
        %6206 = vmatpush1.bf16.msra.mxu0 %v4572
        %6207 = vmatprep.subr.bf16.mxu0 0
        %6208 = vmatpush1.bf16.msra.mxu0 %v4573
        %6209 = vmatprep.subr.bf16.mxu0 0
        %6210 = vmatpush1.bf16.msra.mxu0 %v4574
        %6211 = vmatprep.subr.bf16.mxu0 0
        %6212 = vmatpush1.bf16.msra.mxu0 %v4575
        %6213 = vmatprep.subr.bf16.mxu0 0
        %6214 = vmatpush1.bf16.msra.mxu0 %v4576
        %6215 = vmatprep.subr.bf16.mxu0 0
        %6216 = vmatpush1.bf16.msra.mxu0 %v4577
        %6217 = vmatprep.subr.bf16.mxu0 0
        %6218 = vmatpush1.bf16.msra.mxu0 %v4578
        %6219 = vmatprep.subr.bf16.mxu0 0
        %6220 = vmatpush1.bf16.msra.mxu0 %v4579
        %6221 = vmatprep.subr.bf16.mxu0 0
        %6222 = vmatpush1.bf16.msra.mxu0 %v4580
        %6223 = vmatprep.subr.bf16.mxu0 0
        %6224 = vmatpush1.bf16.msra.mxu0 %v4581
        %6225 = vmatprep.subr.bf16.mxu0 0
        %6226 = vmatpush1.bf16.msra.mxu0 %v4582
        %6227 = vmatprep.subr.bf16.mxu0 0
        %6228 = vmatpush1.bf16.msra.mxu0 %v4583
        %6229 = vmatprep.subr.bf16.mxu0 0
        %6230 = vmatpush1.bf16.msra.mxu0 %v4584
        %6231 = vmatprep.subr.bf16.mxu0 0
        %6232 = vmatpush1.bf16.msra.mxu0 %v4585
        %6233 = vmatprep.subr.bf16.mxu0 0
        %6234 = vmatpush1.bf16.msra.mxu0 %v4586
        %6235 = vmatprep.mubr.bf16.mxu0 %v1716
        %6236 = vmatmul.mubr.bf16.gmra.mrb[0].mxu0 %v1702
        %v6237 = vpop.f32.mrb[0].mxu0
        %v6238 = vadd.f32 %v6198, %v6237
        %v6239 = vpop.f32.mrb[0].mxu0
        %v6240 = vpop.f32.mrb[0].mxu0
        %v6241 = vpop.f32.mrb[0].mxu0
        %6242 = vdwg.mxu0
        %6243 = vmatprep.subr.bf16.mxu0 0
        %6244 = vmatpush1.bf16.msra.mxu0 %v4587
        %6245 = vmatprep.subr.bf16.mxu0 0
        %6246 = vmatpush1.bf16.msra.mxu0 %v4588
        %6247 = vmatprep.subr.bf16.mxu0 0
        %6248 = vmatpush1.bf16.msra.mxu0 %v4589
        %6249 = vmatprep.subr.bf16.mxu0 0
        %6250 = vmatpush1.bf16.msra.mxu0 %v4590
        %6251 = vmatprep.subr.bf16.mxu0 0
        %6252 = vmatpush1.bf16.msra.mxu0 %v4591
        %6253 = vmatprep.subr.bf16.mxu0 0
        %6254 = vmatpush1.bf16.msra.mxu0 %v4592
        %6255 = vmatprep.subr.bf16.mxu0 0
        %6256 = vmatpush1.bf16.msra.mxu0 %v4593
        %6257 = vmatprep.subr.bf16.mxu0 0
        %6258 = vmatpush1.bf16.msra.mxu0 %v4594
        %6259 = vmatprep.subr.bf16.mxu0 0
        %6260 = vmatpush1.bf16.msra.mxu0 %v4595
        %6261 = vmatprep.subr.bf16.mxu0 0
        %6262 = vmatpush1.bf16.msra.mxu0 %v4596
        %6263 = vmatprep.subr.bf16.mxu0 0
        %6264 = vmatpush1.bf16.msra.mxu0 %v4597
        %6265 = vmatprep.subr.bf16.mxu0 0
        %6266 = vmatpush1.bf16.msra.mxu0 %v4598
        %6267 = vmatprep.subr.bf16.mxu0 0
        %6268 = vmatpush1.bf16.msra.mxu0 %v4599
        %6269 = vmatprep.subr.bf16.mxu0 0
        %6270 = vmatpush1.bf16.msra.mxu0 %v4600
        %6271 = vmatprep.subr.bf16.mxu0 0
        %6272 = vmatpush1.bf16.msra.mxu0 %v4601
        %6273 = vmatprep.subr.bf16.mxu0 0
        %6274 = vmatpush1.bf16.msra.mxu0 %v4602
        %6275 = vmatprep.mubr.bf16.mxu0 %v1726
        %6276 = vmatmul.mubr.bf16.gmra.mrb[0].mxu0 %v1724
        %v6277 = vpop.f32.mrb[0].mxu0
        %v6278 = vadd.f32 %v6238, %v6277
        %v6279 = vpop.f32.mrb[0].mxu0
        %v6280 = vpop.f32.mrb[0].mxu0
        %v6281 = vpop.f32.mrb[0].mxu0
        %6282 = vdwg.mxu0
        %6283 = vmatprep.subr.bf16.mxu0 0
        %6284 = vmatpush1.bf16.msra.mxu0 %v4603
        %6285 = vmatprep.subr.bf16.mxu0 0
        %6286 = vmatpush1.bf16.msra.mxu0 %v4604
        %6287 = vmatprep.subr.bf16.mxu0 0
        %6288 = vmatpush1.bf16.msra.mxu0 %v4605
        %6289 = vmatprep.subr.bf16.mxu0 0
        %6290 = vmatpush1.bf16.msra.mxu0 %v4606
        %6291 = vmatprep.subr.bf16.mxu0 0
        %6292 = vmatpush1.bf16.msra.mxu0 %v4607
        %6293 = vmatprep.subr.bf16.mxu0 0
        %6294 = vmatpush1.bf16.msra.mxu0 %v4608
        %6295 = vmatprep.subr.bf16.mxu0 0
        %6296 = vmatpush1.bf16.msra.mxu0 %v4609
        %6297 = vmatprep.subr.bf16.mxu0 0
        %6298 = vmatpush1.bf16.msra.mxu0 %v4610
        %6299 = vmatprep.subr.bf16.mxu0 0
        %6300 = vmatpush1.bf16.msra.mxu0 %v4611
        %6301 = vmatprep.subr.bf16.mxu0 0
        %6302 = vmatpush1.bf16.msra.mxu0 %v4612
        %6303 = vmatprep.subr.bf16.mxu0 0
        %6304 = vmatpush1.bf16.msra.mxu0 %v4613
        %6305 = vmatprep.subr.bf16.mxu0 0
        %6306 = vmatpush1.bf16.msra.mxu0 %v4614
        %6307 = vmatprep.subr.bf16.mxu0 0
        %6308 = vmatpush1.bf16.msra.mxu0 %v4615
        %6309 = vmatprep.subr.bf16.mxu0 0
        %6310 = vmatpush1.bf16.msra.mxu0 %v4616
        %6311 = vmatprep.subr.bf16.mxu0 0
        %6312 = vmatpush1.bf16.msra.mxu0 %v4617
        %6313 = vmatprep.subr.bf16.mxu0 0
        %6314 = vmatpush1.bf16.msra.mxu0 %v4618
        %6315 = vmatprep.mubr.bf16.mxu0 %v1723
        %6316 = vmatmul.mubr.bf16.gmra.mrb[0].mxu0 %v1709
        %v6317 = vpop.f32.mrb[0].mxu0
        %v6318 = vadd.f32 %v6278, %v6317
        %v6319 = vpop.f32.mrb[0].mxu0
        %v6320 = vpop.f32.mrb[0].mxu0
        %v6321 = vpop.f32.mrb[0].mxu0
        %6322 = vdwg.mxu0
        %6323 = vmatprep.subr.bf16.mxu0 0
        %6324 = vmatpush1.bf16.msra.mxu0 %v4619
        %6325 = vmatprep.subr.bf16.mxu0 0
        %6326 = vmatpush1.bf16.msra.mxu0 %v4620
        %6327 = vmatprep.subr.bf16.mxu0 0
        %6328 = vmatpush1.bf16.msra.mxu0 %v4621
        %6329 = vmatprep.subr.bf16.mxu0 0
        %6330 = vmatpush1.bf16.msra.mxu0 %v4622
        %6331 = vmatprep.subr.bf16.mxu0 0
        %6332 = vmatpush1.bf16.msra.mxu0 %v4623
        %6333 = vmatprep.subr.bf16.mxu0 0
        %6334 = vmatpush1.bf16.msra.mxu0 %v4624
        %6335 = vmatprep.subr.bf16.mxu0 0
        %6336 = vmatpush1.bf16.msra.mxu0 %v4625
        %6337 = vmatprep.subr.bf16.mxu0 0
        %6338 = vmatpush1.bf16.msra.mxu0 %v4626
        %6339 = vmatprep.subr.bf16.mxu0 0
        %6340 = vmatpush1.bf16.msra.mxu0 %v4627
        %6341 = vmatprep.subr.bf16.mxu0 0
        %6342 = vmatpush1.bf16.msra.mxu0 %v4628
        %6343 = vmatprep.subr.bf16.mxu0 0
        %6344 = vmatpush1.bf16.msra.mxu0 %v4629
        %6345 = vmatprep.subr.bf16.mxu0 0
        %6346 = vmatpush1.bf16.msra.mxu0 %v4630
        %6347 = vmatprep.subr.bf16.mxu0 0
        %6348 = vmatpush1.bf16.msra.mxu0 %v4631
        %6349 = vmatprep.subr.bf16.mxu0 0
        %6350 = vmatpush1.bf16.msra.mxu0 %v4632
        %6351 = vmatprep.subr.bf16.mxu0 0
        %6352 = vmatpush1.bf16.msra.mxu0 %v4633
        %6353 = vmatprep.subr.bf16.mxu0 0
        %6354 = vmatpush1.bf16.msra.mxu0 %v4634
        %6355 = vmatprep.mubr.bf16.mxu0 %v1727
        %6356 = vmatmul.mubr.bf16.gmra.mrb[0].mxu0 %v1725
        %v6357 = vpop.f32.mrb[0].mxu0
        %v6358 = vadd.f32 %v6318, %v6357
        %v6359 = vpop.f32.mrb[0].mxu0
        %v6360 = vpop.f32.mrb[0].mxu0
        %v6361 = vpop.f32.mrb[0].mxu0
        %6362 = vdwg.mxu0
        %6363 = vmatprep.subr.bf16.mxu0 0
        %6364 = vmatpush1.bf16.msra.mxu0 %v4635
        %6365 = vmatprep.subr.bf16.mxu0 0
        %6366 = vmatpush1.bf16.msra.mxu0 %v4636
        %6367 = vmatprep.subr.bf16.mxu0 0
        %6368 = vmatpush1.bf16.msra.mxu0 %v4637
        %6369 = vmatprep.subr.bf16.mxu0 0
        %6370 = vmatpush1.bf16.msra.mxu0 %v4638
        %6371 = vmatprep.subr.bf16.mxu0 0
        %6372 = vmatpush1.bf16.msra.mxu0 %v4639
        %6373 = vmatprep.subr.bf16.mxu0 0
        %6374 = vmatpush1.bf16.msra.mxu0 %v4640
        %6375 = vmatprep.subr.bf16.mxu0 0
        %6376 = vmatpush1.bf16.msra.mxu0 %v4641
        %6377 = vmatprep.subr.bf16.mxu0 0
        %6378 = vmatpush1.bf16.msra.mxu0 %v4642
        %6379 = vmatprep.subr.bf16.mxu0 0
        %6380 = vmatpush1.bf16.msra.mxu0 %v4643
        %6381 = vmatprep.subr.bf16.mxu0 0
        %6382 = vmatpush1.bf16.msra.mxu0 %v4644
        %6383 = vmatprep.subr.bf16.mxu0 0
        %6384 = vmatpush1.bf16.msra.mxu0 %v4645
        %6385 = vmatprep.subr.bf16.mxu0 0
        %6386 = vmatpush1.bf16.msra.mxu0 %v4646
        %6387 = vmatprep.subr.bf16.mxu0 0
        %6388 = vmatpush1.bf16.msra.mxu0 %v4647
        %6389 = vmatprep.subr.bf16.mxu0 0
        %6390 = vmatpush1.bf16.msra.mxu0 %v4648
        %6391 = vmatprep.subr.bf16.mxu0 0
        %6392 = vmatpush1.bf16.msra.mxu0 %v4649
        %6393 = vmatprep.subr.bf16.mxu0 0
        %6394 = vmatpush1.bf16.msra.mxu0 %v4650
        %6395 = vmatprep.mubr.bf16.mxu0 %v1765
        %6396 = vmatmul.mubr.bf16.gmra.mrb[0].mxu0 %v1751
        %v6397 = vpop.f32.mrb[0].mxu0
        %v6398 = vadd.f32 %v6358, %v6397
        %v6399 = vpop.f32.mrb[0].mxu0
        %v6400 = vpop.f32.mrb[0].mxu0
        %v6401 = vpop.f32.mrb[0].mxu0
        %6402 = vdwg.mxu0
        %6403 = vmatprep.subr.bf16.mxu0 0
        %6404 = vmatpush1.bf16.msra.mxu0 %v4651
        %6405 = vmatprep.subr.bf16.mxu0 0
        %6406 = vmatpush1.bf16.msra.mxu0 %v4652
        %6407 = vmatprep.subr.bf16.mxu0 0
        %6408 = vmatpush1.bf16.msra.mxu0 %v4653
        %6409 = vmatprep.subr.bf16.mxu0 0
        %6410 = vmatpush1.bf16.msra.mxu0 %v4654
        %6411 = vmatprep.subr.bf16.mxu0 0
        %6412 = vmatpush1.bf16.msra.mxu0 %v4655
        %6413 = vmatprep.subr.bf16.mxu0 0
        %6414 = vmatpush1.bf16.msra.mxu0 %v4656
        %6415 = vmatprep.subr.bf16.mxu0 0
        %6416 = vmatpush1.bf16.msra.mxu0 %v4657
        %6417 = vmatprep.subr.bf16.mxu0 0
        %6418 = vmatpush1.bf16.msra.mxu0 %v4658
        %6419 = vmatprep.subr.bf16.mxu0 0
        %6420 = vmatpush1.bf16.msra.mxu0 %v4659
        %6421 = vmatprep.subr.bf16.mxu0 0
        %6422 = vmatpush1.bf16.msra.mxu0 %v4660
        %6423 = vmatprep.subr.bf16.mxu0 0
        %6424 = vmatpush1.bf16.msra.mxu0 %v4661
        %6425 = vmatprep.subr.bf16.mxu0 0
        %6426 = vmatpush1.bf16.msra.mxu0 %v4662
        %6427 = vmatprep.subr.bf16.mxu0 0
        %6428 = vmatpush1.bf16.msra.mxu0 %v4663
        %6429 = vmatprep.subr.bf16.mxu0 0
        %6430 = vmatpush1.bf16.msra.mxu0 %v4664
        %6431 = vmatprep.subr.bf16.mxu0 0
        %6432 = vmatpush1.bf16.msra.mxu0 %v4665
        %6433 = vmatprep.subr.bf16.mxu0 0
        %6434 = vmatpush1.bf16.msra.mxu0 %v4666
        %6435 = vmatprep.mubr.bf16.mxu0 %v1775
        %6436 = vmatmul.mubr.bf16.gmra.mrb[0].mxu0 %v1773
        %v6437 = vpop.f32.mrb[0].mxu0
        %v6438 = vadd.f32 %v6398, %v6437
        %v6439 = vpop.f32.mrb[0].mxu0
        %v6440 = vpop.f32.mrb[0].mxu0
        %v6441 = vpop.f32.mrb[0].mxu0
        %6442 = vdwg.mxu0
        %6443 = vmatprep.subr.bf16.mxu0 0
        %6444 = vmatpush1.bf16.msra.mxu0 %v4667
        %6445 = vmatprep.subr.bf16.mxu0 0
        %6446 = vmatpush1.bf16.msra.mxu0 %v4668
        %6447 = vmatprep.subr.bf16.mxu0 0
        %6448 = vmatpush1.bf16.msra.mxu0 %v4669
        %6449 = vmatprep.subr.bf16.mxu0 0
        %6450 = vmatpush1.bf16.msra.mxu0 %v4670
        %6451 = vmatprep.subr.bf16.mxu0 0
        %6452 = vmatpush1.bf16.msra.mxu0 %v4671
        %6453 = vmatprep.subr.bf16.mxu0 0
        %6454 = vmatpush1.bf16.msra.mxu0 %v4672
        %6455 = vmatprep.subr.bf16.mxu0 0
        %6456 = vmatpush1.bf16.msra.mxu0 %v4673
        %6457 = vmatprep.subr.bf16.mxu0 0
        %6458 = vmatpush1.bf16.msra.mxu0 %v4674
        %6459 = vmatprep.subr.bf16.mxu0 0
        %6460 = vmatpush1.bf16.msra.mxu0 %v4675
        %6461 = vmatprep.subr.bf16.mxu0 0
        %6462 = vmatpush1.bf16.msra.mxu0 %v4676
        %6463 = vmatprep.subr.bf16.mxu0 0
        %6464 = vmatpush1.bf16.msra.mxu0 %v4677
        %6465 = vmatprep.subr.bf16.mxu0 0
        %6466 = vmatpush1.bf16.msra.mxu0 %v4678
        %6467 = vmatprep.subr.bf16.mxu0 0
        %6468 = vmatpush1.bf16.msra.mxu0 %v4679
        %6469 = vmatprep.subr.bf16.mxu0 0
        %6470 = vmatpush1.bf16.msra.mxu0 %v4680
        %6471 = vmatprep.subr.bf16.mxu0 0
        %6472 = vmatpush1.bf16.msra.mxu0 %v4681
        %6473 = vmatprep.subr.bf16.mxu0 0
        %6474 = vmatpush1.bf16.msra.mxu0 %v4682
        %6475 = vmatprep.mubr.bf16.mxu0 %v1772
        %6476 = vmatmul.mubr.bf16.gmra.mrb[0].mxu0 %v1758
        %v6477 = vpop.f32.mrb[0].mxu0
        %v6478 = vadd.f32 %v6438, %v6477
        %v6479 = vpop.f32.mrb[0].mxu0
        %v6480 = vpop.f32.mrb[0].mxu0
        %v6481 = vpop.f32.mrb[0].mxu0
        %6482 = vdwg.mxu0
        %6483 = vmatprep.subr.bf16.mxu0 0
        %6484 = vmatpush1.bf16.msra.mxu0 %v4683
        %6485 = vmatprep.subr.bf16.mxu0 0
        %6486 = vmatpush1.bf16.msra.mxu0 %v4684
        %6487 = vmatprep.subr.bf16.mxu0 0
        %6488 = vmatpush1.bf16.msra.mxu0 %v4685
        %6489 = vmatprep.subr.bf16.mxu0 0
        %6490 = vmatpush1.bf16.msra.mxu0 %v4686
        %6491 = vmatprep.subr.bf16.mxu0 0
        %6492 = vmatpush1.bf16.msra.mxu0 %v4687
        %6493 = vmatprep.subr.bf16.mxu0 0
        %6494 = vmatpush1.bf16.msra.mxu0 %v4688
        %6495 = vmatprep.subr.bf16.mxu0 0
        %6496 = vmatpush1.bf16.msra.mxu0 %v4689
        %6497 = vmatprep.subr.bf16.mxu0 0
        %6498 = vmatpush1.bf16.msra.mxu0 %v4690
        %6499 = vmatprep.subr.bf16.mxu0 0
        %6500 = vmatpush1.bf16.msra.mxu0 %v4691
        %6501 = vmatprep.subr.bf16.mxu0 0
        %6502 = vmatpush1.bf16.msra.mxu0 %v4692
        %6503 = vmatprep.subr.bf16.mxu0 0
        %6504 = vmatpush1.bf16.msra.mxu0 %v4693
        %6505 = vmatprep.subr.bf16.mxu0 0
        %6506 = vmatpush1.bf16.msra.mxu0 %v4694
        %6507 = vmatprep.subr.bf16.mxu0 0
        %6508 = vmatpush1.bf16.msra.mxu0 %v4695
        %6509 = vmatprep.subr.bf16.mxu0 0
        %6510 = vmatpush1.bf16.msra.mxu0 %v4696
        %6511 = vmatprep.subr.bf16.mxu0 0
        %6512 = vmatpush1.bf16.msra.mxu0 %v4697
        %6513 = vmatprep.subr.bf16.mxu0 0
        %6514 = vmatpush1.bf16.msra.mxu0 %v4698
        %6515 = vmatprep.mubr.bf16.mxu0 %v1776
        %6516 = vmatmul.mubr.bf16.gmra.mrb[0].mxu0 %v1774
        %v6517 = vpop.f32.mrb[0].mxu0
        %v6518 = vadd.f32 %v6478, %v6517
        %v6519 = vpop.f32.mrb[0].mxu0
        %v6520 = vpop.f32.mrb[0].mxu0
        %v6521 = vpop.f32.mrb[0].mxu0
        %6522 = vdwg.mxu0
        %6523 = vmatprep.subr.bf16.mxu0 0
        %6524 = vmatpush1.bf16.msra.mxu0 %v4699
        %6525 = vmatprep.subr.bf16.mxu0 0
        %6526 = vmatpush1.bf16.msra.mxu0 %v4700
        %6527 = vmatprep.subr.bf16.mxu0 0
        %6528 = vmatpush1.bf16.msra.mxu0 %v4701
        %6529 = vmatprep.subr.bf16.mxu0 0
        %6530 = vmatpush1.bf16.msra.mxu0 %v4702
        %6531 = vmatprep.subr.bf16.mxu0 0
        %6532 = vmatpush1.bf16.msra.mxu0 %v4703
        %6533 = vmatprep.subr.bf16.mxu0 0
        %6534 = vmatpush1.bf16.msra.mxu0 %v4704
        %6535 = vmatprep.subr.bf16.mxu0 0
        %6536 = vmatpush1.bf16.msra.mxu0 %v4705
        %6537 = vmatprep.subr.bf16.mxu0 0
        %6538 = vmatpush1.bf16.msra.mxu0 %v4706
        %6539 = vmatprep.subr.bf16.mxu0 0
        %6540 = vmatpush1.bf16.msra.mxu0 %v4707
        %6541 = vmatprep.subr.bf16.mxu0 0
        %6542 = vmatpush1.bf16.msra.mxu0 %v4708
        %6543 = vmatprep.subr.bf16.mxu0 0
        %6544 = vmatpush1.bf16.msra.mxu0 %v4709
        %6545 = vmatprep.subr.bf16.mxu0 0
        %6546 = vmatpush1.bf16.msra.mxu0 %v4710
        %6547 = vmatprep.subr.bf16.mxu0 0
        %6548 = vmatpush1.bf16.msra.mxu0 %v4711
        %6549 = vmatprep.subr.bf16.mxu0 0
        %6550 = vmatpush1.bf16.msra.mxu0 %v4712
        %6551 = vmatprep.subr.bf16.mxu0 0
        %6552 = vmatpush1.bf16.msra.mxu0 %v4713
        %6553 = vmatprep.subr.bf16.mxu0 0
        %6554 = vmatpush1.bf16.msra.mxu0 %v4714
        %6555 = vmatprep.mubr.bf16.mxu0 %v1814
        %6556 = vmatmul.mubr.bf16.gmra.mrb[0].mxu0 %v1800
        %v6557 = vpop.f32.mrb[0].mxu0
        %v6558 = vadd.f32 %v6518, %v6557
        %v6559 = vpop.f32.mrb[0].mxu0
        %v6560 = vpop.f32.mrb[0].mxu0
        %v6561 = vpop.f32.mrb[0].mxu0
        %6562 = vdwg.mxu0
        %6563 = vmatprep.subr.bf16.mxu0 0
        %6564 = vmatpush1.bf16.msra.mxu0 %v4715
        %6565 = vmatprep.subr.bf16.mxu0 0
        %6566 = vmatpush1.bf16.msra.mxu0 %v4716
        %6567 = vmatprep.subr.bf16.mxu0 0
        %6568 = vmatpush1.bf16.msra.mxu0 %v4717
        %6569 = vmatprep.subr.bf16.mxu0 0
        %6570 = vmatpush1.bf16.msra.mxu0 %v4718
        %6571 = vmatprep.subr.bf16.mxu0 0
        %6572 = vmatpush1.bf16.msra.mxu0 %v4719
        %6573 = vmatprep.subr.bf16.mxu0 0
        %6574 = vmatpush1.bf16.msra.mxu0 %v4720
        %6575 = vmatprep.subr.bf16.mxu0 0
        %6576 = vmatpush1.bf16.msra.mxu0 %v4721
        %6577 = vmatprep.subr.bf16.mxu0 0
        %6578 = vmatpush1.bf16.msra.mxu0 %v4722
        %6579 = vmatprep.subr.bf16.mxu0 0
        %6580 = vmatpush1.bf16.msra.mxu0 %v4723
        %6581 = vmatprep.subr.bf16.mxu0 0
        %6582 = vmatpush1.bf16.msra.mxu0 %v4724
        %6583 = vmatprep.subr.bf16.mxu0 0
        %6584 = vmatpush1.bf16.msra.mxu0 %v4725
        %6585 = vmatprep.subr.bf16.mxu0 0
        %6586 = vmatpush1.bf16.msra.mxu0 %v4726
        %6587 = vmatprep.subr.bf16.mxu0 0
        %6588 = vmatpush1.bf16.msra.mxu0 %v4727
        %6589 = vmatprep.subr.bf16.mxu0 0
        %6590 = vmatpush1.bf16.msra.mxu0 %v4728
        %6591 = vmatprep.subr.bf16.mxu0 0
        %6592 = vmatpush1.bf16.msra.mxu0 %v4729
        %6593 = vmatprep.subr.bf16.mxu0 0
        %6594 = vmatpush1.bf16.msra.mxu0 %v4730
        %6595 = vmatprep.mubr.bf16.mxu0 %v1824
        %6596 = vmatmul.mubr.bf16.gmra.mrb[0].mxu0 %v1822
        %v6597 = vpop.f32.mrb[0].mxu0
        %v6598 = vadd.f32 %v6558, %v6597
        %v6599 = vpop.f32.mrb[0].mxu0
        %v6600 = vpop.f32.mrb[0].mxu0
        %v6601 = vpop.f32.mrb[0].mxu0
        %6602 = vdwg.mxu0
        %6603 = vmatprep.subr.bf16.mxu0 0
        %6604 = vmatpush1.bf16.msra.mxu0 %v4731
        %6605 = vmatprep.subr.bf16.mxu0 0
        %6606 = vmatpush1.bf16.msra.mxu0 %v4732
        %6607 = vmatprep.subr.bf16.mxu0 0
        %6608 = vmatpush1.bf16.msra.mxu0 %v4733
        %6609 = vmatprep.subr.bf16.mxu0 0
        %6610 = vmatpush1.bf16.msra.mxu0 %v4734
        %6611 = vmatprep.subr.bf16.mxu0 0
        %6612 = vmatpush1.bf16.msra.mxu0 %v4735
        %6613 = vmatprep.subr.bf16.mxu0 0
        %6614 = vmatpush1.bf16.msra.mxu0 %v4736
        %6615 = vmatprep.subr.bf16.mxu0 0
        %6616 = vmatpush1.bf16.msra.mxu0 %v4737
        %6617 = vmatprep.subr.bf16.mxu0 0
        %6618 = vmatpush1.bf16.msra.mxu0 %v4738
        %6619 = vmatprep.subr.bf16.mxu0 0
        %6620 = vmatpush1.bf16.msra.mxu0 %v4739
        %6621 = vmatprep.subr.bf16.mxu0 0
        %6622 = vmatpush1.bf16.msra.mxu0 %v4740
        %6623 = vmatprep.subr.bf16.mxu0 0
        %6624 = vmatpush1.bf16.msra.mxu0 %v4741
        %6625 = vmatprep.subr.bf16.mxu0 0
        %6626 = vmatpush1.bf16.msra.mxu0 %v4742
        %6627 = vmatprep.subr.bf16.mxu0 0
        %6628 = vmatpush1.bf16.msra.mxu0 %v4743
        %6629 = vmatprep.subr.bf16.mxu0 0
        %6630 = vmatpush1.bf16.msra.mxu0 %v4744
        %6631 = vmatprep.subr.bf16.mxu0 0
        %6632 = vmatpush1.bf16.msra.mxu0 %v4745
        %6633 = vmatprep.subr.bf16.mxu0 0
        %6634 = vmatpush1.bf16.msra.mxu0 %v4746
        %6635 = vmatprep.mubr.bf16.mxu0 %v1821
        %6636 = vmatmul.mubr.bf16.gmra.mrb[0].mxu0 %v1807
        %v6637 = vpop.f32.mrb[0].mxu0
        %v6638 = vadd.f32 %v6598, %v6637
        %v6639 = vpop.f32.mrb[0].mxu0
        %v6640 = vpop.f32.mrb[0].mxu0
        %v6641 = vpop.f32.mrb[0].mxu0
        %6642 = vdwg.mxu0
        %6643 = vmatprep.subr.bf16.mxu0 0
        %6644 = vmatpush1.bf16.msra.mxu0 %v4747
        %6645 = vmatprep.subr.bf16.mxu0 0
        %6646 = vmatpush1.bf16.msra.mxu0 %v4748
        %6647 = vmatprep.subr.bf16.mxu0 0
        %6648 = vmatpush1.bf16.msra.mxu0 %v4749
        %6649 = vmatprep.subr.bf16.mxu0 0
        %6650 = vmatpush1.bf16.msra.mxu0 %v4750
        %6651 = vmatprep.subr.bf16.mxu0 0
        %6652 = vmatpush1.bf16.msra.mxu0 %v4751
        %6653 = vmatprep.subr.bf16.mxu0 0
        %6654 = vmatpush1.bf16.msra.mxu0 %v4752
        %6655 = vmatprep.subr.bf16.mxu0 0
        %6656 = vmatpush1.bf16.msra.mxu0 %v4753
        %6657 = vmatprep.subr.bf16.mxu0 0
        %6658 = vmatpush1.bf16.msra.mxu0 %v4754
        %6659 = vmatprep.subr.bf16.mxu0 0
        %6660 = vmatpush1.bf16.msra.mxu0 %v4755
        %6661 = vmatprep.subr.bf16.mxu0 0
        %6662 = vmatpush1.bf16.msra.mxu0 %v4756
        %6663 = vmatprep.subr.bf16.mxu0 0
        %6664 = vmatpush1.bf16.msra.mxu0 %v4757
        %6665 = vmatprep.subr.bf16.mxu0 0
        %6666 = vmatpush1.bf16.msra.mxu0 %v4758
        %6667 = vmatprep.subr.bf16.mxu0 0
        %6668 = vmatpush1.bf16.msra.mxu0 %v4759
        %6669 = vmatprep.subr.bf16.mxu0 0
        %6670 = vmatpush1.bf16.msra.mxu0 %v4760
        %6671 = vmatprep.subr.bf16.mxu0 0
        %6672 = vmatpush1.bf16.msra.mxu0 %v4761
        %6673 = vmatprep.subr.bf16.mxu0 0
        %6674 = vmatpush1.bf16.msra.mxu0 %v4762
        %6675 = vmatprep.mubr.bf16.mxu0 %v1825
        %6676 = vmatmul.mubr.bf16.gmra.mrb[0].mxu0 %v1823
        %v6677 = vpop.f32.mrb[0].mxu0
        %v6678 = vadd.f32 %v6638, %v6677
        %v6679 = vpop.f32.mrb[0].mxu0
        %v6680 = vpop.f32.mrb[0].mxu0
        %v6681 = vpop.f32.mrb[0].mxu0
        %6682 = vdwg.mxu0
        %6683 = vmatprep.subr.bf16.mxu0 0
        %6684 = vmatpush1.bf16.msra.mxu0 %v4763
        %6685 = vmatprep.subr.bf16.mxu0 0
        %6686 = vmatpush1.bf16.msra.mxu0 %v4764
        %6687 = vmatprep.subr.bf16.mxu0 0
        %6688 = vmatpush1.bf16.msra.mxu0 %v4765
        %6689 = vmatprep.subr.bf16.mxu0 0
        %6690 = vmatpush1.bf16.msra.mxu0 %v4766
        %6691 = vmatprep.subr.bf16.mxu0 0
        %6692 = vmatpush1.bf16.msra.mxu0 %v4767
        %6693 = vmatprep.subr.bf16.mxu0 0
        %6694 = vmatpush1.bf16.msra.mxu0 %v4768
        %6695 = vmatprep.subr.bf16.mxu0 0
        %6696 = vmatpush1.bf16.msra.mxu0 %v4769
        %6697 = vmatprep.subr.bf16.mxu0 0
        %6698 = vmatpush1.bf16.msra.mxu0 %v4770
        %6699 = vmatprep.subr.bf16.mxu0 0
        %6700 = vmatpush1.bf16.msra.mxu0 %v4771
        %6701 = vmatprep.subr.bf16.mxu0 0
        %6702 = vmatpush1.bf16.msra.mxu0 %v4772
        %6703 = vmatprep.subr.bf16.mxu0 0
        %6704 = vmatpush1.bf16.msra.mxu0 %v4773
        %6705 = vmatprep.subr.bf16.mxu0 0
        %6706 = vmatpush1.bf16.msra.mxu0 %v4774
        %6707 = vmatprep.subr.bf16.mxu0 0
        %6708 = vmatpush1.bf16.msra.mxu0 %v4775
        %6709 = vmatprep.subr.bf16.mxu0 0
        %6710 = vmatpush1.bf16.msra.mxu0 %v4776
        %6711 = vmatprep.subr.bf16.mxu0 0
        %6712 = vmatpush1.bf16.msra.mxu0 %v4777
        %6713 = vmatprep.subr.bf16.mxu0 0
        %6714 = vmatpush1.bf16.msra.mxu0 %v4778
        %6715 = vmatprep.mubr.bf16.mxu0 %v1863
        %6716 = vmatmul.mubr.bf16.gmra.mrb[0].mxu0 %v1849
        %v6717 = vpop.f32.mrb[0].mxu0
        %v6718 = vadd.f32 %v6678, %v6717
        %v6719 = vpop.f32.mrb[0].mxu0
        %v6720 = vpop.f32.mrb[0].mxu0
        %v6721 = vpop.f32.mrb[0].mxu0
        %6722 = vdwg.mxu0
        %6723 = vmatprep.subr.bf16.mxu0 0
        %6724 = vmatpush1.bf16.msra.mxu0 %v4779
        %6725 = vmatprep.subr.bf16.mxu0 0
        %6726 = vmatpush1.bf16.msra.mxu0 %v4780
        %6727 = vmatprep.subr.bf16.mxu0 0
        %6728 = vmatpush1.bf16.msra.mxu0 %v4781
        %6729 = vmatprep.subr.bf16.mxu0 0
        %6730 = vmatpush1.bf16.msra.mxu0 %v4782
        %6731 = vmatprep.subr.bf16.mxu0 0
        %6732 = vmatpush1.bf16.msra.mxu0 %v4783
        %6733 = vmatprep.subr.bf16.mxu0 0
        %6734 = vmatpush1.bf16.msra.mxu0 %v4784
        %6735 = vmatprep.subr.bf16.mxu0 0
        %6736 = vmatpush1.bf16.msra.mxu0 %v4785
        %6737 = vmatprep.subr.bf16.mxu0 0
        %6738 = vmatpush1.bf16.msra.mxu0 %v4786
        %6739 = vmatprep.subr.bf16.mxu0 0
        %6740 = vmatpush1.bf16.msra.mxu0 %v4787
        %6741 = vmatprep.subr.bf16.mxu0 0
        %6742 = vmatpush1.bf16.msra.mxu0 %v4788
        %6743 = vmatprep.subr.bf16.mxu0 0
        %6744 = vmatpush1.bf16.msra.mxu0 %v4789
        %6745 = vmatprep.subr.bf16.mxu0 0
        %6746 = vmatpush1.bf16.msra.mxu0 %v4790
        %6747 = vmatprep.subr.bf16.mxu0 0
        %6748 = vmatpush1.bf16.msra.mxu0 %v4791
        %6749 = vmatprep.subr.bf16.mxu0 0
        %6750 = vmatpush1.bf16.msra.mxu0 %v4792
        %6751 = vmatprep.subr.bf16.mxu0 0
        %6752 = vmatpush1.bf16.msra.mxu0 %v4793
        %6753 = vmatprep.subr.bf16.mxu0 0
        %6754 = vmatpush1.bf16.msra.mxu0 %v4794
        %6755 = vmatprep.mubr.bf16.mxu0 %v1873
        %6756 = vmatmul.mubr.bf16.gmra.mrb[0].mxu0 %v1871
        %v6757 = vpop.f32.mrb[0].mxu0
        %v6758 = vadd.f32 %v6718, %v6757
        %v6759 = vpop.f32.mrb[0].mxu0
        %v6760 = vpop.f32.mrb[0].mxu0
        %v6761 = vpop.f32.mrb[0].mxu0
        %6762 = vdwg.mxu0
        %6763 = vmatprep.subr.bf16.mxu0 0
        %6764 = vmatpush1.bf16.msra.mxu0 %v4795
        %6765 = vmatprep.subr.bf16.mxu0 0
        %6766 = vmatpush1.bf16.msra.mxu0 %v4796
        %6767 = vmatprep.subr.bf16.mxu0 0
        %6768 = vmatpush1.bf16.msra.mxu0 %v4797
        %6769 = vmatprep.subr.bf16.mxu0 0
        %6770 = vmatpush1.bf16.msra.mxu0 %v4798
        %6771 = vmatprep.subr.bf16.mxu0 0
        %6772 = vmatpush1.bf16.msra.mxu0 %v4799
        %6773 = vmatprep.subr.bf16.mxu0 0
        %6774 = vmatpush1.bf16.msra.mxu0 %v4800
        %6775 = vmatprep.subr.bf16.mxu0 0
        %6776 = vmatpush1.bf16.msra.mxu0 %v4801
        %6777 = vmatprep.subr.bf16.mxu0 0
        %6778 = vmatpush1.bf16.msra.mxu0 %v4802
        %6779 = vmatprep.subr.bf16.mxu0 0
        %6780 = vmatpush1.bf16.msra.mxu0 %v4803
        %6781 = vmatprep.subr.bf16.mxu0 0
        %6782 = vmatpush1.bf16.msra.mxu0 %v4804
        %6783 = vmatprep.subr.bf16.mxu0 0
        %6784 = vmatpush1.bf16.msra.mxu0 %v4805
        %6785 = vmatprep.subr.bf16.mxu0 0
        %6786 = vmatpush1.bf16.msra.mxu0 %v4806
        %6787 = vmatprep.subr.bf16.mxu0 0
        %6788 = vmatpush1.bf16.msra.mxu0 %v4807
        %6789 = vmatprep.subr.bf16.mxu0 0
        %6790 = vmatpush1.bf16.msra.mxu0 %v4808
        %6791 = vmatprep.subr.bf16.mxu0 0
        %6792 = vmatpush1.bf16.msra.mxu0 %v4809
        %6793 = vmatprep.subr.bf16.mxu0 0
        %6794 = vmatpush1.bf16.msra.mxu0 %v4810
        %6795 = vmatprep.mubr.bf16.mxu0 %v1870
        %6796 = vmatmul.mubr.bf16.gmra.mrb[0].mxu0 %v1856
        %v6797 = vpop.f32.mrb[0].mxu0
        %v6798 = vadd.f32 %v6758, %v6797
        %v6799 = vpop.f32.mrb[0].mxu0
        %v6800 = vpop.f32.mrb[0].mxu0
        %v6801 = vpop.f32.mrb[0].mxu0
        %6802 = vdwg.mxu0
        %6803 = vmatprep.subr.bf16.mxu0 0
        %6804 = vmatpush1.bf16.msra.mxu0 %v4811
        %6805 = vmatprep.subr.bf16.mxu0 0
        %6806 = vmatpush1.bf16.msra.mxu0 %v4812
        %6807 = vmatprep.subr.bf16.mxu0 0
        %6808 = vmatpush1.bf16.msra.mxu0 %v4813
        %6809 = vmatprep.subr.bf16.mxu0 0
        %6810 = vmatpush1.bf16.msra.mxu0 %v4814
        %6811 = vmatprep.subr.bf16.mxu0 0
        %6812 = vmatpush1.bf16.msra.mxu0 %v4815
        %6813 = vmatprep.subr.bf16.mxu0 0
        %6814 = vmatpush1.bf16.msra.mxu0 %v4816
        %6815 = vmatprep.subr.bf16.mxu0 0
        %6816 = vmatpush1.bf16.msra.mxu0 %v4817
        %6817 = vmatprep.subr.bf16.mxu0 0
        %6818 = vmatpush1.bf16.msra.mxu0 %v4818
        %6819 = vmatprep.subr.bf16.mxu0 0
        %6820 = vmatpush1.bf16.msra.mxu0 %v4819
        %6821 = vmatprep.subr.bf16.mxu0 0
        %6822 = vmatpush1.bf16.msra.mxu0 %v4820
        %6823 = vmatprep.subr.bf16.mxu0 0
        %6824 = vmatpush1.bf16.msra.mxu0 %v4821
        %6825 = vmatprep.subr.bf16.mxu0 0
        %6826 = vmatpush1.bf16.msra.mxu0 %v4822
        %6827 = vmatprep.subr.bf16.mxu0 0
        %6828 = vmatpush1.bf16.msra.mxu0 %v4823
        %6829 = vmatprep.subr.bf16.mxu0 0
        %6830 = vmatpush1.bf16.msra.mxu0 %v4824
        %6831 = vmatprep.subr.bf16.mxu0 0
        %6832 = vmatpush1.bf16.msra.mxu0 %v4825
        %6833 = vmatprep.subr.bf16.mxu0 0
        %6834 = vmatpush1.bf16.msra.mxu0 %v4826
        %6835 = vmatprep.mubr.bf16.mxu0 %v1874
        %6836 = vmatmul.mubr.bf16.gmra.mrb[0].mxu0 %v1872
        %v6837 = vpop.f32.mrb[0].mxu0
        %v6838 = vadd.f32 %v6798, %v6837
        %v6839 = vpop.f32.mrb[0].mxu0
        %v6840 = vpop.f32.mrb[0].mxu0
        %v6841 = vpop.f32.mrb[0].mxu0
        %6842 = vdwg.mxu0
        %v6843 = vadd.f32 %v263, %v6838
        %6844 = vst [vmem:[#allocation2] sm:$0x3] %v6843
        %p6845 = scmp.eq.s32.totalorder %s25, 1
        // Predicated region
        $region45: #{net_forward.6} parent=31 // pred_check
          %p6846 = pneg %p6845
        $region46: #{net_forward.6} parent=31 // pred_check_branch
          %6848 = sbr.rel (%p6846) target = $region48
        $region47: #{net_forward.6} parent=31 // pred_region
          %v6849 = vld [vmem:[#allocation2] sm:$0x3]
          %v6850 = vld [vmem:[%s219] sm:$0x1]
          %v6852 = vlaneseq
          %v6853 = vshrl.u32 %v6852, 7
          %v6854 = vsub.s32 0, %v6853
          %v6855 = vrot.slane %v6850, %v6854
          %v6857 = vadd.f32 %v6849, %v6855
          %v6858 = vmax.f32 %v6857, 0.0
          %v6859 = vpack.c.bf16 %v6858, %v6858
          %6860 = vst [vmem:[%s256] sm:$0x1] %v6859
        $region48: #{net_forward.6} parent=31 // pred_fallthru
          _
        %p6861 = scmp.lt.s32.totalorder %s24, 1
        %s6862 = scalar_select %p6861, %s24, 1
        %s6863 = scalar_lea.vmem %s3, %s6862
        // Predicated region
        $region49: #{net_forward.6} parent=31 // pred_check
          %p6864 = pneg %p130
        $region50: #{net_forward.6} parent=31 // pred_check_branch
          %6866 = sbr.rel (%p6864) target = $region52
        $region51: #{net_forward.6} parent=31 // pred_region
          _
        $region52: #{net_forward.6} parent=31 // pred_fallthru
          _
      $region32: #{net_forward.6} parent=5 // pred_fallthru
        _
      %p6867 = scmp.le.s32.totalorder 2, %s15
      // Predicated region
      $region53: #{net_forward.6} parent=5 // pred_check
        %p6868 = pneg %p6867
      $region54: #{net_forward.6} parent=5 // pred_check_branch
        %6870 = sbr.rel (%p6868) target = $region56
      $region55: #{net_forward.6} parent=5 // pred_region
        %s6871 = ssub.s32 %s15, 2
        // Predicated region
        $region57: #{net_forward.6} parent=55 // pred_check
          %p6872 = pneg %p136
        $region58: #{net_forward.6} parent=55 // pred_check_branch
          %6874 = sbr.rel (%p6872) target = $region60
        $region59: #{net_forward.6} parent=55 // pred_region
          %p6875 = scmp.lt.s32.totalorder %s26, 1
          %s6876 = scalar_select %p6875, %s26, 1
          %s6877 = scalar_lea.vmem %s3, %s6876
        $region60: #{net_forward.6} parent=55 // pred_fallthru
          _
      $region56: #{net_forward.6} parent=5 // pred_fallthru
        _
    $region6: #{net_forward.6} parent=1 // loop_footer
      %s19 = sadd.s32 1, %s15
    $region7: #{net_forward.6} parent=1 // loop_footer_branch
      %14 = sbr.rel target = $region3
    $region8: #{net_forward.6} parent=1 // loop_exit
      _
    %6878 = vsyncpa [#allocation4], 1
    %s6879 = scalar_lea.sflag [#allocation4], 1
    %6880 = vsyncpa %s6879, 1
    %6881 = vsyncpa [#allocation6], 1
    %s6882 = scalar_lea.sflag [#allocation6], 1
    %6883 = vsyncpa %s6882, 1

</llo_original>
